<compile_context>
chip_gen: v7x
topology: tpu7x:2x2x1
jax: 0.10.0
libtpu: 0.0.40
codegen_flags: <defaults>
</compile_context>

<pallas_src>
import jax
import jax.numpy as jnp
from jax.experimental import pallas as pl
from jax.experimental.pallas import tpu as pltpu

# Layer sizes of the original autoencoder (8 Linear layers).
SIZES = [28 * 28, 128, 64, 12, 3, 12, 64, 128, 28 * 28]


# ---------------------------------------------------------------------------
# Kernel
# ---------------------------------------------------------------------------
def autoencoder_kernel(x_ref,
                       w1, b1, w2, b2, w3, b3, w45, b45,
                       w6, b6, w7, b7, w8, b8,
                       o_ref):
    """Fused MLP forward for one (tile_b, 784) batch tile.

    7 fused Linear layers (layers 4/5 of the original 8 are pre-folded into w45).
    Activations travel in bf16; every matmul accumulates in f32 on the MXU.
    """
    h = x_ref[...].astype(jnp.bfloat16)              # (tile_b, 784) bf16

    def lin(h_bf16, w_ref, b_ref):
        # bf16 x bf16 -> f32 accumulate (MXU), f32 bias add (VPU).
        return jnp.dot(h_bf16, w_ref[...],
                       preferred_element_type=jnp.float32) + b_ref[...]

    def relu_bf16(h_f32):
        return jnp.maximum(h_f32, 0.0).astype(jnp.bfloat16)

    # encoder
    h = relu_bf16(lin(h, w1, b1))                    # 784 -> 128
    h = relu_bf16(lin(h, w2, b2))                    # 128 -> 64
    h = relu_bf16(lin(h, w3, b3))                    # 64  -> 12
    # folded encoder-latent + decoder-first layer (12 -> 3 -> 12, no act in between),
    # then the decoder's ReLU
    h = relu_bf16(lin(h, w45, b45))                  # 12  -> 12
    # decoder
    h = relu_bf16(lin(h, w6, b6))                    # 12  -> 64
    h = relu_bf16(lin(h, w7, b7))                    # 64  -> 128
    h = lin(h, w8, b8)                               # 128 -> 784, f32 logits

    # sigmoid = 1 / (1 + exp(-h)); exp runs on the EUP, exact f32 divide (no approx).
    sig = 1.0 / (1.0 + jnp.exp(-h))
    o_ref[...] = sig.astype(o_ref.dtype)


# ---------------------------------------------------------------------------
# Parameter prep (shared by the Pallas wrapper and the bf16-mirror reference)
# ---------------------------------------------------------------------------
def prepare_params(params):
    """Fold layers 4 & 5 and cast to kernel dtypes (bf16 weights, f32 biases)."""
    assert len(params) == 8
    (w1, b1), (w2, b2), (w3, b3), (w4, b4), (w5, b5), (w6, b6), (w7, b7), (w8, b8) = params
    w4f, b4f = w4.astype(jnp.float32), b4.astype(jnp.float32)
    w5f, b5f = w5.astype(jnp.float32), b5.astype(jnp.float32)
    w45 = w4f @ w5f                                  # (12, 12)
    b45 = b4f @ w5f + b5f                            # (1, 12)
    folded = [(w1, b1), (w2, b2), (w3, b3), (w45, b45),
              (w6, b6), (w7, b7), (w8, b8)]
    return [(w.astype(jnp.bfloat16), b.astype(jnp.float32)) for (w, b) in folded]


# ---------------------------------------------------------------------------
# Wrapper
# ---------------------------------------------------------------------------
def autoencoder_forward(x, params, *, tile_b=512):
    """x: (B, 784). params: list of 8 (w, b) with w (in, out), b (1, out).

    Returns the (B, 784) bfloat16 reconstruction (sigmoid output).
    """
    B, D_in = x.shape
    assert D_in == SIZES[0]
    prepped = prepare_params(params)

    # Only batch padding (if needed). The feature dim stays at 784 end-to-end: no
    # wrapper-side zero-pad of x, no output slice — those were two full HBM passes.
    B_pad = ((B + tile_b - 1) // tile_b) * tile_b
    xp = x if B_pad == B else jnp.pad(x, ((0, B_pad - B), (0, 0)))

    flat_params = []
    weight_specs = []
    for (w, b) in prepped:
        # Constant (0, 0) index_map: each weight/bias is DMA'd once and stays
        # VMEM-resident across every batch-grid step (~0.4 MB total in bf16).
        weight_specs.append(pl.BlockSpec(w.shape, lambda i: (0, 0)))
        weight_specs.append(pl.BlockSpec(b.shape, lambda i: (0, 0)))
        flat_params.extend([w, b])

    grid = (B_pad // tile_b,)
    out = pl.pallas_call(
        autoencoder_kernel,
        out_shape=jax.ShapeDtypeStruct((B_pad, SIZES[-1]), jnp.bfloat16),
        grid_spec=pltpu.PrefetchScalarGridSpec(
            num_scalar_prefetch=0,
            grid=grid,
            in_specs=[pl.BlockSpec((tile_b, SIZES[0]), lambda i: (i, 0))] + weight_specs,
            out_specs=pl.BlockSpec((tile_b, SIZES[-1]), lambda i: (i, 0)),
        ),
        # VMEM use at tile_b=512 is ~6 MB (double-buffered bf16 in/out tiles + f32
        # logits + weights) — well under every generation's default scoped limit.
        # If tile_b is pushed to >= 1024 on v7x, set vmem_limit_bytes explicitly.
        compiler_params=pltpu.CompilerParams(
            dimension_semantics=("parallel",)),
    )(xp, *flat_params)

    return out if B_pad == B else out[:B]


# ---------------------------------------------------------------------------
# Init + references
# ---------------------------------------------------------------------------
def init_params(key):
    """Deterministic PyTorch-Linear-like init: U(-1/sqrt(fan_in), 1/sqrt(fan_in))."""
    params = []
    for li in range(len(SIZES) - 1):
        fan_in, fan_out = SIZES[li], SIZES[li + 1]
        key, kw, kb = jax.random.split(key, 3)
        bound = 1.0 / (fan_in ** 0.5)
        w = jax.random.uniform(kw, (fan_in, fan_out), jnp.float32, -bound, bound)
        b = jax.random.uniform(kb, (1, fan_out), jnp.float32, -bound, bound)
        params.append((w, b))
    return params


def reference_forward_f32(x, params):
    """Faithful f32 reference of the PyTorch module (unfolded, 8 layers)."""
    h = x
    for li, (w, b) in enumerate(params):
        h = h @ w + b
        if li not in (3, 7):                 # no ReLU on the latent or final layer
            h = jnp.maximum(h, 0.0)
    return jax.nn.sigmoid(h)


def reference_forward_bf16(x, params):
    """Pure-JAX reference mirroring the kernel exactly (folded layer 4/5, bf16 matmul
    inputs, f32 accumulation, f32 sigmoid, bf16 output)."""
    prepped = prepare_params(params)
    h = x.astype(jnp.bfloat16)
    n = len(prepped)
    for li, (w, b) in enumerate(prepped):
        h = jnp.dot(h, w, preferred_element_type=jnp.float32) + b
        if li != n - 1:
            h = jnp.maximum(h, 0.0).astype(jnp.bfloat16)
    return (1.0 / (1.0 + jnp.exp(-h))).astype(jnp.bfloat16)


# ---------------------------------------------------------------------------
# Demo / self-test
# ---------------------------------------------------------------------------
if __name__ == "__main__":
    key = jax.random.PRNGKey(0)
    kx, kp = jax.random.split(key)

    tile_b = 512
    B = 4 * tile_b          # 2048 rows -> even grid of 4 "parallel" steps
                            # (2 v7x TensorCores x >= 2 pipelined steps each)
    # Input generated directly in bf16 so the kernel streams bf16 from HBM with no
    # wrapper-side conversion pass.
    x = jax.random.uniform(kx, (B, 28 * 28), jnp.float32).astype(jnp.bfloat16)
    params = init_params(kp)

    out = autoencoder_forward(x, params, tile_b=tile_b)
    out = jax.block_until_ready(out)
    assert out.shape == (B, 28 * 28)

    # Strict check against a reference with identical precision / folding choices.
    ref_bf16 = reference_forward_bf16(x, params)
    assert jnp.allclose(out.astype(jnp.float32), ref_bf16.astype(jnp.float32),
                        atol=1e-2, rtol=0.0), "mismatch vs bf16-mirrored reference"

    # Loose sanity check against the full-f32 PyTorch-semantics reference.
    ref_f32 = reference_forward_f32(x.astype(jnp.float32), params)
    assert float(jnp.max(jnp.abs(out.astype(jnp.float32) - ref_f32))) < 0.1, \
        "mismatch vs f32 reference"

    print("KERNEL_OK")
</pallas_src>

<mosaic_0001>
module attributes {stable_mosaic.version = 11 : i64} {
  func.func @autoencoder_kernel(%arg0: i32, %arg1: memref<512x784xbf16, #tpu.memory_space<vmem>>, %arg2: memref<784x128xbf16, #tpu.memory_space<vmem>>, %arg3: memref<1x128xf32, #tpu.memory_space<vmem>>, %arg4: memref<128x64xbf16, #tpu.memory_space<vmem>>, %arg5: memref<1x64xf32, #tpu.memory_space<vmem>>, %arg6: memref<64x12xbf16, #tpu.memory_space<vmem>>, %arg7: memref<1x12xf32, #tpu.memory_space<vmem>>, %arg8: memref<12x12xbf16, #tpu.memory_space<vmem>>, %arg9: memref<1x12xf32, #tpu.memory_space<vmem>>, %arg10: memref<12x64xbf16, #tpu.memory_space<vmem>>, %arg11: memref<1x64xf32, #tpu.memory_space<vmem>>, %arg12: memref<64x128xbf16, #tpu.memory_space<vmem>>, %arg13: memref<1x128xf32, #tpu.memory_space<vmem>>, %arg14: memref<128x784xbf16, #tpu.memory_space<vmem>>, %arg15: memref<1x784xf32, #tpu.memory_space<vmem>>, %arg16: memref<512x784xbf16, #tpu.memory_space<vmem>>) attributes {dimension_semantics = [#tpu.dimension_semantics<parallel>], iteration_bounds = array<i64: 4>, scalar_prefetch = 0 : i64, scratch_operands = 0 : i64, tpu.core_type = #tpu.core_type<tc>, window_params = [{transform_indices = @transform_0, window_bounds = array<i64: 512, 784>}, {pipeline_mode = #tpu.pipeline_mode<synchronous>, transform_indices = @transform_1, window_bounds = array<i64: 784, 128>}, {pipeline_mode = #tpu.pipeline_mode<synchronous>, transform_indices = @transform_2, window_bounds = array<i64: 1, 128>}, {pipeline_mode = #tpu.pipeline_mode<synchronous>, transform_indices = @transform_3, window_bounds = array<i64: 128, 64>}, {pipeline_mode = #tpu.pipeline_mode<synchronous>, transform_indices = @transform_4, window_bounds = array<i64: 1, 64>}, {pipeline_mode = #tpu.pipeline_mode<synchronous>, transform_indices = @transform_5, window_bounds = array<i64: 64, 12>}, {pipeline_mode = #tpu.pipeline_mode<synchronous>, transform_indices = @transform_6, window_bounds = array<i64: 1, 12>}, {pipeline_mode = #tpu.pipeline_mode<synchronous>, transform_indices = @transform_7, window_bounds = array<i64: 12, 12>}, {pipeline_mode = #tpu.pipeline_mode<synchronous>, transform_indices = @transform_8, window_bounds = array<i64: 1, 12>}, {pipeline_mode = #tpu.pipeline_mode<synchronous>, transform_indices = @transform_9, window_bounds = array<i64: 12, 64>}, {pipeline_mode = #tpu.pipeline_mode<synchronous>, transform_indices = @transform_10, window_bounds = array<i64: 1, 64>}, {pipeline_mode = #tpu.pipeline_mode<synchronous>, transform_indices = @transform_11, window_bounds = array<i64: 64, 128>}, {pipeline_mode = #tpu.pipeline_mode<synchronous>, transform_indices = @transform_12, window_bounds = array<i64: 1, 128>}, {pipeline_mode = #tpu.pipeline_mode<synchronous>, transform_indices = @transform_13, window_bounds = array<i64: 128, 784>}, {pipeline_mode = #tpu.pipeline_mode<synchronous>, transform_indices = @transform_14, window_bounds = array<i64: 1, 784>}, {transform_indices = @transform_15, window_bounds = array<i64: 512, 784>}]} {
    %c0 = arith.constant 0 : index
    %c0_0 = arith.constant 0 : index
    %0 = vector.load %arg1[%c0, %c0_0] : memref<512x784xbf16, #tpu.memory_space<vmem>>, vector<512x784xbf16>
    %c0_1 = arith.constant 0 : index
    %c0_2 = arith.constant 0 : index
    %1 = vector.load %arg2[%c0_1, %c0_2] : memref<784x128xbf16, #tpu.memory_space<vmem>>, vector<784x128xbf16>
    %cst = arith.constant dense<0.000000e+00> : vector<512x128xf32>
    %2 = tpu.matmul %0, %1, %cst {dimension_numbers = #tpu.dot_dimension_numbers<[1], [0], [0], [1], [0, 0, 1, 1], [], []>} : vector<512x784xbf16>, vector<784x128xbf16>, vector<512x128xf32> -> vector<512x128xf32>
    %c0_3 = arith.constant 0 : index
    %c0_4 = arith.constant 0 : index
    %3 = vector.load %arg3[%c0_3, %c0_4] : memref<1x128xf32, #tpu.memory_space<vmem>>, vector<1x128xf32>
    %4 = vector.broadcast %3 : vector<1x128xf32> to vector<512x128xf32>
    %5 = arith.addf %2, %4 : vector<512x128xf32>
    %cst_5 = arith.constant 0.000000e+00 : f32
    %6 = vector.broadcast %cst_5 : f32 to vector<512x128xf32>
    %7 = arith.maximumf %5, %6 : vector<512x128xf32>
    %8 = arith.truncf %7 : vector<512x128xf32> to vector<512x128xbf16>
    %c0_6 = arith.constant 0 : index
    %c0_7 = arith.constant 0 : index
    %9 = vector.load %arg4[%c0_6, %c0_7] : memref<128x64xbf16, #tpu.memory_space<vmem>>, vector<128x64xbf16>
    %cst_8 = arith.constant dense<0.000000e+00> : vector<512x64xf32>
    %10 = tpu.matmul %8, %9, %cst_8 {dimension_numbers = #tpu.dot_dimension_numbers<[1], [0], [0], [1], [0, 0, 1, 1], [], []>} : vector<512x128xbf16>, vector<128x64xbf16>, vector<512x64xf32> -> vector<512x64xf32>
    %c0_9 = arith.constant 0 : index
    %c0_10 = arith.constant 0 : index
    %11 = vector.load %arg5[%c0_9, %c0_10] : memref<1x64xf32, #tpu.memory_space<vmem>>, vector<1x64xf32>
    %12 = vector.broadcast %11 : vector<1x64xf32> to vector<512x64xf32>
    %13 = arith.addf %10, %12 : vector<512x64xf32>
    %cst_11 = arith.constant 0.000000e+00 : f32
    %14 = vector.broadcast %cst_11 : f32 to vector<512x64xf32>
    %15 = arith.maximumf %13, %14 : vector<512x64xf32>
    %16 = arith.truncf %15 : vector<512x64xf32> to vector<512x64xbf16>
    %c0_12 = arith.constant 0 : index
    %c0_13 = arith.constant 0 : index
    %17 = vector.load %arg6[%c0_12, %c0_13] : memref<64x12xbf16, #tpu.memory_space<vmem>>, vector<64x12xbf16>
    %cst_14 = arith.constant dense<0.000000e+00> : vector<512x12xf32>
    %18 = tpu.matmul %16, %17, %cst_14 {dimension_numbers = #tpu.dot_dimension_numbers<[1], [0], [0], [1], [0, 0, 1, 1], [], []>} : vector<512x64xbf16>, vector<64x12xbf16>, vector<512x12xf32> -> vector<512x12xf32>
    %c0_15 = arith.constant 0 : index
    %c0_16 = arith.constant 0 : index
    %19 = vector.load %arg7[%c0_15, %c0_16] : memref<1x12xf32, #tpu.memory_space<vmem>>, vector<1x12xf32>
    %20 = vector.broadcast %19 : vector<1x12xf32> to vector<512x12xf32>
    %21 = arith.addf %18, %20 : vector<512x12xf32>
    %cst_17 = arith.constant 0.000000e+00 : f32
    %22 = vector.broadcast %cst_17 : f32 to vector<512x12xf32>
    %23 = arith.maximumf %21, %22 : vector<512x12xf32>
    %24 = arith.truncf %23 : vector<512x12xf32> to vector<512x12xbf16>
    %c0_18 = arith.constant 0 : index
    %c0_19 = arith.constant 0 : index
    %25 = vector.load %arg8[%c0_18, %c0_19] : memref<12x12xbf16, #tpu.memory_space<vmem>>, vector<12x12xbf16>
    %cst_20 = arith.constant dense<0.000000e+00> : vector<512x12xf32>
    %26 = tpu.matmul %24, %25, %cst_20 {dimension_numbers = #tpu.dot_dimension_numbers<[1], [0], [0], [1], [0, 0, 1, 1], [], []>} : vector<512x12xbf16>, vector<12x12xbf16>, vector<512x12xf32> -> vector<512x12xf32>
    %c0_21 = arith.constant 0 : index
    %c0_22 = arith.constant 0 : index
    %27 = vector.load %arg9[%c0_21, %c0_22] : memref<1x12xf32, #tpu.memory_space<vmem>>, vector<1x12xf32>
    %28 = vector.broadcast %27 : vector<1x12xf32> to vector<512x12xf32>
    %29 = arith.addf %26, %28 : vector<512x12xf32>
    %cst_23 = arith.constant 0.000000e+00 : f32
    %30 = vector.broadcast %cst_23 : f32 to vector<512x12xf32>
    %31 = arith.maximumf %29, %30 : vector<512x12xf32>
    %32 = arith.truncf %31 : vector<512x12xf32> to vector<512x12xbf16>
    %c0_24 = arith.constant 0 : index
    %c0_25 = arith.constant 0 : index
    %33 = vector.load %arg10[%c0_24, %c0_25] : memref<12x64xbf16, #tpu.memory_space<vmem>>, vector<12x64xbf16>
    %cst_26 = arith.constant dense<0.000000e+00> : vector<512x64xf32>
    %34 = tpu.matmul %32, %33, %cst_26 {dimension_numbers = #tpu.dot_dimension_numbers<[1], [0], [0], [1], [0, 0, 1, 1], [], []>} : vector<512x12xbf16>, vector<12x64xbf16>, vector<512x64xf32> -> vector<512x64xf32>
    %c0_27 = arith.constant 0 : index
    %c0_28 = arith.constant 0 : index
    %35 = vector.load %arg11[%c0_27, %c0_28] : memref<1x64xf32, #tpu.memory_space<vmem>>, vector<1x64xf32>
    %36 = vector.broadcast %35 : vector<1x64xf32> to vector<512x64xf32>
    %37 = arith.addf %34, %36 : vector<512x64xf32>
    %cst_29 = arith.constant 0.000000e+00 : f32
    %38 = vector.broadcast %cst_29 : f32 to vector<512x64xf32>
    %39 = arith.maximumf %37, %38 : vector<512x64xf32>
    %40 = arith.truncf %39 : vector<512x64xf32> to vector<512x64xbf16>
    %c0_30 = arith.constant 0 : index
    %c0_31 = arith.constant 0 : index
    %41 = vector.load %arg12[%c0_30, %c0_31] : memref<64x128xbf16, #tpu.memory_space<vmem>>, vector<64x128xbf16>
    %cst_32 = arith.constant dense<0.000000e+00> : vector<512x128xf32>
    %42 = tpu.matmul %40, %41, %cst_32 {dimension_numbers = #tpu.dot_dimension_numbers<[1], [0], [0], [1], [0, 0, 1, 1], [], []>} : vector<512x64xbf16>, vector<64x128xbf16>, vector<512x128xf32> -> vector<512x128xf32>
    %c0_33 = arith.constant 0 : index
    %c0_34 = arith.constant 0 : index
    %43 = vector.load %arg13[%c0_33, %c0_34] : memref<1x128xf32, #tpu.memory_space<vmem>>, vector<1x128xf32>
    %44 = vector.broadcast %43 : vector<1x128xf32> to vector<512x128xf32>
    %45 = arith.addf %42, %44 : vector<512x128xf32>
    %cst_35 = arith.constant 0.000000e+00 : f32
    %46 = vector.broadcast %cst_35 : f32 to vector<512x128xf32>
    %47 = arith.maximumf %45, %46 : vector<512x128xf32>
    %48 = arith.truncf %47 : vector<512x128xf32> to vector<512x128xbf16>
    %c0_36 = arith.constant 0 : index
    %c0_37 = arith.constant 0 : index
    %49 = vector.load %arg14[%c0_36, %c0_37] : memref<128x784xbf16, #tpu.memory_space<vmem>>, vector<128x784xbf16>
    %cst_38 = arith.constant dense<0.000000e+00> : vector<512x784xf32>
    %50 = tpu.matmul %48, %49, %cst_38 {dimension_numbers = #tpu.dot_dimension_numbers<[1], [0], [0], [1], [0, 0, 1, 1], [], []>} : vector<512x128xbf16>, vector<128x784xbf16>, vector<512x784xf32> -> vector<512x784xf32>
    %c0_39 = arith.constant 0 : index
    %c0_40 = arith.constant 0 : index
    %51 = vector.load %arg15[%c0_39, %c0_40] : memref<1x784xf32, #tpu.memory_space<vmem>>, vector<1x784xf32>
    %52 = vector.broadcast %51 : vector<1x784xf32> to vector<512x784xf32>
    %53 = arith.addf %50, %52 : vector<512x784xf32>
    %cst_41 = arith.constant 0.000000e+00 : f32
    %54 = vector.broadcast %cst_41 : f32 to vector<512x784xf32>
    %55 = arith.subf %54, %53 : vector<512x784xf32>
    %56 = math.exp %55 : vector<512x784xf32>
    %cst_42 = arith.constant 1.000000e+00 : f32
    %57 = vector.broadcast %cst_42 : f32 to vector<512x784xf32>
    %58 = arith.addf %57, %56 : vector<512x784xf32>
    %cst_43 = arith.constant 1.000000e+00 : f32
    %59 = vector.broadcast %cst_43 : f32 to vector<512x784xf32>
    %60 = arith.divf %59, %58 : vector<512x784xf32>
    %61 = arith.truncf %60 : vector<512x784xf32> to vector<512x784xbf16>
    %c0_44 = arith.constant 0 : index
    %c0_45 = arith.constant 0 : index
    %62 = vector.load %arg16[%c0_44, %c0_45] : memref<512x784xbf16, #tpu.memory_space<vmem>>, vector<512x784xbf16>
    tpu.vector_store %arg16[%c0_44, %c0_45], %61 {strides = array<i32>} : memref<512x784xbf16, #tpu.memory_space<vmem>>, vector<512x784xbf16>,
    return
  }
  func.func @transform_0(%arg0: i32) -> (i32, i32) {
    %c0_i32 = arith.constant 0 : i32
    %c0_i32_0 = arith.constant 0 : i32
    return %arg0, %c0_i32 : i32, i32
  }
  func.func @transform_1(%arg0: i32) -> (i32, i32) {
    %c0_i32 = arith.constant 0 : i32
    %c0_i32_0 = arith.constant 0 : i32
    %c0_i32_1 = arith.constant 0 : i32
    return %c0_i32, %c0_i32_0 : i32, i32
  }
  func.func @transform_2(%arg0: i32) -> (i32, i32) {
    %c0_i32 = arith.constant 0 : i32
    %c0_i32_0 = arith.constant 0 : i32
    %c0_i32_1 = arith.constant 0 : i32
    return %c0_i32, %c0_i32_0 : i32, i32
  }
  func.func @transform_3(%arg0: i32) -> (i32, i32) {
    %c0_i32 = arith.constant 0 : i32
    %c0_i32_0 = arith.constant 0 : i32
    %c0_i32_1 = arith.constant 0 : i32
    return %c0_i32, %c0_i32_0 : i32, i32
  }
  func.func @transform_4(%arg0: i32) -> (i32, i32) {
    %c0_i32 = arith.constant 0 : i32
    %c0_i32_0 = arith.constant 0 : i32
    %c0_i32_1 = arith.constant 0 : i32
    return %c0_i32, %c0_i32_0 : i32, i32
  }
  func.func @transform_5(%arg0: i32) -> (i32, i32) {
    %c0_i32 = arith.constant 0 : i32
    %c0_i32_0 = arith.constant 0 : i32
    %c0_i32_1 = arith.constant 0 : i32
    return %c0_i32, %c0_i32_0 : i32, i32
  }
  func.func @transform_6(%arg0: i32) -> (i32, i32) {
    %c0_i32 = arith.constant 0 : i32
    %c0_i32_0 = arith.constant 0 : i32
    %c0_i32_1 = arith.constant 0 : i32
    return %c0_i32, %c0_i32_0 : i32, i32
  }
  func.func @transform_7(%arg0: i32) -> (i32, i32) {
    %c0_i32 = arith.constant 0 : i32
    %c0_i32_0 = arith.constant 0 : i32
    %c0_i32_1 = arith.constant 0 : i32
    return %c0_i32, %c0_i32_0 : i32, i32
  }
  func.func @transform_8(%arg0: i32) -> (i32, i32) {
    %c0_i32 = arith.constant 0 : i32
    %c0_i32_0 = arith.constant 0 : i32
    %c0_i32_1 = arith.constant 0 : i32
    return %c0_i32, %c0_i32_0 : i32, i32
  }
  func.func @transform_9(%arg0: i32) -> (i32, i32) {
    %c0_i32 = arith.constant 0 : i32
    %c0_i32_0 = arith.constant 0 : i32
    %c0_i32_1 = arith.constant 0 : i32
    return %c0_i32, %c0_i32_0 : i32, i32
  }
  func.func @transform_10(%arg0: i32) -> (i32, i32) {
    %c0_i32 = arith.constant 0 : i32
    %c0_i32_0 = arith.constant 0 : i32
    %c0_i32_1 = arith.constant 0 : i32
    return %c0_i32, %c0_i32_0 : i32, i32
  }
  func.func @transform_11(%arg0: i32) -> (i32, i32) {
    %c0_i32 = arith.constant 0 : i32
    %c0_i32_0 = arith.constant 0 : i32
    %c0_i32_1 = arith.constant 0 : i32
    return %c0_i32, %c0_i32_0 : i32, i32
  }
  func.func @transform_12(%arg0: i32) -> (i32, i32) {
    %c0_i32 = arith.constant 0 : i32
    %c0_i32_0 = arith.constant 0 : i32
    %c0_i32_1 = arith.constant 0 : i32
    return %c0_i32, %c0_i32_0 : i32, i32
  }
  func.func @transform_13(%arg0: i32) -> (i32, i32) {
    %c0_i32 = arith.constant 0 : i32
    %c0_i32_0 = arith.constant 0 : i32
    %c0_i32_1 = arith.constant 0 : i32
    return %c0_i32, %c0_i32_0 : i32, i32
  }
  func.func @transform_14(%arg0: i32) -> (i32, i32) {
    %c0_i32 = arith.constant 0 : i32
    %c0_i32_0 = arith.constant 0 : i32
    %c0_i32_1 = arith.constant 0 : i32
    return %c0_i32, %c0_i32_0 : i32, i32
  }
  func.func @transform_15(%arg0: i32) -> (i32, i32) {
    %c0_i32 = arith.constant 0 : i32
    %c0_i32_0 = arith.constant 0 : i32
    return %arg0, %c0_i32 : i32, i32
  }
}

</mosaic_0001>

<llo_original>
// kernel: tpu_custom_call.1
$region0: #{tpu_custom_call.1}
  #allocation0 [shape = 'u32[]', space=smem, size = 0x4, offset = 0x4, fixed_abs, tag = 'smem constant byte address 0x4 - core index']
  #allocation1 [shape = 'u32[144,128]{1,0:T(1,128)}', space=vmem, size = 0x12000, scoped, tag = 'internal scratch']
  %s0 = inlined_call_operand.vmem [shape: bf16[2048,784], index: 0, kind: input, shape index: {}]
  %s1 = inlined_call_operand.vmem [shape: bf16[784,128], index: 1, kind: input, shape index: {}]
  %s2 = inlined_call_operand.vmem [shape: f32[1,128], index: 2, kind: input, shape index: {}]
  %s3 = inlined_call_operand.vmem [shape: bf16[128,64], index: 3, kind: input, shape index: {}]
  %s4 = inlined_call_operand.vmem [shape: f32[1,64], index: 4, kind: input, shape index: {}]
  %s5 = inlined_call_operand.vmem [shape: bf16[64,12], index: 5, kind: input, shape index: {}]
  %s6 = inlined_call_operand.vmem [shape: f32[1,12], index: 6, kind: input, shape index: {}]
  %s7 = inlined_call_operand.vmem [shape: bf16[12,12], index: 7, kind: input, shape index: {}]
  %s8 = inlined_call_operand.vmem [shape: f32[1,12], index: 8, kind: input, shape index: {}]
  %s9 = inlined_call_operand.vmem [shape: bf16[12,64], index: 9, kind: input, shape index: {}]
  %s10 = inlined_call_operand.vmem [shape: f32[1,64], index: 10, kind: input, shape index: {}]
  %s11 = inlined_call_operand.vmem [shape: bf16[64,128], index: 11, kind: input, shape index: {}]
  %s12 = inlined_call_operand.vmem [shape: f32[1,128], index: 12, kind: input, shape index: {}]
  %s13 = inlined_call_operand.vmem [shape: bf16[128,784], index: 13, kind: input, shape index: {}]
  %s14 = inlined_call_operand.vmem [shape: f32[1,784], index: 14, kind: input, shape index: {}]
  %s15 = inlined_call_operand.vmem [shape: bf16[2048,784], index: 15, kind: output, shape index: {}]
  %s16 = sld [smem:[#allocation0]]
  $region93: #{tpu_custom_call.1} parent=0
    _
  %s18 = ssub.s32 1, %s16
  %s19 = scalar_select 0, %s18, %s16
  loop: start=0, step=1, limit=6
  $region2: #{tpu_custom_call.1} parent=0 // loop_pre_header
    _
  $region3: #{tpu_custom_call.1} parent=0 // loop_header
    %s21 = sphi 0, %s25
    %p22 = scmp.ge.s32.totalorder %s21, 6
    %s31 = sphi 0, %s33
    %s34 = sphi 0, %s31
    %s35 = sphi 0, %s34
    %s51 = sphi 0, %s35
    %s55 = sphi 0, %s55
    %s57 = sphi 0, %s55
    %s58 = sphi 0, %s57
    %s72 = sphi 0, %s58
    %s76 = sphi 0, %s76
    %s78 = sphi 0, %s76
    %s79 = sphi 0, %s78
    %s93 = sphi 0, %s79
    %s97 = sphi 0, %s97
    %s99 = sphi 0, %s97
    %s100 = sphi 0, %s99
    %s114 = sphi 0, %s100
    %s118 = sphi 0, %s118
    %s120 = sphi 0, %s118
    %s121 = sphi 0, %s120
    %s135 = sphi 0, %s121
    %s139 = sphi 0, %s139
    %s141 = sphi 0, %s139
    %s142 = sphi 0, %s141
    %s156 = sphi 0, %s142
    %s160 = sphi 0, %s160
    %s162 = sphi 0, %s160
    %s163 = sphi 0, %s162
    %s177 = sphi 0, %s163
    %s181 = sphi 0, %s181
    %s183 = sphi 0, %s181
    %s184 = sphi 0, %s183
    %s198 = sphi 0, %s184
    %s202 = sphi 0, %s202
    %s204 = sphi 0, %s202
    %s205 = sphi 0, %s204
    %s219 = sphi 0, %s205
    %s223 = sphi 0, %s223
    %s225 = sphi 0, %s223
    %s226 = sphi 0, %s225
    %s240 = sphi 0, %s226
    %s244 = sphi 0, %s244
    %s246 = sphi 0, %s244
    %s247 = sphi 0, %s246
    %s261 = sphi 0, %s247
    %s265 = sphi 0, %s265
    %s267 = sphi 0, %s265
    %s268 = sphi 0, %s267
    %s282 = sphi 0, %s268
    %s286 = sphi 0, %s286
    %s288 = sphi 0, %s286
    %s289 = sphi 0, %s288
    %s303 = sphi 0, %s289
    %s307 = sphi 0, %s307
    %s309 = sphi 0, %s307
    %s310 = sphi 0, %s309
    %s324 = sphi 0, %s310
    %s328 = sphi 0, %s328
    %s330 = sphi 0, %s328
    %s331 = sphi 0, %s330
    %s345 = sphi 0, %s331
    %s351 = sphi 0, %s353
    %s354 = sphi 0, %s351
    %s355 = sphi 0, %s354
    %s371 = sphi 0, %s355
  $region4: #{tpu_custom_call.1} parent=0 // loop_header_branch
    %24 = sbr.rel (%p22) target = $region8
  $region5: #{tpu_custom_call.1} parent=0 // loop_body
    %s26 = ssub.s32 %s21, 1
    %s27 = ssub.s32 %s21, 2
    %s28 = sadd.s32 %s21, 1
    %s29 = ssub.s32 %s21, %s28
    %p30 = scmp.eq.s32.totalorder %s29, 0
    %s32 = sadd.s32 %s31, 1
    %s33 = scalar_select %p30, %s31, %s32
    %p36 = pneg %p30
    %p37 = scmp.eq.s32.totalorder %s21, 3
    %p38 = por %p36, %p37
    %p39 = scmp.ne.s32.totalorder %s31, %s34
    %p40 = scmp.eq.s32.totalorder %s21, 0
    %p41 = por %p39, %p40
    %p42 = scmp.ne.s32.totalorder %s31, %s34
    %p43 = scmp.eq.s32.totalorder %s26, 3
    %p44 = por %p42, %p43
    %p45 = scmp.ne.s32.totalorder %s34, %s35
    %p46 = scmp.eq.s32.totalorder %s26, 0
    %p47 = por %p45, %p46
    %p48 = scmp.ne.s32.totalorder %s34, %s35
    %p49 = scmp.eq.s32.totalorder %s27, 3
    %p50 = por %p48, %p49
    %p52 = scmp.ne.s32.totalorder %s35, %s51
    %p53 = scmp.eq.s32.totalorder %s27, 0
    %p54 = por %p52, %p53
    %s56 = sadd.s32 %s55, 1
    %p59 = scmp.eq.s32.totalorder %s21, 3
    %p60 = scmp.ne.s32.totalorder %s55, %s57
    %p61 = scmp.eq.s32.totalorder %s21, 0
    %p62 = por %p60, %p61
    %p63 = scmp.ne.s32.totalorder %s55, %s57
    %p64 = scmp.eq.s32.totalorder %s26, 3
    %p65 = por %p63, %p64
    %p66 = scmp.ne.s32.totalorder %s57, %s58
    %p67 = scmp.eq.s32.totalorder %s26, 0
    %p68 = por %p66, %p67
    %p69 = scmp.ne.s32.totalorder %s57, %s58
    %p70 = scmp.eq.s32.totalorder %s27, 3
    %p71 = por %p69, %p70
    %p73 = scmp.ne.s32.totalorder %s58, %s72
    %p74 = scmp.eq.s32.totalorder %s27, 0
    %p75 = por %p73, %p74
    %s77 = sadd.s32 %s76, 1
    %p80 = scmp.eq.s32.totalorder %s21, 3
    %p81 = scmp.ne.s32.totalorder %s76, %s78
    %p82 = scmp.eq.s32.totalorder %s21, 0
    %p83 = por %p81, %p82
    %p84 = scmp.ne.s32.totalorder %s76, %s78
    %p85 = scmp.eq.s32.totalorder %s26, 3
    %p86 = por %p84, %p85
    %p87 = scmp.ne.s32.totalorder %s78, %s79
    %p88 = scmp.eq.s32.totalorder %s26, 0
    %p89 = por %p87, %p88
    %p90 = scmp.ne.s32.totalorder %s78, %s79
    %p91 = scmp.eq.s32.totalorder %s27, 3
    %p92 = por %p90, %p91
    %p94 = scmp.ne.s32.totalorder %s79, %s93
    %p95 = scmp.eq.s32.totalorder %s27, 0
    %p96 = por %p94, %p95
    %s98 = sadd.s32 %s97, 1
    %p101 = scmp.eq.s32.totalorder %s21, 3
    %p102 = scmp.ne.s32.totalorder %s97, %s99
    %p103 = scmp.eq.s32.totalorder %s21, 0
    %p104 = por %p102, %p103
    %p105 = scmp.ne.s32.totalorder %s97, %s99
    %p106 = scmp.eq.s32.totalorder %s26, 3
    %p107 = por %p105, %p106
    %p108 = scmp.ne.s32.totalorder %s99, %s100
    %p109 = scmp.eq.s32.totalorder %s26, 0
    %p110 = por %p108, %p109
    %p111 = scmp.ne.s32.totalorder %s99, %s100
    %p112 = scmp.eq.s32.totalorder %s27, 3
    %p113 = por %p111, %p112
    %p115 = scmp.ne.s32.totalorder %s100, %s114
    %p116 = scmp.eq.s32.totalorder %s27, 0
    %p117 = por %p115, %p116
    %s119 = sadd.s32 %s118, 1
    %p122 = scmp.eq.s32.totalorder %s21, 3
    %p123 = scmp.ne.s32.totalorder %s118, %s120
    %p124 = scmp.eq.s32.totalorder %s21, 0
    %p125 = por %p123, %p124
    %p126 = scmp.ne.s32.totalorder %s118, %s120
    %p127 = scmp.eq.s32.totalorder %s26, 3
    %p128 = por %p126, %p127
    %p129 = scmp.ne.s32.totalorder %s120, %s121
    %p130 = scmp.eq.s32.totalorder %s26, 0
    %p131 = por %p129, %p130
    %p132 = scmp.ne.s32.totalorder %s120, %s121
    %p133 = scmp.eq.s32.totalorder %s27, 3
    %p134 = por %p132, %p133
    %p136 = scmp.ne.s32.totalorder %s121, %s135
    %p137 = scmp.eq.s32.totalorder %s27, 0
    %p138 = por %p136, %p137
    %s140 = sadd.s32 %s139, 1
    %p143 = scmp.eq.s32.totalorder %s21, 3
    %p144 = scmp.ne.s32.totalorder %s139, %s141
    %p145 = scmp.eq.s32.totalorder %s21, 0
    %p146 = por %p144, %p145
    %p147 = scmp.ne.s32.totalorder %s139, %s141
    %p148 = scmp.eq.s32.totalorder %s26, 3
    %p149 = por %p147, %p148
    %p150 = scmp.ne.s32.totalorder %s141, %s142
    %p151 = scmp.eq.s32.totalorder %s26, 0
    %p152 = por %p150, %p151
    %p153 = scmp.ne.s32.totalorder %s141, %s142
    %p154 = scmp.eq.s32.totalorder %s27, 3
    %p155 = por %p153, %p154
    %p157 = scmp.ne.s32.totalorder %s142, %s156
    %p158 = scmp.eq.s32.totalorder %s27, 0
    %p159 = por %p157, %p158
    %s161 = sadd.s32 %s160, 1
    %p164 = scmp.eq.s32.totalorder %s21, 3
    %p165 = scmp.ne.s32.totalorder %s160, %s162
    %p166 = scmp.eq.s32.totalorder %s21, 0
    %p167 = por %p165, %p166
    %p168 = scmp.ne.s32.totalorder %s160, %s162
    %p169 = scmp.eq.s32.totalorder %s26, 3
    %p170 = por %p168, %p169
    %p171 = scmp.ne.s32.totalorder %s162, %s163
    %p172 = scmp.eq.s32.totalorder %s26, 0
    %p173 = por %p171, %p172
    %p174 = scmp.ne.s32.totalorder %s162, %s163
    %p175 = scmp.eq.s32.totalorder %s27, 3
    %p176 = por %p174, %p175
    %p178 = scmp.ne.s32.totalorder %s163, %s177
    %p179 = scmp.eq.s32.totalorder %s27, 0
    %p180 = por %p178, %p179
    %s182 = sadd.s32 %s181, 1
    %p185 = scmp.eq.s32.totalorder %s21, 3
    %p186 = scmp.ne.s32.totalorder %s181, %s183
    %p187 = scmp.eq.s32.totalorder %s21, 0
    %p188 = por %p186, %p187
    %p189 = scmp.ne.s32.totalorder %s181, %s183
    %p190 = scmp.eq.s32.totalorder %s26, 3
    %p191 = por %p189, %p190
    %p192 = scmp.ne.s32.totalorder %s183, %s184
    %p193 = scmp.eq.s32.totalorder %s26, 0
    %p194 = por %p192, %p193
    %p195 = scmp.ne.s32.totalorder %s183, %s184
    %p196 = scmp.eq.s32.totalorder %s27, 3
    %p197 = por %p195, %p196
    %p199 = scmp.ne.s32.totalorder %s184, %s198
    %p200 = scmp.eq.s32.totalorder %s27, 0
    %p201 = por %p199, %p200
    %s203 = sadd.s32 %s202, 1
    %p206 = scmp.eq.s32.totalorder %s21, 3
    %p207 = scmp.ne.s32.totalorder %s202, %s204
    %p208 = scmp.eq.s32.totalorder %s21, 0
    %p209 = por %p207, %p208
    %p210 = scmp.ne.s32.totalorder %s202, %s204
    %p211 = scmp.eq.s32.totalorder %s26, 3
    %p212 = por %p210, %p211
    %p213 = scmp.ne.s32.totalorder %s204, %s205
    %p214 = scmp.eq.s32.totalorder %s26, 0
    %p215 = por %p213, %p214
    %p216 = scmp.ne.s32.totalorder %s204, %s205
    %p217 = scmp.eq.s32.totalorder %s27, 3
    %p218 = por %p216, %p217
    %p220 = scmp.ne.s32.totalorder %s205, %s219
    %p221 = scmp.eq.s32.totalorder %s27, 0
    %p222 = por %p220, %p221
    %s224 = sadd.s32 %s223, 1
    %p227 = scmp.eq.s32.totalorder %s21, 3
    %p228 = scmp.ne.s32.totalorder %s223, %s225
    %p229 = scmp.eq.s32.totalorder %s21, 0
    %p230 = por %p228, %p229
    %p231 = scmp.ne.s32.totalorder %s223, %s225
    %p232 = scmp.eq.s32.totalorder %s26, 3
    %p233 = por %p231, %p232
    %p234 = scmp.ne.s32.totalorder %s225, %s226
    %p235 = scmp.eq.s32.totalorder %s26, 0
    %p236 = por %p234, %p235
    %p237 = scmp.ne.s32.totalorder %s225, %s226
    %p238 = scmp.eq.s32.totalorder %s27, 3
    %p239 = por %p237, %p238
    %p241 = scmp.ne.s32.totalorder %s226, %s240
    %p242 = scmp.eq.s32.totalorder %s27, 0
    %p243 = por %p241, %p242
    %s245 = sadd.s32 %s244, 1
    %p248 = scmp.eq.s32.totalorder %s21, 3
    %p249 = scmp.ne.s32.totalorder %s244, %s246
    %p250 = scmp.eq.s32.totalorder %s21, 0
    %p251 = por %p249, %p250
    %p252 = scmp.ne.s32.totalorder %s244, %s246
    %p253 = scmp.eq.s32.totalorder %s26, 3
    %p254 = por %p252, %p253
    %p255 = scmp.ne.s32.totalorder %s246, %s247
    %p256 = scmp.eq.s32.totalorder %s26, 0
    %p257 = por %p255, %p256
    %p258 = scmp.ne.s32.totalorder %s246, %s247
    %p259 = scmp.eq.s32.totalorder %s27, 3
    %p260 = por %p258, %p259
    %p262 = scmp.ne.s32.totalorder %s247, %s261
    %p263 = scmp.eq.s32.totalorder %s27, 0
    %p264 = por %p262, %p263
    %s266 = sadd.s32 %s265, 1
    %p269 = scmp.eq.s32.totalorder %s21, 3
    %p270 = scmp.ne.s32.totalorder %s265, %s267
    %p271 = scmp.eq.s32.totalorder %s21, 0
    %p272 = por %p270, %p271
    %p273 = scmp.ne.s32.totalorder %s265, %s267
    %p274 = scmp.eq.s32.totalorder %s26, 3
    %p275 = por %p273, %p274
    %p276 = scmp.ne.s32.totalorder %s267, %s268
    %p277 = scmp.eq.s32.totalorder %s26, 0
    %p278 = por %p276, %p277
    %p279 = scmp.ne.s32.totalorder %s267, %s268
    %p280 = scmp.eq.s32.totalorder %s27, 3
    %p281 = por %p279, %p280
    %p283 = scmp.ne.s32.totalorder %s268, %s282
    %p284 = scmp.eq.s32.totalorder %s27, 0
    %p285 = por %p283, %p284
    %s287 = sadd.s32 %s286, 1
    %p290 = scmp.eq.s32.totalorder %s21, 3
    %p291 = scmp.ne.s32.totalorder %s286, %s288
    %p292 = scmp.eq.s32.totalorder %s21, 0
    %p293 = por %p291, %p292
    %p294 = scmp.ne.s32.totalorder %s286, %s288
    %p295 = scmp.eq.s32.totalorder %s26, 3
    %p296 = por %p294, %p295
    %p297 = scmp.ne.s32.totalorder %s288, %s289
    %p298 = scmp.eq.s32.totalorder %s26, 0
    %p299 = por %p297, %p298
    %p300 = scmp.ne.s32.totalorder %s288, %s289
    %p301 = scmp.eq.s32.totalorder %s27, 3
    %p302 = por %p300, %p301
    %p304 = scmp.ne.s32.totalorder %s289, %s303
    %p305 = scmp.eq.s32.totalorder %s27, 0
    %p306 = por %p304, %p305
    %s308 = sadd.s32 %s307, 1
    %p311 = scmp.eq.s32.totalorder %s21, 3
    %p312 = scmp.ne.s32.totalorder %s307, %s309
    %p313 = scmp.eq.s32.totalorder %s21, 0
    %p314 = por %p312, %p313
    %p315 = scmp.ne.s32.totalorder %s307, %s309
    %p316 = scmp.eq.s32.totalorder %s26, 3
    %p317 = por %p315, %p316
    %p318 = scmp.ne.s32.totalorder %s309, %s310
    %p319 = scmp.eq.s32.totalorder %s26, 0
    %p320 = por %p318, %p319
    %p321 = scmp.ne.s32.totalorder %s309, %s310
    %p322 = scmp.eq.s32.totalorder %s27, 3
    %p323 = por %p321, %p322
    %p325 = scmp.ne.s32.totalorder %s310, %s324
    %p326 = scmp.eq.s32.totalorder %s27, 0
    %p327 = por %p325, %p326
    %s329 = sadd.s32 %s328, 1
    %p332 = scmp.eq.s32.totalorder %s21, 3
    %p333 = scmp.ne.s32.totalorder %s328, %s330
    %p334 = scmp.eq.s32.totalorder %s21, 0
    %p335 = por %p333, %p334
    %p336 = scmp.ne.s32.totalorder %s328, %s330
    %p337 = scmp.eq.s32.totalorder %s26, 3
    %p338 = por %p336, %p337
    %p339 = scmp.ne.s32.totalorder %s330, %s331
    %p340 = scmp.eq.s32.totalorder %s26, 0
    %p341 = por %p339, %p340
    %p342 = scmp.ne.s32.totalorder %s330, %s331
    %p343 = scmp.eq.s32.totalorder %s27, 3
    %p344 = por %p342, %p343
    %p346 = scmp.ne.s32.totalorder %s331, %s345
    %p347 = scmp.eq.s32.totalorder %s27, 0
    %p348 = por %p346, %p347
    %s349 = ssub.s32 %s21, %s28
    %p350 = scmp.eq.s32.totalorder %s349, 0
    %s352 = sadd.s32 %s351, 1
    %s353 = scalar_select %p350, %s351, %s352
    %p356 = pneg %p350
    %p357 = scmp.eq.s32.totalorder %s21, 3
    %p358 = por %p356, %p357
    %p359 = scmp.ne.s32.totalorder %s351, %s354
    %p360 = scmp.eq.s32.totalorder %s21, 0
    %p361 = por %p359, %p360
    %p362 = scmp.ne.s32.totalorder %s351, %s354
    %p363 = scmp.eq.s32.totalorder %s26, 3
    %p364 = por %p362, %p363
    %p365 = scmp.ne.s32.totalorder %s354, %s355
    %p366 = scmp.eq.s32.totalorder %s26, 0
    %p367 = por %p365, %p366
    %p368 = scmp.ne.s32.totalorder %s354, %s355
    %p369 = scmp.eq.s32.totalorder %s27, 3
    %p370 = por %p368, %p369
    %p372 = scmp.ne.s32.totalorder %s355, %s371
    %p373 = scmp.eq.s32.totalorder %s27, 0
    %p374 = por %p372, %p373
    %p375 = scmp.le.s32.totalorder 1, %s21
    %p376 = scmp.lt.s32.totalorder %s21, 5
    %p377 = pnand %p375, %p376
    %p378 = pneg %p377
    // Predicated region
    $region9: #{tpu_custom_call.1} parent=5 // pred_check
      _
    $region10: #{tpu_custom_call.1} parent=5 // pred_check_branch
      %380 = sbr.rel (%p377) target = $region12
    $region11: #{tpu_custom_call.1} parent=5 // pred_region
      %s381 = ssub.s32 %s21, 1
      // Predicated region
      $region13: #{tpu_custom_call.1} parent=11 // pred_check
        %p382 = pneg %p68
      $region14: #{tpu_custom_call.1} parent=11 // pred_check_branch
        %384 = sbr.rel (%p382) target = $region16
      $region15: #{tpu_custom_call.1} parent=11 // pred_region
        _
      $region16: #{tpu_custom_call.1} parent=11 // pred_fallthru
        _
      // Predicated region
      $region17: #{tpu_custom_call.1} parent=11 // pred_check
        %p385 = pneg %p89
      $region18: #{tpu_custom_call.1} parent=11 // pred_check_branch
        %387 = sbr.rel (%p385) target = $region20
      $region19: #{tpu_custom_call.1} parent=11 // pred_region
        _
      $region20: #{tpu_custom_call.1} parent=11 // pred_fallthru
        _
      // Predicated region
      $region21: #{tpu_custom_call.1} parent=11 // pred_check
        %p388 = pneg %p110
      $region22: #{tpu_custom_call.1} parent=11 // pred_check_branch
        %390 = sbr.rel (%p388) target = $region24
      $region23: #{tpu_custom_call.1} parent=11 // pred_region
        _
      $region24: #{tpu_custom_call.1} parent=11 // pred_fallthru
        _
      // Predicated region
      $region25: #{tpu_custom_call.1} parent=11 // pred_check
        %p391 = pneg %p131
      $region26: #{tpu_custom_call.1} parent=11 // pred_check_branch
        %393 = sbr.rel (%p391) target = $region28
      $region27: #{tpu_custom_call.1} parent=11 // pred_region
        _
      $region28: #{tpu_custom_call.1} parent=11 // pred_fallthru
        _
      // Predicated region
      $region29: #{tpu_custom_call.1} parent=11 // pred_check
        %p394 = pneg %p152
      $region30: #{tpu_custom_call.1} parent=11 // pred_check_branch
        %396 = sbr.rel (%p394) target = $region32
      $region31: #{tpu_custom_call.1} parent=11 // pred_region
        _
      $region32: #{tpu_custom_call.1} parent=11 // pred_fallthru
        _
      // Predicated region
      $region33: #{tpu_custom_call.1} parent=11 // pred_check
        %p397 = pneg %p173
      $region34: #{tpu_custom_call.1} parent=11 // pred_check_branch
        %399 = sbr.rel (%p397) target = $region36
      $region35: #{tpu_custom_call.1} parent=11 // pred_region
        _
      $region36: #{tpu_custom_call.1} parent=11 // pred_fallthru
        _
      // Predicated region
      $region37: #{tpu_custom_call.1} parent=11 // pred_check
        %p400 = pneg %p194
      $region38: #{tpu_custom_call.1} parent=11 // pred_check_branch
        %402 = sbr.rel (%p400) target = $region40
      $region39: #{tpu_custom_call.1} parent=11 // pred_region
        _
      $region40: #{tpu_custom_call.1} parent=11 // pred_fallthru
        _
      // Predicated region
      $region41: #{tpu_custom_call.1} parent=11 // pred_check
        %p403 = pneg %p215
      $region42: #{tpu_custom_call.1} parent=11 // pred_check_branch
        %405 = sbr.rel (%p403) target = $region44
      $region43: #{tpu_custom_call.1} parent=11 // pred_region
        _
      $region44: #{tpu_custom_call.1} parent=11 // pred_fallthru
        _
      // Predicated region
      $region45: #{tpu_custom_call.1} parent=11 // pred_check
        %p406 = pneg %p236
      $region46: #{tpu_custom_call.1} parent=11 // pred_check_branch
        %408 = sbr.rel (%p406) target = $region48
      $region47: #{tpu_custom_call.1} parent=11 // pred_region
        _
      $region48: #{tpu_custom_call.1} parent=11 // pred_fallthru
        _
      // Predicated region
      $region49: #{tpu_custom_call.1} parent=11 // pred_check
        %p409 = pneg %p257
      $region50: #{tpu_custom_call.1} parent=11 // pred_check_branch
        %411 = sbr.rel (%p409) target = $region52
      $region51: #{tpu_custom_call.1} parent=11 // pred_region
        _
      $region52: #{tpu_custom_call.1} parent=11 // pred_fallthru
        _
      // Predicated region
      $region53: #{tpu_custom_call.1} parent=11 // pred_check
        %p412 = pneg %p278
      $region54: #{tpu_custom_call.1} parent=11 // pred_check_branch
        %414 = sbr.rel (%p412) target = $region56
      $region55: #{tpu_custom_call.1} parent=11 // pred_region
        _
      $region56: #{tpu_custom_call.1} parent=11 // pred_fallthru
        _
      // Predicated region
      $region57: #{tpu_custom_call.1} parent=11 // pred_check
        %p415 = pneg %p299
      $region58: #{tpu_custom_call.1} parent=11 // pred_check_branch
        %417 = sbr.rel (%p415) target = $region60
      $region59: #{tpu_custom_call.1} parent=11 // pred_region
        _
      $region60: #{tpu_custom_call.1} parent=11 // pred_fallthru
        _
      // Predicated region
      $region61: #{tpu_custom_call.1} parent=11 // pred_check
        %p418 = pneg %p320
      $region62: #{tpu_custom_call.1} parent=11 // pred_check_branch
        %420 = sbr.rel (%p418) target = $region64
      $region63: #{tpu_custom_call.1} parent=11 // pred_region
        _
      $region64: #{tpu_custom_call.1} parent=11 // pred_fallthru
        _
      // Predicated region
      $region65: #{tpu_custom_call.1} parent=11 // pred_check
        %p421 = pneg %p341
      $region66: #{tpu_custom_call.1} parent=11 // pred_check_branch
        %423 = sbr.rel (%p421) target = $region68
      $region67: #{tpu_custom_call.1} parent=11 // pred_region
        _
      $region68: #{tpu_custom_call.1} parent=11 // pred_fallthru
        _
    $region12: #{tpu_custom_call.1} parent=5 // pred_fallthru
      _
    %p424 = scmp.lt.s32.totalorder %s21, 4
    // Predicated region
    $region69: #{tpu_custom_call.1} parent=5 // pred_check
      %p425 = pneg %p424
    $region70: #{tpu_custom_call.1} parent=5 // pred_check_branch
      %427 = sbr.rel (%p425) target = $region72
    $region71: #{tpu_custom_call.1} parent=5 // pred_region
      // Predicated region
      $region73: #{tpu_custom_call.1} parent=71 // pred_check
        %p428 = pneg %p41
      $region74: #{tpu_custom_call.1} parent=71 // pred_check_branch
        %430 = sbr.rel (%p428) target = $region76
      $region75: #{tpu_custom_call.1} parent=71 // pred_region
        %s431 = smul.u32 64, %s21
        %p432 = scmp.lt.s32.totalorder %s431, 255
        %s433 = scalar_select %p432, %s431, 255
        %s434 = smul.addr %s433, 7
        %s435 = smul.addr %s434, 4
        %s436 = scalar_lea.vmem %s0, %s435
        %s437 = smul.u32 64, %s21
      $region76: #{tpu_custom_call.1} parent=71 // pred_fallthru
        _
    $region72: #{tpu_custom_call.1} parent=5 // pred_fallthru
      _
    %p438 = scmp.le.s32.totalorder 1, %s21
    %p439 = scmp.lt.s32.totalorder %s21, 5
    %p440 = pnand %p438, %p439
    %p441 = pneg %p440
    // Predicated region
    $region77: #{tpu_custom_call.1} parent=5 // pred_check
      _
    $region78: #{tpu_custom_call.1} parent=5 // pred_check_branch
      %443 = sbr.rel (%p440) target = $region80
    $region79: #{tpu_custom_call.1} parent=5 // pred_region
      %s444 = ssub.s32 %s21, 1
      %s445 = smul.u32 64, %s26
      %p446 = scmp.lt.s32.totalorder %s445, 255
      %s447 = scalar_select %p446, %s445, 255
      %s448 = smul.addr %s447, 7
      %s449 = smul.addr %s448, 4
      %s450 = scalar_lea.vmem %s0, %s449
      %p451 = pneg %p47
      %p452 = pneg %p44
      %p453 = pneg %p68
      %p454 = pneg %p65
      %p455 = pneg %p89
      %p456 = pneg %p86
      %p457 = pneg %p110
      %p458 = pneg %p107
      %p459 = pneg %p131
      %p460 = pneg %p128
      %p461 = pneg %p152
      %p462 = pneg %p149
      %p463 = pneg %p173
      %p464 = pneg %p170
      %p465 = pneg %p194
      %p466 = pneg %p191
      %p467 = pneg %p215
      %p468 = pneg %p212
      %p469 = pneg %p236
      %p470 = pneg %p233
      %p471 = pneg %p257
      %p472 = pneg %p254
      %p473 = pneg %p278
      %p474 = pneg %p275
      %p475 = pneg %p299
      %p476 = pneg %p296
      %p477 = pneg %p320
      %p478 = pneg %p317
      %p479 = pneg %p341
      %p480 = pneg %p338
      %p481 = pneg %p367
      %p482 = pneg %p364
      %s483 = smul.u32 64, %s26
      %p484 = scmp.lt.s32.totalorder %s483, 255
      %s485 = scalar_select %p484, %s483, 255
      %s486 = smul.addr %s485, 7
      %s487 = smul.addr %s486, 4
      %s488 = scalar_lea.vmem %s15, %s487
      %s489 = smul.u32 64, %s26
      %p490 = scmp.lt.s32.totalorder %s489, 255
      %s491 = scalar_select %p490, %s489, 255
      %s492 = smul.addr %s491, 7
      %s493 = smul.addr %s492, 4
      %s494 = scalar_lea.vmem %s0, %s493
      %s495 = smul.u32 64, %s26
      %s496 = smul.u32 64, %s26
      %p497 = scmp.lt.s32.totalorder %s496, 255
      %s498 = scalar_select %p497, %s496, 255
      %s499 = smul.addr %s498, 7
      %s500 = smul.addr %s499, 4
      %s501 = scalar_lea.vmem %s15, %s500
      %s502 = smul.u32 64, %s26
      %v504 = vld [vmem:[%s494] sm:$0xff]
      %v505 = vld [vmem:[%s494 + $0x8] sm:$0xff]
      %v506 = vld [vmem:[%s494 + $0x10] sm:$0xff]
      %v507 = vld [vmem:[%s494 + $0x18] sm:$0xf]
      %v508 = vld [vmem:[%s494 + $0x1c] sm:$0xff]
      %v509 = vld [vmem:[%s494 + $0x24] sm:$0xff]
      %v510 = vld [vmem:[%s494 + $0x2c] sm:$0xff]
      %v511 = vld [vmem:[%s494 + $0x34] sm:$0xf]
      %v512 = vld [vmem:[%s494 + $0x38] sm:$0xff]
      %v513 = vld [vmem:[%s494 + $0x40] sm:$0xff]
      %v514 = vld [vmem:[%s494 + $0x48] sm:$0xff]
      %v515 = vld [vmem:[%s494 + $0x50] sm:$0xf]
      %v516 = vld [vmem:[%s494 + $0x54] sm:$0xff]
      %v517 = vld [vmem:[%s494 + $0x5c] sm:$0xff]
      %v518 = vld [vmem:[%s494 + $0x64] sm:$0xff]
      %v519 = vld [vmem:[%s494 + $0x6c] sm:$0xf]
      %v520 = vld [vmem:[%s494 + $0x70] sm:$0xff]
      %v521 = vld [vmem:[%s494 + $0x78] sm:$0xff]
      %v522 = vld [vmem:[%s494 + $0x80] sm:$0xff]
      %v523 = vld [vmem:[%s494 + $0x88] sm:$0xf]
      %v524 = vld [vmem:[%s494 + $0x8c] sm:$0xff]
      %v525 = vld [vmem:[%s494 + $0x94] sm:$0xff]
      %v526 = vld [vmem:[%s494 + $0x9c] sm:$0xff]
      %v527 = vld [vmem:[%s494 + $0xa4] sm:$0xf]
      %v528 = vld [vmem:[%s494 + $0xa8] sm:$0xff]
      %v529 = vld [vmem:[%s494 + $0xb0] sm:$0xff]
      %v530 = vld [vmem:[%s494 + $0xb8] sm:$0xff]
      %v531 = vld [vmem:[%s494 + $0xc0] sm:$0xf]
      %v532 = vld [vmem:[%s494 + $0xc4] sm:$0xff]
      %v533 = vld [vmem:[%s494 + $0xcc] sm:$0xff]
      %v534 = vld [vmem:[%s494 + $0xd4] sm:$0xff]
      %v535 = vld [vmem:[%s494 + $0xdc] sm:$0xf]
      %v536 = vld [vmem:[%s494 + $0xe0] sm:$0xff]
      %v537 = vld [vmem:[%s494 + $0xe8] sm:$0xff]
      %v538 = vld [vmem:[%s494 + $0xf0] sm:$0xff]
      %v539 = vld [vmem:[%s494 + $0xf8] sm:$0xf]
      %v540 = vld [vmem:[%s494 + $0xfc] sm:$0xff]
      %v541 = vld [vmem:[%s494 + $0x104] sm:$0xff]
      %v542 = vld [vmem:[%s494 + $0x10c] sm:$0xff]
      %v543 = vld [vmem:[%s494 + $0x114] sm:$0xf]
      %v544 = vld [vmem:[%s494 + $0x118] sm:$0xff]
      %v545 = vld [vmem:[%s494 + $0x120] sm:$0xff]
      %v546 = vld [vmem:[%s494 + $0x128] sm:$0xff]
      %v547 = vld [vmem:[%s494 + $0x130] sm:$0xf]
      %v548 = vld [vmem:[%s494 + $0x134] sm:$0xff]
      %v549 = vld [vmem:[%s494 + $0x13c] sm:$0xff]
      %v550 = vld [vmem:[%s494 + $0x144] sm:$0xff]
      %v551 = vld [vmem:[%s494 + $0x14c] sm:$0xf]
      %v552 = vld [vmem:[%s494 + $0x150] sm:$0xff]
      %v553 = vld [vmem:[%s494 + $0x158] sm:$0xff]
      %v554 = vld [vmem:[%s494 + $0x160] sm:$0xff]
      %v555 = vld [vmem:[%s494 + $0x168] sm:$0xf]
      %v556 = vld [vmem:[%s494 + $0x16c] sm:$0xff]
      %v557 = vld [vmem:[%s494 + $0x174] sm:$0xff]
      %v558 = vld [vmem:[%s494 + $0x17c] sm:$0xff]
      %v559 = vld [vmem:[%s494 + $0x184] sm:$0xf]
      %v560 = vld [vmem:[%s494 + $0x188] sm:$0xff]
      %v561 = vld [vmem:[%s494 + $0x190] sm:$0xff]
      %v562 = vld [vmem:[%s494 + $0x198] sm:$0xff]
      %v563 = vld [vmem:[%s494 + $0x1a0] sm:$0xf]
      %v564 = vld [vmem:[%s494 + $0x1a4] sm:$0xff]
      %v565 = vld [vmem:[%s494 + $0x1ac] sm:$0xff]
      %v566 = vld [vmem:[%s494 + $0x1b4] sm:$0xff]
      %v567 = vld [vmem:[%s494 + $0x1bc] sm:$0xf]
      %v568 = vld [vmem:[%s494 + $0x1c0] sm:$0xff]
      %v569 = vld [vmem:[%s494 + $0x1c8] sm:$0xff]
      %v570 = vld [vmem:[%s494 + $0x1d0] sm:$0xff]
      %v571 = vld [vmem:[%s494 + $0x1d8] sm:$0xf]
      %v572 = vld [vmem:[%s494 + $0x1dc] sm:$0xff]
      %v573 = vld [vmem:[%s494 + $0x1e4] sm:$0xff]
      %v574 = vld [vmem:[%s494 + $0x1ec] sm:$0xff]
      %v575 = vld [vmem:[%s494 + $0x1f4] sm:$0xf]
      %v576 = vld [vmem:[%s494 + $0x1f8] sm:$0xff]
      %v577 = vld [vmem:[%s494 + $0x200] sm:$0xff]
      %v578 = vld [vmem:[%s494 + $0x208] sm:$0xff]
      %v579 = vld [vmem:[%s494 + $0x210] sm:$0xf]
      %v580 = vld [vmem:[%s494 + $0x214] sm:$0xff]
      %v581 = vld [vmem:[%s494 + $0x21c] sm:$0xff]
      %v582 = vld [vmem:[%s494 + $0x224] sm:$0xff]
      %v583 = vld [vmem:[%s494 + $0x22c] sm:$0xf]
      %v584 = vld [vmem:[%s494 + $0x230] sm:$0xff]
      %v585 = vld [vmem:[%s494 + $0x238] sm:$0xff]
      %v586 = vld [vmem:[%s494 + $0x240] sm:$0xff]
      %v587 = vld [vmem:[%s494 + $0x248] sm:$0xf]
      %v588 = vld [vmem:[%s494 + $0x24c] sm:$0xff]
      %v589 = vld [vmem:[%s494 + $0x254] sm:$0xff]
      %v590 = vld [vmem:[%s494 + $0x25c] sm:$0xff]
      %v591 = vld [vmem:[%s494 + $0x264] sm:$0xf]
      %v592 = vld [vmem:[%s494 + $0x268] sm:$0xff]
      %v593 = vld [vmem:[%s494 + $0x270] sm:$0xff]
      %v594 = vld [vmem:[%s494 + $0x278] sm:$0xff]
      %v595 = vld [vmem:[%s494 + $0x280] sm:$0xf]
      %v596 = vld [vmem:[%s494 + $0x284] sm:$0xff]
      %v597 = vld [vmem:[%s494 + $0x28c] sm:$0xff]
      %v598 = vld [vmem:[%s494 + $0x294] sm:$0xff]
      %v599 = vld [vmem:[%s494 + $0x29c] sm:$0xf]
      %v600 = vld [vmem:[%s494 + $0x2a0] sm:$0xff]
      %v601 = vld [vmem:[%s494 + $0x2a8] sm:$0xff]
      %v602 = vld [vmem:[%s494 + $0x2b0] sm:$0xff]
      %v603 = vld [vmem:[%s494 + $0x2b8] sm:$0xf]
      %v604 = vld [vmem:[%s494 + $0x2bc] sm:$0xff]
      %v605 = vld [vmem:[%s494 + $0x2c4] sm:$0xff]
      %v606 = vld [vmem:[%s494 + $0x2cc] sm:$0xff]
      %v607 = vld [vmem:[%s494 + $0x2d4] sm:$0xf]
      %v608 = vld [vmem:[%s494 + $0x2d8] sm:$0xff]
      %v609 = vld [vmem:[%s494 + $0x2e0] sm:$0xff]
      %v610 = vld [vmem:[%s494 + $0x2e8] sm:$0xff]
      %v611 = vld [vmem:[%s494 + $0x2f0] sm:$0xf]
      %v612 = vld [vmem:[%s494 + $0x2f4] sm:$0xff]
      %v613 = vld [vmem:[%s494 + $0x2fc] sm:$0xff]
      %v614 = vld [vmem:[%s494 + $0x304] sm:$0xff]
      %v615 = vld [vmem:[%s494 + $0x30c] sm:$0xf]
      %v616 = vld [vmem:[%s494 + $0x310] sm:$0xff]
      %v617 = vld [vmem:[%s494 + $0x318] sm:$0xff]
      %v618 = vld [vmem:[%s494 + $0x320] sm:$0xff]
      %v619 = vld [vmem:[%s494 + $0x328] sm:$0xf]
      %v620 = vld [vmem:[%s494 + $0x32c] sm:$0xff]
      %v621 = vld [vmem:[%s494 + $0x334] sm:$0xff]
      %v622 = vld [vmem:[%s494 + $0x33c] sm:$0xff]
      %v623 = vld [vmem:[%s494 + $0x344] sm:$0xf]
      %v624 = vld [vmem:[%s494 + $0x348] sm:$0xff]
      %v625 = vld [vmem:[%s494 + $0x350] sm:$0xff]
      %v626 = vld [vmem:[%s494 + $0x358] sm:$0xff]
      %v627 = vld [vmem:[%s494 + $0x360] sm:$0xf]
      %v628 = vld [vmem:[%s494 + $0x364] sm:$0xff]
      %v629 = vld [vmem:[%s494 + $0x36c] sm:$0xff]
      %v630 = vld [vmem:[%s494 + $0x374] sm:$0xff]
      %v631 = vld [vmem:[%s494 + $0x37c] sm:$0xf]
      %v632 = vld [vmem:[%s494 + $0x380] sm:$0xff]
      %v633 = vld [vmem:[%s494 + $0x388] sm:$0xff]
      %v634 = vld [vmem:[%s494 + $0x390] sm:$0xff]
      %v635 = vld [vmem:[%s494 + $0x398] sm:$0xf]
      %v636 = vld [vmem:[%s494 + $0x39c] sm:$0xff]
      %v637 = vld [vmem:[%s494 + $0x3a4] sm:$0xff]
      %v638 = vld [vmem:[%s494 + $0x3ac] sm:$0xff]
      %v639 = vld [vmem:[%s494 + $0x3b4] sm:$0xf]
      %v640 = vld [vmem:[%s494 + $0x3b8] sm:$0xff]
      %v641 = vld [vmem:[%s494 + $0x3c0] sm:$0xff]
      %v642 = vld [vmem:[%s494 + $0x3c8] sm:$0xff]
      %v643 = vld [vmem:[%s494 + $0x3d0] sm:$0xf]
      %v644 = vld [vmem:[%s494 + $0x3d4] sm:$0xff]
      %v645 = vld [vmem:[%s494 + $0x3dc] sm:$0xff]
      %v646 = vld [vmem:[%s494 + $0x3e4] sm:$0xff]
      %v647 = vld [vmem:[%s494 + $0x3ec] sm:$0xf]
      %v648 = vld [vmem:[%s494 + $0x3f0] sm:$0xff]
      %v649 = vld [vmem:[%s494 + $0x3f8] sm:$0xff]
      %v650 = vld [vmem:[%s494 + $0x400] sm:$0xff]
      %v651 = vld [vmem:[%s494 + $0x408] sm:$0xf]
      %v652 = vld [vmem:[%s494 + $0x40c] sm:$0xff]
      %v653 = vld [vmem:[%s494 + $0x414] sm:$0xff]
      %v654 = vld [vmem:[%s494 + $0x41c] sm:$0xff]
      %v655 = vld [vmem:[%s494 + $0x424] sm:$0xf]
      %v656 = vld [vmem:[%s494 + $0x428] sm:$0xff]
      %v657 = vld [vmem:[%s494 + $0x430] sm:$0xff]
      %v658 = vld [vmem:[%s494 + $0x438] sm:$0xff]
      %v659 = vld [vmem:[%s494 + $0x440] sm:$0xf]
      %v660 = vld [vmem:[%s494 + $0x444] sm:$0xff]
      %v661 = vld [vmem:[%s494 + $0x44c] sm:$0xff]
      %v662 = vld [vmem:[%s494 + $0x454] sm:$0xff]
      %v663 = vld [vmem:[%s494 + $0x45c] sm:$0xf]
      %v664 = vld [vmem:[%s494 + $0x460] sm:$0xff]
      %v665 = vld [vmem:[%s494 + $0x468] sm:$0xff]
      %v666 = vld [vmem:[%s494 + $0x470] sm:$0xff]
      %v667 = vld [vmem:[%s494 + $0x478] sm:$0xf]
      %v668 = vld [vmem:[%s494 + $0x47c] sm:$0xff]
      %v669 = vld [vmem:[%s494 + $0x484] sm:$0xff]
      %v670 = vld [vmem:[%s494 + $0x48c] sm:$0xff]
      %v671 = vld [vmem:[%s494 + $0x494] sm:$0xf]
      %v672 = vld [vmem:[%s494 + $0x498] sm:$0xff]
      %v673 = vld [vmem:[%s494 + $0x4a0] sm:$0xff]
      %v674 = vld [vmem:[%s494 + $0x4a8] sm:$0xff]
      %v675 = vld [vmem:[%s494 + $0x4b0] sm:$0xf]
      %v676 = vld [vmem:[%s494 + $0x4b4] sm:$0xff]
      %v677 = vld [vmem:[%s494 + $0x4bc] sm:$0xff]
      %v678 = vld [vmem:[%s494 + $0x4c4] sm:$0xff]
      %v679 = vld [vmem:[%s494 + $0x4cc] sm:$0xf]
      %v680 = vld [vmem:[%s494 + $0x4d0] sm:$0xff]
      %v681 = vld [vmem:[%s494 + $0x4d8] sm:$0xff]
      %v682 = vld [vmem:[%s494 + $0x4e0] sm:$0xff]
      %v683 = vld [vmem:[%s494 + $0x4e8] sm:$0xf]
      %v684 = vld [vmem:[%s494 + $0x4ec] sm:$0xff]
      %v685 = vld [vmem:[%s494 + $0x4f4] sm:$0xff]
      %v686 = vld [vmem:[%s494 + $0x4fc] sm:$0xff]
      %v687 = vld [vmem:[%s494 + $0x504] sm:$0xf]
      %v688 = vld [vmem:[%s494 + $0x508] sm:$0xff]
      %v689 = vld [vmem:[%s494 + $0x510] sm:$0xff]
      %v690 = vld [vmem:[%s494 + $0x518] sm:$0xff]
      %v691 = vld [vmem:[%s494 + $0x520] sm:$0xf]
      %v692 = vld [vmem:[%s494 + $0x524] sm:$0xff]
      %v693 = vld [vmem:[%s494 + $0x52c] sm:$0xff]
      %v694 = vld [vmem:[%s494 + $0x534] sm:$0xff]
      %v695 = vld [vmem:[%s494 + $0x53c] sm:$0xf]
      %v696 = vld [vmem:[%s494 + $0x540] sm:$0xff]
      %v697 = vld [vmem:[%s494 + $0x548] sm:$0xff]
      %v698 = vld [vmem:[%s494 + $0x550] sm:$0xff]
      %v699 = vld [vmem:[%s494 + $0x558] sm:$0xf]
      %v700 = vld [vmem:[%s494 + $0x55c] sm:$0xff]
      %v701 = vld [vmem:[%s494 + $0x564] sm:$0xff]
      %v702 = vld [vmem:[%s494 + $0x56c] sm:$0xff]
      %v703 = vld [vmem:[%s494 + $0x574] sm:$0xf]
      %v704 = vld [vmem:[%s494 + $0x578] sm:$0xff]
      %v705 = vld [vmem:[%s494 + $0x580] sm:$0xff]
      %v706 = vld [vmem:[%s494 + $0x588] sm:$0xff]
      %v707 = vld [vmem:[%s494 + $0x590] sm:$0xf]
      %v708 = vld [vmem:[%s494 + $0x594] sm:$0xff]
      %v709 = vld [vmem:[%s494 + $0x59c] sm:$0xff]
      %v710 = vld [vmem:[%s494 + $0x5a4] sm:$0xff]
      %v711 = vld [vmem:[%s494 + $0x5ac] sm:$0xf]
      %v712 = vld [vmem:[%s494 + $0x5b0] sm:$0xff]
      %v713 = vld [vmem:[%s494 + $0x5b8] sm:$0xff]
      %v714 = vld [vmem:[%s494 + $0x5c0] sm:$0xff]
      %v715 = vld [vmem:[%s494 + $0x5c8] sm:$0xf]
      %v716 = vld [vmem:[%s494 + $0x5cc] sm:$0xff]
      %v717 = vld [vmem:[%s494 + $0x5d4] sm:$0xff]
      %v718 = vld [vmem:[%s494 + $0x5dc] sm:$0xff]
      %v719 = vld [vmem:[%s494 + $0x5e4] sm:$0xf]
      %v720 = vld [vmem:[%s494 + $0x5e8] sm:$0xff]
      %v721 = vld [vmem:[%s494 + $0x5f0] sm:$0xff]
      %v722 = vld [vmem:[%s494 + $0x5f8] sm:$0xff]
      %v723 = vld [vmem:[%s494 + $0x600] sm:$0xf]
      %v724 = vld [vmem:[%s494 + $0x604] sm:$0xff]
      %v725 = vld [vmem:[%s494 + $0x60c] sm:$0xff]
      %v726 = vld [vmem:[%s494 + $0x614] sm:$0xff]
      %v727 = vld [vmem:[%s494 + $0x61c] sm:$0xf]
      %v728 = vld [vmem:[%s494 + $0x620] sm:$0xff]
      %v729 = vld [vmem:[%s494 + $0x628] sm:$0xff]
      %v730 = vld [vmem:[%s494 + $0x630] sm:$0xff]
      %v731 = vld [vmem:[%s494 + $0x638] sm:$0xf]
      %v732 = vld [vmem:[%s494 + $0x63c] sm:$0xff]
      %v733 = vld [vmem:[%s494 + $0x644] sm:$0xff]
      %v734 = vld [vmem:[%s494 + $0x64c] sm:$0xff]
      %v735 = vld [vmem:[%s494 + $0x654] sm:$0xf]
      %v736 = vld [vmem:[%s494 + $0x658] sm:$0xff]
      %v737 = vld [vmem:[%s494 + $0x660] sm:$0xff]
      %v738 = vld [vmem:[%s494 + $0x668] sm:$0xff]
      %v739 = vld [vmem:[%s494 + $0x670] sm:$0xf]
      %v740 = vld [vmem:[%s494 + $0x674] sm:$0xff]
      %v741 = vld [vmem:[%s494 + $0x67c] sm:$0xff]
      %v742 = vld [vmem:[%s494 + $0x684] sm:$0xff]
      %v743 = vld [vmem:[%s494 + $0x68c] sm:$0xf]
      %v744 = vld [vmem:[%s494 + $0x690] sm:$0xff]
      %v745 = vld [vmem:[%s494 + $0x698] sm:$0xff]
      %v746 = vld [vmem:[%s494 + $0x6a0] sm:$0xff]
      %v747 = vld [vmem:[%s494 + $0x6a8] sm:$0xf]
      %v748 = vld [vmem:[%s494 + $0x6ac] sm:$0xff]
      %v749 = vld [vmem:[%s494 + $0x6b4] sm:$0xff]
      %v750 = vld [vmem:[%s494 + $0x6bc] sm:$0xff]
      %v751 = vld [vmem:[%s494 + $0x6c4] sm:$0xf]
      %v752 = vld [vmem:[%s494 + $0x6c8] sm:$0xff]
      %v753 = vld [vmem:[%s494 + $0x6d0] sm:$0xff]
      %v754 = vld [vmem:[%s494 + $0x6d8] sm:$0xff]
      %v755 = vld [vmem:[%s494 + $0x6e0] sm:$0xf]
      %v756 = vld [vmem:[%s494 + $0x6e4] sm:$0xff]
      %v757 = vld [vmem:[%s494 + $0x6ec] sm:$0xff]
      %v758 = vld [vmem:[%s494 + $0x6f4] sm:$0xff]
      %v759 = vld [vmem:[%s494 + $0x6fc] sm:$0xf]
      %v760 = vld [vmem:[%s1] sm:$0xf]
      %v761 = vld [vmem:[%s1 + $0x4] sm:$0xf]
      %v762 = vld [vmem:[%s1 + $0x8] sm:$0xf]
      %v763 = vld [vmem:[%s1 + $0xc] sm:$0xf]
      %v764 = vld [vmem:[%s1 + $0x10] sm:$0xf]
      %v765 = vld [vmem:[%s1 + $0x14] sm:$0xf]
      %v766 = vld [vmem:[%s1 + $0x18] sm:$0xf]
      %v767 = vld [vmem:[%s1 + $0x1c] sm:$0xf]
      %v768 = vld [vmem:[%s1 + $0x20] sm:$0xf]
      %v769 = vld [vmem:[%s1 + $0x24] sm:$0xf]
      %v770 = vld [vmem:[%s1 + $0x28] sm:$0xf]
      %v771 = vld [vmem:[%s1 + $0x2c] sm:$0xf]
      %v772 = vld [vmem:[%s1 + $0x30] sm:$0xf]
      %v773 = vld [vmem:[%s1 + $0x34] sm:$0xf]
      %v774 = vld [vmem:[%s1 + $0x38] sm:$0xf]
      %v775 = vld [vmem:[%s1 + $0x3c] sm:$0xf]
      %v776 = vld [vmem:[%s1 + $0x40] sm:$0xf]
      %v777 = vld [vmem:[%s1 + $0x44] sm:$0xf]
      %v778 = vld [vmem:[%s1 + $0x48] sm:$0xf]
      %v779 = vld [vmem:[%s1 + $0x4c] sm:$0xf]
      %v780 = vld [vmem:[%s1 + $0x50] sm:$0xf]
      %v781 = vld [vmem:[%s1 + $0x54] sm:$0xf]
      %v782 = vld [vmem:[%s1 + $0x58] sm:$0xf]
      %v783 = vld [vmem:[%s1 + $0x5c] sm:$0xf]
      %v784 = vld [vmem:[%s1 + $0x60] sm:$0xf]
      %v785 = vld [vmem:[%s1 + $0x64] sm:$0xf]
      %v786 = vld [vmem:[%s1 + $0x68] sm:$0xf]
      %v787 = vld [vmem:[%s1 + $0x6c] sm:$0xf]
      %v788 = vld [vmem:[%s1 + $0x70] sm:$0xf]
      %v789 = vld [vmem:[%s1 + $0x74] sm:$0xf]
      %v790 = vld [vmem:[%s1 + $0x78] sm:$0xf]
      %v791 = vld [vmem:[%s1 + $0x7c] sm:$0xf]
      %v792 = vld [vmem:[%s1 + $0x80] sm:$0xf]
      %v793 = vld [vmem:[%s1 + $0x84] sm:$0xf]
      %v794 = vld [vmem:[%s1 + $0x88] sm:$0xf]
      %v795 = vld [vmem:[%s1 + $0x8c] sm:$0xf]
      %v796 = vld [vmem:[%s1 + $0x90] sm:$0xf]
      %v797 = vld [vmem:[%s1 + $0x94] sm:$0xf]
      %v798 = vld [vmem:[%s1 + $0x98] sm:$0xf]
      %v799 = vld [vmem:[%s1 + $0x9c] sm:$0xf]
      %v800 = vld [vmem:[%s1 + $0xa0] sm:$0xf]
      %v801 = vld [vmem:[%s1 + $0xa4] sm:$0xf]
      %v802 = vld [vmem:[%s1 + $0xa8] sm:$0xf]
      %v803 = vld [vmem:[%s1 + $0xac] sm:$0xf]
      %v804 = vld [vmem:[%s1 + $0xb0] sm:$0xf]
      %v805 = vld [vmem:[%s1 + $0xb4] sm:$0xf]
      %v806 = vld [vmem:[%s1 + $0xb8] sm:$0xf]
      %v807 = vld [vmem:[%s1 + $0xbc] sm:$0xf]
      %v808 = vld [vmem:[%s1 + $0xc0] sm:$0xf]
      %v809 = vld [vmem:[%s1 + $0xc4] sm:$0xf]
      %v810 = vld [vmem:[%s1 + $0xc8] sm:$0xf]
      %v811 = vld [vmem:[%s1 + $0xcc] sm:$0xf]
      %v812 = vld [vmem:[%s1 + $0xd0] sm:$0xf]
      %v813 = vld [vmem:[%s1 + $0xd4] sm:$0xf]
      %v814 = vld [vmem:[%s1 + $0xd8] sm:$0xf]
      %v815 = vld [vmem:[%s1 + $0xdc] sm:$0xf]
      %v816 = vld [vmem:[%s1 + $0xe0] sm:$0xf]
      %v817 = vld [vmem:[%s1 + $0xe4] sm:$0xf]
      %v818 = vld [vmem:[%s1 + $0xe8] sm:$0xf]
      %v819 = vld [vmem:[%s1 + $0xec] sm:$0xf]
      %v820 = vld [vmem:[%s1 + $0xf0] sm:$0xf]
      %v821 = vld [vmem:[%s1 + $0xf4] sm:$0xf]
      %v822 = vld [vmem:[%s1 + $0xf8] sm:$0xf]
      %v823 = vld [vmem:[%s1 + $0xfc] sm:$0xf]
      %v824 = vld [vmem:[%s1 + $0x100] sm:$0xf]
      %v825 = vld [vmem:[%s1 + $0x104] sm:$0xf]
      %v826 = vld [vmem:[%s1 + $0x108] sm:$0xf]
      %v827 = vld [vmem:[%s1 + $0x10c] sm:$0xf]
      %v828 = vld [vmem:[%s1 + $0x110] sm:$0xf]
      %v829 = vld [vmem:[%s1 + $0x114] sm:$0xf]
      %v830 = vld [vmem:[%s1 + $0x118] sm:$0xf]
      %v831 = vld [vmem:[%s1 + $0x11c] sm:$0xf]
      %v832 = vld [vmem:[%s1 + $0x120] sm:$0xf]
      %v833 = vld [vmem:[%s1 + $0x124] sm:$0xf]
      %v834 = vld [vmem:[%s1 + $0x128] sm:$0xf]
      %v835 = vld [vmem:[%s1 + $0x12c] sm:$0xf]
      %v836 = vld [vmem:[%s1 + $0x130] sm:$0xf]
      %v837 = vld [vmem:[%s1 + $0x134] sm:$0xf]
      %v838 = vld [vmem:[%s1 + $0x138] sm:$0xf]
      %v839 = vld [vmem:[%s1 + $0x13c] sm:$0xf]
      %v840 = vld [vmem:[%s1 + $0x140] sm:$0xf]
      %v841 = vld [vmem:[%s1 + $0x144] sm:$0xf]
      %v842 = vld [vmem:[%s1 + $0x148] sm:$0xf]
      %v843 = vld [vmem:[%s1 + $0x14c] sm:$0xf]
      %v844 = vld [vmem:[%s1 + $0x150] sm:$0xf]
      %v845 = vld [vmem:[%s1 + $0x154] sm:$0xf]
      %v846 = vld [vmem:[%s1 + $0x158] sm:$0xf]
      %v847 = vld [vmem:[%s1 + $0x15c] sm:$0xf]
      %v848 = vld [vmem:[%s1 + $0x160] sm:$0xf]
      %v849 = vld [vmem:[%s1 + $0x164] sm:$0xf]
      %v850 = vld [vmem:[%s1 + $0x168] sm:$0xf]
      %v851 = vld [vmem:[%s1 + $0x16c] sm:$0xf]
      %v852 = vld [vmem:[%s1 + $0x170] sm:$0xf]
      %v853 = vld [vmem:[%s1 + $0x174] sm:$0xf]
      %v854 = vld [vmem:[%s1 + $0x178] sm:$0xf]
      %v855 = vld [vmem:[%s1 + $0x17c] sm:$0xf]
      %v856 = vld [vmem:[%s1 + $0x180] sm:$0xf]
      %v857 = vld [vmem:[%s1 + $0x184] sm:$0xf]
      %v858 = vld [vmem:[%s2] sm:$0x1]
      %v860 = vlaneseq
      %v861 = vshrl.u32 %v860, 7
      %v862 = vsub.s32 0, %v861
      %v863 = vrot.slane %v858, %v862
      %v1121 = vunpack.c.l.b16 %v504
      %v1122 = vunpack.c.h.b16 %v504
      %v1123 = vunpack.c.l.b16 %v505
      %v1124 = vunpack.c.h.b16 %v505
      %v1125 = vunpack.c.l.b16 %v506
      %v1126 = vunpack.c.h.b16 %v506
      %v1127 = vunpack.c.l.b16 %v507
      %v1128 = vunpack.c.l.b16 %v508
      %v1129 = vunpack.c.h.b16 %v508
      %v1130 = vunpack.c.l.b16 %v509
      %v1131 = vunpack.c.h.b16 %v509
      %v1132 = vunpack.c.l.b16 %v510
      %v1133 = vunpack.c.h.b16 %v510
      %v1134 = vunpack.c.l.b16 %v511
      %v1135 = vunpack.c.l.b16 %v512
      %v1136 = vunpack.c.h.b16 %v512
      %v1137 = vunpack.c.l.b16 %v513
      %v1138 = vunpack.c.h.b16 %v513
      %v1139 = vunpack.c.l.b16 %v514
      %v1140 = vunpack.c.h.b16 %v514
      %v1141 = vunpack.c.l.b16 %v515
      %v1142 = vunpack.c.l.b16 %v516
      %v1143 = vunpack.c.h.b16 %v516
      %v1144 = vunpack.c.l.b16 %v517
      %v1145 = vunpack.c.h.b16 %v517
      %v1146 = vunpack.c.l.b16 %v518
      %v1147 = vunpack.c.h.b16 %v518
      %v1148 = vunpack.c.l.b16 %v519
      %v1149 = vunpack.c.l.b16 %v520
      %v1150 = vunpack.c.h.b16 %v520
      %v1151 = vunpack.c.l.b16 %v521
      %v1152 = vunpack.c.h.b16 %v521
      %v1153 = vunpack.c.l.b16 %v522
      %v1154 = vunpack.c.h.b16 %v522
      %v1155 = vunpack.c.l.b16 %v523
      %v1156 = vunpack.c.l.b16 %v524
      %v1157 = vunpack.c.h.b16 %v524
      %v1158 = vunpack.c.l.b16 %v525
      %v1159 = vunpack.c.h.b16 %v525
      %v1160 = vunpack.c.l.b16 %v526
      %v1161 = vunpack.c.h.b16 %v526
      %v1162 = vunpack.c.l.b16 %v527
      %v1163 = vunpack.c.l.b16 %v528
      %v1164 = vunpack.c.h.b16 %v528
      %v1165 = vunpack.c.l.b16 %v529
      %v1166 = vunpack.c.h.b16 %v529
      %v1167 = vunpack.c.l.b16 %v530
      %v1168 = vunpack.c.h.b16 %v530
      %v1169 = vunpack.c.l.b16 %v531
      %v1170 = vunpack.c.l.b16 %v532
      %v1171 = vunpack.c.h.b16 %v532
      %v1172 = vunpack.c.l.b16 %v533
      %v1173 = vunpack.c.h.b16 %v533
      %v1174 = vunpack.c.l.b16 %v534
      %v1175 = vunpack.c.h.b16 %v534
      %v1176 = vunpack.c.l.b16 %v535
      %v1177 = vunpack.c.l.b16 %v536
      %v1178 = vunpack.c.h.b16 %v536
      %v1179 = vunpack.c.l.b16 %v537
      %v1180 = vunpack.c.h.b16 %v537
      %v1181 = vunpack.c.l.b16 %v538
      %v1182 = vunpack.c.h.b16 %v538
      %v1183 = vunpack.c.l.b16 %v539
      %v1184 = vunpack.c.l.b16 %v540
      %v1185 = vunpack.c.h.b16 %v540
      %v1186 = vunpack.c.l.b16 %v541
      %v1187 = vunpack.c.h.b16 %v541
      %v1188 = vunpack.c.l.b16 %v542
      %v1189 = vunpack.c.h.b16 %v542
      %v1190 = vunpack.c.l.b16 %v543
      %v1191 = vunpack.c.l.b16 %v544
      %v1192 = vunpack.c.h.b16 %v544
      %v1193 = vunpack.c.l.b16 %v545
      %v1194 = vunpack.c.h.b16 %v545
      %v1195 = vunpack.c.l.b16 %v546
      %v1196 = vunpack.c.h.b16 %v546
      %v1197 = vunpack.c.l.b16 %v547
      %v1198 = vunpack.c.l.b16 %v548
      %v1199 = vunpack.c.h.b16 %v548
      %v1200 = vunpack.c.l.b16 %v549
      %v1201 = vunpack.c.h.b16 %v549
      %v1202 = vunpack.c.l.b16 %v550
      %v1203 = vunpack.c.h.b16 %v550
      %v1204 = vunpack.c.l.b16 %v551
      %v1205 = vunpack.c.l.b16 %v552
      %v1206 = vunpack.c.h.b16 %v552
      %v1207 = vunpack.c.l.b16 %v553
      %v1208 = vunpack.c.h.b16 %v553
      %v1209 = vunpack.c.l.b16 %v554
      %v1210 = vunpack.c.h.b16 %v554
      %v1211 = vunpack.c.l.b16 %v555
      %v1212 = vunpack.c.l.b16 %v556
      %v1213 = vunpack.c.h.b16 %v556
      %v1214 = vunpack.c.l.b16 %v557
      %v1215 = vunpack.c.h.b16 %v557
      %v1216 = vunpack.c.l.b16 %v558
      %v1217 = vunpack.c.h.b16 %v558
      %v1218 = vunpack.c.l.b16 %v559
      %v1219 = vunpack.c.l.b16 %v560
      %v1220 = vunpack.c.h.b16 %v560
      %v1221 = vunpack.c.l.b16 %v561
      %v1222 = vunpack.c.h.b16 %v561
      %v1223 = vunpack.c.l.b16 %v562
      %v1224 = vunpack.c.h.b16 %v562
      %v1225 = vunpack.c.l.b16 %v563
      %v1226 = vunpack.c.l.b16 %v564
      %v1227 = vunpack.c.h.b16 %v564
      %v1228 = vunpack.c.l.b16 %v565
      %v1229 = vunpack.c.h.b16 %v565
      %v1230 = vunpack.c.l.b16 %v566
      %v1231 = vunpack.c.h.b16 %v566
      %v1232 = vunpack.c.l.b16 %v567
      %v1233 = vunpack.c.l.b16 %v568
      %v1234 = vunpack.c.h.b16 %v568
      %v1235 = vunpack.c.l.b16 %v569
      %v1236 = vunpack.c.h.b16 %v569
      %v1237 = vunpack.c.l.b16 %v570
      %v1238 = vunpack.c.h.b16 %v570
      %v1239 = vunpack.c.l.b16 %v571
      %v1240 = vunpack.c.l.b16 %v572
      %v1241 = vunpack.c.h.b16 %v572
      %v1242 = vunpack.c.l.b16 %v573
      %v1243 = vunpack.c.h.b16 %v573
      %v1244 = vunpack.c.l.b16 %v574
      %v1245 = vunpack.c.h.b16 %v574
      %v1246 = vunpack.c.l.b16 %v575
      %v1247 = vunpack.c.l.b16 %v576
      %v1248 = vunpack.c.h.b16 %v576
      %v1249 = vunpack.c.l.b16 %v577
      %v1250 = vunpack.c.h.b16 %v577
      %v1251 = vunpack.c.l.b16 %v578
      %v1252 = vunpack.c.h.b16 %v578
      %v1253 = vunpack.c.l.b16 %v579
      %v1254 = vunpack.c.l.b16 %v580
      %v1255 = vunpack.c.h.b16 %v580
      %v1256 = vunpack.c.l.b16 %v581
      %v1257 = vunpack.c.h.b16 %v581
      %v1258 = vunpack.c.l.b16 %v582
      %v1259 = vunpack.c.h.b16 %v582
      %v1260 = vunpack.c.l.b16 %v583
      %v1261 = vunpack.c.l.b16 %v584
      %v1262 = vunpack.c.h.b16 %v584
      %v1263 = vunpack.c.l.b16 %v585
      %v1264 = vunpack.c.h.b16 %v585
      %v1265 = vunpack.c.l.b16 %v586
      %v1266 = vunpack.c.h.b16 %v586
      %v1267 = vunpack.c.l.b16 %v587
      %v1268 = vunpack.c.l.b16 %v588
      %v1269 = vunpack.c.h.b16 %v588
      %v1270 = vunpack.c.l.b16 %v589
      %v1271 = vunpack.c.h.b16 %v589
      %v1272 = vunpack.c.l.b16 %v590
      %v1273 = vunpack.c.h.b16 %v590
      %v1274 = vunpack.c.l.b16 %v591
      %v1275 = vunpack.c.l.b16 %v592
      %v1276 = vunpack.c.h.b16 %v592
      %v1277 = vunpack.c.l.b16 %v593
      %v1278 = vunpack.c.h.b16 %v593
      %v1279 = vunpack.c.l.b16 %v594
      %v1280 = vunpack.c.h.b16 %v594
      %v1281 = vunpack.c.l.b16 %v595
      %v1282 = vunpack.c.l.b16 %v596
      %v1283 = vunpack.c.h.b16 %v596
      %v1284 = vunpack.c.l.b16 %v597
      %v1285 = vunpack.c.h.b16 %v597
      %v1286 = vunpack.c.l.b16 %v598
      %v1287 = vunpack.c.h.b16 %v598
      %v1288 = vunpack.c.l.b16 %v599
      %v1289 = vunpack.c.l.b16 %v600
      %v1290 = vunpack.c.h.b16 %v600
      %v1291 = vunpack.c.l.b16 %v601
      %v1292 = vunpack.c.h.b16 %v601
      %v1293 = vunpack.c.l.b16 %v602
      %v1294 = vunpack.c.h.b16 %v602
      %v1295 = vunpack.c.l.b16 %v603
      %v1296 = vunpack.c.l.b16 %v604
      %v1297 = vunpack.c.h.b16 %v604
      %v1298 = vunpack.c.l.b16 %v605
      %v1299 = vunpack.c.h.b16 %v605
      %v1300 = vunpack.c.l.b16 %v606
      %v1301 = vunpack.c.h.b16 %v606
      %v1302 = vunpack.c.l.b16 %v607
      %v1303 = vunpack.c.l.b16 %v608
      %v1304 = vunpack.c.h.b16 %v608
      %v1305 = vunpack.c.l.b16 %v609
      %v1306 = vunpack.c.h.b16 %v609
      %v1307 = vunpack.c.l.b16 %v610
      %v1308 = vunpack.c.h.b16 %v610
      %v1309 = vunpack.c.l.b16 %v611
      %v1310 = vunpack.c.l.b16 %v612
      %v1311 = vunpack.c.h.b16 %v612
      %v1312 = vunpack.c.l.b16 %v613
      %v1313 = vunpack.c.h.b16 %v613
      %v1314 = vunpack.c.l.b16 %v614
      %v1315 = vunpack.c.h.b16 %v614
      %v1316 = vunpack.c.l.b16 %v615
      %v1317 = vunpack.c.l.b16 %v616
      %v1318 = vunpack.c.h.b16 %v616
      %v1319 = vunpack.c.l.b16 %v617
      %v1320 = vunpack.c.h.b16 %v617
      %v1321 = vunpack.c.l.b16 %v618
      %v1322 = vunpack.c.h.b16 %v618
      %v1323 = vunpack.c.l.b16 %v619
      %v1324 = vunpack.c.l.b16 %v620
      %v1325 = vunpack.c.h.b16 %v620
      %v1326 = vunpack.c.l.b16 %v621
      %v1327 = vunpack.c.h.b16 %v621
      %v1328 = vunpack.c.l.b16 %v622
      %v1329 = vunpack.c.h.b16 %v622
      %v1330 = vunpack.c.l.b16 %v623
      %v1331 = vunpack.c.l.b16 %v624
      %v1332 = vunpack.c.h.b16 %v624
      %v1333 = vunpack.c.l.b16 %v625
      %v1334 = vunpack.c.h.b16 %v625
      %v1335 = vunpack.c.l.b16 %v626
      %v1336 = vunpack.c.h.b16 %v626
      %v1337 = vunpack.c.l.b16 %v627
      %v1338 = vunpack.c.l.b16 %v628
      %v1339 = vunpack.c.h.b16 %v628
      %v1340 = vunpack.c.l.b16 %v629
      %v1341 = vunpack.c.h.b16 %v629
      %v1342 = vunpack.c.l.b16 %v630
      %v1343 = vunpack.c.h.b16 %v630
      %v1344 = vunpack.c.l.b16 %v631
      %v1345 = vunpack.c.l.b16 %v632
      %v1346 = vunpack.c.h.b16 %v632
      %v1347 = vunpack.c.l.b16 %v633
      %v1348 = vunpack.c.h.b16 %v633
      %v1349 = vunpack.c.l.b16 %v634
      %v1350 = vunpack.c.h.b16 %v634
      %v1351 = vunpack.c.l.b16 %v635
      %v1352 = vunpack.c.l.b16 %v636
      %v1353 = vunpack.c.h.b16 %v636
      %v1354 = vunpack.c.l.b16 %v637
      %v1355 = vunpack.c.h.b16 %v637
      %v1356 = vunpack.c.l.b16 %v638
      %v1357 = vunpack.c.h.b16 %v638
      %v1358 = vunpack.c.l.b16 %v639
      %v1359 = vunpack.c.l.b16 %v640
      %v1360 = vunpack.c.h.b16 %v640
      %v1361 = vunpack.c.l.b16 %v641
      %v1362 = vunpack.c.h.b16 %v641
      %v1363 = vunpack.c.l.b16 %v642
      %v1364 = vunpack.c.h.b16 %v642
      %v1365 = vunpack.c.l.b16 %v643
      %v1366 = vunpack.c.l.b16 %v644
      %v1367 = vunpack.c.h.b16 %v644
      %v1368 = vunpack.c.l.b16 %v645
      %v1369 = vunpack.c.h.b16 %v645
      %v1370 = vunpack.c.l.b16 %v646
      %v1371 = vunpack.c.h.b16 %v646
      %v1372 = vunpack.c.l.b16 %v647
      %v1373 = vunpack.c.l.b16 %v648
      %v1374 = vunpack.c.h.b16 %v648
      %v1375 = vunpack.c.l.b16 %v649
      %v1376 = vunpack.c.h.b16 %v649
      %v1377 = vunpack.c.l.b16 %v650
      %v1378 = vunpack.c.h.b16 %v650
      %v1379 = vunpack.c.l.b16 %v651
      %v1380 = vunpack.c.l.b16 %v652
      %v1381 = vunpack.c.h.b16 %v652
      %v1382 = vunpack.c.l.b16 %v653
      %v1383 = vunpack.c.h.b16 %v653
      %v1384 = vunpack.c.l.b16 %v654
      %v1385 = vunpack.c.h.b16 %v654
      %v1386 = vunpack.c.l.b16 %v655
      %v1387 = vunpack.c.l.b16 %v656
      %v1388 = vunpack.c.h.b16 %v656
      %v1389 = vunpack.c.l.b16 %v657
      %v1390 = vunpack.c.h.b16 %v657
      %v1391 = vunpack.c.l.b16 %v658
      %v1392 = vunpack.c.h.b16 %v658
      %v1393 = vunpack.c.l.b16 %v659
      %v1394 = vunpack.c.l.b16 %v660
      %v1395 = vunpack.c.h.b16 %v660
      %v1396 = vunpack.c.l.b16 %v661
      %v1397 = vunpack.c.h.b16 %v661
      %v1398 = vunpack.c.l.b16 %v662
      %v1399 = vunpack.c.h.b16 %v662
      %v1400 = vunpack.c.l.b16 %v663
      %v1401 = vunpack.c.l.b16 %v664
      %v1402 = vunpack.c.h.b16 %v664
      %v1403 = vunpack.c.l.b16 %v665
      %v1404 = vunpack.c.h.b16 %v665
      %v1405 = vunpack.c.l.b16 %v666
      %v1406 = vunpack.c.h.b16 %v666
      %v1407 = vunpack.c.l.b16 %v667
      %v1408 = vunpack.c.l.b16 %v668
      %v1409 = vunpack.c.h.b16 %v668
      %v1410 = vunpack.c.l.b16 %v669
      %v1411 = vunpack.c.h.b16 %v669
      %v1412 = vunpack.c.l.b16 %v670
      %v1413 = vunpack.c.h.b16 %v670
      %v1414 = vunpack.c.l.b16 %v671
      %v1415 = vunpack.c.l.b16 %v672
      %v1416 = vunpack.c.h.b16 %v672
      %v1417 = vunpack.c.l.b16 %v673
      %v1418 = vunpack.c.h.b16 %v673
      %v1419 = vunpack.c.l.b16 %v674
      %v1420 = vunpack.c.h.b16 %v674
      %v1421 = vunpack.c.l.b16 %v675
      %v1422 = vunpack.c.l.b16 %v676
      %v1423 = vunpack.c.h.b16 %v676
      %v1424 = vunpack.c.l.b16 %v677
      %v1425 = vunpack.c.h.b16 %v677
      %v1426 = vunpack.c.l.b16 %v678
      %v1427 = vunpack.c.h.b16 %v678
      %v1428 = vunpack.c.l.b16 %v679
      %v1429 = vunpack.c.l.b16 %v680
      %v1430 = vunpack.c.h.b16 %v680
      %v1431 = vunpack.c.l.b16 %v681
      %v1432 = vunpack.c.h.b16 %v681
      %v1433 = vunpack.c.l.b16 %v682
      %v1434 = vunpack.c.h.b16 %v682
      %v1435 = vunpack.c.l.b16 %v683
      %v1436 = vunpack.c.l.b16 %v684
      %v1437 = vunpack.c.h.b16 %v684
      %v1438 = vunpack.c.l.b16 %v685
      %v1439 = vunpack.c.h.b16 %v685
      %v1440 = vunpack.c.l.b16 %v686
      %v1441 = vunpack.c.h.b16 %v686
      %v1442 = vunpack.c.l.b16 %v687
      %v1443 = vunpack.c.l.b16 %v688
      %v1444 = vunpack.c.h.b16 %v688
      %v1445 = vunpack.c.l.b16 %v689
      %v1446 = vunpack.c.h.b16 %v689
      %v1447 = vunpack.c.l.b16 %v690
      %v1448 = vunpack.c.h.b16 %v690
      %v1449 = vunpack.c.l.b16 %v691
      %v1450 = vunpack.c.l.b16 %v692
      %v1451 = vunpack.c.h.b16 %v692
      %v1452 = vunpack.c.l.b16 %v693
      %v1453 = vunpack.c.h.b16 %v693
      %v1454 = vunpack.c.l.b16 %v694
      %v1455 = vunpack.c.h.b16 %v694
      %v1456 = vunpack.c.l.b16 %v695
      %v1457 = vunpack.c.l.b16 %v696
      %v1458 = vunpack.c.h.b16 %v696
      %v1459 = vunpack.c.l.b16 %v697
      %v1460 = vunpack.c.h.b16 %v697
      %v1461 = vunpack.c.l.b16 %v698
      %v1462 = vunpack.c.h.b16 %v698
      %v1463 = vunpack.c.l.b16 %v699
      %v1464 = vunpack.c.l.b16 %v700
      %v1465 = vunpack.c.h.b16 %v700
      %v1466 = vunpack.c.l.b16 %v701
      %v1467 = vunpack.c.h.b16 %v701
      %v1468 = vunpack.c.l.b16 %v702
      %v1469 = vunpack.c.h.b16 %v702
      %v1470 = vunpack.c.l.b16 %v703
      %v1471 = vunpack.c.l.b16 %v704
      %v1472 = vunpack.c.h.b16 %v704
      %v1473 = vunpack.c.l.b16 %v705
      %v1474 = vunpack.c.h.b16 %v705
      %v1475 = vunpack.c.l.b16 %v706
      %v1476 = vunpack.c.h.b16 %v706
      %v1477 = vunpack.c.l.b16 %v707
      %v1478 = vunpack.c.l.b16 %v708
      %v1479 = vunpack.c.h.b16 %v708
      %v1480 = vunpack.c.l.b16 %v709
      %v1481 = vunpack.c.h.b16 %v709
      %v1482 = vunpack.c.l.b16 %v710
      %v1483 = vunpack.c.h.b16 %v710
      %v1484 = vunpack.c.l.b16 %v711
      %v1485 = vunpack.c.l.b16 %v712
      %v1486 = vunpack.c.h.b16 %v712
      %v1487 = vunpack.c.l.b16 %v713
      %v1488 = vunpack.c.h.b16 %v713
      %v1489 = vunpack.c.l.b16 %v714
      %v1490 = vunpack.c.h.b16 %v714
      %v1491 = vunpack.c.l.b16 %v715
      %v1492 = vunpack.c.l.b16 %v716
      %v1493 = vunpack.c.h.b16 %v716
      %v1494 = vunpack.c.l.b16 %v717
      %v1495 = vunpack.c.h.b16 %v717
      %v1496 = vunpack.c.l.b16 %v718
      %v1497 = vunpack.c.h.b16 %v718
      %v1498 = vunpack.c.l.b16 %v719
      %v1499 = vunpack.c.l.b16 %v720
      %v1500 = vunpack.c.h.b16 %v720
      %v1501 = vunpack.c.l.b16 %v721
      %v1502 = vunpack.c.h.b16 %v721
      %v1503 = vunpack.c.l.b16 %v722
      %v1504 = vunpack.c.h.b16 %v722
      %v1505 = vunpack.c.l.b16 %v723
      %v1506 = vunpack.c.l.b16 %v724
      %v1507 = vunpack.c.h.b16 %v724
      %v1508 = vunpack.c.l.b16 %v725
      %v1509 = vunpack.c.h.b16 %v725
      %v1510 = vunpack.c.l.b16 %v726
      %v1511 = vunpack.c.h.b16 %v726
      %v1512 = vunpack.c.l.b16 %v727
      %v1513 = vunpack.c.l.b16 %v728
      %v1514 = vunpack.c.h.b16 %v728
      %v1515 = vunpack.c.l.b16 %v729
      %v1516 = vunpack.c.h.b16 %v729
      %v1517 = vunpack.c.l.b16 %v730
      %v1518 = vunpack.c.h.b16 %v730
      %v1519 = vunpack.c.l.b16 %v731
      %v1520 = vunpack.c.l.b16 %v732
      %v1521 = vunpack.c.h.b16 %v732
      %v1522 = vunpack.c.l.b16 %v733
      %v1523 = vunpack.c.h.b16 %v733
      %v1524 = vunpack.c.l.b16 %v734
      %v1525 = vunpack.c.h.b16 %v734
      %v1526 = vunpack.c.l.b16 %v735
      %v1527 = vunpack.c.l.b16 %v736
      %v1528 = vunpack.c.h.b16 %v736
      %v1529 = vunpack.c.l.b16 %v737
      %v1530 = vunpack.c.h.b16 %v737
      %v1531 = vunpack.c.l.b16 %v738
      %v1532 = vunpack.c.h.b16 %v738
      %v1533 = vunpack.c.l.b16 %v739
      %v1534 = vunpack.c.l.b16 %v740
      %v1535 = vunpack.c.h.b16 %v740
      %v1536 = vunpack.c.l.b16 %v741
      %v1537 = vunpack.c.h.b16 %v741
      %v1538 = vunpack.c.l.b16 %v742
      %v1539 = vunpack.c.h.b16 %v742
      %v1540 = vunpack.c.l.b16 %v743
      %v1541 = vunpack.c.l.b16 %v744
      %v1542 = vunpack.c.h.b16 %v744
      %v1543 = vunpack.c.l.b16 %v745
      %v1544 = vunpack.c.h.b16 %v745
      %v1545 = vunpack.c.l.b16 %v746
      %v1546 = vunpack.c.h.b16 %v746
      %v1547 = vunpack.c.l.b16 %v747
      %v1548 = vunpack.c.l.b16 %v748
      %v1549 = vunpack.c.h.b16 %v748
      %v1550 = vunpack.c.l.b16 %v749
      %v1551 = vunpack.c.h.b16 %v749
      %v1552 = vunpack.c.l.b16 %v750
      %v1553 = vunpack.c.h.b16 %v750
      %v1554 = vunpack.c.l.b16 %v751
      %v1555 = vunpack.c.l.b16 %v752
      %v1556 = vunpack.c.h.b16 %v752
      %v1557 = vunpack.c.l.b16 %v753
      %v1558 = vunpack.c.h.b16 %v753
      %v1559 = vunpack.c.l.b16 %v754
      %v1560 = vunpack.c.h.b16 %v754
      %v1561 = vunpack.c.l.b16 %v755
      %v1562 = vunpack.c.l.b16 %v756
      %v1563 = vunpack.c.h.b16 %v756
      %v1564 = vunpack.c.l.b16 %v757
      %v1565 = vunpack.c.h.b16 %v757
      %v1566 = vunpack.c.l.b16 %v758
      %v1567 = vunpack.c.h.b16 %v758
      %v1568 = vunpack.c.l.b16 %v759
      %v1569 = vpack.c.b16 %v1128, %v1121
      %v1570 = vpack.c.b16 %v1129, %v1122
      %v1571 = vpack.c.b16 %v1130, %v1123
      %v1572 = vpack.c.b16 %v1131, %v1124
      %v1573 = vpack.c.b16 %v1132, %v1125
      %v1574 = vpack.c.b16 %v1133, %v1126
      %v1575 = vpack.c.b16 %v1134, %v1127
      %v1576 = vpack.c.b16 %v1142, %v1135
      %v1577 = vpack.c.b16 %v1143, %v1136
      %v1578 = vpack.c.b16 %v1144, %v1137
      %v1579 = vpack.c.b16 %v1145, %v1138
      %v1580 = vpack.c.b16 %v1146, %v1139
      %v1581 = vpack.c.b16 %v1147, %v1140
      %v1582 = vpack.c.b16 %v1148, %v1141
      %v1583 = vpack.c.b16 %v1156, %v1149
      %v1584 = vpack.c.b16 %v1157, %v1150
      %v1585 = vpack.c.b16 %v1158, %v1151
      %v1586 = vpack.c.b16 %v1159, %v1152
      %v1587 = vpack.c.b16 %v1160, %v1153
      %v1588 = vpack.c.b16 %v1161, %v1154
      %v1589 = vpack.c.b16 %v1162, %v1155
      %v1590 = vpack.c.b16 %v1170, %v1163
      %v1591 = vpack.c.b16 %v1171, %v1164
      %v1592 = vpack.c.b16 %v1172, %v1165
      %v1593 = vpack.c.b16 %v1173, %v1166
      %v1594 = vpack.c.b16 %v1174, %v1167
      %v1595 = vpack.c.b16 %v1175, %v1168
      %v1596 = vpack.c.b16 %v1176, %v1169
      %v1597 = vpack.c.b16 %v1184, %v1177
      %v1598 = vpack.c.b16 %v1185, %v1178
      %v1599 = vpack.c.b16 %v1186, %v1179
      %v1600 = vpack.c.b16 %v1187, %v1180
      %v1601 = vpack.c.b16 %v1188, %v1181
      %v1602 = vpack.c.b16 %v1189, %v1182
      %v1603 = vpack.c.b16 %v1190, %v1183
      %v1604 = vpack.c.b16 %v1198, %v1191
      %v1605 = vpack.c.b16 %v1199, %v1192
      %v1606 = vpack.c.b16 %v1200, %v1193
      %v1607 = vpack.c.b16 %v1201, %v1194
      %v1608 = vpack.c.b16 %v1202, %v1195
      %v1609 = vpack.c.b16 %v1203, %v1196
      %v1610 = vpack.c.b16 %v1204, %v1197
      %v1611 = vpack.c.b16 %v1212, %v1205
      %v1612 = vpack.c.b16 %v1213, %v1206
      %v1613 = vpack.c.b16 %v1214, %v1207
      %v1614 = vpack.c.b16 %v1215, %v1208
      %v1615 = vpack.c.b16 %v1216, %v1209
      %v1616 = vpack.c.b16 %v1217, %v1210
      %v1617 = vpack.c.b16 %v1218, %v1211
      %v1618 = vpack.c.b16 %v1226, %v1219
      %v1619 = vpack.c.b16 %v1227, %v1220
      %v1620 = vpack.c.b16 %v1228, %v1221
      %v1621 = vpack.c.b16 %v1229, %v1222
      %v1622 = vpack.c.b16 %v1230, %v1223
      %v1623 = vpack.c.b16 %v1231, %v1224
      %v1624 = vpack.c.b16 %v1232, %v1225
      %v1625 = vpack.c.b16 %v1240, %v1233
      %v1626 = vpack.c.b16 %v1241, %v1234
      %v1627 = vpack.c.b16 %v1242, %v1235
      %v1628 = vpack.c.b16 %v1243, %v1236
      %v1629 = vpack.c.b16 %v1244, %v1237
      %v1630 = vpack.c.b16 %v1245, %v1238
      %v1631 = vpack.c.b16 %v1246, %v1239
      %v1632 = vpack.c.b16 %v1254, %v1247
      %v1633 = vpack.c.b16 %v1255, %v1248
      %v1634 = vpack.c.b16 %v1256, %v1249
      %v1635 = vpack.c.b16 %v1257, %v1250
      %v1636 = vpack.c.b16 %v1258, %v1251
      %v1637 = vpack.c.b16 %v1259, %v1252
      %v1638 = vpack.c.b16 %v1260, %v1253
      %v1639 = vpack.c.b16 %v1268, %v1261
      %v1640 = vpack.c.b16 %v1269, %v1262
      %v1641 = vpack.c.b16 %v1270, %v1263
      %v1642 = vpack.c.b16 %v1271, %v1264
      %v1643 = vpack.c.b16 %v1272, %v1265
      %v1644 = vpack.c.b16 %v1273, %v1266
      %v1645 = vpack.c.b16 %v1274, %v1267
      %v1646 = vpack.c.b16 %v1282, %v1275
      %v1647 = vpack.c.b16 %v1283, %v1276
      %v1648 = vpack.c.b16 %v1284, %v1277
      %v1649 = vpack.c.b16 %v1285, %v1278
      %v1650 = vpack.c.b16 %v1286, %v1279
      %v1651 = vpack.c.b16 %v1287, %v1280
      %v1652 = vpack.c.b16 %v1288, %v1281
      %v1653 = vpack.c.b16 %v1296, %v1289
      %v1654 = vpack.c.b16 %v1297, %v1290
      %v1655 = vpack.c.b16 %v1298, %v1291
      %v1656 = vpack.c.b16 %v1299, %v1292
      %v1657 = vpack.c.b16 %v1300, %v1293
      %v1658 = vpack.c.b16 %v1301, %v1294
      %v1659 = vpack.c.b16 %v1302, %v1295
      %v1660 = vpack.c.b16 %v1310, %v1303
      %v1661 = vpack.c.b16 %v1311, %v1304
      %v1662 = vpack.c.b16 %v1312, %v1305
      %v1663 = vpack.c.b16 %v1313, %v1306
      %v1664 = vpack.c.b16 %v1314, %v1307
      %v1665 = vpack.c.b16 %v1315, %v1308
      %v1666 = vpack.c.b16 %v1316, %v1309
      %v1667 = vpack.c.b16 %v1324, %v1317
      %v1668 = vpack.c.b16 %v1325, %v1318
      %v1669 = vpack.c.b16 %v1326, %v1319
      %v1670 = vpack.c.b16 %v1327, %v1320
      %v1671 = vpack.c.b16 %v1328, %v1321
      %v1672 = vpack.c.b16 %v1329, %v1322
      %v1673 = vpack.c.b16 %v1330, %v1323
      %v1674 = vpack.c.b16 %v1338, %v1331
      %v1675 = vpack.c.b16 %v1339, %v1332
      %v1676 = vpack.c.b16 %v1340, %v1333
      %v1677 = vpack.c.b16 %v1341, %v1334
      %v1678 = vpack.c.b16 %v1342, %v1335
      %v1679 = vpack.c.b16 %v1343, %v1336
      %v1680 = vpack.c.b16 %v1344, %v1337
      %v1681 = vpack.c.b16 %v1352, %v1345
      %v1682 = vpack.c.b16 %v1353, %v1346
      %v1683 = vpack.c.b16 %v1354, %v1347
      %v1684 = vpack.c.b16 %v1355, %v1348
      %v1685 = vpack.c.b16 %v1356, %v1349
      %v1686 = vpack.c.b16 %v1357, %v1350
      %v1687 = vpack.c.b16 %v1358, %v1351
      %v1688 = vpack.c.b16 %v1366, %v1359
      %v1689 = vpack.c.b16 %v1367, %v1360
      %v1690 = vpack.c.b16 %v1368, %v1361
      %v1691 = vpack.c.b16 %v1369, %v1362
      %v1692 = vpack.c.b16 %v1370, %v1363
      %v1693 = vpack.c.b16 %v1371, %v1364
      %v1694 = vpack.c.b16 %v1372, %v1365
      %v1695 = vpack.c.b16 %v1380, %v1373
      %v1696 = vpack.c.b16 %v1381, %v1374
      %v1697 = vpack.c.b16 %v1382, %v1375
      %v1698 = vpack.c.b16 %v1383, %v1376
      %v1699 = vpack.c.b16 %v1384, %v1377
      %v1700 = vpack.c.b16 %v1385, %v1378
      %v1701 = vpack.c.b16 %v1386, %v1379
      %v1702 = vpack.c.b16 %v1394, %v1387
      %v1703 = vpack.c.b16 %v1395, %v1388
      %v1704 = vpack.c.b16 %v1396, %v1389
      %v1705 = vpack.c.b16 %v1397, %v1390
      %v1706 = vpack.c.b16 %v1398, %v1391
      %v1707 = vpack.c.b16 %v1399, %v1392
      %v1708 = vpack.c.b16 %v1400, %v1393
      %v1709 = vpack.c.b16 %v1408, %v1401
      %v1710 = vpack.c.b16 %v1409, %v1402
      %v1711 = vpack.c.b16 %v1410, %v1403
      %v1712 = vpack.c.b16 %v1411, %v1404
      %v1713 = vpack.c.b16 %v1412, %v1405
      %v1714 = vpack.c.b16 %v1413, %v1406
      %v1715 = vpack.c.b16 %v1414, %v1407
      %v1716 = vpack.c.b16 %v1422, %v1415
      %v1717 = vpack.c.b16 %v1423, %v1416
      %v1718 = vpack.c.b16 %v1424, %v1417
      %v1719 = vpack.c.b16 %v1425, %v1418
      %v1720 = vpack.c.b16 %v1426, %v1419
      %v1721 = vpack.c.b16 %v1427, %v1420
      %v1722 = vpack.c.b16 %v1428, %v1421
      %v1723 = vpack.c.b16 %v1436, %v1429
      %v1724 = vpack.c.b16 %v1437, %v1430
      %v1725 = vpack.c.b16 %v1438, %v1431
      %v1726 = vpack.c.b16 %v1439, %v1432
      %v1727 = vpack.c.b16 %v1440, %v1433
      %v1728 = vpack.c.b16 %v1441, %v1434
      %v1729 = vpack.c.b16 %v1442, %v1435
      %v1730 = vpack.c.b16 %v1450, %v1443
      %v1731 = vpack.c.b16 %v1451, %v1444
      %v1732 = vpack.c.b16 %v1452, %v1445
      %v1733 = vpack.c.b16 %v1453, %v1446
      %v1734 = vpack.c.b16 %v1454, %v1447
      %v1735 = vpack.c.b16 %v1455, %v1448
      %v1736 = vpack.c.b16 %v1456, %v1449
      %v1737 = vpack.c.b16 %v1464, %v1457
      %v1738 = vpack.c.b16 %v1465, %v1458
      %v1739 = vpack.c.b16 %v1466, %v1459
      %v1740 = vpack.c.b16 %v1467, %v1460
      %v1741 = vpack.c.b16 %v1468, %v1461
      %v1742 = vpack.c.b16 %v1469, %v1462
      %v1743 = vpack.c.b16 %v1470, %v1463
      %v1744 = vpack.c.b16 %v1478, %v1471
      %v1745 = vpack.c.b16 %v1479, %v1472
      %v1746 = vpack.c.b16 %v1480, %v1473
      %v1747 = vpack.c.b16 %v1481, %v1474
      %v1748 = vpack.c.b16 %v1482, %v1475
      %v1749 = vpack.c.b16 %v1483, %v1476
      %v1750 = vpack.c.b16 %v1484, %v1477
      %v1751 = vpack.c.b16 %v1492, %v1485
      %v1752 = vpack.c.b16 %v1493, %v1486
      %v1753 = vpack.c.b16 %v1494, %v1487
      %v1754 = vpack.c.b16 %v1495, %v1488
      %v1755 = vpack.c.b16 %v1496, %v1489
      %v1756 = vpack.c.b16 %v1497, %v1490
      %v1757 = vpack.c.b16 %v1498, %v1491
      %v1758 = vpack.c.b16 %v1506, %v1499
      %v1759 = vpack.c.b16 %v1507, %v1500
      %v1760 = vpack.c.b16 %v1508, %v1501
      %v1761 = vpack.c.b16 %v1509, %v1502
      %v1762 = vpack.c.b16 %v1510, %v1503
      %v1763 = vpack.c.b16 %v1511, %v1504
      %v1764 = vpack.c.b16 %v1512, %v1505
      %v1765 = vpack.c.b16 %v1520, %v1513
      %v1766 = vpack.c.b16 %v1521, %v1514
      %v1767 = vpack.c.b16 %v1522, %v1515
      %v1768 = vpack.c.b16 %v1523, %v1516
      %v1769 = vpack.c.b16 %v1524, %v1517
      %v1770 = vpack.c.b16 %v1525, %v1518
      %v1771 = vpack.c.b16 %v1526, %v1519
      %v1772 = vpack.c.b16 %v1534, %v1527
      %v1773 = vpack.c.b16 %v1535, %v1528
      %v1774 = vpack.c.b16 %v1536, %v1529
      %v1775 = vpack.c.b16 %v1537, %v1530
      %v1776 = vpack.c.b16 %v1538, %v1531
      %v1777 = vpack.c.b16 %v1539, %v1532
      %v1778 = vpack.c.b16 %v1540, %v1533
      %v1779 = vpack.c.b16 %v1548, %v1541
      %v1780 = vpack.c.b16 %v1549, %v1542
      %v1781 = vpack.c.b16 %v1550, %v1543
      %v1782 = vpack.c.b16 %v1551, %v1544
      %v1783 = vpack.c.b16 %v1552, %v1545
      %v1784 = vpack.c.b16 %v1553, %v1546
      %v1785 = vpack.c.b16 %v1554, %v1547
      %v1786 = vpack.c.b16 %v1562, %v1555
      %v1787 = vpack.c.b16 %v1563, %v1556
      %v1788 = vpack.c.b16 %v1564, %v1557
      %v1789 = vpack.c.b16 %v1565, %v1558
      %v1790 = vpack.c.b16 %v1566, %v1559
      %v1791 = vpack.c.b16 %v1567, %v1560
      %v1792 = vpack.c.b16 %v1568, %v1561
      %v2083 = vunpack.c.l.b16 %v760
      %v2084 = vunpack.c.l.b16 %v761
      %v2085 = vunpack.c.l.b16 %v762
      %v2086 = vunpack.c.l.b16 %v763
      %v2087 = vunpack.c.l.b16 %v764
      %v2088 = vunpack.c.l.b16 %v765
      %v2089 = vunpack.c.l.b16 %v766
      %v2090 = vunpack.c.l.b16 %v767
      %v2091 = vunpack.c.l.b16 %v768
      %v2092 = vunpack.c.l.b16 %v769
      %v2093 = vunpack.c.l.b16 %v770
      %v2094 = vunpack.c.l.b16 %v771
      %v2095 = vunpack.c.l.b16 %v772
      %v2096 = vunpack.c.l.b16 %v773
      %v2097 = vunpack.c.l.b16 %v774
      %v2098 = vunpack.c.l.b16 %v775
      %v2099 = vunpack.c.l.b16 %v776
      %v2100 = vunpack.c.l.b16 %v777
      %v2101 = vunpack.c.l.b16 %v778
      %v2102 = vunpack.c.l.b16 %v779
      %v2103 = vunpack.c.l.b16 %v780
      %v2104 = vunpack.c.l.b16 %v781
      %v2105 = vunpack.c.l.b16 %v782
      %v2106 = vunpack.c.l.b16 %v783
      %v2107 = vunpack.c.l.b16 %v784
      %v2108 = vunpack.c.l.b16 %v785
      %v2109 = vunpack.c.l.b16 %v786
      %v2110 = vunpack.c.l.b16 %v787
      %v2111 = vunpack.c.l.b16 %v788
      %v2112 = vunpack.c.l.b16 %v789
      %v2113 = vunpack.c.l.b16 %v790
      %v2114 = vunpack.c.l.b16 %v791
      %v2115 = vunpack.c.l.b16 %v792
      %v2116 = vunpack.c.l.b16 %v793
      %v2117 = vunpack.c.l.b16 %v794
      %v2118 = vunpack.c.l.b16 %v795
      %v2119 = vunpack.c.l.b16 %v796
      %v2120 = vunpack.c.l.b16 %v797
      %v2121 = vunpack.c.l.b16 %v798
      %v2122 = vunpack.c.l.b16 %v799
      %v2123 = vunpack.c.l.b16 %v800
      %v2124 = vunpack.c.l.b16 %v801
      %v2125 = vunpack.c.l.b16 %v802
      %v2126 = vunpack.c.l.b16 %v803
      %v2127 = vunpack.c.l.b16 %v804
      %v2128 = vunpack.c.l.b16 %v805
      %v2129 = vunpack.c.l.b16 %v806
      %v2130 = vunpack.c.l.b16 %v807
      %v2131 = vunpack.c.l.b16 %v808
      %v2132 = vunpack.c.l.b16 %v809
      %v2133 = vunpack.c.l.b16 %v810
      %v2134 = vunpack.c.l.b16 %v811
      %v2135 = vunpack.c.l.b16 %v812
      %v2136 = vunpack.c.l.b16 %v813
      %v2137 = vunpack.c.l.b16 %v814
      %v2138 = vunpack.c.l.b16 %v815
      %v2139 = vunpack.c.l.b16 %v816
      %v2140 = vunpack.c.l.b16 %v817
      %v2141 = vunpack.c.l.b16 %v818
      %v2142 = vunpack.c.l.b16 %v819
      %v2143 = vunpack.c.l.b16 %v820
      %v2144 = vunpack.c.l.b16 %v821
      %v2145 = vunpack.c.l.b16 %v822
      %v2146 = vunpack.c.l.b16 %v823
      %v2147 = vunpack.c.l.b16 %v824
      %v2148 = vunpack.c.l.b16 %v825
      %v2149 = vunpack.c.l.b16 %v826
      %v2150 = vunpack.c.l.b16 %v827
      %v2151 = vunpack.c.l.b16 %v828
      %v2152 = vunpack.c.l.b16 %v829
      %v2153 = vunpack.c.l.b16 %v830
      %v2154 = vunpack.c.l.b16 %v831
      %v2155 = vunpack.c.l.b16 %v832
      %v2156 = vunpack.c.l.b16 %v833
      %v2157 = vunpack.c.l.b16 %v834
      %v2158 = vunpack.c.l.b16 %v835
      %v2159 = vunpack.c.l.b16 %v836
      %v2160 = vunpack.c.l.b16 %v837
      %v2161 = vunpack.c.l.b16 %v838
      %v2162 = vunpack.c.l.b16 %v839
      %v2163 = vunpack.c.l.b16 %v840
      %v2164 = vunpack.c.l.b16 %v841
      %v2165 = vunpack.c.l.b16 %v842
      %v2166 = vunpack.c.l.b16 %v843
      %v2167 = vunpack.c.l.b16 %v844
      %v2168 = vunpack.c.l.b16 %v845
      %v2169 = vunpack.c.l.b16 %v846
      %v2170 = vunpack.c.l.b16 %v847
      %v2171 = vunpack.c.l.b16 %v848
      %v2172 = vunpack.c.l.b16 %v849
      %v2173 = vunpack.c.l.b16 %v850
      %v2174 = vunpack.c.l.b16 %v851
      %v2175 = vunpack.c.l.b16 %v852
      %v2176 = vunpack.c.l.b16 %v853
      %v2177 = vunpack.c.l.b16 %v854
      %v2178 = vunpack.c.l.b16 %v855
      %v2179 = vunpack.c.l.b16 %v856
      %v2180 = vunpack.c.l.b16 %v857
      %v2181 = vpack.c.b16 %v2084, %v2083
      %v2182 = vpack.c.b16 %v2086, %v2085
      %v2183 = vpack.c.b16 %v2088, %v2087
      %v2184 = vpack.c.b16 %v2090, %v2089
      %v2185 = vpack.c.b16 %v2092, %v2091
      %v2186 = vpack.c.b16 %v2094, %v2093
      %v2187 = vpack.c.b16 %v2096, %v2095
      %v2188 = vpack.c.b16 %v2098, %v2097
      %v2189 = vpack.c.b16 %v2100, %v2099
      %v2190 = vpack.c.b16 %v2102, %v2101
      %v2191 = vpack.c.b16 %v2104, %v2103
      %v2192 = vpack.c.b16 %v2106, %v2105
      %v2193 = vpack.c.b16 %v2108, %v2107
      %v2194 = vpack.c.b16 %v2110, %v2109
      %v2195 = vpack.c.b16 %v2112, %v2111
      %v2196 = vpack.c.b16 %v2114, %v2113
      %v2197 = vpack.c.b16 %v2116, %v2115
      %v2198 = vpack.c.b16 %v2118, %v2117
      %v2199 = vpack.c.b16 %v2120, %v2119
      %v2200 = vpack.c.b16 %v2122, %v2121
      %v2201 = vpack.c.b16 %v2124, %v2123
      %v2202 = vpack.c.b16 %v2126, %v2125
      %v2203 = vpack.c.b16 %v2128, %v2127
      %v2204 = vpack.c.b16 %v2130, %v2129
      %v2205 = vpack.c.b16 %v2132, %v2131
      %v2206 = vpack.c.b16 %v2134, %v2133
      %v2207 = vpack.c.b16 %v2136, %v2135
      %v2208 = vpack.c.b16 %v2138, %v2137
      %v2209 = vpack.c.b16 %v2140, %v2139
      %v2210 = vpack.c.b16 %v2142, %v2141
      %v2211 = vpack.c.b16 %v2144, %v2143
      %v2212 = vpack.c.b16 %v2146, %v2145
      %v2213 = vpack.c.b16 %v2148, %v2147
      %v2214 = vpack.c.b16 %v2150, %v2149
      %v2215 = vpack.c.b16 %v2152, %v2151
      %v2216 = vpack.c.b16 %v2154, %v2153
      %v2217 = vpack.c.b16 %v2156, %v2155
      %v2218 = vpack.c.b16 %v2158, %v2157
      %v2219 = vpack.c.b16 %v2160, %v2159
      %v2220 = vpack.c.b16 %v2162, %v2161
      %v2221 = vpack.c.b16 %v2164, %v2163
      %v2222 = vpack.c.b16 %v2166, %v2165
      %v2223 = vpack.c.b16 %v2168, %v2167
      %v2224 = vpack.c.b16 %v2170, %v2169
      %v2225 = vpack.c.b16 %v2172, %v2171
      %v2226 = vpack.c.b16 %v2174, %v2173
      %v2227 = vpack.c.b16 %v2176, %v2175
      %v2228 = vpack.c.b16 %v2178, %v2177
      %v2229 = vpack.c.b16 %v2180, %v2179
      %vm2279 = vcmask 130048
      %v2281 = vsel %vm2279, %v1575, 0
      %v2284 = vsel %vm2279, %v1582, 0
      %v2287 = vsel %vm2279, %v1589, 0
      %v2290 = vsel %vm2279, %v1596, 0
      %v2293 = vsel %vm2279, %v1603, 0
      %v2296 = vsel %vm2279, %v1610, 0
      %v2299 = vsel %vm2279, %v1617, 0
      %v2302 = vsel %vm2279, %v1624, 0
      %v2305 = vsel %vm2279, %v1631, 0
      %v2308 = vsel %vm2279, %v1638, 0
      %v2311 = vsel %vm2279, %v1645, 0
      %v2314 = vsel %vm2279, %v1652, 0
      %v2317 = vsel %vm2279, %v1659, 0
      %v2320 = vsel %vm2279, %v1666, 0
      %v2323 = vsel %vm2279, %v1673, 0
      %v2326 = vsel %vm2279, %v1680, 0
      %v2329 = vsel %vm2279, %v1687, 0
      %v2332 = vsel %vm2279, %v1694, 0
      %v2335 = vsel %vm2279, %v1701, 0
      %v2338 = vsel %vm2279, %v1708, 0
      %v2341 = vsel %vm2279, %v1715, 0
      %v2344 = vsel %vm2279, %v1722, 0
      %v2347 = vsel %vm2279, %v1729, 0
      %v2350 = vsel %vm2279, %v1736, 0
      %v2353 = vsel %vm2279, %v1743, 0
      %v2356 = vsel %vm2279, %v1750, 0
      %v2359 = vsel %vm2279, %v1757, 0
      %v2362 = vsel %vm2279, %v1764, 0
      %v2365 = vsel %vm2279, %v1771, 0
      %v2368 = vsel %vm2279, %v1778, 0
      %v2371 = vsel %vm2279, %v1785, 0
      %v2374 = vsel %vm2279, %v1792, 0
      %2376 = vmatprep.subr.bf16.mxu0 0
      %2377 = vmatpush1.bf16.msra.mxu0 %v2181
      %2378 = vmatprep.subr.bf16.mxu0 0
      %2379 = vmatpush1.bf16.msra.mxu0 %v2182
      %2380 = vmatprep.subr.bf16.mxu0 0
      %2381 = vmatpush1.bf16.msra.mxu0 %v2183
      %2382 = vmatprep.subr.bf16.mxu0 0
      %2383 = vmatpush1.bf16.msra.mxu0 %v2184
      %2384 = vmatprep.subr.bf16.mxu0 0
      %2385 = vmatpush1.bf16.msra.mxu0 %v2185
      %2386 = vmatprep.subr.bf16.mxu0 0
      %2387 = vmatpush1.bf16.msra.mxu0 %v2186
      %2388 = vmatprep.subr.bf16.mxu0 0
      %2389 = vmatpush1.bf16.msra.mxu0 %v2187
      %2390 = vmatprep.subr.bf16.mxu0 0
      %2391 = vmatpush1.bf16.msra.mxu0 %v2188
      %2392 = vmatprep.subr.bf16.mxu0 0
      %2393 = vmatpush1.bf16.msra.mxu0 %v2189
      %2394 = vmatprep.subr.bf16.mxu0 0
      %2395 = vmatpush1.bf16.msra.mxu0 %v2190
      %2396 = vmatprep.subr.bf16.mxu0 0
      %2397 = vmatpush1.bf16.msra.mxu0 %v2191
      %2398 = vmatprep.subr.bf16.mxu0 0
      %2399 = vmatpush1.bf16.msra.mxu0 %v2192
      %2400 = vmatprep.subr.bf16.mxu0 0
      %2401 = vmatpush1.bf16.msra.mxu0 %v2193
      %2402 = vmatprep.subr.bf16.mxu0 0
      %2403 = vmatpush1.bf16.msra.mxu0 %v2194
      %2404 = vmatprep.subr.bf16.mxu0 0
      %2405 = vmatpush1.bf16.msra.mxu0 %v2195
      %2406 = vmatprep.subr.bf16.mxu0 0
      %2407 = vmatpush1.bf16.msra.mxu0 %v2196
      %2408 = vmatprep.mubr.bf16.mxu0 %v1570
      %2409 = vmatmul.mubr.bf16.gmra.mrb[0].mxu0 %v1569
      %v2410 = vpop.f32.mrb[0].mxu0
      %v2411 = vadd.f32 %v863, %v2410
      %v2412 = vpop.f32.mrb[0].mxu0
      %v2413 = vpop.f32.mrb[0].mxu0
      %v2414 = vadd.f32 %v863, %v2413
      %v2415 = vpop.f32.mrb[0].mxu0
      %2416 = vmatprep.mubr.bf16.mxu0 %v1577
      %2417 = vmatmul.mubr.bf16.gmra.mrb[0].mxu0 %v1576
      %v2418 = vpop.f32.mrb[0].mxu0
      %v2419 = vadd.f32 %v863, %v2418
      %v2420 = vpop.f32.mrb[0].mxu0
      %v2421 = vpop.f32.mrb[0].mxu0
      %v2422 = vadd.f32 %v863, %v2421
      %v2423 = vpop.f32.mrb[0].mxu0
      %2424 = vmatprep.mubr.bf16.mxu0 %v1584
      %2425 = vmatmul.mubr.bf16.gmra.mrb[0].mxu0 %v1583
      %v2426 = vpop.f32.mrb[0].mxu0
      %v2427 = vadd.f32 %v863, %v2426
      %v2428 = vpop.f32.mrb[0].mxu0
      %v2429 = vpop.f32.mrb[0].mxu0
      %v2430 = vadd.f32 %v863, %v2429
      %v2431 = vpop.f32.mrb[0].mxu0
      %2432 = vmatprep.mubr.bf16.mxu0 %v1591
      %2433 = vmatmul.mubr.bf16.gmra.mrb[0].mxu0 %v1590
      %v2434 = vpop.f32.mrb[0].mxu0
      %v2435 = vadd.f32 %v863, %v2434
      %v2436 = vpop.f32.mrb[0].mxu0
      %v2437 = vpop.f32.mrb[0].mxu0
      %v2438 = vadd.f32 %v863, %v2437
      %v2439 = vpop.f32.mrb[0].mxu0
      %2440 = vmatprep.mubr.bf16.mxu0 %v1598
      %2441 = vmatmul.mubr.bf16.gmra.mrb[0].mxu0 %v1597
      %v2442 = vpop.f32.mrb[0].mxu0
      %v2443 = vadd.f32 %v863, %v2442
      %v2444 = vpop.f32.mrb[0].mxu0
      %v2445 = vpop.f32.mrb[0].mxu0
      %v2446 = vadd.f32 %v863, %v2445
      %v2447 = vpop.f32.mrb[0].mxu0
      %2448 = vmatprep.mubr.bf16.mxu0 %v1605
      %2449 = vmatmul.mubr.bf16.gmra.mrb[0].mxu0 %v1604
      %v2450 = vpop.f32.mrb[0].mxu0
      %v2451 = vadd.f32 %v863, %v2450
      %v2452 = vpop.f32.mrb[0].mxu0
      %v2453 = vpop.f32.mrb[0].mxu0
      %v2454 = vadd.f32 %v863, %v2453
      %v2455 = vpop.f32.mrb[0].mxu0
      %2456 = vmatprep.mubr.bf16.mxu0 %v1612
      %2457 = vmatmul.mubr.bf16.gmra.mrb[0].mxu0 %v1611
      %v2458 = vpop.f32.mrb[0].mxu0
      %v2459 = vadd.f32 %v863, %v2458
      %v2460 = vpop.f32.mrb[0].mxu0
      %v2461 = vpop.f32.mrb[0].mxu0
      %v2462 = vadd.f32 %v863, %v2461
      %v2463 = vpop.f32.mrb[0].mxu0
      %2464 = vmatprep.mubr.bf16.mxu0 %v1619
      %2465 = vmatmul.mubr.bf16.gmra.mrb[0].mxu0 %v1618
      %v2466 = vpop.f32.mrb[0].mxu0
      %v2467 = vadd.f32 %v863, %v2466
      %v2468 = vpop.f32.mrb[0].mxu0
      %v2469 = vpop.f32.mrb[0].mxu0
      %v2470 = vadd.f32 %v863, %v2469
      %v2471 = vpop.f32.mrb[0].mxu0
      %2472 = vmatprep.mubr.bf16.mxu0 %v1626
      %2473 = vmatmul.mubr.bf16.gmra.mrb[0].mxu0 %v1625
      %v2474 = vpop.f32.mrb[0].mxu0
      %v2475 = vadd.f32 %v863, %v2474
      %v2476 = vpop.f32.mrb[0].mxu0
      %v2477 = vpop.f32.mrb[0].mxu0
      %v2478 = vadd.f32 %v863, %v2477
      %v2479 = vpop.f32.mrb[0].mxu0
      %2480 = vmatprep.mubr.bf16.mxu0 %v1633
      %2481 = vmatmul.mubr.bf16.gmra.mrb[0].mxu0 %v1632
      %v2482 = vpop.f32.mrb[0].mxu0
      %v2483 = vadd.f32 %v863, %v2482
      %v2484 = vpop.f32.mrb[0].mxu0
      %v2485 = vpop.f32.mrb[0].mxu0
      %v2486 = vadd.f32 %v863, %v2485
      %v2487 = vpop.f32.mrb[0].mxu0
      %2488 = vmatprep.mubr.bf16.mxu0 %v1640
      %2489 = vmatmul.mubr.bf16.gmra.mrb[0].mxu0 %v1639
      %v2490 = vpop.f32.mrb[0].mxu0
      %v2491 = vadd.f32 %v863, %v2490
      %v2492 = vpop.f32.mrb[0].mxu0
      %v2493 = vpop.f32.mrb[0].mxu0
      %v2494 = vadd.f32 %v863, %v2493
      %v2495 = vpop.f32.mrb[0].mxu0
      %2496 = vmatprep.mubr.bf16.mxu0 %v1647
      %2497 = vmatmul.mubr.bf16.gmra.mrb[0].mxu0 %v1646
      %v2498 = vpop.f32.mrb[0].mxu0
      %v2499 = vadd.f32 %v863, %v2498
      %v2500 = vpop.f32.mrb[0].mxu0
      %v2501 = vpop.f32.mrb[0].mxu0
      %v2502 = vadd.f32 %v863, %v2501
      %v2503 = vpop.f32.mrb[0].mxu0
      %2504 = vmatprep.mubr.bf16.mxu0 %v1654
      %2505 = vmatmul.mubr.bf16.gmra.mrb[0].mxu0 %v1653
      %v2506 = vpop.f32.mrb[0].mxu0
      %v2507 = vadd.f32 %v863, %v2506
      %v2508 = vpop.f32.mrb[0].mxu0
      %v2509 = vpop.f32.mrb[0].mxu0
      %v2510 = vadd.f32 %v863, %v2509
      %v2511 = vpop.f32.mrb[0].mxu0
      %2512 = vmatprep.mubr.bf16.mxu0 %v1661
      %2513 = vmatmul.mubr.bf16.gmra.mrb[0].mxu0 %v1660
      %v2514 = vpop.f32.mrb[0].mxu0
      %v2515 = vadd.f32 %v863, %v2514
      %v2516 = vpop.f32.mrb[0].mxu0
      %v2517 = vpop.f32.mrb[0].mxu0
      %v2518 = vadd.f32 %v863, %v2517
      %v2519 = vpop.f32.mrb[0].mxu0
      %2520 = vmatprep.mubr.bf16.mxu0 %v1668
      %2521 = vmatmul.mubr.bf16.gmra.mrb[0].mxu0 %v1667
      %v2522 = vpop.f32.mrb[0].mxu0
      %v2523 = vadd.f32 %v863, %v2522
      %v2524 = vpop.f32.mrb[0].mxu0
      %v2525 = vpop.f32.mrb[0].mxu0
      %v2526 = vadd.f32 %v863, %v2525
      %v2527 = vpop.f32.mrb[0].mxu0
      %2528 = vmatprep.mubr.bf16.mxu0 %v1675
      %2529 = vmatmul.mubr.bf16.gmra.mrb[0].mxu0 %v1674
      %v2530 = vpop.f32.mrb[0].mxu0
      %v2531 = vadd.f32 %v863, %v2530
      %v2532 = vpop.f32.mrb[0].mxu0
      %v2533 = vpop.f32.mrb[0].mxu0
      %v2534 = vadd.f32 %v863, %v2533
      %v2535 = vpop.f32.mrb[0].mxu0
      %2536 = vmatprep.mubr.bf16.mxu0 %v1682
      %2537 = vmatmul.mubr.bf16.gmra.mrb[0].mxu0 %v1681
      %v2538 = vpop.f32.mrb[0].mxu0
      %v2539 = vadd.f32 %v863, %v2538
      %v2540 = vpop.f32.mrb[0].mxu0
      %v2541 = vpop.f32.mrb[0].mxu0
      %v2542 = vadd.f32 %v863, %v2541
      %v2543 = vpop.f32.mrb[0].mxu0
      %2544 = vmatprep.mubr.bf16.mxu0 %v1689
      %2545 = vmatmul.mubr.bf16.gmra.mrb[0].mxu0 %v1688
      %v2546 = vpop.f32.mrb[0].mxu0
      %v2547 = vadd.f32 %v863, %v2546
      %v2548 = vpop.f32.mrb[0].mxu0
      %v2549 = vpop.f32.mrb[0].mxu0
      %v2550 = vadd.f32 %v863, %v2549
      %v2551 = vpop.f32.mrb[0].mxu0
      %2552 = vmatprep.mubr.bf16.mxu0 %v1696
      %2553 = vmatmul.mubr.bf16.gmra.mrb[0].mxu0 %v1695
      %v2554 = vpop.f32.mrb[0].mxu0
      %v2555 = vadd.f32 %v863, %v2554
      %v2556 = vpop.f32.mrb[0].mxu0
      %v2557 = vpop.f32.mrb[0].mxu0
      %v2558 = vadd.f32 %v863, %v2557
      %v2559 = vpop.f32.mrb[0].mxu0
      %2560 = vmatprep.mubr.bf16.mxu0 %v1703
      %2561 = vmatmul.mubr.bf16.gmra.mrb[0].mxu0 %v1702
      %v2562 = vpop.f32.mrb[0].mxu0
      %v2563 = vadd.f32 %v863, %v2562
      %v2564 = vpop.f32.mrb[0].mxu0
      %v2565 = vpop.f32.mrb[0].mxu0
      %v2566 = vadd.f32 %v863, %v2565
      %v2567 = vpop.f32.mrb[0].mxu0
      %2568 = vmatprep.mubr.bf16.mxu0 %v1710
      %2569 = vmatmul.mubr.bf16.gmra.mrb[0].mxu0 %v1709
      %v2570 = vpop.f32.mrb[0].mxu0
      %v2571 = vadd.f32 %v863, %v2570
      %v2572 = vpop.f32.mrb[0].mxu0
      %v2573 = vpop.f32.mrb[0].mxu0
      %v2574 = vadd.f32 %v863, %v2573
      %v2575 = vpop.f32.mrb[0].mxu0
      %2576 = vmatprep.mubr.bf16.mxu0 %v1717
      %2577 = vmatmul.mubr.bf16.gmra.mrb[0].mxu0 %v1716
      %v2578 = vpop.f32.mrb[0].mxu0
      %v2579 = vadd.f32 %v863, %v2578
      %v2580 = vpop.f32.mrb[0].mxu0
      %v2581 = vpop.f32.mrb[0].mxu0
      %v2582 = vadd.f32 %v863, %v2581
      %v2583 = vpop.f32.mrb[0].mxu0
      %2584 = vmatprep.mubr.bf16.mxu0 %v1724
      %2585 = vmatmul.mubr.bf16.gmra.mrb[0].mxu0 %v1723
      %v2586 = vpop.f32.mrb[0].mxu0
      %v2587 = vadd.f32 %v863, %v2586
      %v2588 = vpop.f32.mrb[0].mxu0
      %v2589 = vpop.f32.mrb[0].mxu0
      %v2590 = vadd.f32 %v863, %v2589
      %v2591 = vpop.f32.mrb[0].mxu0
      %2592 = vmatprep.mubr.bf16.mxu0 %v1731
      %2593 = vmatmul.mubr.bf16.gmra.mrb[0].mxu0 %v1730
      %v2594 = vpop.f32.mrb[0].mxu0
      %v2595 = vadd.f32 %v863, %v2594
      %v2596 = vpop.f32.mrb[0].mxu0
      %v2597 = vpop.f32.mrb[0].mxu0
      %v2598 = vadd.f32 %v863, %v2597
      %v2599 = vpop.f32.mrb[0].mxu0
      %2600 = vmatprep.mubr.bf16.mxu0 %v1738
      %2601 = vmatmul.mubr.bf16.gmra.mrb[0].mxu0 %v1737
      %v2602 = vpop.f32.mrb[0].mxu0
      %v2603 = vadd.f32 %v863, %v2602
      %v2604 = vpop.f32.mrb[0].mxu0
      %v2605 = vpop.f32.mrb[0].mxu0
      %v2606 = vadd.f32 %v863, %v2605
      %v2607 = vpop.f32.mrb[0].mxu0
      %2608 = vmatprep.mubr.bf16.mxu0 %v1745
      %2609 = vmatmul.mubr.bf16.gmra.mrb[0].mxu0 %v1744
      %v2610 = vpop.f32.mrb[0].mxu0
      %v2611 = vadd.f32 %v863, %v2610
      %v2612 = vpop.f32.mrb[0].mxu0
      %v2613 = vpop.f32.mrb[0].mxu0
      %v2614 = vadd.f32 %v863, %v2613
      %v2615 = vpop.f32.mrb[0].mxu0
      %2616 = vmatprep.mubr.bf16.mxu0 %v1752
      %2617 = vmatmul.mubr.bf16.gmra.mrb[0].mxu0 %v1751
      %v2618 = vpop.f32.mrb[0].mxu0
      %v2619 = vadd.f32 %v863, %v2618
      %v2620 = vpop.f32.mrb[0].mxu0
      %v2621 = vpop.f32.mrb[0].mxu0
      %v2622 = vadd.f32 %v863, %v2621
      %v2623 = vpop.f32.mrb[0].mxu0
      %2624 = vmatprep.mubr.bf16.mxu0 %v1759
      %2625 = vmatmul.mubr.bf16.gmra.mrb[0].mxu0 %v1758
      %v2626 = vpop.f32.mrb[0].mxu0
      %v2627 = vadd.f32 %v863, %v2626
      %v2628 = vpop.f32.mrb[0].mxu0
      %v2629 = vpop.f32.mrb[0].mxu0
      %v2630 = vadd.f32 %v863, %v2629
      %v2631 = vpop.f32.mrb[0].mxu0
      %2632 = vmatprep.mubr.bf16.mxu0 %v1766
      %2633 = vmatmul.mubr.bf16.gmra.mrb[0].mxu0 %v1765
      %v2634 = vpop.f32.mrb[0].mxu0
      %v2635 = vadd.f32 %v863, %v2634
      %v2636 = vpop.f32.mrb[0].mxu0
      %v2637 = vpop.f32.mrb[0].mxu0
      %v2638 = vadd.f32 %v863, %v2637
      %v2639 = vpop.f32.mrb[0].mxu0
      %2640 = vmatprep.mubr.bf16.mxu0 %v1773
      %2641 = vmatmul.mubr.bf16.gmra.mrb[0].mxu0 %v1772
      %v2642 = vpop.f32.mrb[0].mxu0
      %v2643 = vadd.f32 %v863, %v2642
      %v2644 = vpop.f32.mrb[0].mxu0
      %v2645 = vpop.f32.mrb[0].mxu0
      %v2646 = vadd.f32 %v863, %v2645
      %v2647 = vpop.f32.mrb[0].mxu0
      %2648 = vmatprep.mubr.bf16.mxu0 %v1780
      %2649 = vmatmul.mubr.bf16.gmra.mrb[0].mxu0 %v1779
      %v2650 = vpop.f32.mrb[0].mxu0
      %v2651 = vadd.f32 %v863, %v2650
      %v2652 = vpop.f32.mrb[0].mxu0
      %v2653 = vpop.f32.mrb[0].mxu0
      %v2654 = vadd.f32 %v863, %v2653
      %v2655 = vpop.f32.mrb[0].mxu0
      %2656 = vmatprep.mubr.bf16.mxu0 %v1787
      %2657 = vmatmul.mubr.bf16.gmra.mrb[0].mxu0 %v1786
      %v2658 = vpop.f32.mrb[0].mxu0
      %v2659 = vadd.f32 %v863, %v2658
      %v2660 = vpop.f32.mrb[0].mxu0
      %v2661 = vpop.f32.mrb[0].mxu0
      %v2662 = vadd.f32 %v863, %v2661
      %v2663 = vpop.f32.mrb[0].mxu0
      %2664 = vdwg.mxu0
      %2665 = vmatprep.subr.bf16.mxu0 0
      %2666 = vmatpush1.bf16.msra.mxu0 %v2197
      %2667 = vmatprep.subr.bf16.mxu0 0
      %2668 = vmatpush1.bf16.msra.mxu0 %v2198
      %2669 = vmatprep.subr.bf16.mxu0 0
      %2670 = vmatpush1.bf16.msra.mxu0 %v2199
      %2671 = vmatprep.subr.bf16.mxu0 0
      %2672 = vmatpush1.bf16.msra.mxu0 %v2200
      %2673 = vmatprep.subr.bf16.mxu0 0
      %2674 = vmatpush1.bf16.msra.mxu0 %v2201
      %2675 = vmatprep.subr.bf16.mxu0 0
      %2676 = vmatpush1.bf16.msra.mxu0 %v2202
      %2677 = vmatprep.subr.bf16.mxu0 0
      %2678 = vmatpush1.bf16.msra.mxu0 %v2203
      %2679 = vmatprep.subr.bf16.mxu0 0
      %2680 = vmatpush1.bf16.msra.mxu0 %v2204
      %2681 = vmatprep.subr.bf16.mxu0 0
      %2682 = vmatpush1.bf16.msra.mxu0 %v2205
      %2683 = vmatprep.subr.bf16.mxu0 0
      %2684 = vmatpush1.bf16.msra.mxu0 %v2206
      %2685 = vmatprep.subr.bf16.mxu0 0
      %2686 = vmatpush1.bf16.msra.mxu0 %v2207
      %2687 = vmatprep.subr.bf16.mxu0 0
      %2688 = vmatpush1.bf16.msra.mxu0 %v2208
      %2689 = vmatprep.subr.bf16.mxu0 0
      %2690 = vmatpush1.bf16.msra.mxu0 %v2209
      %2691 = vmatprep.subr.bf16.mxu0 0
      %2692 = vmatpush1.bf16.msra.mxu0 %v2210
      %2693 = vmatprep.subr.bf16.mxu0 0
      %2694 = vmatpush1.bf16.msra.mxu0 %v2211
      %2695 = vmatprep.subr.bf16.mxu0 0
      %2696 = vmatpush1.bf16.msra.mxu0 %v2212
      %2697 = vmatprep.mubr.bf16.mxu0 %v1572
      %2698 = vmatmul.mubr.bf16.gmra.mrb[0].mxu0 %v1571
      %v2699 = vpop.f32.mrb[0].mxu0
      %v2700 = vadd.f32 %v2411, %v2699
      %v2701 = vpop.f32.mrb[0].mxu0
      %v2702 = vpop.f32.mrb[0].mxu0
      %v2703 = vadd.f32 %v2414, %v2702
      %v2704 = vpop.f32.mrb[0].mxu0
      %2705 = vmatprep.mubr.bf16.mxu0 %v1579
      %2706 = vmatmul.mubr.bf16.gmra.mrb[0].mxu0 %v1578
      %v2707 = vpop.f32.mrb[0].mxu0
      %v2708 = vadd.f32 %v2419, %v2707
      %v2709 = vpop.f32.mrb[0].mxu0
      %v2710 = vpop.f32.mrb[0].mxu0
      %v2711 = vadd.f32 %v2422, %v2710
      %v2712 = vpop.f32.mrb[0].mxu0
      %2713 = vmatprep.mubr.bf16.mxu0 %v1586
      %2714 = vmatmul.mubr.bf16.gmra.mrb[0].mxu0 %v1585
      %v2715 = vpop.f32.mrb[0].mxu0
      %v2716 = vadd.f32 %v2427, %v2715
      %v2717 = vpop.f32.mrb[0].mxu0
      %v2718 = vpop.f32.mrb[0].mxu0
      %v2719 = vadd.f32 %v2430, %v2718
      %v2720 = vpop.f32.mrb[0].mxu0
      %2721 = vmatprep.mubr.bf16.mxu0 %v1593
      %2722 = vmatmul.mubr.bf16.gmra.mrb[0].mxu0 %v1592
      %v2723 = vpop.f32.mrb[0].mxu0
      %v2724 = vadd.f32 %v2435, %v2723
      %v2725 = vpop.f32.mrb[0].mxu0
      %v2726 = vpop.f32.mrb[0].mxu0
      %v2727 = vadd.f32 %v2438, %v2726
      %v2728 = vpop.f32.mrb[0].mxu0
      %2729 = vmatprep.mubr.bf16.mxu0 %v1600
      %2730 = vmatmul.mubr.bf16.gmra.mrb[0].mxu0 %v1599
      %v2731 = vpop.f32.mrb[0].mxu0
      %v2732 = vadd.f32 %v2443, %v2731
      %v2733 = vpop.f32.mrb[0].mxu0
      %v2734 = vpop.f32.mrb[0].mxu0
      %v2735 = vadd.f32 %v2446, %v2734
      %v2736 = vpop.f32.mrb[0].mxu0
      %2737 = vmatprep.mubr.bf16.mxu0 %v1607
      %2738 = vmatmul.mubr.bf16.gmra.mrb[0].mxu0 %v1606
      %v2739 = vpop.f32.mrb[0].mxu0
      %v2740 = vadd.f32 %v2451, %v2739
      %v2741 = vpop.f32.mrb[0].mxu0
      %v2742 = vpop.f32.mrb[0].mxu0
      %v2743 = vadd.f32 %v2454, %v2742
      %v2744 = vpop.f32.mrb[0].mxu0
      %2745 = vmatprep.mubr.bf16.mxu0 %v1614
      %2746 = vmatmul.mubr.bf16.gmra.mrb[0].mxu0 %v1613
      %v2747 = vpop.f32.mrb[0].mxu0
      %v2748 = vadd.f32 %v2459, %v2747
      %v2749 = vpop.f32.mrb[0].mxu0
      %v2750 = vpop.f32.mrb[0].mxu0
      %v2751 = vadd.f32 %v2462, %v2750
      %v2752 = vpop.f32.mrb[0].mxu0
      %2753 = vmatprep.mubr.bf16.mxu0 %v1621
      %2754 = vmatmul.mubr.bf16.gmra.mrb[0].mxu0 %v1620
      %v2755 = vpop.f32.mrb[0].mxu0
      %v2756 = vadd.f32 %v2467, %v2755
      %v2757 = vpop.f32.mrb[0].mxu0
      %v2758 = vpop.f32.mrb[0].mxu0
      %v2759 = vadd.f32 %v2470, %v2758
      %v2760 = vpop.f32.mrb[0].mxu0
      %2761 = vmatprep.mubr.bf16.mxu0 %v1628
      %2762 = vmatmul.mubr.bf16.gmra.mrb[0].mxu0 %v1627
      %v2763 = vpop.f32.mrb[0].mxu0
      %v2764 = vadd.f32 %v2475, %v2763
      %v2765 = vpop.f32.mrb[0].mxu0
      %v2766 = vpop.f32.mrb[0].mxu0
      %v2767 = vadd.f32 %v2478, %v2766
      %v2768 = vpop.f32.mrb[0].mxu0
      %2769 = vmatprep.mubr.bf16.mxu0 %v1635
      %2770 = vmatmul.mubr.bf16.gmra.mrb[0].mxu0 %v1634
      %v2771 = vpop.f32.mrb[0].mxu0
      %v2772 = vadd.f32 %v2483, %v2771
      %v2773 = vpop.f32.mrb[0].mxu0
      %v2774 = vpop.f32.mrb[0].mxu0
      %v2775 = vadd.f32 %v2486, %v2774
      %v2776 = vpop.f32.mrb[0].mxu0
      %2777 = vmatprep.mubr.bf16.mxu0 %v1642
      %2778 = vmatmul.mubr.bf16.gmra.mrb[0].mxu0 %v1641
      %v2779 = vpop.f32.mrb[0].mxu0
      %v2780 = vadd.f32 %v2491, %v2779
      %v2781 = vpop.f32.mrb[0].mxu0
      %v2782 = vpop.f32.mrb[0].mxu0
      %v2783 = vadd.f32 %v2494, %v2782
      %v2784 = vpop.f32.mrb[0].mxu0
      %2785 = vmatprep.mubr.bf16.mxu0 %v1649
      %2786 = vmatmul.mubr.bf16.gmra.mrb[0].mxu0 %v1648
      %v2787 = vpop.f32.mrb[0].mxu0
      %v2788 = vadd.f32 %v2499, %v2787
      %v2789 = vpop.f32.mrb[0].mxu0
      %v2790 = vpop.f32.mrb[0].mxu0
      %v2791 = vadd.f32 %v2502, %v2790
      %v2792 = vpop.f32.mrb[0].mxu0
      %2793 = vmatprep.mubr.bf16.mxu0 %v1656
      %2794 = vmatmul.mubr.bf16.gmra.mrb[0].mxu0 %v1655
      %v2795 = vpop.f32.mrb[0].mxu0
      %v2796 = vadd.f32 %v2507, %v2795
      %v2797 = vpop.f32.mrb[0].mxu0
      %v2798 = vpop.f32.mrb[0].mxu0
      %v2799 = vadd.f32 %v2510, %v2798
      %v2800 = vpop.f32.mrb[0].mxu0
      %2801 = vmatprep.mubr.bf16.mxu0 %v1663
      %2802 = vmatmul.mubr.bf16.gmra.mrb[0].mxu0 %v1662
      %v2803 = vpop.f32.mrb[0].mxu0
      %v2804 = vadd.f32 %v2515, %v2803
      %v2805 = vpop.f32.mrb[0].mxu0
      %v2806 = vpop.f32.mrb[0].mxu0
      %v2807 = vadd.f32 %v2518, %v2806
      %v2808 = vpop.f32.mrb[0].mxu0
      %2809 = vmatprep.mubr.bf16.mxu0 %v1670
      %2810 = vmatmul.mubr.bf16.gmra.mrb[0].mxu0 %v1669
      %v2811 = vpop.f32.mrb[0].mxu0
      %v2812 = vadd.f32 %v2523, %v2811
      %v2813 = vpop.f32.mrb[0].mxu0
      %v2814 = vpop.f32.mrb[0].mxu0
      %v2815 = vadd.f32 %v2526, %v2814
      %v2816 = vpop.f32.mrb[0].mxu0
      %2817 = vmatprep.mubr.bf16.mxu0 %v1677
      %2818 = vmatmul.mubr.bf16.gmra.mrb[0].mxu0 %v1676
      %v2819 = vpop.f32.mrb[0].mxu0
      %v2820 = vadd.f32 %v2531, %v2819
      %v2821 = vpop.f32.mrb[0].mxu0
      %v2822 = vpop.f32.mrb[0].mxu0
      %v2823 = vadd.f32 %v2534, %v2822
      %v2824 = vpop.f32.mrb[0].mxu0
      %2825 = vmatprep.mubr.bf16.mxu0 %v1684
      %2826 = vmatmul.mubr.bf16.gmra.mrb[0].mxu0 %v1683
      %v2827 = vpop.f32.mrb[0].mxu0
      %v2828 = vadd.f32 %v2539, %v2827
      %v2829 = vpop.f32.mrb[0].mxu0
      %v2830 = vpop.f32.mrb[0].mxu0
      %v2831 = vadd.f32 %v2542, %v2830
      %v2832 = vpop.f32.mrb[0].mxu0
      %2833 = vmatprep.mubr.bf16.mxu0 %v1691
      %2834 = vmatmul.mubr.bf16.gmra.mrb[0].mxu0 %v1690
      %v2835 = vpop.f32.mrb[0].mxu0
      %v2836 = vadd.f32 %v2547, %v2835
      %v2837 = vpop.f32.mrb[0].mxu0
      %v2838 = vpop.f32.mrb[0].mxu0
      %v2839 = vadd.f32 %v2550, %v2838
      %v2840 = vpop.f32.mrb[0].mxu0
      %2841 = vmatprep.mubr.bf16.mxu0 %v1698
      %2842 = vmatmul.mubr.bf16.gmra.mrb[0].mxu0 %v1697
      %v2843 = vpop.f32.mrb[0].mxu0
      %v2844 = vadd.f32 %v2555, %v2843
      %v2845 = vpop.f32.mrb[0].mxu0
      %v2846 = vpop.f32.mrb[0].mxu0
      %v2847 = vadd.f32 %v2558, %v2846
      %v2848 = vpop.f32.mrb[0].mxu0
      %2849 = vmatprep.mubr.bf16.mxu0 %v1705
      %2850 = vmatmul.mubr.bf16.gmra.mrb[0].mxu0 %v1704
      %v2851 = vpop.f32.mrb[0].mxu0
      %v2852 = vadd.f32 %v2563, %v2851
      %v2853 = vpop.f32.mrb[0].mxu0
      %v2854 = vpop.f32.mrb[0].mxu0
      %v2855 = vadd.f32 %v2566, %v2854
      %v2856 = vpop.f32.mrb[0].mxu0
      %2857 = vmatprep.mubr.bf16.mxu0 %v1712
      %2858 = vmatmul.mubr.bf16.gmra.mrb[0].mxu0 %v1711
      %v2859 = vpop.f32.mrb[0].mxu0
      %v2860 = vadd.f32 %v2571, %v2859
      %v2861 = vpop.f32.mrb[0].mxu0
      %v2862 = vpop.f32.mrb[0].mxu0
      %v2863 = vadd.f32 %v2574, %v2862
      %v2864 = vpop.f32.mrb[0].mxu0
      %2865 = vmatprep.mubr.bf16.mxu0 %v1719
      %2866 = vmatmul.mubr.bf16.gmra.mrb[0].mxu0 %v1718
      %v2867 = vpop.f32.mrb[0].mxu0
      %v2868 = vadd.f32 %v2579, %v2867
      %v2869 = vpop.f32.mrb[0].mxu0
      %v2870 = vpop.f32.mrb[0].mxu0
      %v2871 = vadd.f32 %v2582, %v2870
      %v2872 = vpop.f32.mrb[0].mxu0
      %2873 = vmatprep.mubr.bf16.mxu0 %v1726
      %2874 = vmatmul.mubr.bf16.gmra.mrb[0].mxu0 %v1725
      %v2875 = vpop.f32.mrb[0].mxu0
      %v2876 = vadd.f32 %v2587, %v2875
      %v2877 = vpop.f32.mrb[0].mxu0
      %v2878 = vpop.f32.mrb[0].mxu0
      %v2879 = vadd.f32 %v2590, %v2878
      %v2880 = vpop.f32.mrb[0].mxu0
      %2881 = vmatprep.mubr.bf16.mxu0 %v1733
      %2882 = vmatmul.mubr.bf16.gmra.mrb[0].mxu0 %v1732
      %v2883 = vpop.f32.mrb[0].mxu0
      %v2884 = vadd.f32 %v2595, %v2883
      %v2885 = vpop.f32.mrb[0].mxu0
      %v2886 = vpop.f32.mrb[0].mxu0
      %v2887 = vadd.f32 %v2598, %v2886
      %v2888 = vpop.f32.mrb[0].mxu0
      %2889 = vmatprep.mubr.bf16.mxu0 %v1740
      %2890 = vmatmul.mubr.bf16.gmra.mrb[0].mxu0 %v1739
      %v2891 = vpop.f32.mrb[0].mxu0
      %v2892 = vadd.f32 %v2603, %v2891
      %v2893 = vpop.f32.mrb[0].mxu0
      %v2894 = vpop.f32.mrb[0].mxu0
      %v2895 = vadd.f32 %v2606, %v2894
      %v2896 = vpop.f32.mrb[0].mxu0
      %2897 = vmatprep.mubr.bf16.mxu0 %v1747
      %2898 = vmatmul.mubr.bf16.gmra.mrb[0].mxu0 %v1746
      %v2899 = vpop.f32.mrb[0].mxu0
      %v2900 = vadd.f32 %v2611, %v2899
      %v2901 = vpop.f32.mrb[0].mxu0
      %v2902 = vpop.f32.mrb[0].mxu0
      %v2903 = vadd.f32 %v2614, %v2902
      %v2904 = vpop.f32.mrb[0].mxu0
      %2905 = vmatprep.mubr.bf16.mxu0 %v1754
      %2906 = vmatmul.mubr.bf16.gmra.mrb[0].mxu0 %v1753
      %v2907 = vpop.f32.mrb[0].mxu0
      %v2908 = vadd.f32 %v2619, %v2907
      %v2909 = vpop.f32.mrb[0].mxu0
      %v2910 = vpop.f32.mrb[0].mxu0
      %v2911 = vadd.f32 %v2622, %v2910
      %v2912 = vpop.f32.mrb[0].mxu0
      %2913 = vmatprep.mubr.bf16.mxu0 %v1761
      %2914 = vmatmul.mubr.bf16.gmra.mrb[0].mxu0 %v1760
      %v2915 = vpop.f32.mrb[0].mxu0
      %v2916 = vadd.f32 %v2627, %v2915
      %v2917 = vpop.f32.mrb[0].mxu0
      %v2918 = vpop.f32.mrb[0].mxu0
      %v2919 = vadd.f32 %v2630, %v2918
      %v2920 = vpop.f32.mrb[0].mxu0
      %2921 = vmatprep.mubr.bf16.mxu0 %v1768
      %2922 = vmatmul.mubr.bf16.gmra.mrb[0].mxu0 %v1767
      %v2923 = vpop.f32.mrb[0].mxu0
      %v2924 = vadd.f32 %v2635, %v2923
      %v2925 = vpop.f32.mrb[0].mxu0
      %v2926 = vpop.f32.mrb[0].mxu0
      %v2927 = vadd.f32 %v2638, %v2926
      %v2928 = vpop.f32.mrb[0].mxu0
      %2929 = vmatprep.mubr.bf16.mxu0 %v1775
      %2930 = vmatmul.mubr.bf16.gmra.mrb[0].mxu0 %v1774
      %v2931 = vpop.f32.mrb[0].mxu0
      %v2932 = vadd.f32 %v2643, %v2931
      %v2933 = vpop.f32.mrb[0].mxu0
      %v2934 = vpop.f32.mrb[0].mxu0
      %v2935 = vadd.f32 %v2646, %v2934
      %v2936 = vpop.f32.mrb[0].mxu0
      %2937 = vmatprep.mubr.bf16.mxu0 %v1782
      %2938 = vmatmul.mubr.bf16.gmra.mrb[0].mxu0 %v1781
      %v2939 = vpop.f32.mrb[0].mxu0
      %v2940 = vadd.f32 %v2651, %v2939
      %v2941 = vpop.f32.mrb[0].mxu0
      %v2942 = vpop.f32.mrb[0].mxu0
      %v2943 = vadd.f32 %v2654, %v2942
      %v2944 = vpop.f32.mrb[0].mxu0
      %2945 = vmatprep.mubr.bf16.mxu0 %v1789
      %2946 = vmatmul.mubr.bf16.gmra.mrb[0].mxu0 %v1788
      %v2947 = vpop.f32.mrb[0].mxu0
      %v2948 = vadd.f32 %v2659, %v2947
      %v2949 = vpop.f32.mrb[0].mxu0
      %v2950 = vpop.f32.mrb[0].mxu0
      %v2951 = vadd.f32 %v2662, %v2950
      %v2952 = vpop.f32.mrb[0].mxu0
      %2953 = vdwg.mxu0
      %2954 = vmatprep.subr.bf16.mxu0 0
      %2955 = vmatpush1.bf16.msra.mxu0 %v2213
      %2956 = vmatprep.subr.bf16.mxu0 0
      %2957 = vmatpush1.bf16.msra.mxu0 %v2214
      %2958 = vmatprep.subr.bf16.mxu0 0
      %2959 = vmatpush1.bf16.msra.mxu0 %v2215
      %2960 = vmatprep.subr.bf16.mxu0 0
      %2961 = vmatpush1.bf16.msra.mxu0 %v2216
      %2962 = vmatprep.subr.bf16.mxu0 0
      %2963 = vmatpush1.bf16.msra.mxu0 %v2217
      %2964 = vmatprep.subr.bf16.mxu0 0
      %2965 = vmatpush1.bf16.msra.mxu0 %v2218
      %2966 = vmatprep.subr.bf16.mxu0 0
      %2967 = vmatpush1.bf16.msra.mxu0 %v2219
      %2968 = vmatprep.subr.bf16.mxu0 0
      %2969 = vmatpush1.bf16.msra.mxu0 %v2220
      %2970 = vmatprep.subr.bf16.mxu0 0
      %2971 = vmatpush1.bf16.msra.mxu0 %v2221
      %2972 = vmatprep.subr.bf16.mxu0 0
      %2973 = vmatpush1.bf16.msra.mxu0 %v2222
      %2974 = vmatprep.subr.bf16.mxu0 0
      %2975 = vmatpush1.bf16.msra.mxu0 %v2223
      %2976 = vmatprep.subr.bf16.mxu0 0
      %2977 = vmatpush1.bf16.msra.mxu0 %v2224
      %2978 = vmatprep.subr.bf16.mxu0 0
      %2979 = vmatpush1.bf16.msra.mxu0 %v2225
      %2980 = vmatprep.subr.bf16.mxu0 0
      %2981 = vmatpush1.bf16.msra.mxu0 %v2226
      %2982 = vmatprep.subr.bf16.mxu0 0
      %2983 = vmatpush1.bf16.msra.mxu0 %v2227
      %2984 = vmatprep.subr.bf16.mxu0 0
      %2985 = vmatpush1.bf16.msra.mxu0 %v2228
      %2986 = vmatprep.mubr.bf16.mxu0 %v1574
      %2987 = vmatmul.mubr.bf16.gmra.mrb[0].mxu0 %v1573
      %v2988 = vpop.f32.mrb[0].mxu0
      %v2989 = vadd.f32 %v2700, %v2988
      %v2990 = vpop.f32.mrb[0].mxu0
      %v2991 = vpop.f32.mrb[0].mxu0
      %v2992 = vadd.f32 %v2703, %v2991
      %v2993 = vpop.f32.mrb[0].mxu0
      %2994 = vmatprep.mubr.bf16.mxu0 %v1581
      %2995 = vmatmul.mubr.bf16.gmra.mrb[0].mxu0 %v1580
      %v2996 = vpop.f32.mrb[0].mxu0
      %v2997 = vadd.f32 %v2708, %v2996
      %v2998 = vpop.f32.mrb[0].mxu0
      %v2999 = vpop.f32.mrb[0].mxu0
      %v3000 = vadd.f32 %v2711, %v2999
      %v3001 = vpop.f32.mrb[0].mxu0
      %3002 = vmatprep.mubr.bf16.mxu0 %v1588
      %3003 = vmatmul.mubr.bf16.gmra.mrb[0].mxu0 %v1587
      %v3004 = vpop.f32.mrb[0].mxu0
      %v3005 = vadd.f32 %v2716, %v3004
      %v3006 = vpop.f32.mrb[0].mxu0
      %v3007 = vpop.f32.mrb[0].mxu0
      %v3008 = vadd.f32 %v2719, %v3007
      %v3009 = vpop.f32.mrb[0].mxu0
      %3010 = vmatprep.mubr.bf16.mxu0 %v1595
      %3011 = vmatmul.mubr.bf16.gmra.mrb[0].mxu0 %v1594
      %v3012 = vpop.f32.mrb[0].mxu0
      %v3013 = vadd.f32 %v2724, %v3012
      %v3014 = vpop.f32.mrb[0].mxu0
      %v3015 = vpop.f32.mrb[0].mxu0
      %v3016 = vadd.f32 %v2727, %v3015
      %v3017 = vpop.f32.mrb[0].mxu0
      %3018 = vmatprep.mubr.bf16.mxu0 %v1602
      %3019 = vmatmul.mubr.bf16.gmra.mrb[0].mxu0 %v1601
      %v3020 = vpop.f32.mrb[0].mxu0
      %v3021 = vadd.f32 %v2732, %v3020
      %v3022 = vpop.f32.mrb[0].mxu0
      %v3023 = vpop.f32.mrb[0].mxu0
      %v3024 = vadd.f32 %v2735, %v3023
      %v3025 = vpop.f32.mrb[0].mxu0
      %3026 = vmatprep.mubr.bf16.mxu0 %v1609
      %3027 = vmatmul.mubr.bf16.gmra.mrb[0].mxu0 %v1608
      %v3028 = vpop.f32.mrb[0].mxu0
      %v3029 = vadd.f32 %v2740, %v3028
      %v3030 = vpop.f32.mrb[0].mxu0
      %v3031 = vpop.f32.mrb[0].mxu0
      %v3032 = vadd.f32 %v2743, %v3031
      %v3033 = vpop.f32.mrb[0].mxu0
      %3034 = vmatprep.mubr.bf16.mxu0 %v1616
      %3035 = vmatmul.mubr.bf16.gmra.mrb[0].mxu0 %v1615
      %v3036 = vpop.f32.mrb[0].mxu0
      %v3037 = vadd.f32 %v2748, %v3036
      %v3038 = vpop.f32.mrb[0].mxu0
      %v3039 = vpop.f32.mrb[0].mxu0
      %v3040 = vadd.f32 %v2751, %v3039
      %v3041 = vpop.f32.mrb[0].mxu0
      %3042 = vmatprep.mubr.bf16.mxu0 %v1623
      %3043 = vmatmul.mubr.bf16.gmra.mrb[0].mxu0 %v1622
      %v3044 = vpop.f32.mrb[0].mxu0
      %v3045 = vadd.f32 %v2756, %v3044
      %v3046 = vpop.f32.mrb[0].mxu0
      %v3047 = vpop.f32.mrb[0].mxu0
      %v3048 = vadd.f32 %v2759, %v3047
      %v3049 = vpop.f32.mrb[0].mxu0
      %3050 = vmatprep.mubr.bf16.mxu0 %v1630
      %3051 = vmatmul.mubr.bf16.gmra.mrb[0].mxu0 %v1629
      %v3052 = vpop.f32.mrb[0].mxu0
      %v3053 = vadd.f32 %v2764, %v3052
      %v3054 = vpop.f32.mrb[0].mxu0
      %v3055 = vpop.f32.mrb[0].mxu0
      %v3056 = vadd.f32 %v2767, %v3055
      %v3057 = vpop.f32.mrb[0].mxu0
      %3058 = vmatprep.mubr.bf16.mxu0 %v1637
      %3059 = vmatmul.mubr.bf16.gmra.mrb[0].mxu0 %v1636
      %v3060 = vpop.f32.mrb[0].mxu0
      %v3061 = vadd.f32 %v2772, %v3060
      %v3062 = vpop.f32.mrb[0].mxu0
      %v3063 = vpop.f32.mrb[0].mxu0
      %v3064 = vadd.f32 %v2775, %v3063
      %v3065 = vpop.f32.mrb[0].mxu0
      %3066 = vmatprep.mubr.bf16.mxu0 %v1644
      %3067 = vmatmul.mubr.bf16.gmra.mrb[0].mxu0 %v1643
      %v3068 = vpop.f32.mrb[0].mxu0
      %v3069 = vadd.f32 %v2780, %v3068
      %v3070 = vpop.f32.mrb[0].mxu0
      %v3071 = vpop.f32.mrb[0].mxu0
      %v3072 = vadd.f32 %v2783, %v3071
      %v3073 = vpop.f32.mrb[0].mxu0
      %3074 = vmatprep.mubr.bf16.mxu0 %v1651
      %3075 = vmatmul.mubr.bf16.gmra.mrb[0].mxu0 %v1650
      %v3076 = vpop.f32.mrb[0].mxu0
      %v3077 = vadd.f32 %v2788, %v3076
      %v3078 = vpop.f32.mrb[0].mxu0
      %v3079 = vpop.f32.mrb[0].mxu0
      %v3080 = vadd.f32 %v2791, %v3079
      %v3081 = vpop.f32.mrb[0].mxu0
      %3082 = vmatprep.mubr.bf16.mxu0 %v1658
      %3083 = vmatmul.mubr.bf16.gmra.mrb[0].mxu0 %v1657
      %v3084 = vpop.f32.mrb[0].mxu0
      %v3085 = vadd.f32 %v2796, %v3084
      %v3086 = vpop.f32.mrb[0].mxu0
      %v3087 = vpop.f32.mrb[0].mxu0
      %v3088 = vadd.f32 %v2799, %v3087
      %v3089 = vpop.f32.mrb[0].mxu0
      %3090 = vmatprep.mubr.bf16.mxu0 %v1665
      %3091 = vmatmul.mubr.bf16.gmra.mrb[0].mxu0 %v1664
      %v3092 = vpop.f32.mrb[0].mxu0
      %v3093 = vadd.f32 %v2804, %v3092
      %v3094 = vpop.f32.mrb[0].mxu0
      %v3095 = vpop.f32.mrb[0].mxu0
      %v3096 = vadd.f32 %v2807, %v3095
      %v3097 = vpop.f32.mrb[0].mxu0
      %3098 = vmatprep.mubr.bf16.mxu0 %v1672
      %3099 = vmatmul.mubr.bf16.gmra.mrb[0].mxu0 %v1671
      %v3100 = vpop.f32.mrb[0].mxu0
      %v3101 = vadd.f32 %v2812, %v3100
      %v3102 = vpop.f32.mrb[0].mxu0
      %v3103 = vpop.f32.mrb[0].mxu0
      %v3104 = vadd.f32 %v2815, %v3103
      %v3105 = vpop.f32.mrb[0].mxu0
      %3106 = vmatprep.mubr.bf16.mxu0 %v1679
      %3107 = vmatmul.mubr.bf16.gmra.mrb[0].mxu0 %v1678
      %v3108 = vpop.f32.mrb[0].mxu0
      %v3109 = vadd.f32 %v2820, %v3108
      %v3110 = vpop.f32.mrb[0].mxu0
      %v3111 = vpop.f32.mrb[0].mxu0
      %v3112 = vadd.f32 %v2823, %v3111
      %v3113 = vpop.f32.mrb[0].mxu0
      %3114 = vmatprep.mubr.bf16.mxu0 %v1686
      %3115 = vmatmul.mubr.bf16.gmra.mrb[0].mxu0 %v1685
      %v3116 = vpop.f32.mrb[0].mxu0
      %v3117 = vadd.f32 %v2828, %v3116
      %v3118 = vpop.f32.mrb[0].mxu0
      %v3119 = vpop.f32.mrb[0].mxu0
      %v3120 = vadd.f32 %v2831, %v3119
      %v3121 = vpop.f32.mrb[0].mxu0
      %3122 = vmatprep.mubr.bf16.mxu0 %v1693
      %3123 = vmatmul.mubr.bf16.gmra.mrb[0].mxu0 %v1692
      %v3124 = vpop.f32.mrb[0].mxu0
      %v3125 = vadd.f32 %v2836, %v3124
      %v3126 = vpop.f32.mrb[0].mxu0
      %v3127 = vpop.f32.mrb[0].mxu0
      %v3128 = vadd.f32 %v2839, %v3127
      %v3129 = vpop.f32.mrb[0].mxu0
      %3130 = vmatprep.mubr.bf16.mxu0 %v1700
      %3131 = vmatmul.mubr.bf16.gmra.mrb[0].mxu0 %v1699
      %v3132 = vpop.f32.mrb[0].mxu0
      %v3133 = vadd.f32 %v2844, %v3132
      %v3134 = vpop.f32.mrb[0].mxu0
      %v3135 = vpop.f32.mrb[0].mxu0
      %v3136 = vadd.f32 %v2847, %v3135
      %v3137 = vpop.f32.mrb[0].mxu0
      %3138 = vmatprep.mubr.bf16.mxu0 %v1707
      %3139 = vmatmul.mubr.bf16.gmra.mrb[0].mxu0 %v1706
      %v3140 = vpop.f32.mrb[0].mxu0
      %v3141 = vadd.f32 %v2852, %v3140
      %v3142 = vpop.f32.mrb[0].mxu0
      %v3143 = vpop.f32.mrb[0].mxu0
      %v3144 = vadd.f32 %v2855, %v3143
      %v3145 = vpop.f32.mrb[0].mxu0
      %3146 = vmatprep.mubr.bf16.mxu0 %v1714
      %3147 = vmatmul.mubr.bf16.gmra.mrb[0].mxu0 %v1713
      %v3148 = vpop.f32.mrb[0].mxu0
      %v3149 = vadd.f32 %v2860, %v3148
      %v3150 = vpop.f32.mrb[0].mxu0
      %v3151 = vpop.f32.mrb[0].mxu0
      %v3152 = vadd.f32 %v2863, %v3151
      %v3153 = vpop.f32.mrb[0].mxu0
      %3154 = vmatprep.mubr.bf16.mxu0 %v1721
      %3155 = vmatmul.mubr.bf16.gmra.mrb[0].mxu0 %v1720
      %v3156 = vpop.f32.mrb[0].mxu0
      %v3157 = vadd.f32 %v2868, %v3156
      %v3158 = vpop.f32.mrb[0].mxu0
      %v3159 = vpop.f32.mrb[0].mxu0
      %v3160 = vadd.f32 %v2871, %v3159
      %v3161 = vpop.f32.mrb[0].mxu0
      %3162 = vmatprep.mubr.bf16.mxu0 %v1728
      %3163 = vmatmul.mubr.bf16.gmra.mrb[0].mxu0 %v1727
      %v3164 = vpop.f32.mrb[0].mxu0
      %v3165 = vadd.f32 %v2876, %v3164
      %v3166 = vpop.f32.mrb[0].mxu0
      %v3167 = vpop.f32.mrb[0].mxu0
      %v3168 = vadd.f32 %v2879, %v3167
      %v3169 = vpop.f32.mrb[0].mxu0
      %3170 = vmatprep.mubr.bf16.mxu0 %v1735
      %3171 = vmatmul.mubr.bf16.gmra.mrb[0].mxu0 %v1734
      %v3172 = vpop.f32.mrb[0].mxu0
      %v3173 = vadd.f32 %v2884, %v3172
      %v3174 = vpop.f32.mrb[0].mxu0
      %v3175 = vpop.f32.mrb[0].mxu0
      %v3176 = vadd.f32 %v2887, %v3175
      %v3177 = vpop.f32.mrb[0].mxu0
      %3178 = vmatprep.mubr.bf16.mxu0 %v1742
      %3179 = vmatmul.mubr.bf16.gmra.mrb[0].mxu0 %v1741
      %v3180 = vpop.f32.mrb[0].mxu0
      %v3181 = vadd.f32 %v2892, %v3180
      %v3182 = vpop.f32.mrb[0].mxu0
      %v3183 = vpop.f32.mrb[0].mxu0
      %v3184 = vadd.f32 %v2895, %v3183
      %v3185 = vpop.f32.mrb[0].mxu0
      %3186 = vmatprep.mubr.bf16.mxu0 %v1749
      %3187 = vmatmul.mubr.bf16.gmra.mrb[0].mxu0 %v1748
      %v3188 = vpop.f32.mrb[0].mxu0
      %v3189 = vadd.f32 %v2900, %v3188
      %v3190 = vpop.f32.mrb[0].mxu0
      %v3191 = vpop.f32.mrb[0].mxu0
      %v3192 = vadd.f32 %v2903, %v3191
      %v3193 = vpop.f32.mrb[0].mxu0
      %3194 = vmatprep.mubr.bf16.mxu0 %v1756
      %3195 = vmatmul.mubr.bf16.gmra.mrb[0].mxu0 %v1755
      %v3196 = vpop.f32.mrb[0].mxu0
      %v3197 = vadd.f32 %v2908, %v3196
      %v3198 = vpop.f32.mrb[0].mxu0
      %v3199 = vpop.f32.mrb[0].mxu0
      %v3200 = vadd.f32 %v2911, %v3199
      %v3201 = vpop.f32.mrb[0].mxu0
      %3202 = vmatprep.mubr.bf16.mxu0 %v1763
      %3203 = vmatmul.mubr.bf16.gmra.mrb[0].mxu0 %v1762
      %v3204 = vpop.f32.mrb[0].mxu0
      %v3205 = vadd.f32 %v2916, %v3204
      %v3206 = vpop.f32.mrb[0].mxu0
      %v3207 = vpop.f32.mrb[0].mxu0
      %v3208 = vadd.f32 %v2919, %v3207
      %v3209 = vpop.f32.mrb[0].mxu0
      %3210 = vmatprep.mubr.bf16.mxu0 %v1770
      %3211 = vmatmul.mubr.bf16.gmra.mrb[0].mxu0 %v1769
      %v3212 = vpop.f32.mrb[0].mxu0
      %v3213 = vadd.f32 %v2924, %v3212
      %v3214 = vpop.f32.mrb[0].mxu0
      %v3215 = vpop.f32.mrb[0].mxu0
      %v3216 = vadd.f32 %v2927, %v3215
      %v3217 = vpop.f32.mrb[0].mxu0
      %3218 = vmatprep.mubr.bf16.mxu0 %v1777
      %3219 = vmatmul.mubr.bf16.gmra.mrb[0].mxu0 %v1776
      %v3220 = vpop.f32.mrb[0].mxu0
      %v3221 = vadd.f32 %v2932, %v3220
      %v3222 = vpop.f32.mrb[0].mxu0
      %v3223 = vpop.f32.mrb[0].mxu0
      %v3224 = vadd.f32 %v2935, %v3223
      %v3225 = vpop.f32.mrb[0].mxu0
      %3226 = vmatprep.mubr.bf16.mxu0 %v1784
      %3227 = vmatmul.mubr.bf16.gmra.mrb[0].mxu0 %v1783
      %v3228 = vpop.f32.mrb[0].mxu0
      %v3229 = vadd.f32 %v2940, %v3228
      %v3230 = vpop.f32.mrb[0].mxu0
      %v3231 = vpop.f32.mrb[0].mxu0
      %v3232 = vadd.f32 %v2943, %v3231
      %v3233 = vpop.f32.mrb[0].mxu0
      %3234 = vmatprep.mubr.bf16.mxu0 %v1791
      %3235 = vmatmul.mubr.bf16.gmra.mrb[0].mxu0 %v1790
      %v3236 = vpop.f32.mrb[0].mxu0
      %v3237 = vadd.f32 %v2948, %v3236
      %v3238 = vpop.f32.mrb[0].mxu0
      %v3239 = vpop.f32.mrb[0].mxu0
      %v3240 = vadd.f32 %v2951, %v3239
      %v3241 = vpop.f32.mrb[0].mxu0
      %3242 = vdwg.mxu0
      %3243 = vmatprep.subr.bf16.mxu0 0
      %3244 = vmatpush1.bf16.msra.mxu0 %v2229
      %3245 = vmatprep.subr.bf16.mxu0 0
      %3246 = vmatpush1.bf16.msra.mxu0 0
      %3247 = vmatprep.subr.bf16.mxu0 0
      %3248 = vmatpush1.bf16.msra.mxu0 0
      %3249 = vmatprep.subr.bf16.mxu0 0
      %3250 = vmatpush1.bf16.msra.mxu0 0
      %3251 = vmatprep.subr.bf16.mxu0 0
      %3252 = vmatpush1.bf16.msra.mxu0 0
      %3253 = vmatprep.subr.bf16.mxu0 0
      %3254 = vmatpush1.bf16.msra.mxu0 0
      %3255 = vmatprep.subr.bf16.mxu0 0
      %3256 = vmatpush1.bf16.msra.mxu0 0
      %3257 = vmatprep.subr.bf16.mxu0 0
      %3258 = vmatpush1.bf16.msra.mxu0 0
      %3259 = vmatprep.subr.bf16.mxu0 0
      %3260 = vmatpush1.bf16.msra.mxu0 0
      %3261 = vmatprep.subr.bf16.mxu0 0
      %3262 = vmatpush1.bf16.msra.mxu0 0
      %3263 = vmatprep.subr.bf16.mxu0 0
      %3264 = vmatpush1.bf16.msra.mxu0 0
      %3265 = vmatprep.subr.bf16.mxu0 0
      %3266 = vmatpush1.bf16.msra.mxu0 0
      %3267 = vmatprep.subr.bf16.mxu0 0
      %3268 = vmatpush1.bf16.msra.mxu0 0
      %3269 = vmatprep.subr.bf16.mxu0 0
      %3270 = vmatpush1.bf16.msra.mxu0 0
      %3271 = vmatprep.subr.bf16.mxu0 0
      %3272 = vmatpush1.bf16.msra.mxu0 0
      %3273 = vmatprep.subr.bf16.mxu0 0
      %3274 = vmatpush1.bf16.msra.mxu0 0
      %3275 = vmatprep.mubr.bf16.mxu0 0
      %3276 = vmatmul.mubr.bf16.gmra.mrb[0].mxu0 %v2281
      %v3277 = vpop.f32.mrb[0].mxu0
      %v3278 = vadd.f32 %v2989, %v3277
      %v3279 = vpop.f32.mrb[0].mxu0
      %v3280 = vpop.f32.mrb[0].mxu0
      %v3281 = vadd.f32 %v2992, %v3280
      %v3282 = vpop.f32.mrb[0].mxu0
      %3283 = vmatprep.mubr.bf16.mxu0 0
      %3284 = vmatmul.mubr.bf16.gmra.mrb[0].mxu0 %v2284
      %v3285 = vpop.f32.mrb[0].mxu0
      %v3286 = vadd.f32 %v2997, %v3285
      %v3287 = vpop.f32.mrb[0].mxu0
      %v3288 = vpop.f32.mrb[0].mxu0
      %v3289 = vadd.f32 %v3000, %v3288
      %v3290 = vpop.f32.mrb[0].mxu0
      %3291 = vmatprep.mubr.bf16.mxu0 0
      %3292 = vmatmul.mubr.bf16.gmra.mrb[0].mxu0 %v2287
      %v3293 = vpop.f32.mrb[0].mxu0
      %v3294 = vadd.f32 %v3005, %v3293
      %v3295 = vpop.f32.mrb[0].mxu0
      %v3296 = vpop.f32.mrb[0].mxu0
      %v3297 = vadd.f32 %v3008, %v3296
      %v3298 = vpop.f32.mrb[0].mxu0
      %3299 = vmatprep.mubr.bf16.mxu0 0
      %3300 = vmatmul.mubr.bf16.gmra.mrb[0].mxu0 %v2290
      %v3301 = vpop.f32.mrb[0].mxu0
      %v3302 = vadd.f32 %v3013, %v3301
      %v3303 = vpop.f32.mrb[0].mxu0
      %v3304 = vpop.f32.mrb[0].mxu0
      %v3305 = vadd.f32 %v3016, %v3304
      %v3306 = vpop.f32.mrb[0].mxu0
      %3307 = vmatprep.mubr.bf16.mxu0 0
      %3308 = vmatmul.mubr.bf16.gmra.mrb[0].mxu0 %v2293
      %v3309 = vpop.f32.mrb[0].mxu0
      %v3310 = vadd.f32 %v3021, %v3309
      %v3311 = vpop.f32.mrb[0].mxu0
      %v3312 = vpop.f32.mrb[0].mxu0
      %v3313 = vadd.f32 %v3024, %v3312
      %v3314 = vpop.f32.mrb[0].mxu0
      %3315 = vmatprep.mubr.bf16.mxu0 0
      %3316 = vmatmul.mubr.bf16.gmra.mrb[0].mxu0 %v2296
      %v3317 = vpop.f32.mrb[0].mxu0
      %v3318 = vadd.f32 %v3029, %v3317
      %v3319 = vpop.f32.mrb[0].mxu0
      %v3320 = vpop.f32.mrb[0].mxu0
      %v3321 = vadd.f32 %v3032, %v3320
      %v3322 = vpop.f32.mrb[0].mxu0
      %3323 = vmatprep.mubr.bf16.mxu0 0
      %3324 = vmatmul.mubr.bf16.gmra.mrb[0].mxu0 %v2299
      %v3325 = vpop.f32.mrb[0].mxu0
      %v3326 = vadd.f32 %v3037, %v3325
      %v3327 = vpop.f32.mrb[0].mxu0
      %v3328 = vpop.f32.mrb[0].mxu0
      %v3329 = vadd.f32 %v3040, %v3328
      %v3330 = vpop.f32.mrb[0].mxu0
      %3331 = vmatprep.mubr.bf16.mxu0 0
      %3332 = vmatmul.mubr.bf16.gmra.mrb[0].mxu0 %v2302
      %v3333 = vpop.f32.mrb[0].mxu0
      %v3334 = vadd.f32 %v3045, %v3333
      %v3335 = vpop.f32.mrb[0].mxu0
      %v3336 = vpop.f32.mrb[0].mxu0
      %v3337 = vadd.f32 %v3048, %v3336
      %v3338 = vpop.f32.mrb[0].mxu0
      %3339 = vmatprep.mubr.bf16.mxu0 0
      %3340 = vmatmul.mubr.bf16.gmra.mrb[0].mxu0 %v2305
      %v3341 = vpop.f32.mrb[0].mxu0
      %v3342 = vadd.f32 %v3053, %v3341
      %v3343 = vpop.f32.mrb[0].mxu0
      %v3344 = vpop.f32.mrb[0].mxu0
      %v3345 = vadd.f32 %v3056, %v3344
      %v3346 = vpop.f32.mrb[0].mxu0
      %3347 = vmatprep.mubr.bf16.mxu0 0
      %3348 = vmatmul.mubr.bf16.gmra.mrb[0].mxu0 %v2308
      %v3349 = vpop.f32.mrb[0].mxu0
      %v3350 = vadd.f32 %v3061, %v3349
      %v3351 = vpop.f32.mrb[0].mxu0
      %v3352 = vpop.f32.mrb[0].mxu0
      %v3353 = vadd.f32 %v3064, %v3352
      %v3354 = vpop.f32.mrb[0].mxu0
      %3355 = vmatprep.mubr.bf16.mxu0 0
      %3356 = vmatmul.mubr.bf16.gmra.mrb[0].mxu0 %v2311
      %v3357 = vpop.f32.mrb[0].mxu0
      %v3358 = vadd.f32 %v3069, %v3357
      %v3359 = vpop.f32.mrb[0].mxu0
      %v3360 = vpop.f32.mrb[0].mxu0
      %v3361 = vadd.f32 %v3072, %v3360
      %v3362 = vpop.f32.mrb[0].mxu0
      %3363 = vmatprep.mubr.bf16.mxu0 0
      %3364 = vmatmul.mubr.bf16.gmra.mrb[0].mxu0 %v2314
      %v3365 = vpop.f32.mrb[0].mxu0
      %v3366 = vadd.f32 %v3077, %v3365
      %v3367 = vpop.f32.mrb[0].mxu0
      %v3368 = vpop.f32.mrb[0].mxu0
      %v3369 = vadd.f32 %v3080, %v3368
      %v3370 = vpop.f32.mrb[0].mxu0
      %3371 = vmatprep.mubr.bf16.mxu0 0
      %3372 = vmatmul.mubr.bf16.gmra.mrb[0].mxu0 %v2317
      %v3373 = vpop.f32.mrb[0].mxu0
      %v3374 = vadd.f32 %v3085, %v3373
      %v3375 = vpop.f32.mrb[0].mxu0
      %v3376 = vpop.f32.mrb[0].mxu0
      %v3377 = vadd.f32 %v3088, %v3376
      %v3378 = vpop.f32.mrb[0].mxu0
      %3379 = vmatprep.mubr.bf16.mxu0 0
      %3380 = vmatmul.mubr.bf16.gmra.mrb[0].mxu0 %v2320
      %v3381 = vpop.f32.mrb[0].mxu0
      %v3382 = vadd.f32 %v3093, %v3381
      %v3383 = vpop.f32.mrb[0].mxu0
      %v3384 = vpop.f32.mrb[0].mxu0
      %v3385 = vadd.f32 %v3096, %v3384
      %v3386 = vpop.f32.mrb[0].mxu0
      %3387 = vmatprep.mubr.bf16.mxu0 0
      %3388 = vmatmul.mubr.bf16.gmra.mrb[0].mxu0 %v2323
      %v3389 = vpop.f32.mrb[0].mxu0
      %v3390 = vadd.f32 %v3101, %v3389
      %v3391 = vpop.f32.mrb[0].mxu0
      %v3392 = vpop.f32.mrb[0].mxu0
      %v3393 = vadd.f32 %v3104, %v3392
      %v3394 = vpop.f32.mrb[0].mxu0
      %3395 = vmatprep.mubr.bf16.mxu0 0
      %3396 = vmatmul.mubr.bf16.gmra.mrb[0].mxu0 %v2326
      %v3397 = vpop.f32.mrb[0].mxu0
      %v3398 = vadd.f32 %v3109, %v3397
      %v3399 = vpop.f32.mrb[0].mxu0
      %v3400 = vpop.f32.mrb[0].mxu0
      %v3401 = vadd.f32 %v3112, %v3400
      %v3402 = vpop.f32.mrb[0].mxu0
      %3403 = vmatprep.mubr.bf16.mxu0 0
      %3404 = vmatmul.mubr.bf16.gmra.mrb[0].mxu0 %v2329
      %v3405 = vpop.f32.mrb[0].mxu0
      %v3406 = vadd.f32 %v3117, %v3405
      %v3407 = vpop.f32.mrb[0].mxu0
      %v3408 = vpop.f32.mrb[0].mxu0
      %v3409 = vadd.f32 %v3120, %v3408
      %v3410 = vpop.f32.mrb[0].mxu0
      %3411 = vmatprep.mubr.bf16.mxu0 0
      %3412 = vmatmul.mubr.bf16.gmra.mrb[0].mxu0 %v2332
      %v3413 = vpop.f32.mrb[0].mxu0
      %v3414 = vadd.f32 %v3125, %v3413
      %v3415 = vpop.f32.mrb[0].mxu0
      %v3416 = vpop.f32.mrb[0].mxu0
      %v3417 = vadd.f32 %v3128, %v3416
      %v3418 = vpop.f32.mrb[0].mxu0
      %3419 = vmatprep.mubr.bf16.mxu0 0
      %3420 = vmatmul.mubr.bf16.gmra.mrb[0].mxu0 %v2335
      %v3421 = vpop.f32.mrb[0].mxu0
      %v3422 = vadd.f32 %v3133, %v3421
      %v3423 = vpop.f32.mrb[0].mxu0
      %v3424 = vpop.f32.mrb[0].mxu0
      %v3425 = vadd.f32 %v3136, %v3424
      %v3426 = vpop.f32.mrb[0].mxu0
      %3427 = vmatprep.mubr.bf16.mxu0 0
      %3428 = vmatmul.mubr.bf16.gmra.mrb[0].mxu0 %v2338
      %v3429 = vpop.f32.mrb[0].mxu0
      %v3430 = vadd.f32 %v3141, %v3429
      %v3431 = vpop.f32.mrb[0].mxu0
      %v3432 = vpop.f32.mrb[0].mxu0
      %v3433 = vadd.f32 %v3144, %v3432
      %v3434 = vpop.f32.mrb[0].mxu0
      %3435 = vmatprep.mubr.bf16.mxu0 0
      %3436 = vmatmul.mubr.bf16.gmra.mrb[0].mxu0 %v2341
      %v3437 = vpop.f32.mrb[0].mxu0
      %v3438 = vadd.f32 %v3149, %v3437
      %v3439 = vpop.f32.mrb[0].mxu0
      %v3440 = vpop.f32.mrb[0].mxu0
      %v3441 = vadd.f32 %v3152, %v3440
      %v3442 = vpop.f32.mrb[0].mxu0
      %3443 = vmatprep.mubr.bf16.mxu0 0
      %3444 = vmatmul.mubr.bf16.gmra.mrb[0].mxu0 %v2344
      %v3445 = vpop.f32.mrb[0].mxu0
      %v3446 = vadd.f32 %v3157, %v3445
      %v3447 = vpop.f32.mrb[0].mxu0
      %v3448 = vpop.f32.mrb[0].mxu0
      %v3449 = vadd.f32 %v3160, %v3448
      %v3450 = vpop.f32.mrb[0].mxu0
      %3451 = vmatprep.mubr.bf16.mxu0 0
      %3452 = vmatmul.mubr.bf16.gmra.mrb[0].mxu0 %v2347
      %v3453 = vpop.f32.mrb[0].mxu0
      %v3454 = vadd.f32 %v3165, %v3453
      %v3455 = vpop.f32.mrb[0].mxu0
      %v3456 = vpop.f32.mrb[0].mxu0
      %v3457 = vadd.f32 %v3168, %v3456
      %v3458 = vpop.f32.mrb[0].mxu0
      %3459 = vmatprep.mubr.bf16.mxu0 0
      %3460 = vmatmul.mubr.bf16.gmra.mrb[0].mxu0 %v2350
      %v3461 = vpop.f32.mrb[0].mxu0
      %v3462 = vadd.f32 %v3173, %v3461
      %v3463 = vpop.f32.mrb[0].mxu0
      %v3464 = vpop.f32.mrb[0].mxu0
      %v3465 = vadd.f32 %v3176, %v3464
      %v3466 = vpop.f32.mrb[0].mxu0
      %3467 = vmatprep.mubr.bf16.mxu0 0
      %3468 = vmatmul.mubr.bf16.gmra.mrb[0].mxu0 %v2353
      %v3469 = vpop.f32.mrb[0].mxu0
      %v3470 = vadd.f32 %v3181, %v3469
      %v3471 = vpop.f32.mrb[0].mxu0
      %v3472 = vpop.f32.mrb[0].mxu0
      %v3473 = vadd.f32 %v3184, %v3472
      %v3474 = vpop.f32.mrb[0].mxu0
      %3475 = vmatprep.mubr.bf16.mxu0 0
      %3476 = vmatmul.mubr.bf16.gmra.mrb[0].mxu0 %v2356
      %v3477 = vpop.f32.mrb[0].mxu0
      %v3478 = vadd.f32 %v3189, %v3477
      %v3479 = vpop.f32.mrb[0].mxu0
      %v3480 = vpop.f32.mrb[0].mxu0
      %v3481 = vadd.f32 %v3192, %v3480
      %v3482 = vpop.f32.mrb[0].mxu0
      %3483 = vmatprep.mubr.bf16.mxu0 0
      %3484 = vmatmul.mubr.bf16.gmra.mrb[0].mxu0 %v2359
      %v3485 = vpop.f32.mrb[0].mxu0
      %v3486 = vadd.f32 %v3197, %v3485
      %v3487 = vpop.f32.mrb[0].mxu0
      %v3488 = vpop.f32.mrb[0].mxu0
      %v3489 = vadd.f32 %v3200, %v3488
      %v3490 = vpop.f32.mrb[0].mxu0
      %3491 = vmatprep.mubr.bf16.mxu0 0
      %3492 = vmatmul.mubr.bf16.gmra.mrb[0].mxu0 %v2362
      %v3493 = vpop.f32.mrb[0].mxu0
      %v3494 = vadd.f32 %v3205, %v3493
      %v3495 = vpop.f32.mrb[0].mxu0
      %v3496 = vpop.f32.mrb[0].mxu0
      %v3497 = vadd.f32 %v3208, %v3496
      %v3498 = vpop.f32.mrb[0].mxu0
      %3499 = vmatprep.mubr.bf16.mxu0 0
      %3500 = vmatmul.mubr.bf16.gmra.mrb[0].mxu0 %v2365
      %v3501 = vpop.f32.mrb[0].mxu0
      %v3502 = vadd.f32 %v3213, %v3501
      %v3503 = vpop.f32.mrb[0].mxu0
      %v3504 = vpop.f32.mrb[0].mxu0
      %v3505 = vadd.f32 %v3216, %v3504
      %v3506 = vpop.f32.mrb[0].mxu0
      %3507 = vmatprep.mubr.bf16.mxu0 0
      %3508 = vmatmul.mubr.bf16.gmra.mrb[0].mxu0 %v2368
      %v3509 = vpop.f32.mrb[0].mxu0
      %v3510 = vadd.f32 %v3221, %v3509
      %v3511 = vpop.f32.mrb[0].mxu0
      %v3512 = vpop.f32.mrb[0].mxu0
      %v3513 = vadd.f32 %v3224, %v3512
      %v3514 = vpop.f32.mrb[0].mxu0
      %3515 = vmatprep.mubr.bf16.mxu0 0
      %3516 = vmatmul.mubr.bf16.gmra.mrb[0].mxu0 %v2371
      %v3517 = vpop.f32.mrb[0].mxu0
      %v3518 = vadd.f32 %v3229, %v3517
      %v3519 = vpop.f32.mrb[0].mxu0
      %v3520 = vpop.f32.mrb[0].mxu0
      %v3521 = vadd.f32 %v3232, %v3520
      %v3522 = vpop.f32.mrb[0].mxu0
      %3523 = vmatprep.mubr.bf16.mxu0 0
      %3524 = vmatmul.mubr.bf16.gmra.mrb[0].mxu0 %v2374
      %v3525 = vpop.f32.mrb[0].mxu0
      %v3526 = vadd.f32 %v3237, %v3525
      %v3527 = vpop.f32.mrb[0].mxu0
      %v3528 = vpop.f32.mrb[0].mxu0
      %v3529 = vadd.f32 %v3240, %v3528
      %v3530 = vpop.f32.mrb[0].mxu0
      %3531 = vdwg.mxu0
      %v3532 = vmax.f32 %v3278, 0.0
      %v3533 = vmax.f32 %v3281, 0.0
      %v3534 = vmax.f32 %v3286, 0.0
      %v3535 = vmax.f32 %v3289, 0.0
      %v3536 = vmax.f32 %v3294, 0.0
      %v3537 = vmax.f32 %v3297, 0.0
      %v3538 = vmax.f32 %v3302, 0.0
      %v3539 = vmax.f32 %v3305, 0.0
      %v3540 = vmax.f32 %v3310, 0.0
      %v3541 = vmax.f32 %v3313, 0.0
      %v3542 = vmax.f32 %v3318, 0.0
      %v3543 = vmax.f32 %v3321, 0.0
      %v3544 = vmax.f32 %v3326, 0.0
      %v3545 = vmax.f32 %v3329, 0.0
      %v3546 = vmax.f32 %v3334, 0.0
      %v3547 = vmax.f32 %v3337, 0.0
      %v3548 = vmax.f32 %v3342, 0.0
      %v3549 = vmax.f32 %v3345, 0.0
      %v3550 = vmax.f32 %v3350, 0.0
      %v3551 = vmax.f32 %v3353, 0.0
      %v3552 = vmax.f32 %v3358, 0.0
      %v3553 = vmax.f32 %v3361, 0.0
      %v3554 = vmax.f32 %v3366, 0.0
      %v3555 = vmax.f32 %v3369, 0.0
      %v3556 = vmax.f32 %v3374, 0.0
      %v3557 = vmax.f32 %v3377, 0.0
      %v3558 = vmax.f32 %v3382, 0.0
      %v3559 = vmax.f32 %v3385, 0.0
      %v3560 = vmax.f32 %v3390, 0.0
      %v3561 = vmax.f32 %v3393, 0.0
      %v3562 = vmax.f32 %v3398, 0.0
      %v3563 = vmax.f32 %v3401, 0.0
      %v3564 = vmax.f32 %v3406, 0.0
      %v3565 = vmax.f32 %v3409, 0.0
      %v3566 = vmax.f32 %v3414, 0.0
      %v3567 = vmax.f32 %v3417, 0.0
      %v3568 = vmax.f32 %v3422, 0.0
      %v3569 = vmax.f32 %v3425, 0.0
      %v3570 = vmax.f32 %v3430, 0.0
      %v3571 = vmax.f32 %v3433, 0.0
      %v3572 = vmax.f32 %v3438, 0.0
      %v3573 = vmax.f32 %v3441, 0.0
      %v3574 = vmax.f32 %v3446, 0.0
      %v3575 = vmax.f32 %v3449, 0.0
      %v3576 = vmax.f32 %v3454, 0.0
      %v3577 = vmax.f32 %v3457, 0.0
      %v3578 = vmax.f32 %v3462, 0.0
      %v3579 = vmax.f32 %v3465, 0.0
      %v3580 = vmax.f32 %v3470, 0.0
      %v3581 = vmax.f32 %v3473, 0.0
      %v3582 = vmax.f32 %v3478, 0.0
      %v3583 = vmax.f32 %v3481, 0.0
      %v3584 = vmax.f32 %v3486, 0.0
      %v3585 = vmax.f32 %v3489, 0.0
      %v3586 = vmax.f32 %v3494, 0.0
      %v3587 = vmax.f32 %v3497, 0.0
      %v3588 = vmax.f32 %v3502, 0.0
      %v3589 = vmax.f32 %v3505, 0.0
      %v3590 = vmax.f32 %v3510, 0.0
      %v3591 = vmax.f32 %v3513, 0.0
      %v3592 = vmax.f32 %v3518, 0.0
      %v3593 = vmax.f32 %v3521, 0.0
      %v3594 = vmax.f32 %v3526, 0.0
      %v3595 = vmax.f32 %v3529, 0.0
      %v3596 = vpack.c.bf16 %v3533, %v3532
      %v3597 = vpack.c.bf16 %v3535, %v3534
      %v3598 = vpack.c.bf16 %v3537, %v3536
      %v3599 = vpack.c.bf16 %v3539, %v3538
      %v3600 = vpack.c.bf16 %v3541, %v3540
      %v3601 = vpack.c.bf16 %v3543, %v3542
      %v3602 = vpack.c.bf16 %v3545, %v3544
      %v3603 = vpack.c.bf16 %v3547, %v3546
      %v3604 = vpack.c.bf16 %v3549, %v3548
      %v3605 = vpack.c.bf16 %v3551, %v3550
      %v3606 = vpack.c.bf16 %v3553, %v3552
      %v3607 = vpack.c.bf16 %v3555, %v3554
      %v3608 = vpack.c.bf16 %v3557, %v3556
      %v3609 = vpack.c.bf16 %v3559, %v3558
      %v3610 = vpack.c.bf16 %v3561, %v3560
      %v3611 = vpack.c.bf16 %v3563, %v3562
      %v3612 = vpack.c.bf16 %v3565, %v3564
      %v3613 = vpack.c.bf16 %v3567, %v3566
      %v3614 = vpack.c.bf16 %v3569, %v3568
      %v3615 = vpack.c.bf16 %v3571, %v3570
      %v3616 = vpack.c.bf16 %v3573, %v3572
      %v3617 = vpack.c.bf16 %v3575, %v3574
      %v3618 = vpack.c.bf16 %v3577, %v3576
      %v3619 = vpack.c.bf16 %v3579, %v3578
      %v3620 = vpack.c.bf16 %v3581, %v3580
      %v3621 = vpack.c.bf16 %v3583, %v3582
      %v3622 = vpack.c.bf16 %v3585, %v3584
      %v3623 = vpack.c.bf16 %v3587, %v3586
      %v3624 = vpack.c.bf16 %v3589, %v3588
      %v3625 = vpack.c.bf16 %v3591, %v3590
      %v3626 = vpack.c.bf16 %v3593, %v3592
      %v3627 = vpack.c.bf16 %v3595, %v3594
      %v3628 = vld [vmem:[%s3] sm:$0xf]
      %v3629 = vld [vmem:[%s3 + $0x4] sm:$0xf]
      %v3630 = vld [vmem:[%s3 + $0x8] sm:$0xf]
      %v3631 = vld [vmem:[%s3 + $0xc] sm:$0xf]
      %v3632 = vld [vmem:[%s3 + $0x10] sm:$0xf]
      %v3633 = vld [vmem:[%s3 + $0x14] sm:$0xf]
      %v3634 = vld [vmem:[%s3 + $0x18] sm:$0xf]
      %v3635 = vld [vmem:[%s3 + $0x1c] sm:$0xf]
      %v3636 = vld [vmem:[%s3 + $0x20] sm:$0xf]
      %v3637 = vld [vmem:[%s3 + $0x24] sm:$0xf]
      %v3638 = vld [vmem:[%s3 + $0x28] sm:$0xf]
      %v3639 = vld [vmem:[%s3 + $0x2c] sm:$0xf]
      %v3640 = vld [vmem:[%s3 + $0x30] sm:$0xf]
      %v3641 = vld [vmem:[%s3 + $0x34] sm:$0xf]
      %v3642 = vld [vmem:[%s3 + $0x38] sm:$0xf]
      %v3643 = vld [vmem:[%s3 + $0x3c] sm:$0xf]
      %v3644 = vld [vmem:[%s4] sm:$0x1]
      %v3646 = vlaneseq
      %v3647 = vshrl.u32 %v3646, 7
      %v3648 = vsub.s32 0, %v3647
      %v3649 = vrot.slane %v3644, %v3648
      %v3667 = vunpack.c.l.b16 %v3628
      %v3668 = vunpack.c.l.b16 %v3629
      %v3669 = vunpack.c.l.b16 %v3630
      %v3670 = vunpack.c.l.b16 %v3631
      %v3671 = vunpack.c.l.b16 %v3632
      %v3672 = vunpack.c.l.b16 %v3633
      %v3673 = vunpack.c.l.b16 %v3634
      %v3674 = vunpack.c.l.b16 %v3635
      %v3675 = vunpack.c.l.b16 %v3636
      %v3676 = vunpack.c.l.b16 %v3637
      %v3677 = vunpack.c.l.b16 %v3638
      %v3678 = vunpack.c.l.b16 %v3639
      %v3679 = vunpack.c.l.b16 %v3640
      %v3680 = vunpack.c.l.b16 %v3641
      %v3681 = vunpack.c.l.b16 %v3642
      %v3682 = vunpack.c.l.b16 %v3643
      %v3683 = vpack.c.b16 %v3668, %v3667
      %v3684 = vpack.c.b16 %v3670, %v3669
      %v3685 = vpack.c.b16 %v3672, %v3671
      %v3686 = vpack.c.b16 %v3674, %v3673
      %v3687 = vpack.c.b16 %v3676, %v3675
      %v3688 = vpack.c.b16 %v3678, %v3677
      %v3689 = vpack.c.b16 %v3680, %v3679
      %v3690 = vpack.c.b16 %v3682, %v3681
      %3699 = vmatprep.subr.bf16.mxu0 0
      %3700 = vmatpush1.bf16.msra.mxu0 %v3683
      %3701 = vmatprep.subr.bf16.mxu0 0
      %3702 = vmatpush1.bf16.msra.mxu0 %v3684
      %3703 = vmatprep.subr.bf16.mxu0 0
      %3704 = vmatpush1.bf16.msra.mxu0 %v3685
      %3705 = vmatprep.subr.bf16.mxu0 0
      %3706 = vmatpush1.bf16.msra.mxu0 %v3686
      %3707 = vmatprep.subr.bf16.mxu0 0
      %3708 = vmatpush1.bf16.msra.mxu0 %v3687
      %3709 = vmatprep.subr.bf16.mxu0 0
      %3710 = vmatpush1.bf16.msra.mxu0 %v3688
      %3711 = vmatprep.subr.bf16.mxu0 0
      %3712 = vmatpush1.bf16.msra.mxu0 %v3689
      %3713 = vmatprep.subr.bf16.mxu0 0
      %3714 = vmatpush1.bf16.msra.mxu0 %v3690
      %3715 = vmatprep.subr.bf16.mxu0 0
      %3716 = vmatpush1.bf16.msra.mxu0 0
      %3717 = vmatprep.subr.bf16.mxu0 0
      %3718 = vmatpush1.bf16.msra.mxu0 0
      %3719 = vmatprep.subr.bf16.mxu0 0
      %3720 = vmatpush1.bf16.msra.mxu0 0
      %3721 = vmatprep.subr.bf16.mxu0 0
      %3722 = vmatpush1.bf16.msra.mxu0 0
      %3723 = vmatprep.subr.bf16.mxu0 0
      %3724 = vmatpush1.bf16.msra.mxu0 0
      %3725 = vmatprep.subr.bf16.mxu0 0
      %3726 = vmatpush1.bf16.msra.mxu0 0
      %3727 = vmatprep.subr.bf16.mxu0 0
      %3728 = vmatpush1.bf16.msra.mxu0 0
      %3729 = vmatprep.subr.bf16.mxu0 0
      %3730 = vmatpush1.bf16.msra.mxu0 0
      %3731 = vmatprep.mubr.bf16.mxu0 0
      %3732 = vmatmul.mubr.bf16.gmra.mrb[0].mxu0 %v3596
      %v3733 = vpop.f32.mrb[0].mxu0
      %v3734 = vadd.f32 %v3649, %v3733
      %v3735 = vpop.f32.mrb[0].mxu0
      %v3736 = vpop.f32.mrb[0].mxu0
      %v3737 = vadd.f32 %v3649, %v3736
      %v3738 = vpop.f32.mrb[0].mxu0
      %3739 = vmatprep.mubr.bf16.mxu0 0
      %3740 = vmatmul.mubr.bf16.gmra.mrb[0].mxu0 %v3597
      %v3741 = vpop.f32.mrb[0].mxu0
      %v3742 = vadd.f32 %v3649, %v3741
      %v3743 = vpop.f32.mrb[0].mxu0
      %v3744 = vpop.f32.mrb[0].mxu0
      %v3745 = vadd.f32 %v3649, %v3744
      %v3746 = vpop.f32.mrb[0].mxu0
      %3747 = vmatprep.mubr.bf16.mxu0 0
      %3748 = vmatmul.mubr.bf16.gmra.mrb[0].mxu0 %v3598
      %v3749 = vpop.f32.mrb[0].mxu0
      %v3750 = vadd.f32 %v3649, %v3749
      %v3751 = vpop.f32.mrb[0].mxu0
      %v3752 = vpop.f32.mrb[0].mxu0
      %v3753 = vadd.f32 %v3649, %v3752
      %v3754 = vpop.f32.mrb[0].mxu0
      %3755 = vmatprep.mubr.bf16.mxu0 0
      %3756 = vmatmul.mubr.bf16.gmra.mrb[0].mxu0 %v3599
      %v3757 = vpop.f32.mrb[0].mxu0
      %v3758 = vadd.f32 %v3649, %v3757
      %v3759 = vpop.f32.mrb[0].mxu0
      %v3760 = vpop.f32.mrb[0].mxu0
      %v3761 = vadd.f32 %v3649, %v3760
      %v3762 = vpop.f32.mrb[0].mxu0
      %3763 = vmatprep.mubr.bf16.mxu0 0
      %3764 = vmatmul.mubr.bf16.gmra.mrb[0].mxu0 %v3600
      %v3765 = vpop.f32.mrb[0].mxu0
      %v3766 = vadd.f32 %v3649, %v3765
      %v3767 = vpop.f32.mrb[0].mxu0
      %v3768 = vpop.f32.mrb[0].mxu0
      %v3769 = vadd.f32 %v3649, %v3768
      %v3770 = vpop.f32.mrb[0].mxu0
      %3771 = vmatprep.mubr.bf16.mxu0 0
      %3772 = vmatmul.mubr.bf16.gmra.mrb[0].mxu0 %v3601
      %v3773 = vpop.f32.mrb[0].mxu0
      %v3774 = vadd.f32 %v3649, %v3773
      %v3775 = vpop.f32.mrb[0].mxu0
      %v3776 = vpop.f32.mrb[0].mxu0
      %v3777 = vadd.f32 %v3649, %v3776
      %v3778 = vpop.f32.mrb[0].mxu0
      %3779 = vmatprep.mubr.bf16.mxu0 0
      %3780 = vmatmul.mubr.bf16.gmra.mrb[0].mxu0 %v3602
      %v3781 = vpop.f32.mrb[0].mxu0
      %v3782 = vadd.f32 %v3649, %v3781
      %v3783 = vpop.f32.mrb[0].mxu0
      %v3784 = vpop.f32.mrb[0].mxu0
      %v3785 = vadd.f32 %v3649, %v3784
      %v3786 = vpop.f32.mrb[0].mxu0
      %3787 = vmatprep.mubr.bf16.mxu0 0
      %3788 = vmatmul.mubr.bf16.gmra.mrb[0].mxu0 %v3603
      %v3789 = vpop.f32.mrb[0].mxu0
      %v3790 = vadd.f32 %v3649, %v3789
      %v3791 = vpop.f32.mrb[0].mxu0
      %v3792 = vpop.f32.mrb[0].mxu0
      %v3793 = vadd.f32 %v3649, %v3792
      %v3794 = vpop.f32.mrb[0].mxu0
      %3795 = vmatprep.mubr.bf16.mxu0 0
      %3796 = vmatmul.mubr.bf16.gmra.mrb[0].mxu0 %v3604
      %v3797 = vpop.f32.mrb[0].mxu0
      %v3798 = vadd.f32 %v3649, %v3797
      %v3799 = vpop.f32.mrb[0].mxu0
      %v3800 = vpop.f32.mrb[0].mxu0
      %v3801 = vadd.f32 %v3649, %v3800
      %v3802 = vpop.f32.mrb[0].mxu0
      %3803 = vmatprep.mubr.bf16.mxu0 0
      %3804 = vmatmul.mubr.bf16.gmra.mrb[0].mxu0 %v3605
      %v3805 = vpop.f32.mrb[0].mxu0
      %v3806 = vadd.f32 %v3649, %v3805
      %v3807 = vpop.f32.mrb[0].mxu0
      %v3808 = vpop.f32.mrb[0].mxu0
      %v3809 = vadd.f32 %v3649, %v3808
      %v3810 = vpop.f32.mrb[0].mxu0
      %3811 = vmatprep.mubr.bf16.mxu0 0
      %3812 = vmatmul.mubr.bf16.gmra.mrb[0].mxu0 %v3606
      %v3813 = vpop.f32.mrb[0].mxu0
      %v3814 = vadd.f32 %v3649, %v3813
      %v3815 = vpop.f32.mrb[0].mxu0
      %v3816 = vpop.f32.mrb[0].mxu0
      %v3817 = vadd.f32 %v3649, %v3816
      %v3818 = vpop.f32.mrb[0].mxu0
      %3819 = vmatprep.mubr.bf16.mxu0 0
      %3820 = vmatmul.mubr.bf16.gmra.mrb[0].mxu0 %v3607
      %v3821 = vpop.f32.mrb[0].mxu0
      %v3822 = vadd.f32 %v3649, %v3821
      %v3823 = vpop.f32.mrb[0].mxu0
      %v3824 = vpop.f32.mrb[0].mxu0
      %v3825 = vadd.f32 %v3649, %v3824
      %v3826 = vpop.f32.mrb[0].mxu0
      %3827 = vmatprep.mubr.bf16.mxu0 0
      %3828 = vmatmul.mubr.bf16.gmra.mrb[0].mxu0 %v3608
      %v3829 = vpop.f32.mrb[0].mxu0
      %v3830 = vadd.f32 %v3649, %v3829
      %v3831 = vpop.f32.mrb[0].mxu0
      %v3832 = vpop.f32.mrb[0].mxu0
      %v3833 = vadd.f32 %v3649, %v3832
      %v3834 = vpop.f32.mrb[0].mxu0
      %3835 = vmatprep.mubr.bf16.mxu0 0
      %3836 = vmatmul.mubr.bf16.gmra.mrb[0].mxu0 %v3609
      %v3837 = vpop.f32.mrb[0].mxu0
      %v3838 = vadd.f32 %v3649, %v3837
      %v3839 = vpop.f32.mrb[0].mxu0
      %v3840 = vpop.f32.mrb[0].mxu0
      %v3841 = vadd.f32 %v3649, %v3840
      %v3842 = vpop.f32.mrb[0].mxu0
      %3843 = vmatprep.mubr.bf16.mxu0 0
      %3844 = vmatmul.mubr.bf16.gmra.mrb[0].mxu0 %v3610
      %v3845 = vpop.f32.mrb[0].mxu0
      %v3846 = vadd.f32 %v3649, %v3845
      %v3847 = vpop.f32.mrb[0].mxu0
      %v3848 = vpop.f32.mrb[0].mxu0
      %v3849 = vadd.f32 %v3649, %v3848
      %v3850 = vpop.f32.mrb[0].mxu0
      %3851 = vmatprep.mubr.bf16.mxu0 0
      %3852 = vmatmul.mubr.bf16.gmra.mrb[0].mxu0 %v3611
      %v3853 = vpop.f32.mrb[0].mxu0
      %v3854 = vadd.f32 %v3649, %v3853
      %v3855 = vpop.f32.mrb[0].mxu0
      %v3856 = vpop.f32.mrb[0].mxu0
      %v3857 = vadd.f32 %v3649, %v3856
      %v3858 = vpop.f32.mrb[0].mxu0
      %3859 = vmatprep.mubr.bf16.mxu0 0
      %3860 = vmatmul.mubr.bf16.gmra.mrb[0].mxu0 %v3612
      %v3861 = vpop.f32.mrb[0].mxu0
      %v3862 = vadd.f32 %v3649, %v3861
      %v3863 = vpop.f32.mrb[0].mxu0
      %v3864 = vpop.f32.mrb[0].mxu0
      %v3865 = vadd.f32 %v3649, %v3864
      %v3866 = vpop.f32.mrb[0].mxu0
      %3867 = vmatprep.mubr.bf16.mxu0 0
      %3868 = vmatmul.mubr.bf16.gmra.mrb[0].mxu0 %v3613
      %v3869 = vpop.f32.mrb[0].mxu0
      %v3870 = vadd.f32 %v3649, %v3869
      %v3871 = vpop.f32.mrb[0].mxu0
      %v3872 = vpop.f32.mrb[0].mxu0
      %v3873 = vadd.f32 %v3649, %v3872
      %v3874 = vpop.f32.mrb[0].mxu0
      %3875 = vmatprep.mubr.bf16.mxu0 0
      %3876 = vmatmul.mubr.bf16.gmra.mrb[0].mxu0 %v3614
      %v3877 = vpop.f32.mrb[0].mxu0
      %v3878 = vadd.f32 %v3649, %v3877
      %v3879 = vpop.f32.mrb[0].mxu0
      %v3880 = vpop.f32.mrb[0].mxu0
      %v3881 = vadd.f32 %v3649, %v3880
      %v3882 = vpop.f32.mrb[0].mxu0
      %3883 = vmatprep.mubr.bf16.mxu0 0
      %3884 = vmatmul.mubr.bf16.gmra.mrb[0].mxu0 %v3615
      %v3885 = vpop.f32.mrb[0].mxu0
      %v3886 = vadd.f32 %v3649, %v3885
      %v3887 = vpop.f32.mrb[0].mxu0
      %v3888 = vpop.f32.mrb[0].mxu0
      %v3889 = vadd.f32 %v3649, %v3888
      %v3890 = vpop.f32.mrb[0].mxu0
      %3891 = vmatprep.mubr.bf16.mxu0 0
      %3892 = vmatmul.mubr.bf16.gmra.mrb[0].mxu0 %v3616
      %v3893 = vpop.f32.mrb[0].mxu0
      %v3894 = vadd.f32 %v3649, %v3893
      %v3895 = vpop.f32.mrb[0].mxu0
      %v3896 = vpop.f32.mrb[0].mxu0
      %v3897 = vadd.f32 %v3649, %v3896
      %v3898 = vpop.f32.mrb[0].mxu0
      %3899 = vmatprep.mubr.bf16.mxu0 0
      %3900 = vmatmul.mubr.bf16.gmra.mrb[0].mxu0 %v3617
      %v3901 = vpop.f32.mrb[0].mxu0
      %v3902 = vadd.f32 %v3649, %v3901
      %v3903 = vpop.f32.mrb[0].mxu0
      %v3904 = vpop.f32.mrb[0].mxu0
      %v3905 = vadd.f32 %v3649, %v3904
      %v3906 = vpop.f32.mrb[0].mxu0
      %3907 = vmatprep.mubr.bf16.mxu0 0
      %3908 = vmatmul.mubr.bf16.gmra.mrb[0].mxu0 %v3618
      %v3909 = vpop.f32.mrb[0].mxu0
      %v3910 = vadd.f32 %v3649, %v3909
      %v3911 = vpop.f32.mrb[0].mxu0
      %v3912 = vpop.f32.mrb[0].mxu0
      %v3913 = vadd.f32 %v3649, %v3912
      %v3914 = vpop.f32.mrb[0].mxu0
      %3915 = vmatprep.mubr.bf16.mxu0 0
      %3916 = vmatmul.mubr.bf16.gmra.mrb[0].mxu0 %v3619
      %v3917 = vpop.f32.mrb[0].mxu0
      %v3918 = vadd.f32 %v3649, %v3917
      %v3919 = vpop.f32.mrb[0].mxu0
      %v3920 = vpop.f32.mrb[0].mxu0
      %v3921 = vadd.f32 %v3649, %v3920
      %v3922 = vpop.f32.mrb[0].mxu0
      %3923 = vmatprep.mubr.bf16.mxu0 0
      %3924 = vmatmul.mubr.bf16.gmra.mrb[0].mxu0 %v3620
      %v3925 = vpop.f32.mrb[0].mxu0
      %v3926 = vadd.f32 %v3649, %v3925
      %v3927 = vpop.f32.mrb[0].mxu0
      %v3928 = vpop.f32.mrb[0].mxu0
      %v3929 = vadd.f32 %v3649, %v3928
      %v3930 = vpop.f32.mrb[0].mxu0
      %3931 = vmatprep.mubr.bf16.mxu0 0
      %3932 = vmatmul.mubr.bf16.gmra.mrb[0].mxu0 %v3621
      %v3933 = vpop.f32.mrb[0].mxu0
      %v3934 = vadd.f32 %v3649, %v3933
      %v3935 = vpop.f32.mrb[0].mxu0
      %v3936 = vpop.f32.mrb[0].mxu0
      %v3937 = vadd.f32 %v3649, %v3936
      %v3938 = vpop.f32.mrb[0].mxu0
      %3939 = vmatprep.mubr.bf16.mxu0 0
      %3940 = vmatmul.mubr.bf16.gmra.mrb[0].mxu0 %v3622
      %v3941 = vpop.f32.mrb[0].mxu0
      %v3942 = vadd.f32 %v3649, %v3941
      %v3943 = vpop.f32.mrb[0].mxu0
      %v3944 = vpop.f32.mrb[0].mxu0
      %v3945 = vadd.f32 %v3649, %v3944
      %v3946 = vpop.f32.mrb[0].mxu0
      %3947 = vmatprep.mubr.bf16.mxu0 0
      %3948 = vmatmul.mubr.bf16.gmra.mrb[0].mxu0 %v3623
      %v3949 = vpop.f32.mrb[0].mxu0
      %v3950 = vadd.f32 %v3649, %v3949
      %v3951 = vpop.f32.mrb[0].mxu0
      %v3952 = vpop.f32.mrb[0].mxu0
      %v3953 = vadd.f32 %v3649, %v3952
      %v3954 = vpop.f32.mrb[0].mxu0
      %3955 = vmatprep.mubr.bf16.mxu0 0
      %3956 = vmatmul.mubr.bf16.gmra.mrb[0].mxu0 %v3624
      %v3957 = vpop.f32.mrb[0].mxu0
      %v3958 = vadd.f32 %v3649, %v3957
      %v3959 = vpop.f32.mrb[0].mxu0
      %v3960 = vpop.f32.mrb[0].mxu0
      %v3961 = vadd.f32 %v3649, %v3960
      %v3962 = vpop.f32.mrb[0].mxu0
      %3963 = vmatprep.mubr.bf16.mxu0 0
      %3964 = vmatmul.mubr.bf16.gmra.mrb[0].mxu0 %v3625
      %v3965 = vpop.f32.mrb[0].mxu0
      %v3966 = vadd.f32 %v3649, %v3965
      %v3967 = vpop.f32.mrb[0].mxu0
      %v3968 = vpop.f32.mrb[0].mxu0
      %v3969 = vadd.f32 %v3649, %v3968
      %v3970 = vpop.f32.mrb[0].mxu0
      %3971 = vmatprep.mubr.bf16.mxu0 0
      %3972 = vmatmul.mubr.bf16.gmra.mrb[0].mxu0 %v3626
      %v3973 = vpop.f32.mrb[0].mxu0
      %v3974 = vadd.f32 %v3649, %v3973
      %v3975 = vpop.f32.mrb[0].mxu0
      %v3976 = vpop.f32.mrb[0].mxu0
      %v3977 = vadd.f32 %v3649, %v3976
      %v3978 = vpop.f32.mrb[0].mxu0
      %3979 = vmatprep.mubr.bf16.mxu0 0
      %3980 = vmatmul.mubr.bf16.gmra.mrb[0].mxu0 %v3627
      %v3981 = vpop.f32.mrb[0].mxu0
      %v3982 = vadd.f32 %v3649, %v3981
      %v3983 = vpop.f32.mrb[0].mxu0
      %v3984 = vpop.f32.mrb[0].mxu0
      %v3985 = vadd.f32 %v3649, %v3984
      %v3986 = vpop.f32.mrb[0].mxu0
      %3987 = vdwg.mxu0
      %v3988 = vmax.f32 %v3734, 0.0
      %v3989 = vmax.f32 %v3737, 0.0
      %v3990 = vmax.f32 %v3742, 0.0
      %v3991 = vmax.f32 %v3745, 0.0
      %v3992 = vmax.f32 %v3750, 0.0
      %v3993 = vmax.f32 %v3753, 0.0
      %v3994 = vmax.f32 %v3758, 0.0
      %v3995 = vmax.f32 %v3761, 0.0
      %v3996 = vmax.f32 %v3766, 0.0
      %v3997 = vmax.f32 %v3769, 0.0
      %v3998 = vmax.f32 %v3774, 0.0
      %v3999 = vmax.f32 %v3777, 0.0
      %v4000 = vmax.f32 %v3782, 0.0
      %v4001 = vmax.f32 %v3785, 0.0
      %v4002 = vmax.f32 %v3790, 0.0
      %v4003 = vmax.f32 %v3793, 0.0
      %v4004 = vmax.f32 %v3798, 0.0
      %v4005 = vmax.f32 %v3801, 0.0
      %v4006 = vmax.f32 %v3806, 0.0
      %v4007 = vmax.f32 %v3809, 0.0
      %v4008 = vmax.f32 %v3814, 0.0
      %v4009 = vmax.f32 %v3817, 0.0
      %v4010 = vmax.f32 %v3822, 0.0
      %v4011 = vmax.f32 %v3825, 0.0
      %v4012 = vmax.f32 %v3830, 0.0
      %v4013 = vmax.f32 %v3833, 0.0
      %v4014 = vmax.f32 %v3838, 0.0
      %v4015 = vmax.f32 %v3841, 0.0
      %v4016 = vmax.f32 %v3846, 0.0
      %v4017 = vmax.f32 %v3849, 0.0
      %v4018 = vmax.f32 %v3854, 0.0
      %v4019 = vmax.f32 %v3857, 0.0
      %v4020 = vmax.f32 %v3862, 0.0
      %v4021 = vmax.f32 %v3865, 0.0
      %v4022 = vmax.f32 %v3870, 0.0
      %v4023 = vmax.f32 %v3873, 0.0
      %v4024 = vmax.f32 %v3878, 0.0
      %v4025 = vmax.f32 %v3881, 0.0
      %v4026 = vmax.f32 %v3886, 0.0
      %v4027 = vmax.f32 %v3889, 0.0
      %v4028 = vmax.f32 %v3894, 0.0
      %v4029 = vmax.f32 %v3897, 0.0
      %v4030 = vmax.f32 %v3902, 0.0
      %v4031 = vmax.f32 %v3905, 0.0
      %v4032 = vmax.f32 %v3910, 0.0
      %v4033 = vmax.f32 %v3913, 0.0
      %v4034 = vmax.f32 %v3918, 0.0
      %v4035 = vmax.f32 %v3921, 0.0
      %v4036 = vmax.f32 %v3926, 0.0
      %v4037 = vmax.f32 %v3929, 0.0
      %v4038 = vmax.f32 %v3934, 0.0
      %v4039 = vmax.f32 %v3937, 0.0
      %v4040 = vmax.f32 %v3942, 0.0
      %v4041 = vmax.f32 %v3945, 0.0
      %v4042 = vmax.f32 %v3950, 0.0
      %v4043 = vmax.f32 %v3953, 0.0
      %v4044 = vmax.f32 %v3958, 0.0
      %v4045 = vmax.f32 %v3961, 0.0
      %v4046 = vmax.f32 %v3966, 0.0
      %v4047 = vmax.f32 %v3969, 0.0
      %v4048 = vmax.f32 %v3974, 0.0
      %v4049 = vmax.f32 %v3977, 0.0
      %v4050 = vmax.f32 %v3982, 0.0
      %v4051 = vmax.f32 %v3985, 0.0
      %v4052 = vpack.c.bf16 %v3989, %v3988
      %v4053 = vpack.c.bf16 %v3991, %v3990
      %v4054 = vpack.c.bf16 %v3993, %v3992
      %v4055 = vpack.c.bf16 %v3995, %v3994
      %v4056 = vpack.c.bf16 %v3997, %v3996
      %v4057 = vpack.c.bf16 %v3999, %v3998
      %v4058 = vpack.c.bf16 %v4001, %v4000
      %v4059 = vpack.c.bf16 %v4003, %v4002
      %v4060 = vpack.c.bf16 %v4005, %v4004
      %v4061 = vpack.c.bf16 %v4007, %v4006
      %v4062 = vpack.c.bf16 %v4009, %v4008
      %v4063 = vpack.c.bf16 %v4011, %v4010
      %v4064 = vpack.c.bf16 %v4013, %v4012
      %v4065 = vpack.c.bf16 %v4015, %v4014
      %v4066 = vpack.c.bf16 %v4017, %v4016
      %v4067 = vpack.c.bf16 %v4019, %v4018
      %v4068 = vpack.c.bf16 %v4021, %v4020
      %v4069 = vpack.c.bf16 %v4023, %v4022
      %v4070 = vpack.c.bf16 %v4025, %v4024
      %v4071 = vpack.c.bf16 %v4027, %v4026
      %v4072 = vpack.c.bf16 %v4029, %v4028
      %v4073 = vpack.c.bf16 %v4031, %v4030
      %v4074 = vpack.c.bf16 %v4033, %v4032
      %v4075 = vpack.c.bf16 %v4035, %v4034
      %v4076 = vpack.c.bf16 %v4037, %v4036
      %v4077 = vpack.c.bf16 %v4039, %v4038
      %v4078 = vpack.c.bf16 %v4041, %v4040
      %v4079 = vpack.c.bf16 %v4043, %v4042
      %v4080 = vpack.c.bf16 %v4045, %v4044
      %v4081 = vpack.c.bf16 %v4047, %v4046
      %v4082 = vpack.c.bf16 %v4049, %v4048
      %v4083 = vpack.c.bf16 %v4051, %v4050
      %v4084 = vld [vmem:[%s5] sm:$0xf]
      %v4085 = vld [vmem:[%s5 + $0x4] sm:$0xf]
      %v4086 = vld [vmem:[%s5 + $0x8] sm:$0xf]
      %v4087 = vld [vmem:[%s5 + $0xc] sm:$0xf]
      %v4088 = vld [vmem:[%s5 + $0x10] sm:$0xf]
      %v4089 = vld [vmem:[%s5 + $0x14] sm:$0xf]
      %v4090 = vld [vmem:[%s5 + $0x18] sm:$0xf]
      %v4091 = vld [vmem:[%s5 + $0x1c] sm:$0xf]
      %v4092 = vld [vmem:[%s6] sm:$0x1]
      %v4094 = vlaneseq
      %v4095 = vshrl.u32 %v4094, 7
      %v4096 = vsub.s32 0, %v4095
      %v4097 = vrot.slane %v4092, %v4096
      %v4107 = vunpack.c.l.b16 %v4084
      %v4108 = vunpack.c.l.b16 %v4085
      %v4109 = vunpack.c.l.b16 %v4086
      %v4110 = vunpack.c.l.b16 %v4087
      %v4111 = vunpack.c.l.b16 %v4088
      %v4112 = vunpack.c.l.b16 %v4089
      %v4113 = vunpack.c.l.b16 %v4090
      %v4114 = vunpack.c.l.b16 %v4091
      %v4115 = vpack.c.b16 %v4108, %v4107
      %v4116 = vpack.c.b16 %v4110, %v4109
      %v4117 = vpack.c.b16 %v4112, %v4111
      %v4118 = vpack.c.b16 %v4114, %v4113
      %vm4123 = vcmask 523264
      %v4125 = vsel %vm4123, %v4052, 0
      %v4128 = vsel %vm4123, %v4053, 0
      %v4131 = vsel %vm4123, %v4054, 0
      %v4134 = vsel %vm4123, %v4055, 0
      %v4137 = vsel %vm4123, %v4056, 0
      %v4140 = vsel %vm4123, %v4057, 0
      %v4143 = vsel %vm4123, %v4058, 0
      %v4146 = vsel %vm4123, %v4059, 0
      %v4149 = vsel %vm4123, %v4060, 0
      %v4152 = vsel %vm4123, %v4061, 0
      %v4155 = vsel %vm4123, %v4062, 0
      %v4158 = vsel %vm4123, %v4063, 0
      %v4161 = vsel %vm4123, %v4064, 0
      %v4164 = vsel %vm4123, %v4065, 0
      %v4167 = vsel %vm4123, %v4066, 0
      %v4170 = vsel %vm4123, %v4067, 0
      %v4173 = vsel %vm4123, %v4068, 0
      %v4176 = vsel %vm4123, %v4069, 0
      %v4179 = vsel %vm4123, %v4070, 0
      %v4182 = vsel %vm4123, %v4071, 0
      %v4185 = vsel %vm4123, %v4072, 0
      %v4188 = vsel %vm4123, %v4073, 0
      %v4191 = vsel %vm4123, %v4074, 0
      %v4194 = vsel %vm4123, %v4075, 0
      %v4197 = vsel %vm4123, %v4076, 0
      %v4200 = vsel %vm4123, %v4077, 0
      %v4203 = vsel %vm4123, %v4078, 0
      %v4206 = vsel %vm4123, %v4079, 0
      %v4209 = vsel %vm4123, %v4080, 0
      %v4212 = vsel %vm4123, %v4081, 0
      %v4215 = vsel %vm4123, %v4082, 0
      %v4218 = vsel %vm4123, %v4083, 0
      %4220 = vmatprep.subr.bf16.mxu0 0
      %4221 = vmatpush1.bf16.msra.mxu0 %v4115
      %4222 = vmatprep.subr.bf16.mxu0 0
      %4223 = vmatpush1.bf16.msra.mxu0 %v4116
      %4224 = vmatprep.subr.bf16.mxu0 0
      %4225 = vmatpush1.bf16.msra.mxu0 %v4117
      %4226 = vmatprep.subr.bf16.mxu0 0
      %4227 = vmatpush1.bf16.msra.mxu0 %v4118
      %4228 = vmatprep.subr.bf16.mxu0 0
      %4229 = vmatpush1.bf16.msra.mxu0 0
      %4230 = vmatprep.subr.bf16.mxu0 0
      %4231 = vmatpush1.bf16.msra.mxu0 0
      %4232 = vmatprep.subr.bf16.mxu0 0
      %4233 = vmatpush1.bf16.msra.mxu0 0
      %4234 = vmatprep.subr.bf16.mxu0 0
      %4235 = vmatpush1.bf16.msra.mxu0 0
      %4236 = vmatprep.subr.bf16.mxu0 0
      %4237 = vmatpush1.bf16.msra.mxu0 0
      %4238 = vmatprep.subr.bf16.mxu0 0
      %4239 = vmatpush1.bf16.msra.mxu0 0
      %4240 = vmatprep.subr.bf16.mxu0 0
      %4241 = vmatpush1.bf16.msra.mxu0 0
      %4242 = vmatprep.subr.bf16.mxu0 0
      %4243 = vmatpush1.bf16.msra.mxu0 0
      %4244 = vmatprep.subr.bf16.mxu0 0
      %4245 = vmatpush1.bf16.msra.mxu0 0
      %4246 = vmatprep.subr.bf16.mxu0 0
      %4247 = vmatpush1.bf16.msra.mxu0 0
      %4248 = vmatprep.subr.bf16.mxu0 0
      %4249 = vmatpush1.bf16.msra.mxu0 0
      %4250 = vmatprep.subr.bf16.mxu0 0
      %4251 = vmatpush1.bf16.msra.mxu0 0
      %4252 = vmatprep.mubr.bf16.mxu0 0
      %4253 = vmatmul.mubr.bf16.gmra.mrb[0].mxu0 %v4125
      %v4254 = vpop.f32.mrb[0].mxu0
      %v4255 = vadd.f32 %v4097, %v4254
      %v4256 = vpop.f32.mrb[0].mxu0
      %v4257 = vpop.f32.mrb[0].mxu0
      %v4258 = vadd.f32 %v4097, %v4257
      %v4259 = vpop.f32.mrb[0].mxu0
      %4260 = vmatprep.mubr.bf16.mxu0 0
      %4261 = vmatmul.mubr.bf16.gmra.mrb[0].mxu0 %v4128
      %v4262 = vpop.f32.mrb[0].mxu0
      %v4263 = vadd.f32 %v4097, %v4262
      %v4264 = vpop.f32.mrb[0].mxu0
      %v4265 = vpop.f32.mrb[0].mxu0
      %v4266 = vadd.f32 %v4097, %v4265
      %v4267 = vpop.f32.mrb[0].mxu0
      %4268 = vmatprep.mubr.bf16.mxu0 0
      %4269 = vmatmul.mubr.bf16.gmra.mrb[0].mxu0 %v4131
      %v4270 = vpop.f32.mrb[0].mxu0
      %v4271 = vadd.f32 %v4097, %v4270
      %v4272 = vpop.f32.mrb[0].mxu0
      %v4273 = vpop.f32.mrb[0].mxu0
      %v4274 = vadd.f32 %v4097, %v4273
      %v4275 = vpop.f32.mrb[0].mxu0
      %4276 = vmatprep.mubr.bf16.mxu0 0
      %4277 = vmatmul.mubr.bf16.gmra.mrb[0].mxu0 %v4134
      %v4278 = vpop.f32.mrb[0].mxu0
      %v4279 = vadd.f32 %v4097, %v4278
      %v4280 = vpop.f32.mrb[0].mxu0
      %v4281 = vpop.f32.mrb[0].mxu0
      %v4282 = vadd.f32 %v4097, %v4281
      %v4283 = vpop.f32.mrb[0].mxu0
      %4284 = vmatprep.mubr.bf16.mxu0 0
      %4285 = vmatmul.mubr.bf16.gmra.mrb[0].mxu0 %v4137
      %v4286 = vpop.f32.mrb[0].mxu0
      %v4287 = vadd.f32 %v4097, %v4286
      %v4288 = vpop.f32.mrb[0].mxu0
      %v4289 = vpop.f32.mrb[0].mxu0
      %v4290 = vadd.f32 %v4097, %v4289
      %v4291 = vpop.f32.mrb[0].mxu0
      %4292 = vmatprep.mubr.bf16.mxu0 0
      %4293 = vmatmul.mubr.bf16.gmra.mrb[0].mxu0 %v4140
      %v4294 = vpop.f32.mrb[0].mxu0
      %v4295 = vadd.f32 %v4097, %v4294
      %v4296 = vpop.f32.mrb[0].mxu0
      %v4297 = vpop.f32.mrb[0].mxu0
      %v4298 = vadd.f32 %v4097, %v4297
      %v4299 = vpop.f32.mrb[0].mxu0
      %4300 = vmatprep.mubr.bf16.mxu0 0
      %4301 = vmatmul.mubr.bf16.gmra.mrb[0].mxu0 %v4143
      %v4302 = vpop.f32.mrb[0].mxu0
      %v4303 = vadd.f32 %v4097, %v4302
      %v4304 = vpop.f32.mrb[0].mxu0
      %v4305 = vpop.f32.mrb[0].mxu0
      %v4306 = vadd.f32 %v4097, %v4305
      %v4307 = vpop.f32.mrb[0].mxu0
      %4308 = vmatprep.mubr.bf16.mxu0 0
      %4309 = vmatmul.mubr.bf16.gmra.mrb[0].mxu0 %v4146
      %v4310 = vpop.f32.mrb[0].mxu0
      %v4311 = vadd.f32 %v4097, %v4310
      %v4312 = vpop.f32.mrb[0].mxu0
      %v4313 = vpop.f32.mrb[0].mxu0
      %v4314 = vadd.f32 %v4097, %v4313
      %v4315 = vpop.f32.mrb[0].mxu0
      %4316 = vmatprep.mubr.bf16.mxu0 0
      %4317 = vmatmul.mubr.bf16.gmra.mrb[0].mxu0 %v4149
      %v4318 = vpop.f32.mrb[0].mxu0
      %v4319 = vadd.f32 %v4097, %v4318
      %v4320 = vpop.f32.mrb[0].mxu0
      %v4321 = vpop.f32.mrb[0].mxu0
      %v4322 = vadd.f32 %v4097, %v4321
      %v4323 = vpop.f32.mrb[0].mxu0
      %4324 = vmatprep.mubr.bf16.mxu0 0
      %4325 = vmatmul.mubr.bf16.gmra.mrb[0].mxu0 %v4152
      %v4326 = vpop.f32.mrb[0].mxu0
      %v4327 = vadd.f32 %v4097, %v4326
      %v4328 = vpop.f32.mrb[0].mxu0
      %v4329 = vpop.f32.mrb[0].mxu0
      %v4330 = vadd.f32 %v4097, %v4329
      %v4331 = vpop.f32.mrb[0].mxu0
      %4332 = vmatprep.mubr.bf16.mxu0 0
      %4333 = vmatmul.mubr.bf16.gmra.mrb[0].mxu0 %v4155
      %v4334 = vpop.f32.mrb[0].mxu0
      %v4335 = vadd.f32 %v4097, %v4334
      %v4336 = vpop.f32.mrb[0].mxu0
      %v4337 = vpop.f32.mrb[0].mxu0
      %v4338 = vadd.f32 %v4097, %v4337
      %v4339 = vpop.f32.mrb[0].mxu0
      %4340 = vmatprep.mubr.bf16.mxu0 0
      %4341 = vmatmul.mubr.bf16.gmra.mrb[0].mxu0 %v4158
      %v4342 = vpop.f32.mrb[0].mxu0
      %v4343 = vadd.f32 %v4097, %v4342
      %v4344 = vpop.f32.mrb[0].mxu0
      %v4345 = vpop.f32.mrb[0].mxu0
      %v4346 = vadd.f32 %v4097, %v4345
      %v4347 = vpop.f32.mrb[0].mxu0
      %4348 = vmatprep.mubr.bf16.mxu0 0
      %4349 = vmatmul.mubr.bf16.gmra.mrb[0].mxu0 %v4161
      %v4350 = vpop.f32.mrb[0].mxu0
      %v4351 = vadd.f32 %v4097, %v4350
      %v4352 = vpop.f32.mrb[0].mxu0
      %v4353 = vpop.f32.mrb[0].mxu0
      %v4354 = vadd.f32 %v4097, %v4353
      %v4355 = vpop.f32.mrb[0].mxu0
      %4356 = vmatprep.mubr.bf16.mxu0 0
      %4357 = vmatmul.mubr.bf16.gmra.mrb[0].mxu0 %v4164
      %v4358 = vpop.f32.mrb[0].mxu0
      %v4359 = vadd.f32 %v4097, %v4358
      %v4360 = vpop.f32.mrb[0].mxu0
      %v4361 = vpop.f32.mrb[0].mxu0
      %v4362 = vadd.f32 %v4097, %v4361
      %v4363 = vpop.f32.mrb[0].mxu0
      %4364 = vmatprep.mubr.bf16.mxu0 0
      %4365 = vmatmul.mubr.bf16.gmra.mrb[0].mxu0 %v4167
      %v4366 = vpop.f32.mrb[0].mxu0
      %v4367 = vadd.f32 %v4097, %v4366
      %v4368 = vpop.f32.mrb[0].mxu0
      %v4369 = vpop.f32.mrb[0].mxu0
      %v4370 = vadd.f32 %v4097, %v4369
      %v4371 = vpop.f32.mrb[0].mxu0
      %4372 = vmatprep.mubr.bf16.mxu0 0
      %4373 = vmatmul.mubr.bf16.gmra.mrb[0].mxu0 %v4170
      %v4374 = vpop.f32.mrb[0].mxu0
      %v4375 = vadd.f32 %v4097, %v4374
      %v4376 = vpop.f32.mrb[0].mxu0
      %v4377 = vpop.f32.mrb[0].mxu0
      %v4378 = vadd.f32 %v4097, %v4377
      %v4379 = vpop.f32.mrb[0].mxu0
      %4380 = vmatprep.mubr.bf16.mxu0 0
      %4381 = vmatmul.mubr.bf16.gmra.mrb[0].mxu0 %v4173
      %v4382 = vpop.f32.mrb[0].mxu0
      %v4383 = vadd.f32 %v4097, %v4382
      %v4384 = vpop.f32.mrb[0].mxu0
      %v4385 = vpop.f32.mrb[0].mxu0
      %v4386 = vadd.f32 %v4097, %v4385
      %v4387 = vpop.f32.mrb[0].mxu0
      %4388 = vmatprep.mubr.bf16.mxu0 0
      %4389 = vmatmul.mubr.bf16.gmra.mrb[0].mxu0 %v4176
      %v4390 = vpop.f32.mrb[0].mxu0
      %v4391 = vadd.f32 %v4097, %v4390
      %v4392 = vpop.f32.mrb[0].mxu0
      %v4393 = vpop.f32.mrb[0].mxu0
      %v4394 = vadd.f32 %v4097, %v4393
      %v4395 = vpop.f32.mrb[0].mxu0
      %4396 = vmatprep.mubr.bf16.mxu0 0
      %4397 = vmatmul.mubr.bf16.gmra.mrb[0].mxu0 %v4179
      %v4398 = vpop.f32.mrb[0].mxu0
      %v4399 = vadd.f32 %v4097, %v4398
      %v4400 = vpop.f32.mrb[0].mxu0
      %v4401 = vpop.f32.mrb[0].mxu0
      %v4402 = vadd.f32 %v4097, %v4401
      %v4403 = vpop.f32.mrb[0].mxu0
      %4404 = vmatprep.mubr.bf16.mxu0 0
      %4405 = vmatmul.mubr.bf16.gmra.mrb[0].mxu0 %v4182
      %v4406 = vpop.f32.mrb[0].mxu0
      %v4407 = vadd.f32 %v4097, %v4406
      %v4408 = vpop.f32.mrb[0].mxu0
      %v4409 = vpop.f32.mrb[0].mxu0
      %v4410 = vadd.f32 %v4097, %v4409
      %v4411 = vpop.f32.mrb[0].mxu0
      %4412 = vmatprep.mubr.bf16.mxu0 0
      %4413 = vmatmul.mubr.bf16.gmra.mrb[0].mxu0 %v4185
      %v4414 = vpop.f32.mrb[0].mxu0
      %v4415 = vadd.f32 %v4097, %v4414
      %v4416 = vpop.f32.mrb[0].mxu0
      %v4417 = vpop.f32.mrb[0].mxu0
      %v4418 = vadd.f32 %v4097, %v4417
      %v4419 = vpop.f32.mrb[0].mxu0
      %4420 = vmatprep.mubr.bf16.mxu0 0
      %4421 = vmatmul.mubr.bf16.gmra.mrb[0].mxu0 %v4188
      %v4422 = vpop.f32.mrb[0].mxu0
      %v4423 = vadd.f32 %v4097, %v4422
      %v4424 = vpop.f32.mrb[0].mxu0
      %v4425 = vpop.f32.mrb[0].mxu0
      %v4426 = vadd.f32 %v4097, %v4425
      %v4427 = vpop.f32.mrb[0].mxu0
      %4428 = vmatprep.mubr.bf16.mxu0 0
      %4429 = vmatmul.mubr.bf16.gmra.mrb[0].mxu0 %v4191
      %v4430 = vpop.f32.mrb[0].mxu0
      %v4431 = vadd.f32 %v4097, %v4430
      %v4432 = vpop.f32.mrb[0].mxu0
      %v4433 = vpop.f32.mrb[0].mxu0
      %v4434 = vadd.f32 %v4097, %v4433
      %v4435 = vpop.f32.mrb[0].mxu0
      %4436 = vmatprep.mubr.bf16.mxu0 0
      %4437 = vmatmul.mubr.bf16.gmra.mrb[0].mxu0 %v4194
      %v4438 = vpop.f32.mrb[0].mxu0
      %v4439 = vadd.f32 %v4097, %v4438
      %v4440 = vpop.f32.mrb[0].mxu0
      %v4441 = vpop.f32.mrb[0].mxu0
      %v4442 = vadd.f32 %v4097, %v4441
      %v4443 = vpop.f32.mrb[0].mxu0
      %4444 = vmatprep.mubr.bf16.mxu0 0
      %4445 = vmatmul.mubr.bf16.gmra.mrb[0].mxu0 %v4197
      %v4446 = vpop.f32.mrb[0].mxu0
      %v4447 = vadd.f32 %v4097, %v4446
      %v4448 = vpop.f32.mrb[0].mxu0
      %v4449 = vpop.f32.mrb[0].mxu0
      %v4450 = vadd.f32 %v4097, %v4449
      %v4451 = vpop.f32.mrb[0].mxu0
      %4452 = vmatprep.mubr.bf16.mxu0 0
      %4453 = vmatmul.mubr.bf16.gmra.mrb[0].mxu0 %v4200
      %v4454 = vpop.f32.mrb[0].mxu0
      %v4455 = vadd.f32 %v4097, %v4454
      %v4456 = vpop.f32.mrb[0].mxu0
      %v4457 = vpop.f32.mrb[0].mxu0
      %v4458 = vadd.f32 %v4097, %v4457
      %v4459 = vpop.f32.mrb[0].mxu0
      %4460 = vmatprep.mubr.bf16.mxu0 0
      %4461 = vmatmul.mubr.bf16.gmra.mrb[0].mxu0 %v4203
      %v4462 = vpop.f32.mrb[0].mxu0
      %v4463 = vadd.f32 %v4097, %v4462
      %v4464 = vpop.f32.mrb[0].mxu0
      %v4465 = vpop.f32.mrb[0].mxu0
      %v4466 = vadd.f32 %v4097, %v4465
      %v4467 = vpop.f32.mrb[0].mxu0
      %4468 = vmatprep.mubr.bf16.mxu0 0
      %4469 = vmatmul.mubr.bf16.gmra.mrb[0].mxu0 %v4206
      %v4470 = vpop.f32.mrb[0].mxu0
      %v4471 = vadd.f32 %v4097, %v4470
      %v4472 = vpop.f32.mrb[0].mxu0
      %v4473 = vpop.f32.mrb[0].mxu0
      %v4474 = vadd.f32 %v4097, %v4473
      %v4475 = vpop.f32.mrb[0].mxu0
      %4476 = vmatprep.mubr.bf16.mxu0 0
      %4477 = vmatmul.mubr.bf16.gmra.mrb[0].mxu0 %v4209
      %v4478 = vpop.f32.mrb[0].mxu0
      %v4479 = vadd.f32 %v4097, %v4478
      %v4480 = vpop.f32.mrb[0].mxu0
      %v4481 = vpop.f32.mrb[0].mxu0
      %v4482 = vadd.f32 %v4097, %v4481
      %v4483 = vpop.f32.mrb[0].mxu0
      %4484 = vmatprep.mubr.bf16.mxu0 0
      %4485 = vmatmul.mubr.bf16.gmra.mrb[0].mxu0 %v4212
      %v4486 = vpop.f32.mrb[0].mxu0
      %v4487 = vadd.f32 %v4097, %v4486
      %v4488 = vpop.f32.mrb[0].mxu0
      %v4489 = vpop.f32.mrb[0].mxu0
      %v4490 = vadd.f32 %v4097, %v4489
      %v4491 = vpop.f32.mrb[0].mxu0
      %4492 = vmatprep.mubr.bf16.mxu0 0
      %4493 = vmatmul.mubr.bf16.gmra.mrb[0].mxu0 %v4215
      %v4494 = vpop.f32.mrb[0].mxu0
      %v4495 = vadd.f32 %v4097, %v4494
      %v4496 = vpop.f32.mrb[0].mxu0
      %v4497 = vpop.f32.mrb[0].mxu0
      %v4498 = vadd.f32 %v4097, %v4497
      %v4499 = vpop.f32.mrb[0].mxu0
      %4500 = vmatprep.mubr.bf16.mxu0 0
      %4501 = vmatmul.mubr.bf16.gmra.mrb[0].mxu0 %v4218
      %v4502 = vpop.f32.mrb[0].mxu0
      %v4503 = vadd.f32 %v4097, %v4502
      %v4504 = vpop.f32.mrb[0].mxu0
      %v4505 = vpop.f32.mrb[0].mxu0
      %v4506 = vadd.f32 %v4097, %v4505
      %v4507 = vpop.f32.mrb[0].mxu0
      %4508 = vdwg.mxu0
      %v4509 = vmax.f32 %v4255, 0.0
      %v4510 = vmax.f32 %v4258, 0.0
      %v4511 = vmax.f32 %v4263, 0.0
      %v4512 = vmax.f32 %v4266, 0.0
      %v4513 = vmax.f32 %v4271, 0.0
      %v4514 = vmax.f32 %v4274, 0.0
      %v4515 = vmax.f32 %v4279, 0.0
      %v4516 = vmax.f32 %v4282, 0.0
      %v4517 = vmax.f32 %v4287, 0.0
      %v4518 = vmax.f32 %v4290, 0.0
      %v4519 = vmax.f32 %v4295, 0.0
      %v4520 = vmax.f32 %v4298, 0.0
      %v4521 = vmax.f32 %v4303, 0.0
      %v4522 = vmax.f32 %v4306, 0.0
      %v4523 = vmax.f32 %v4311, 0.0
      %v4524 = vmax.f32 %v4314, 0.0
      %v4525 = vmax.f32 %v4319, 0.0
      %v4526 = vmax.f32 %v4322, 0.0
      %v4527 = vmax.f32 %v4327, 0.0
      %v4528 = vmax.f32 %v4330, 0.0
      %v4529 = vmax.f32 %v4335, 0.0
      %v4530 = vmax.f32 %v4338, 0.0
      %v4531 = vmax.f32 %v4343, 0.0
      %v4532 = vmax.f32 %v4346, 0.0
      %v4533 = vmax.f32 %v4351, 0.0
      %v4534 = vmax.f32 %v4354, 0.0
      %v4535 = vmax.f32 %v4359, 0.0
      %v4536 = vmax.f32 %v4362, 0.0
      %v4537 = vmax.f32 %v4367, 0.0
      %v4538 = vmax.f32 %v4370, 0.0
      %v4539 = vmax.f32 %v4375, 0.0
      %v4540 = vmax.f32 %v4378, 0.0
      %v4541 = vmax.f32 %v4383, 0.0
      %v4542 = vmax.f32 %v4386, 0.0
      %v4543 = vmax.f32 %v4391, 0.0
      %v4544 = vmax.f32 %v4394, 0.0
      %v4545 = vmax.f32 %v4399, 0.0
      %v4546 = vmax.f32 %v4402, 0.0
      %v4547 = vmax.f32 %v4407, 0.0
      %v4548 = vmax.f32 %v4410, 0.0
      %v4549 = vmax.f32 %v4415, 0.0
      %v4550 = vmax.f32 %v4418, 0.0
      %v4551 = vmax.f32 %v4423, 0.0
      %v4552 = vmax.f32 %v4426, 0.0
      %v4553 = vmax.f32 %v4431, 0.0
      %v4554 = vmax.f32 %v4434, 0.0
      %v4555 = vmax.f32 %v4439, 0.0
      %v4556 = vmax.f32 %v4442, 0.0
      %v4557 = vmax.f32 %v4447, 0.0
      %v4558 = vmax.f32 %v4450, 0.0
      %v4559 = vmax.f32 %v4455, 0.0
      %v4560 = vmax.f32 %v4458, 0.0
      %v4561 = vmax.f32 %v4463, 0.0
      %v4562 = vmax.f32 %v4466, 0.0
      %v4563 = vmax.f32 %v4471, 0.0
      %v4564 = vmax.f32 %v4474, 0.0
      %v4565 = vmax.f32 %v4479, 0.0
      %v4566 = vmax.f32 %v4482, 0.0
      %v4567 = vmax.f32 %v4487, 0.0
      %v4568 = vmax.f32 %v4490, 0.0
      %v4569 = vmax.f32 %v4495, 0.0
      %v4570 = vmax.f32 %v4498, 0.0
      %v4571 = vmax.f32 %v4503, 0.0
      %v4572 = vmax.f32 %v4506, 0.0
      %v4573 = vpack.c.bf16 %v4510, %v4509
      %v4574 = vpack.c.bf16 %v4512, %v4511
      %v4575 = vpack.c.bf16 %v4514, %v4513
      %v4576 = vpack.c.bf16 %v4516, %v4515
      %v4577 = vpack.c.bf16 %v4518, %v4517
      %v4578 = vpack.c.bf16 %v4520, %v4519
      %v4579 = vpack.c.bf16 %v4522, %v4521
      %v4580 = vpack.c.bf16 %v4524, %v4523
      %v4581 = vpack.c.bf16 %v4526, %v4525
      %v4582 = vpack.c.bf16 %v4528, %v4527
      %v4583 = vpack.c.bf16 %v4530, %v4529
      %v4584 = vpack.c.bf16 %v4532, %v4531
      %v4585 = vpack.c.bf16 %v4534, %v4533
      %v4586 = vpack.c.bf16 %v4536, %v4535
      %v4587 = vpack.c.bf16 %v4538, %v4537
      %v4588 = vpack.c.bf16 %v4540, %v4539
      %v4589 = vpack.c.bf16 %v4542, %v4541
      %v4590 = vpack.c.bf16 %v4544, %v4543
      %v4591 = vpack.c.bf16 %v4546, %v4545
      %v4592 = vpack.c.bf16 %v4548, %v4547
      %v4593 = vpack.c.bf16 %v4550, %v4549
      %v4594 = vpack.c.bf16 %v4552, %v4551
      %v4595 = vpack.c.bf16 %v4554, %v4553
      %v4596 = vpack.c.bf16 %v4556, %v4555
      %v4597 = vpack.c.bf16 %v4558, %v4557
      %v4598 = vpack.c.bf16 %v4560, %v4559
      %v4599 = vpack.c.bf16 %v4562, %v4561
      %v4600 = vpack.c.bf16 %v4564, %v4563
      %v4601 = vpack.c.bf16 %v4566, %v4565
      %v4602 = vpack.c.bf16 %v4568, %v4567
      %v4603 = vpack.c.bf16 %v4570, %v4569
      %v4604 = vpack.c.bf16 %v4572, %v4571
      %v4605 = vld [vmem:[%s7] sm:$0xf]
      %v4606 = vld [vmem:[%s7 + $0x4] sm:$0x3]
      %v4607 = vld [vmem:[%s8] sm:$0x1]
      %v4609 = vlaneseq
      %v4610 = vshrl.u32 %v4609, 7
      %v4611 = vsub.s32 0, %v4610
      %v4612 = vrot.slane %v4607, %v4611
      %v4616 = vunpack.c.l.b16 %v4605
      %v4617 = vunpack.c.l.b16 %v4606
      %v4618 = vpack.c.b16 %v4617, %v4616
      %vm4619 = vcmask 97280
      %v4621 = vsel %vm4619, %v4573, 0
      %v4624 = vsel %vm4619, %v4574, 0
      %v4627 = vsel %vm4619, %v4575, 0
      %v4630 = vsel %vm4619, %v4576, 0
      %v4633 = vsel %vm4619, %v4577, 0
      %v4636 = vsel %vm4619, %v4578, 0
      %v4639 = vsel %vm4619, %v4579, 0
      %v4642 = vsel %vm4619, %v4580, 0
      %v4645 = vsel %vm4619, %v4581, 0
      %v4648 = vsel %vm4619, %v4582, 0
      %v4651 = vsel %vm4619, %v4583, 0
      %v4654 = vsel %vm4619, %v4584, 0
      %v4657 = vsel %vm4619, %v4585, 0
      %v4660 = vsel %vm4619, %v4586, 0
      %v4663 = vsel %vm4619, %v4587, 0
      %v4666 = vsel %vm4619, %v4588, 0
      %v4669 = vsel %vm4619, %v4589, 0
      %v4672 = vsel %vm4619, %v4590, 0
      %v4675 = vsel %vm4619, %v4591, 0
      %v4678 = vsel %vm4619, %v4592, 0
      %v4681 = vsel %vm4619, %v4593, 0
      %v4684 = vsel %vm4619, %v4594, 0
      %v4687 = vsel %vm4619, %v4595, 0
      %v4690 = vsel %vm4619, %v4596, 0
      %v4693 = vsel %vm4619, %v4597, 0
      %v4696 = vsel %vm4619, %v4598, 0
      %v4699 = vsel %vm4619, %v4599, 0
      %v4702 = vsel %vm4619, %v4600, 0
      %v4705 = vsel %vm4619, %v4601, 0
      %v4708 = vsel %vm4619, %v4602, 0
      %v4711 = vsel %vm4619, %v4603, 0
      %v4714 = vsel %vm4619, %v4604, 0
      %vm4716 = vcmask 1045504
      %v4718 = vsel %vm4716, %v4618, 0
      %4720 = vmatprep.subr.bf16.mxu0 0
      %4721 = vmatpush1.bf16.msra.mxu0 %v4718
      %4722 = vmatprep.subr.bf16.mxu0 0
      %4723 = vmatpush1.bf16.msra.mxu0 0
      %4724 = vmatprep.subr.bf16.mxu0 0
      %4725 = vmatpush1.bf16.msra.mxu0 0
      %4726 = vmatprep.subr.bf16.mxu0 0
      %4727 = vmatpush1.bf16.msra.mxu0 0
      %4728 = vmatprep.subr.bf16.mxu0 0
      %4729 = vmatpush1.bf16.msra.mxu0 0
      %4730 = vmatprep.subr.bf16.mxu0 0
      %4731 = vmatpush1.bf16.msra.mxu0 0
      %4732 = vmatprep.subr.bf16.mxu0 0
      %4733 = vmatpush1.bf16.msra.mxu0 0
      %4734 = vmatprep.subr.bf16.mxu0 0
      %4735 = vmatpush1.bf16.msra.mxu0 0
      %4736 = vmatprep.subr.bf16.mxu0 0
      %4737 = vmatpush1.bf16.msra.mxu0 0
      %4738 = vmatprep.subr.bf16.mxu0 0
      %4739 = vmatpush1.bf16.msra.mxu0 0
      %4740 = vmatprep.subr.bf16.mxu0 0
      %4741 = vmatpush1.bf16.msra.mxu0 0
      %4742 = vmatprep.subr.bf16.mxu0 0
      %4743 = vmatpush1.bf16.msra.mxu0 0
      %4744 = vmatprep.subr.bf16.mxu0 0
      %4745 = vmatpush1.bf16.msra.mxu0 0
      %4746 = vmatprep.subr.bf16.mxu0 0
      %4747 = vmatpush1.bf16.msra.mxu0 0
      %4748 = vmatprep.subr.bf16.mxu0 0
      %4749 = vmatpush1.bf16.msra.mxu0 0
      %4750 = vmatprep.subr.bf16.mxu0 0
      %4751 = vmatpush1.bf16.msra.mxu0 0
      %4752 = vmatprep.mubr.bf16.mxu0 0
      %4753 = vmatmul.mubr.bf16.gmra.mrb[0].mxu0 %v4621
      %v4754 = vpop.f32.mrb[0].mxu0
      %v4755 = vadd.f32 %v4612, %v4754
      %v4756 = vpop.f32.mrb[0].mxu0
      %v4757 = vpop.f32.mrb[0].mxu0
      %v4758 = vadd.f32 %v4612, %v4757
      %v4759 = vpop.f32.mrb[0].mxu0
      %4760 = vmatprep.mubr.bf16.mxu0 0
      %4761 = vmatmul.mubr.bf16.gmra.mrb[0].mxu0 %v4624
      %v4762 = vpop.f32.mrb[0].mxu0
      %v4763 = vadd.f32 %v4612, %v4762
      %v4764 = vpop.f32.mrb[0].mxu0
      %v4765 = vpop.f32.mrb[0].mxu0
      %v4766 = vadd.f32 %v4612, %v4765
      %v4767 = vpop.f32.mrb[0].mxu0
      %4768 = vmatprep.mubr.bf16.mxu0 0
      %4769 = vmatmul.mubr.bf16.gmra.mrb[0].mxu0 %v4627
      %v4770 = vpop.f32.mrb[0].mxu0
      %v4771 = vadd.f32 %v4612, %v4770
      %v4772 = vpop.f32.mrb[0].mxu0
      %v4773 = vpop.f32.mrb[0].mxu0
      %v4774 = vadd.f32 %v4612, %v4773
      %v4775 = vpop.f32.mrb[0].mxu0
      %4776 = vmatprep.mubr.bf16.mxu0 0
      %4777 = vmatmul.mubr.bf16.gmra.mrb[0].mxu0 %v4630
      %v4778 = vpop.f32.mrb[0].mxu0
      %v4779 = vadd.f32 %v4612, %v4778
      %v4780 = vpop.f32.mrb[0].mxu0
      %v4781 = vpop.f32.mrb[0].mxu0
      %v4782 = vadd.f32 %v4612, %v4781
      %v4783 = vpop.f32.mrb[0].mxu0
      %4784 = vmatprep.mubr.bf16.mxu0 0
      %4785 = vmatmul.mubr.bf16.gmra.mrb[0].mxu0 %v4633
      %v4786 = vpop.f32.mrb[0].mxu0
      %v4787 = vadd.f32 %v4612, %v4786
      %v4788 = vpop.f32.mrb[0].mxu0
      %v4789 = vpop.f32.mrb[0].mxu0
      %v4790 = vadd.f32 %v4612, %v4789
      %v4791 = vpop.f32.mrb[0].mxu0
      %4792 = vmatprep.mubr.bf16.mxu0 0
      %4793 = vmatmul.mubr.bf16.gmra.mrb[0].mxu0 %v4636
      %v4794 = vpop.f32.mrb[0].mxu0
      %v4795 = vadd.f32 %v4612, %v4794
      %v4796 = vpop.f32.mrb[0].mxu0
      %v4797 = vpop.f32.mrb[0].mxu0
      %v4798 = vadd.f32 %v4612, %v4797
      %v4799 = vpop.f32.mrb[0].mxu0
      %4800 = vmatprep.mubr.bf16.mxu0 0
      %4801 = vmatmul.mubr.bf16.gmra.mrb[0].mxu0 %v4639
      %v4802 = vpop.f32.mrb[0].mxu0
      %v4803 = vadd.f32 %v4612, %v4802
      %v4804 = vpop.f32.mrb[0].mxu0
      %v4805 = vpop.f32.mrb[0].mxu0
      %v4806 = vadd.f32 %v4612, %v4805
      %v4807 = vpop.f32.mrb[0].mxu0
      %4808 = vmatprep.mubr.bf16.mxu0 0
      %4809 = vmatmul.mubr.bf16.gmra.mrb[0].mxu0 %v4642
      %v4810 = vpop.f32.mrb[0].mxu0
      %v4811 = vadd.f32 %v4612, %v4810
      %v4812 = vpop.f32.mrb[0].mxu0
      %v4813 = vpop.f32.mrb[0].mxu0
      %v4814 = vadd.f32 %v4612, %v4813
      %v4815 = vpop.f32.mrb[0].mxu0
      %4816 = vmatprep.mubr.bf16.mxu0 0
      %4817 = vmatmul.mubr.bf16.gmra.mrb[0].mxu0 %v4645
      %v4818 = vpop.f32.mrb[0].mxu0
      %v4819 = vadd.f32 %v4612, %v4818
      %v4820 = vpop.f32.mrb[0].mxu0
      %v4821 = vpop.f32.mrb[0].mxu0
      %v4822 = vadd.f32 %v4612, %v4821
      %v4823 = vpop.f32.mrb[0].mxu0
      %4824 = vmatprep.mubr.bf16.mxu0 0
      %4825 = vmatmul.mubr.bf16.gmra.mrb[0].mxu0 %v4648
      %v4826 = vpop.f32.mrb[0].mxu0
      %v4827 = vadd.f32 %v4612, %v4826
      %v4828 = vpop.f32.mrb[0].mxu0
      %v4829 = vpop.f32.mrb[0].mxu0
      %v4830 = vadd.f32 %v4612, %v4829
      %v4831 = vpop.f32.mrb[0].mxu0
      %4832 = vmatprep.mubr.bf16.mxu0 0
      %4833 = vmatmul.mubr.bf16.gmra.mrb[0].mxu0 %v4651
      %v4834 = vpop.f32.mrb[0].mxu0
      %v4835 = vadd.f32 %v4612, %v4834
      %v4836 = vpop.f32.mrb[0].mxu0
      %v4837 = vpop.f32.mrb[0].mxu0
      %v4838 = vadd.f32 %v4612, %v4837
      %v4839 = vpop.f32.mrb[0].mxu0
      %4840 = vmatprep.mubr.bf16.mxu0 0
      %4841 = vmatmul.mubr.bf16.gmra.mrb[0].mxu0 %v4654
      %v4842 = vpop.f32.mrb[0].mxu0
      %v4843 = vadd.f32 %v4612, %v4842
      %v4844 = vpop.f32.mrb[0].mxu0
      %v4845 = vpop.f32.mrb[0].mxu0
      %v4846 = vadd.f32 %v4612, %v4845
      %v4847 = vpop.f32.mrb[0].mxu0
      %4848 = vmatprep.mubr.bf16.mxu0 0
      %4849 = vmatmul.mubr.bf16.gmra.mrb[0].mxu0 %v4657
      %v4850 = vpop.f32.mrb[0].mxu0
      %v4851 = vadd.f32 %v4612, %v4850
      %v4852 = vpop.f32.mrb[0].mxu0
      %v4853 = vpop.f32.mrb[0].mxu0
      %v4854 = vadd.f32 %v4612, %v4853
      %v4855 = vpop.f32.mrb[0].mxu0
      %4856 = vmatprep.mubr.bf16.mxu0 0
      %4857 = vmatmul.mubr.bf16.gmra.mrb[0].mxu0 %v4660
      %v4858 = vpop.f32.mrb[0].mxu0
      %v4859 = vadd.f32 %v4612, %v4858
      %v4860 = vpop.f32.mrb[0].mxu0
      %v4861 = vpop.f32.mrb[0].mxu0
      %v4862 = vadd.f32 %v4612, %v4861
      %v4863 = vpop.f32.mrb[0].mxu0
      %4864 = vmatprep.mubr.bf16.mxu0 0
      %4865 = vmatmul.mubr.bf16.gmra.mrb[0].mxu0 %v4663
      %v4866 = vpop.f32.mrb[0].mxu0
      %v4867 = vadd.f32 %v4612, %v4866
      %v4868 = vpop.f32.mrb[0].mxu0
      %v4869 = vpop.f32.mrb[0].mxu0
      %v4870 = vadd.f32 %v4612, %v4869
      %v4871 = vpop.f32.mrb[0].mxu0
      %4872 = vmatprep.mubr.bf16.mxu0 0
      %4873 = vmatmul.mubr.bf16.gmra.mrb[0].mxu0 %v4666
      %v4874 = vpop.f32.mrb[0].mxu0
      %v4875 = vadd.f32 %v4612, %v4874
      %v4876 = vpop.f32.mrb[0].mxu0
      %v4877 = vpop.f32.mrb[0].mxu0
      %v4878 = vadd.f32 %v4612, %v4877
      %v4879 = vpop.f32.mrb[0].mxu0
      %4880 = vmatprep.mubr.bf16.mxu0 0
      %4881 = vmatmul.mubr.bf16.gmra.mrb[0].mxu0 %v4669
      %v4882 = vpop.f32.mrb[0].mxu0
      %v4883 = vadd.f32 %v4612, %v4882
      %v4884 = vpop.f32.mrb[0].mxu0
      %v4885 = vpop.f32.mrb[0].mxu0
      %v4886 = vadd.f32 %v4612, %v4885
      %v4887 = vpop.f32.mrb[0].mxu0
      %4888 = vmatprep.mubr.bf16.mxu0 0
      %4889 = vmatmul.mubr.bf16.gmra.mrb[0].mxu0 %v4672
      %v4890 = vpop.f32.mrb[0].mxu0
      %v4891 = vadd.f32 %v4612, %v4890
      %v4892 = vpop.f32.mrb[0].mxu0
      %v4893 = vpop.f32.mrb[0].mxu0
      %v4894 = vadd.f32 %v4612, %v4893
      %v4895 = vpop.f32.mrb[0].mxu0
      %4896 = vmatprep.mubr.bf16.mxu0 0
      %4897 = vmatmul.mubr.bf16.gmra.mrb[0].mxu0 %v4675
      %v4898 = vpop.f32.mrb[0].mxu0
      %v4899 = vadd.f32 %v4612, %v4898
      %v4900 = vpop.f32.mrb[0].mxu0
      %v4901 = vpop.f32.mrb[0].mxu0
      %v4902 = vadd.f32 %v4612, %v4901
      %v4903 = vpop.f32.mrb[0].mxu0
      %4904 = vmatprep.mubr.bf16.mxu0 0
      %4905 = vmatmul.mubr.bf16.gmra.mrb[0].mxu0 %v4678
      %v4906 = vpop.f32.mrb[0].mxu0
      %v4907 = vadd.f32 %v4612, %v4906
      %v4908 = vpop.f32.mrb[0].mxu0
      %v4909 = vpop.f32.mrb[0].mxu0
      %v4910 = vadd.f32 %v4612, %v4909
      %v4911 = vpop.f32.mrb[0].mxu0
      %4912 = vmatprep.mubr.bf16.mxu0 0
      %4913 = vmatmul.mubr.bf16.gmra.mrb[0].mxu0 %v4681
      %v4914 = vpop.f32.mrb[0].mxu0
      %v4915 = vadd.f32 %v4612, %v4914
      %v4916 = vpop.f32.mrb[0].mxu0
      %v4917 = vpop.f32.mrb[0].mxu0
      %v4918 = vadd.f32 %v4612, %v4917
      %v4919 = vpop.f32.mrb[0].mxu0
      %4920 = vmatprep.mubr.bf16.mxu0 0
      %4921 = vmatmul.mubr.bf16.gmra.mrb[0].mxu0 %v4684
      %v4922 = vpop.f32.mrb[0].mxu0
      %v4923 = vadd.f32 %v4612, %v4922
      %v4924 = vpop.f32.mrb[0].mxu0
      %v4925 = vpop.f32.mrb[0].mxu0
      %v4926 = vadd.f32 %v4612, %v4925
      %v4927 = vpop.f32.mrb[0].mxu0
      %4928 = vmatprep.mubr.bf16.mxu0 0
      %4929 = vmatmul.mubr.bf16.gmra.mrb[0].mxu0 %v4687
      %v4930 = vpop.f32.mrb[0].mxu0
      %v4931 = vadd.f32 %v4612, %v4930
      %v4932 = vpop.f32.mrb[0].mxu0
      %v4933 = vpop.f32.mrb[0].mxu0
      %v4934 = vadd.f32 %v4612, %v4933
      %v4935 = vpop.f32.mrb[0].mxu0
      %4936 = vmatprep.mubr.bf16.mxu0 0
      %4937 = vmatmul.mubr.bf16.gmra.mrb[0].mxu0 %v4690
      %v4938 = vpop.f32.mrb[0].mxu0
      %v4939 = vadd.f32 %v4612, %v4938
      %v4940 = vpop.f32.mrb[0].mxu0
      %v4941 = vpop.f32.mrb[0].mxu0
      %v4942 = vadd.f32 %v4612, %v4941
      %v4943 = vpop.f32.mrb[0].mxu0
      %4944 = vmatprep.mubr.bf16.mxu0 0
      %4945 = vmatmul.mubr.bf16.gmra.mrb[0].mxu0 %v4693
      %v4946 = vpop.f32.mrb[0].mxu0
      %v4947 = vadd.f32 %v4612, %v4946
      %v4948 = vpop.f32.mrb[0].mxu0
      %v4949 = vpop.f32.mrb[0].mxu0
      %v4950 = vadd.f32 %v4612, %v4949
      %v4951 = vpop.f32.mrb[0].mxu0
      %4952 = vmatprep.mubr.bf16.mxu0 0
      %4953 = vmatmul.mubr.bf16.gmra.mrb[0].mxu0 %v4696
      %v4954 = vpop.f32.mrb[0].mxu0
      %v4955 = vadd.f32 %v4612, %v4954
      %v4956 = vpop.f32.mrb[0].mxu0
      %v4957 = vpop.f32.mrb[0].mxu0
      %v4958 = vadd.f32 %v4612, %v4957
      %v4959 = vpop.f32.mrb[0].mxu0
      %4960 = vmatprep.mubr.bf16.mxu0 0
      %4961 = vmatmul.mubr.bf16.gmra.mrb[0].mxu0 %v4699
      %v4962 = vpop.f32.mrb[0].mxu0
      %v4963 = vadd.f32 %v4612, %v4962
      %v4964 = vpop.f32.mrb[0].mxu0
      %v4965 = vpop.f32.mrb[0].mxu0
      %v4966 = vadd.f32 %v4612, %v4965
      %v4967 = vpop.f32.mrb[0].mxu0
      %4968 = vmatprep.mubr.bf16.mxu0 0
      %4969 = vmatmul.mubr.bf16.gmra.mrb[0].mxu0 %v4702
      %v4970 = vpop.f32.mrb[0].mxu0
      %v4971 = vadd.f32 %v4612, %v4970
      %v4972 = vpop.f32.mrb[0].mxu0
      %v4973 = vpop.f32.mrb[0].mxu0
      %v4974 = vadd.f32 %v4612, %v4973
      %v4975 = vpop.f32.mrb[0].mxu0
      %4976 = vmatprep.mubr.bf16.mxu0 0
      %4977 = vmatmul.mubr.bf16.gmra.mrb[0].mxu0 %v4705
      %v4978 = vpop.f32.mrb[0].mxu0
      %v4979 = vadd.f32 %v4612, %v4978
      %v4980 = vpop.f32.mrb[0].mxu0
      %v4981 = vpop.f32.mrb[0].mxu0
      %v4982 = vadd.f32 %v4612, %v4981
      %v4983 = vpop.f32.mrb[0].mxu0
      %4984 = vmatprep.mubr.bf16.mxu0 0
      %4985 = vmatmul.mubr.bf16.gmra.mrb[0].mxu0 %v4708
      %v4986 = vpop.f32.mrb[0].mxu0
      %v4987 = vadd.f32 %v4612, %v4986
      %v4988 = vpop.f32.mrb[0].mxu0
      %v4989 = vpop.f32.mrb[0].mxu0
      %v4990 = vadd.f32 %v4612, %v4989
      %v4991 = vpop.f32.mrb[0].mxu0
      %4992 = vmatprep.mubr.bf16.mxu0 0
      %4993 = vmatmul.mubr.bf16.gmra.mrb[0].mxu0 %v4711
      %v4994 = vpop.f32.mrb[0].mxu0
      %v4995 = vadd.f32 %v4612, %v4994
      %v4996 = vpop.f32.mrb[0].mxu0
      %v4997 = vpop.f32.mrb[0].mxu0
      %v4998 = vadd.f32 %v4612, %v4997
      %v4999 = vpop.f32.mrb[0].mxu0
      %5000 = vmatprep.mubr.bf16.mxu0 0
      %5001 = vmatmul.mubr.bf16.gmra.mrb[0].mxu0 %v4714
      %v5002 = vpop.f32.mrb[0].mxu0
      %v5003 = vadd.f32 %v4612, %v5002
      %v5004 = vpop.f32.mrb[0].mxu0
      %v5005 = vpop.f32.mrb[0].mxu0
      %v5006 = vadd.f32 %v4612, %v5005
      %v5007 = vpop.f32.mrb[0].mxu0
      %5008 = vdwg.mxu0
      %v5009 = vmax.f32 %v4755, 0.0
      %v5010 = vmax.f32 %v4758, 0.0
      %v5011 = vmax.f32 %v4763, 0.0
      %v5012 = vmax.f32 %v4766, 0.0
      %v5013 = vmax.f32 %v4771, 0.0
      %v5014 = vmax.f32 %v4774, 0.0
      %v5015 = vmax.f32 %v4779, 0.0
      %v5016 = vmax.f32 %v4782, 0.0
      %v5017 = vmax.f32 %v4787, 0.0
      %v5018 = vmax.f32 %v4790, 0.0
      %v5019 = vmax.f32 %v4795, 0.0
      %v5020 = vmax.f32 %v4798, 0.0
      %v5021 = vmax.f32 %v4803, 0.0
      %v5022 = vmax.f32 %v4806, 0.0
      %v5023 = vmax.f32 %v4811, 0.0
      %v5024 = vmax.f32 %v4814, 0.0
      %v5025 = vmax.f32 %v4819, 0.0
      %v5026 = vmax.f32 %v4822, 0.0
      %v5027 = vmax.f32 %v4827, 0.0
      %v5028 = vmax.f32 %v4830, 0.0
      %v5029 = vmax.f32 %v4835, 0.0
      %v5030 = vmax.f32 %v4838, 0.0
      %v5031 = vmax.f32 %v4843, 0.0
      %v5032 = vmax.f32 %v4846, 0.0
      %v5033 = vmax.f32 %v4851, 0.0
      %v5034 = vmax.f32 %v4854, 0.0
      %v5035 = vmax.f32 %v4859, 0.0
      %v5036 = vmax.f32 %v4862, 0.0
      %v5037 = vmax.f32 %v4867, 0.0
      %v5038 = vmax.f32 %v4870, 0.0
      %v5039 = vmax.f32 %v4875, 0.0
      %v5040 = vmax.f32 %v4878, 0.0
      %v5041 = vmax.f32 %v4883, 0.0
      %v5042 = vmax.f32 %v4886, 0.0
      %v5043 = vmax.f32 %v4891, 0.0
      %v5044 = vmax.f32 %v4894, 0.0
      %v5045 = vmax.f32 %v4899, 0.0
      %v5046 = vmax.f32 %v4902, 0.0
      %v5047 = vmax.f32 %v4907, 0.0
      %v5048 = vmax.f32 %v4910, 0.0
      %v5049 = vmax.f32 %v4915, 0.0
      %v5050 = vmax.f32 %v4918, 0.0
      %v5051 = vmax.f32 %v4923, 0.0
      %v5052 = vmax.f32 %v4926, 0.0
      %v5053 = vmax.f32 %v4931, 0.0
      %v5054 = vmax.f32 %v4934, 0.0
      %v5055 = vmax.f32 %v4939, 0.0
      %v5056 = vmax.f32 %v4942, 0.0
      %v5057 = vmax.f32 %v4947, 0.0
      %v5058 = vmax.f32 %v4950, 0.0
      %v5059 = vmax.f32 %v4955, 0.0
      %v5060 = vmax.f32 %v4958, 0.0
      %v5061 = vmax.f32 %v4963, 0.0
      %v5062 = vmax.f32 %v4966, 0.0
      %v5063 = vmax.f32 %v4971, 0.0
      %v5064 = vmax.f32 %v4974, 0.0
      %v5065 = vmax.f32 %v4979, 0.0
      %v5066 = vmax.f32 %v4982, 0.0
      %v5067 = vmax.f32 %v4987, 0.0
      %v5068 = vmax.f32 %v4990, 0.0
      %v5069 = vmax.f32 %v4995, 0.0
      %v5070 = vmax.f32 %v4998, 0.0
      %v5071 = vmax.f32 %v5003, 0.0
      %v5072 = vmax.f32 %v5006, 0.0
      %v5073 = vpack.c.bf16 %v5010, %v5009
      %v5074 = vpack.c.bf16 %v5012, %v5011
      %v5075 = vpack.c.bf16 %v5014, %v5013
      %v5076 = vpack.c.bf16 %v5016, %v5015
      %v5077 = vpack.c.bf16 %v5018, %v5017
      %v5078 = vpack.c.bf16 %v5020, %v5019
      %v5079 = vpack.c.bf16 %v5022, %v5021
      %v5080 = vpack.c.bf16 %v5024, %v5023
      %v5081 = vpack.c.bf16 %v5026, %v5025
      %v5082 = vpack.c.bf16 %v5028, %v5027
      %v5083 = vpack.c.bf16 %v5030, %v5029
      %v5084 = vpack.c.bf16 %v5032, %v5031
      %v5085 = vpack.c.bf16 %v5034, %v5033
      %v5086 = vpack.c.bf16 %v5036, %v5035
      %v5087 = vpack.c.bf16 %v5038, %v5037
      %v5088 = vpack.c.bf16 %v5040, %v5039
      %v5089 = vpack.c.bf16 %v5042, %v5041
      %v5090 = vpack.c.bf16 %v5044, %v5043
      %v5091 = vpack.c.bf16 %v5046, %v5045
      %v5092 = vpack.c.bf16 %v5048, %v5047
      %v5093 = vpack.c.bf16 %v5050, %v5049
      %v5094 = vpack.c.bf16 %v5052, %v5051
      %v5095 = vpack.c.bf16 %v5054, %v5053
      %v5096 = vpack.c.bf16 %v5056, %v5055
      %v5097 = vpack.c.bf16 %v5058, %v5057
      %v5098 = vpack.c.bf16 %v5060, %v5059
      %v5099 = vpack.c.bf16 %v5062, %v5061
      %v5100 = vpack.c.bf16 %v5064, %v5063
      %v5101 = vpack.c.bf16 %v5066, %v5065
      %v5102 = vpack.c.bf16 %v5068, %v5067
      %v5103 = vpack.c.bf16 %v5070, %v5069
      %v5104 = vpack.c.bf16 %v5072, %v5071
      %v5105 = vld [vmem:[%s9] sm:$0xf]
      %v5106 = vld [vmem:[%s9 + $0x4] sm:$0x3]
      %v5107 = vld [vmem:[%s10] sm:$0x1]
      %v5109 = vlaneseq
      %v5110 = vshrl.u32 %v5109, 7
      %v5111 = vsub.s32 0, %v5110
      %v5112 = vrot.slane %v5107, %v5111
      %v5116 = vunpack.c.l.b16 %v5105
      %v5117 = vunpack.c.l.b16 %v5106
      %v5118 = vpack.c.b16 %v5117, %v5116
      %v5120 = vsel %vm4619, %v5073, 0
      %v5123 = vsel %vm4619, %v5074, 0
      %v5126 = vsel %vm4619, %v5075, 0
      %v5129 = vsel %vm4619, %v5076, 0
      %v5132 = vsel %vm4619, %v5077, 0
      %v5135 = vsel %vm4619, %v5078, 0
      %v5138 = vsel %vm4619, %v5079, 0
      %v5141 = vsel %vm4619, %v5080, 0
      %v5144 = vsel %vm4619, %v5081, 0
      %v5147 = vsel %vm4619, %v5082, 0
      %v5150 = vsel %vm4619, %v5083, 0
      %v5153 = vsel %vm4619, %v5084, 0
      %v5156 = vsel %vm4619, %v5085, 0
      %v5159 = vsel %vm4619, %v5086, 0
      %v5162 = vsel %vm4619, %v5087, 0
      %v5165 = vsel %vm4619, %v5088, 0
      %v5168 = vsel %vm4619, %v5089, 0
      %v5171 = vsel %vm4619, %v5090, 0
      %v5174 = vsel %vm4619, %v5091, 0
      %v5177 = vsel %vm4619, %v5092, 0
      %v5180 = vsel %vm4619, %v5093, 0
      %v5183 = vsel %vm4619, %v5094, 0
      %v5186 = vsel %vm4619, %v5095, 0
      %v5189 = vsel %vm4619, %v5096, 0
      %v5192 = vsel %vm4619, %v5097, 0
      %v5195 = vsel %vm4619, %v5098, 0
      %v5198 = vsel %vm4619, %v5099, 0
      %v5201 = vsel %vm4619, %v5100, 0
      %v5204 = vsel %vm4619, %v5101, 0
      %v5207 = vsel %vm4619, %v5102, 0
      %v5210 = vsel %vm4619, %v5103, 0
      %v5213 = vsel %vm4619, %v5104, 0
      %v5216 = vsel %vm4716, %v5118, 0
      %5218 = vmatprep.subr.bf16.mxu0 0
      %5219 = vmatpush1.bf16.msra.mxu0 %v5216
      %5220 = vmatprep.subr.bf16.mxu0 0
      %5221 = vmatpush1.bf16.msra.mxu0 0
      %5222 = vmatprep.subr.bf16.mxu0 0
      %5223 = vmatpush1.bf16.msra.mxu0 0
      %5224 = vmatprep.subr.bf16.mxu0 0
      %5225 = vmatpush1.bf16.msra.mxu0 0
      %5226 = vmatprep.subr.bf16.mxu0 0
      %5227 = vmatpush1.bf16.msra.mxu0 0
      %5228 = vmatprep.subr.bf16.mxu0 0
      %5229 = vmatpush1.bf16.msra.mxu0 0
      %5230 = vmatprep.subr.bf16.mxu0 0
      %5231 = vmatpush1.bf16.msra.mxu0 0
      %5232 = vmatprep.subr.bf16.mxu0 0
      %5233 = vmatpush1.bf16.msra.mxu0 0
      %5234 = vmatprep.subr.bf16.mxu0 0
      %5235 = vmatpush1.bf16.msra.mxu0 0
      %5236 = vmatprep.subr.bf16.mxu0 0
      %5237 = vmatpush1.bf16.msra.mxu0 0
      %5238 = vmatprep.subr.bf16.mxu0 0
      %5239 = vmatpush1.bf16.msra.mxu0 0
      %5240 = vmatprep.subr.bf16.mxu0 0
      %5241 = vmatpush1.bf16.msra.mxu0 0
      %5242 = vmatprep.subr.bf16.mxu0 0
      %5243 = vmatpush1.bf16.msra.mxu0 0
      %5244 = vmatprep.subr.bf16.mxu0 0
      %5245 = vmatpush1.bf16.msra.mxu0 0
      %5246 = vmatprep.subr.bf16.mxu0 0
      %5247 = vmatpush1.bf16.msra.mxu0 0
      %5248 = vmatprep.subr.bf16.mxu0 0
      %5249 = vmatpush1.bf16.msra.mxu0 0
      %5250 = vmatprep.mubr.bf16.mxu0 0
      %5251 = vmatmul.mubr.bf16.gmra.mrb[0].mxu0 %v5120
      %v5252 = vpop.f32.mrb[0].mxu0
      %v5253 = vadd.f32 %v5112, %v5252
      %v5254 = vpop.f32.mrb[0].mxu0
      %v5255 = vpop.f32.mrb[0].mxu0
      %v5256 = vadd.f32 %v5112, %v5255
      %v5257 = vpop.f32.mrb[0].mxu0
      %5258 = vmatprep.mubr.bf16.mxu0 0
      %5259 = vmatmul.mubr.bf16.gmra.mrb[0].mxu0 %v5123
      %v5260 = vpop.f32.mrb[0].mxu0
      %v5261 = vadd.f32 %v5112, %v5260
      %v5262 = vpop.f32.mrb[0].mxu0
      %v5263 = vpop.f32.mrb[0].mxu0
      %v5264 = vadd.f32 %v5112, %v5263
      %v5265 = vpop.f32.mrb[0].mxu0
      %5266 = vmatprep.mubr.bf16.mxu0 0
      %5267 = vmatmul.mubr.bf16.gmra.mrb[0].mxu0 %v5126
      %v5268 = vpop.f32.mrb[0].mxu0
      %v5269 = vadd.f32 %v5112, %v5268
      %v5270 = vpop.f32.mrb[0].mxu0
      %v5271 = vpop.f32.mrb[0].mxu0
      %v5272 = vadd.f32 %v5112, %v5271
      %v5273 = vpop.f32.mrb[0].mxu0
      %5274 = vmatprep.mubr.bf16.mxu0 0
      %5275 = vmatmul.mubr.bf16.gmra.mrb[0].mxu0 %v5129
      %v5276 = vpop.f32.mrb[0].mxu0
      %v5277 = vadd.f32 %v5112, %v5276
      %v5278 = vpop.f32.mrb[0].mxu0
      %v5279 = vpop.f32.mrb[0].mxu0
      %v5280 = vadd.f32 %v5112, %v5279
      %v5281 = vpop.f32.mrb[0].mxu0
      %5282 = vmatprep.mubr.bf16.mxu0 0
      %5283 = vmatmul.mubr.bf16.gmra.mrb[0].mxu0 %v5132
      %v5284 = vpop.f32.mrb[0].mxu0
      %v5285 = vadd.f32 %v5112, %v5284
      %v5286 = vpop.f32.mrb[0].mxu0
      %v5287 = vpop.f32.mrb[0].mxu0
      %v5288 = vadd.f32 %v5112, %v5287
      %v5289 = vpop.f32.mrb[0].mxu0
      %5290 = vmatprep.mubr.bf16.mxu0 0
      %5291 = vmatmul.mubr.bf16.gmra.mrb[0].mxu0 %v5135
      %v5292 = vpop.f32.mrb[0].mxu0
      %v5293 = vadd.f32 %v5112, %v5292
      %v5294 = vpop.f32.mrb[0].mxu0
      %v5295 = vpop.f32.mrb[0].mxu0
      %v5296 = vadd.f32 %v5112, %v5295
      %v5297 = vpop.f32.mrb[0].mxu0
      %5298 = vmatprep.mubr.bf16.mxu0 0
      %5299 = vmatmul.mubr.bf16.gmra.mrb[0].mxu0 %v5138
      %v5300 = vpop.f32.mrb[0].mxu0
      %v5301 = vadd.f32 %v5112, %v5300
      %v5302 = vpop.f32.mrb[0].mxu0
      %v5303 = vpop.f32.mrb[0].mxu0
      %v5304 = vadd.f32 %v5112, %v5303
      %v5305 = vpop.f32.mrb[0].mxu0
      %5306 = vmatprep.mubr.bf16.mxu0 0
      %5307 = vmatmul.mubr.bf16.gmra.mrb[0].mxu0 %v5141
      %v5308 = vpop.f32.mrb[0].mxu0
      %v5309 = vadd.f32 %v5112, %v5308
      %v5310 = vpop.f32.mrb[0].mxu0
      %v5311 = vpop.f32.mrb[0].mxu0
      %v5312 = vadd.f32 %v5112, %v5311
      %v5313 = vpop.f32.mrb[0].mxu0
      %5314 = vmatprep.mubr.bf16.mxu0 0
      %5315 = vmatmul.mubr.bf16.gmra.mrb[0].mxu0 %v5144
      %v5316 = vpop.f32.mrb[0].mxu0
      %v5317 = vadd.f32 %v5112, %v5316
      %v5318 = vpop.f32.mrb[0].mxu0
      %v5319 = vpop.f32.mrb[0].mxu0
      %v5320 = vadd.f32 %v5112, %v5319
      %v5321 = vpop.f32.mrb[0].mxu0
      %5322 = vmatprep.mubr.bf16.mxu0 0
      %5323 = vmatmul.mubr.bf16.gmra.mrb[0].mxu0 %v5147
      %v5324 = vpop.f32.mrb[0].mxu0
      %v5325 = vadd.f32 %v5112, %v5324
      %v5326 = vpop.f32.mrb[0].mxu0
      %v5327 = vpop.f32.mrb[0].mxu0
      %v5328 = vadd.f32 %v5112, %v5327
      %v5329 = vpop.f32.mrb[0].mxu0
      %5330 = vmatprep.mubr.bf16.mxu0 0
      %5331 = vmatmul.mubr.bf16.gmra.mrb[0].mxu0 %v5150
      %v5332 = vpop.f32.mrb[0].mxu0
      %v5333 = vadd.f32 %v5112, %v5332
      %v5334 = vpop.f32.mrb[0].mxu0
      %v5335 = vpop.f32.mrb[0].mxu0
      %v5336 = vadd.f32 %v5112, %v5335
      %v5337 = vpop.f32.mrb[0].mxu0
      %5338 = vmatprep.mubr.bf16.mxu0 0
      %5339 = vmatmul.mubr.bf16.gmra.mrb[0].mxu0 %v5153
      %v5340 = vpop.f32.mrb[0].mxu0
      %v5341 = vadd.f32 %v5112, %v5340
      %v5342 = vpop.f32.mrb[0].mxu0
      %v5343 = vpop.f32.mrb[0].mxu0
      %v5344 = vadd.f32 %v5112, %v5343
      %v5345 = vpop.f32.mrb[0].mxu0
      %5346 = vmatprep.mubr.bf16.mxu0 0
      %5347 = vmatmul.mubr.bf16.gmra.mrb[0].mxu0 %v5156
      %v5348 = vpop.f32.mrb[0].mxu0
      %v5349 = vadd.f32 %v5112, %v5348
      %v5350 = vpop.f32.mrb[0].mxu0
      %v5351 = vpop.f32.mrb[0].mxu0
      %v5352 = vadd.f32 %v5112, %v5351
      %v5353 = vpop.f32.mrb[0].mxu0
      %5354 = vmatprep.mubr.bf16.mxu0 0
      %5355 = vmatmul.mubr.bf16.gmra.mrb[0].mxu0 %v5159
      %v5356 = vpop.f32.mrb[0].mxu0
      %v5357 = vadd.f32 %v5112, %v5356
      %v5358 = vpop.f32.mrb[0].mxu0
      %v5359 = vpop.f32.mrb[0].mxu0
      %v5360 = vadd.f32 %v5112, %v5359
      %v5361 = vpop.f32.mrb[0].mxu0
      %5362 = vmatprep.mubr.bf16.mxu0 0
      %5363 = vmatmul.mubr.bf16.gmra.mrb[0].mxu0 %v5162
      %v5364 = vpop.f32.mrb[0].mxu0
      %v5365 = vadd.f32 %v5112, %v5364
      %v5366 = vpop.f32.mrb[0].mxu0
      %v5367 = vpop.f32.mrb[0].mxu0
      %v5368 = vadd.f32 %v5112, %v5367
      %v5369 = vpop.f32.mrb[0].mxu0
      %5370 = vmatprep.mubr.bf16.mxu0 0
      %5371 = vmatmul.mubr.bf16.gmra.mrb[0].mxu0 %v5165
      %v5372 = vpop.f32.mrb[0].mxu0
      %v5373 = vadd.f32 %v5112, %v5372
      %v5374 = vpop.f32.mrb[0].mxu0
      %v5375 = vpop.f32.mrb[0].mxu0
      %v5376 = vadd.f32 %v5112, %v5375
      %v5377 = vpop.f32.mrb[0].mxu0
      %5378 = vmatprep.mubr.bf16.mxu0 0
      %5379 = vmatmul.mubr.bf16.gmra.mrb[0].mxu0 %v5168
      %v5380 = vpop.f32.mrb[0].mxu0
      %v5381 = vadd.f32 %v5112, %v5380
      %v5382 = vpop.f32.mrb[0].mxu0
      %v5383 = vpop.f32.mrb[0].mxu0
      %v5384 = vadd.f32 %v5112, %v5383
      %v5385 = vpop.f32.mrb[0].mxu0
      %5386 = vmatprep.mubr.bf16.mxu0 0
      %5387 = vmatmul.mubr.bf16.gmra.mrb[0].mxu0 %v5171
      %v5388 = vpop.f32.mrb[0].mxu0
      %v5389 = vadd.f32 %v5112, %v5388
      %v5390 = vpop.f32.mrb[0].mxu0
      %v5391 = vpop.f32.mrb[0].mxu0
      %v5392 = vadd.f32 %v5112, %v5391
      %v5393 = vpop.f32.mrb[0].mxu0
      %5394 = vmatprep.mubr.bf16.mxu0 0
      %5395 = vmatmul.mubr.bf16.gmra.mrb[0].mxu0 %v5174
      %v5396 = vpop.f32.mrb[0].mxu0
      %v5397 = vadd.f32 %v5112, %v5396
      %v5398 = vpop.f32.mrb[0].mxu0
      %v5399 = vpop.f32.mrb[0].mxu0
      %v5400 = vadd.f32 %v5112, %v5399
      %v5401 = vpop.f32.mrb[0].mxu0
      %5402 = vmatprep.mubr.bf16.mxu0 0
      %5403 = vmatmul.mubr.bf16.gmra.mrb[0].mxu0 %v5177
      %v5404 = vpop.f32.mrb[0].mxu0
      %v5405 = vadd.f32 %v5112, %v5404
      %v5406 = vpop.f32.mrb[0].mxu0
      %v5407 = vpop.f32.mrb[0].mxu0
      %v5408 = vadd.f32 %v5112, %v5407
      %v5409 = vpop.f32.mrb[0].mxu0
      %5410 = vmatprep.mubr.bf16.mxu0 0
      %5411 = vmatmul.mubr.bf16.gmra.mrb[0].mxu0 %v5180
      %v5412 = vpop.f32.mrb[0].mxu0
      %v5413 = vadd.f32 %v5112, %v5412
      %v5414 = vpop.f32.mrb[0].mxu0
      %v5415 = vpop.f32.mrb[0].mxu0
      %v5416 = vadd.f32 %v5112, %v5415
      %v5417 = vpop.f32.mrb[0].mxu0
      %5418 = vmatprep.mubr.bf16.mxu0 0
      %5419 = vmatmul.mubr.bf16.gmra.mrb[0].mxu0 %v5183
      %v5420 = vpop.f32.mrb[0].mxu0
      %v5421 = vadd.f32 %v5112, %v5420
      %v5422 = vpop.f32.mrb[0].mxu0
      %v5423 = vpop.f32.mrb[0].mxu0
      %v5424 = vadd.f32 %v5112, %v5423
      %v5425 = vpop.f32.mrb[0].mxu0
      %5426 = vmatprep.mubr.bf16.mxu0 0
      %5427 = vmatmul.mubr.bf16.gmra.mrb[0].mxu0 %v5186
      %v5428 = vpop.f32.mrb[0].mxu0
      %v5429 = vadd.f32 %v5112, %v5428
      %v5430 = vpop.f32.mrb[0].mxu0
      %v5431 = vpop.f32.mrb[0].mxu0
      %v5432 = vadd.f32 %v5112, %v5431
      %v5433 = vpop.f32.mrb[0].mxu0
      %5434 = vmatprep.mubr.bf16.mxu0 0
      %5435 = vmatmul.mubr.bf16.gmra.mrb[0].mxu0 %v5189
      %v5436 = vpop.f32.mrb[0].mxu0
      %v5437 = vadd.f32 %v5112, %v5436
      %v5438 = vpop.f32.mrb[0].mxu0
      %v5439 = vpop.f32.mrb[0].mxu0
      %v5440 = vadd.f32 %v5112, %v5439
      %v5441 = vpop.f32.mrb[0].mxu0
      %5442 = vmatprep.mubr.bf16.mxu0 0
      %5443 = vmatmul.mubr.bf16.gmra.mrb[0].mxu0 %v5192
      %v5444 = vpop.f32.mrb[0].mxu0
      %v5445 = vadd.f32 %v5112, %v5444
      %v5446 = vpop.f32.mrb[0].mxu0
      %v5447 = vpop.f32.mrb[0].mxu0
      %v5448 = vadd.f32 %v5112, %v5447
      %v5449 = vpop.f32.mrb[0].mxu0
      %5450 = vmatprep.mubr.bf16.mxu0 0
      %5451 = vmatmul.mubr.bf16.gmra.mrb[0].mxu0 %v5195
      %v5452 = vpop.f32.mrb[0].mxu0
      %v5453 = vadd.f32 %v5112, %v5452
      %v5454 = vpop.f32.mrb[0].mxu0
      %v5455 = vpop.f32.mrb[0].mxu0
      %v5456 = vadd.f32 %v5112, %v5455
      %v5457 = vpop.f32.mrb[0].mxu0
      %5458 = vmatprep.mubr.bf16.mxu0 0
      %5459 = vmatmul.mubr.bf16.gmra.mrb[0].mxu0 %v5198
      %v5460 = vpop.f32.mrb[0].mxu0
      %v5461 = vadd.f32 %v5112, %v5460
      %v5462 = vpop.f32.mrb[0].mxu0
      %v5463 = vpop.f32.mrb[0].mxu0
      %v5464 = vadd.f32 %v5112, %v5463
      %v5465 = vpop.f32.mrb[0].mxu0
      %5466 = vmatprep.mubr.bf16.mxu0 0
      %5467 = vmatmul.mubr.bf16.gmra.mrb[0].mxu0 %v5201
      %v5468 = vpop.f32.mrb[0].mxu0
      %v5469 = vadd.f32 %v5112, %v5468
      %v5470 = vpop.f32.mrb[0].mxu0
      %v5471 = vpop.f32.mrb[0].mxu0
      %v5472 = vadd.f32 %v5112, %v5471
      %v5473 = vpop.f32.mrb[0].mxu0
      %5474 = vmatprep.mubr.bf16.mxu0 0
      %5475 = vmatmul.mubr.bf16.gmra.mrb[0].mxu0 %v5204
      %v5476 = vpop.f32.mrb[0].mxu0
      %v5477 = vadd.f32 %v5112, %v5476
      %v5478 = vpop.f32.mrb[0].mxu0
      %v5479 = vpop.f32.mrb[0].mxu0
      %v5480 = vadd.f32 %v5112, %v5479
      %v5481 = vpop.f32.mrb[0].mxu0
      %5482 = vmatprep.mubr.bf16.mxu0 0
      %5483 = vmatmul.mubr.bf16.gmra.mrb[0].mxu0 %v5207
      %v5484 = vpop.f32.mrb[0].mxu0
      %v5485 = vadd.f32 %v5112, %v5484
      %v5486 = vpop.f32.mrb[0].mxu0
      %v5487 = vpop.f32.mrb[0].mxu0
      %v5488 = vadd.f32 %v5112, %v5487
      %v5489 = vpop.f32.mrb[0].mxu0
      %5490 = vmatprep.mubr.bf16.mxu0 0
      %5491 = vmatmul.mubr.bf16.gmra.mrb[0].mxu0 %v5210
      %v5492 = vpop.f32.mrb[0].mxu0
      %v5493 = vadd.f32 %v5112, %v5492
      %v5494 = vpop.f32.mrb[0].mxu0
      %v5495 = vpop.f32.mrb[0].mxu0
      %v5496 = vadd.f32 %v5112, %v5495
      %v5497 = vpop.f32.mrb[0].mxu0
      %5498 = vmatprep.mubr.bf16.mxu0 0
      %5499 = vmatmul.mubr.bf16.gmra.mrb[0].mxu0 %v5213
      %v5500 = vpop.f32.mrb[0].mxu0
      %v5501 = vadd.f32 %v5112, %v5500
      %v5502 = vpop.f32.mrb[0].mxu0
      %v5503 = vpop.f32.mrb[0].mxu0
      %v5504 = vadd.f32 %v5112, %v5503
      %v5505 = vpop.f32.mrb[0].mxu0
      %5506 = vdwg.mxu0
      %v5507 = vmax.f32 %v5253, 0.0
      %v5508 = vmax.f32 %v5256, 0.0
      %v5509 = vmax.f32 %v5261, 0.0
      %v5510 = vmax.f32 %v5264, 0.0
      %v5511 = vmax.f32 %v5269, 0.0
      %v5512 = vmax.f32 %v5272, 0.0
      %v5513 = vmax.f32 %v5277, 0.0
      %v5514 = vmax.f32 %v5280, 0.0
      %v5515 = vmax.f32 %v5285, 0.0
      %v5516 = vmax.f32 %v5288, 0.0
      %v5517 = vmax.f32 %v5293, 0.0
      %v5518 = vmax.f32 %v5296, 0.0
      %v5519 = vmax.f32 %v5301, 0.0
      %v5520 = vmax.f32 %v5304, 0.0
      %v5521 = vmax.f32 %v5309, 0.0
      %v5522 = vmax.f32 %v5312, 0.0
      %v5523 = vmax.f32 %v5317, 0.0
      %v5524 = vmax.f32 %v5320, 0.0
      %v5525 = vmax.f32 %v5325, 0.0
      %v5526 = vmax.f32 %v5328, 0.0
      %v5527 = vmax.f32 %v5333, 0.0
      %v5528 = vmax.f32 %v5336, 0.0
      %v5529 = vmax.f32 %v5341, 0.0
      %v5530 = vmax.f32 %v5344, 0.0
      %v5531 = vmax.f32 %v5349, 0.0
      %v5532 = vmax.f32 %v5352, 0.0
      %v5533 = vmax.f32 %v5357, 0.0
      %v5534 = vmax.f32 %v5360, 0.0
      %v5535 = vmax.f32 %v5365, 0.0
      %v5536 = vmax.f32 %v5368, 0.0
      %v5537 = vmax.f32 %v5373, 0.0
      %v5538 = vmax.f32 %v5376, 0.0
      %v5539 = vmax.f32 %v5381, 0.0
      %v5540 = vmax.f32 %v5384, 0.0
      %v5541 = vmax.f32 %v5389, 0.0
      %v5542 = vmax.f32 %v5392, 0.0
      %v5543 = vmax.f32 %v5397, 0.0
      %v5544 = vmax.f32 %v5400, 0.0
      %v5545 = vmax.f32 %v5405, 0.0
      %v5546 = vmax.f32 %v5408, 0.0
      %v5547 = vmax.f32 %v5413, 0.0
      %v5548 = vmax.f32 %v5416, 0.0
      %v5549 = vmax.f32 %v5421, 0.0
      %v5550 = vmax.f32 %v5424, 0.0
      %v5551 = vmax.f32 %v5429, 0.0
      %v5552 = vmax.f32 %v5432, 0.0
      %v5553 = vmax.f32 %v5437, 0.0
      %v5554 = vmax.f32 %v5440, 0.0
      %v5555 = vmax.f32 %v5445, 0.0
      %v5556 = vmax.f32 %v5448, 0.0
      %v5557 = vmax.f32 %v5453, 0.0
      %v5558 = vmax.f32 %v5456, 0.0
      %v5559 = vmax.f32 %v5461, 0.0
      %v5560 = vmax.f32 %v5464, 0.0
      %v5561 = vmax.f32 %v5469, 0.0
      %v5562 = vmax.f32 %v5472, 0.0
      %v5563 = vmax.f32 %v5477, 0.0
      %v5564 = vmax.f32 %v5480, 0.0
      %v5565 = vmax.f32 %v5485, 0.0
      %v5566 = vmax.f32 %v5488, 0.0
      %v5567 = vmax.f32 %v5493, 0.0
      %v5568 = vmax.f32 %v5496, 0.0
      %v5569 = vmax.f32 %v5501, 0.0
      %v5570 = vmax.f32 %v5504, 0.0
      %v5571 = vpack.c.bf16 %v5508, %v5507
      %v5572 = vpack.c.bf16 %v5510, %v5509
      %v5573 = vpack.c.bf16 %v5512, %v5511
      %v5574 = vpack.c.bf16 %v5514, %v5513
      %v5575 = vpack.c.bf16 %v5516, %v5515
      %v5576 = vpack.c.bf16 %v5518, %v5517
      %v5577 = vpack.c.bf16 %v5520, %v5519
      %v5578 = vpack.c.bf16 %v5522, %v5521
      %v5579 = vpack.c.bf16 %v5524, %v5523
      %v5580 = vpack.c.bf16 %v5526, %v5525
      %v5581 = vpack.c.bf16 %v5528, %v5527
      %v5582 = vpack.c.bf16 %v5530, %v5529
      %v5583 = vpack.c.bf16 %v5532, %v5531
      %v5584 = vpack.c.bf16 %v5534, %v5533
      %v5585 = vpack.c.bf16 %v5536, %v5535
      %v5586 = vpack.c.bf16 %v5538, %v5537
      %v5587 = vpack.c.bf16 %v5540, %v5539
      %v5588 = vpack.c.bf16 %v5542, %v5541
      %v5589 = vpack.c.bf16 %v5544, %v5543
      %v5590 = vpack.c.bf16 %v5546, %v5545
      %v5591 = vpack.c.bf16 %v5548, %v5547
      %v5592 = vpack.c.bf16 %v5550, %v5549
      %v5593 = vpack.c.bf16 %v5552, %v5551
      %v5594 = vpack.c.bf16 %v5554, %v5553
      %v5595 = vpack.c.bf16 %v5556, %v5555
      %v5596 = vpack.c.bf16 %v5558, %v5557
      %v5597 = vpack.c.bf16 %v5560, %v5559
      %v5598 = vpack.c.bf16 %v5562, %v5561
      %v5599 = vpack.c.bf16 %v5564, %v5563
      %v5600 = vpack.c.bf16 %v5566, %v5565
      %v5601 = vpack.c.bf16 %v5568, %v5567
      %v5602 = vpack.c.bf16 %v5570, %v5569
      %v5603 = vld [vmem:[%s11] sm:$0xf]
      %v5604 = vld [vmem:[%s11 + $0x4] sm:$0xf]
      %v5605 = vld [vmem:[%s11 + $0x8] sm:$0xf]
      %v5606 = vld [vmem:[%s11 + $0xc] sm:$0xf]
      %v5607 = vld [vmem:[%s11 + $0x10] sm:$0xf]
      %v5608 = vld [vmem:[%s11 + $0x14] sm:$0xf]
      %v5609 = vld [vmem:[%s11 + $0x18] sm:$0xf]
      %v5610 = vld [vmem:[%s11 + $0x1c] sm:$0xf]
      %v5611 = vld [vmem:[%s12] sm:$0x1]
      %v5613 = vlaneseq
      %v5614 = vshrl.u32 %v5613, 7
      %v5615 = vsub.s32 0, %v5614
      %v5616 = vrot.slane %v5611, %v5615
      %v5626 = vunpack.c.l.b16 %v5603
      %v5627 = vunpack.c.l.b16 %v5604
      %v5628 = vunpack.c.l.b16 %v5605
      %v5629 = vunpack.c.l.b16 %v5606
      %v5630 = vunpack.c.l.b16 %v5607
      %v5631 = vunpack.c.l.b16 %v5608
      %v5632 = vunpack.c.l.b16 %v5609
      %v5633 = vunpack.c.l.b16 %v5610
      %v5634 = vpack.c.b16 %v5627, %v5626
      %v5635 = vpack.c.b16 %v5629, %v5628
      %v5636 = vpack.c.b16 %v5631, %v5630
      %v5637 = vpack.c.b16 %v5633, %v5632
      %v5643 = vsel %vm4123, %v5571, 0
      %v5646 = vsel %vm4123, %v5572, 0
      %v5649 = vsel %vm4123, %v5573, 0
      %v5652 = vsel %vm4123, %v5574, 0
      %v5655 = vsel %vm4123, %v5575, 0
      %v5658 = vsel %vm4123, %v5576, 0
      %v5661 = vsel %vm4123, %v5577, 0
      %v5664 = vsel %vm4123, %v5578, 0
      %v5667 = vsel %vm4123, %v5579, 0
      %v5670 = vsel %vm4123, %v5580, 0
      %v5673 = vsel %vm4123, %v5581, 0
      %v5676 = vsel %vm4123, %v5582, 0
      %v5679 = vsel %vm4123, %v5583, 0
      %v5682 = vsel %vm4123, %v5584, 0
      %v5685 = vsel %vm4123, %v5585, 0
      %v5688 = vsel %vm4123, %v5586, 0
      %v5691 = vsel %vm4123, %v5587, 0
      %v5694 = vsel %vm4123, %v5588, 0
      %v5697 = vsel %vm4123, %v5589, 0
      %v5700 = vsel %vm4123, %v5590, 0
      %v5703 = vsel %vm4123, %v5591, 0
      %v5706 = vsel %vm4123, %v5592, 0
      %v5709 = vsel %vm4123, %v5593, 0
      %v5712 = vsel %vm4123, %v5594, 0
      %v5715 = vsel %vm4123, %v5595, 0
      %v5718 = vsel %vm4123, %v5596, 0
      %v5721 = vsel %vm4123, %v5597, 0
      %v5724 = vsel %vm4123, %v5598, 0
      %v5727 = vsel %vm4123, %v5599, 0
      %v5730 = vsel %vm4123, %v5600, 0
      %v5733 = vsel %vm4123, %v5601, 0
      %v5736 = vsel %vm4123, %v5602, 0
      %5738 = vmatprep.subr.bf16.mxu0 0
      %5739 = vmatpush1.bf16.msra.mxu0 %v5634
      %5740 = vmatprep.subr.bf16.mxu0 0
      %5741 = vmatpush1.bf16.msra.mxu0 %v5635
      %5742 = vmatprep.subr.bf16.mxu0 0
      %5743 = vmatpush1.bf16.msra.mxu0 %v5636
      %5744 = vmatprep.subr.bf16.mxu0 0
      %5745 = vmatpush1.bf16.msra.mxu0 %v5637
      %5746 = vmatprep.subr.bf16.mxu0 0
      %5747 = vmatpush1.bf16.msra.mxu0 0
      %5748 = vmatprep.subr.bf16.mxu0 0
      %5749 = vmatpush1.bf16.msra.mxu0 0
      %5750 = vmatprep.subr.bf16.mxu0 0
      %5751 = vmatpush1.bf16.msra.mxu0 0
      %5752 = vmatprep.subr.bf16.mxu0 0
      %5753 = vmatpush1.bf16.msra.mxu0 0
      %5754 = vmatprep.subr.bf16.mxu0 0
      %5755 = vmatpush1.bf16.msra.mxu0 0
      %5756 = vmatprep.subr.bf16.mxu0 0
      %5757 = vmatpush1.bf16.msra.mxu0 0
      %5758 = vmatprep.subr.bf16.mxu0 0
      %5759 = vmatpush1.bf16.msra.mxu0 0
      %5760 = vmatprep.subr.bf16.mxu0 0
      %5761 = vmatpush1.bf16.msra.mxu0 0
      %5762 = vmatprep.subr.bf16.mxu0 0
      %5763 = vmatpush1.bf16.msra.mxu0 0
      %5764 = vmatprep.subr.bf16.mxu0 0
      %5765 = vmatpush1.bf16.msra.mxu0 0
      %5766 = vmatprep.subr.bf16.mxu0 0
      %5767 = vmatpush1.bf16.msra.mxu0 0
      %5768 = vmatprep.subr.bf16.mxu0 0
      %5769 = vmatpush1.bf16.msra.mxu0 0
      %5770 = vmatprep.mubr.bf16.mxu0 0
      %5771 = vmatmul.mubr.bf16.gmra.mrb[0].mxu0 %v5643
      %v5772 = vpop.f32.mrb[0].mxu0
      %v5773 = vadd.f32 %v5616, %v5772
      %v5774 = vpop.f32.mrb[0].mxu0
      %v5775 = vpop.f32.mrb[0].mxu0
      %v5776 = vadd.f32 %v5616, %v5775
      %v5777 = vpop.f32.mrb[0].mxu0
      %5778 = vmatprep.mubr.bf16.mxu0 0
      %5779 = vmatmul.mubr.bf16.gmra.mrb[0].mxu0 %v5646
      %v5780 = vpop.f32.mrb[0].mxu0
      %v5781 = vadd.f32 %v5616, %v5780
      %v5782 = vpop.f32.mrb[0].mxu0
      %v5783 = vpop.f32.mrb[0].mxu0
      %v5784 = vadd.f32 %v5616, %v5783
      %v5785 = vpop.f32.mrb[0].mxu0
      %5786 = vmatprep.mubr.bf16.mxu0 0
      %5787 = vmatmul.mubr.bf16.gmra.mrb[0].mxu0 %v5649
      %v5788 = vpop.f32.mrb[0].mxu0
      %v5789 = vadd.f32 %v5616, %v5788
      %v5790 = vpop.f32.mrb[0].mxu0
      %v5791 = vpop.f32.mrb[0].mxu0
      %v5792 = vadd.f32 %v5616, %v5791
      %v5793 = vpop.f32.mrb[0].mxu0
      %5794 = vmatprep.mubr.bf16.mxu0 0
      %5795 = vmatmul.mubr.bf16.gmra.mrb[0].mxu0 %v5652
      %v5796 = vpop.f32.mrb[0].mxu0
      %v5797 = vadd.f32 %v5616, %v5796
      %v5798 = vpop.f32.mrb[0].mxu0
      %v5799 = vpop.f32.mrb[0].mxu0
      %v5800 = vadd.f32 %v5616, %v5799
      %v5801 = vpop.f32.mrb[0].mxu0
      %5802 = vmatprep.mubr.bf16.mxu0 0
      %5803 = vmatmul.mubr.bf16.gmra.mrb[0].mxu0 %v5655
      %v5804 = vpop.f32.mrb[0].mxu0
      %v5805 = vadd.f32 %v5616, %v5804
      %v5806 = vpop.f32.mrb[0].mxu0
      %v5807 = vpop.f32.mrb[0].mxu0
      %v5808 = vadd.f32 %v5616, %v5807
      %v5809 = vpop.f32.mrb[0].mxu0
      %5810 = vmatprep.mubr.bf16.mxu0 0
      %5811 = vmatmul.mubr.bf16.gmra.mrb[0].mxu0 %v5658
      %v5812 = vpop.f32.mrb[0].mxu0
      %v5813 = vadd.f32 %v5616, %v5812
      %v5814 = vpop.f32.mrb[0].mxu0
      %v5815 = vpop.f32.mrb[0].mxu0
      %v5816 = vadd.f32 %v5616, %v5815
      %v5817 = vpop.f32.mrb[0].mxu0
      %5818 = vmatprep.mubr.bf16.mxu0 0
      %5819 = vmatmul.mubr.bf16.gmra.mrb[0].mxu0 %v5661
      %v5820 = vpop.f32.mrb[0].mxu0
      %v5821 = vadd.f32 %v5616, %v5820
      %v5822 = vpop.f32.mrb[0].mxu0
      %v5823 = vpop.f32.mrb[0].mxu0
      %v5824 = vadd.f32 %v5616, %v5823
      %v5825 = vpop.f32.mrb[0].mxu0
      %5826 = vmatprep.mubr.bf16.mxu0 0
      %5827 = vmatmul.mubr.bf16.gmra.mrb[0].mxu0 %v5664
      %v5828 = vpop.f32.mrb[0].mxu0
      %v5829 = vadd.f32 %v5616, %v5828
      %v5830 = vpop.f32.mrb[0].mxu0
      %v5831 = vpop.f32.mrb[0].mxu0
      %v5832 = vadd.f32 %v5616, %v5831
      %v5833 = vpop.f32.mrb[0].mxu0
      %5834 = vmatprep.mubr.bf16.mxu0 0
      %5835 = vmatmul.mubr.bf16.gmra.mrb[0].mxu0 %v5667
      %v5836 = vpop.f32.mrb[0].mxu0
      %v5837 = vadd.f32 %v5616, %v5836
      %v5838 = vpop.f32.mrb[0].mxu0
      %v5839 = vpop.f32.mrb[0].mxu0
      %v5840 = vadd.f32 %v5616, %v5839
      %v5841 = vpop.f32.mrb[0].mxu0
      %5842 = vmatprep.mubr.bf16.mxu0 0
      %5843 = vmatmul.mubr.bf16.gmra.mrb[0].mxu0 %v5670
      %v5844 = vpop.f32.mrb[0].mxu0
      %v5845 = vadd.f32 %v5616, %v5844
      %v5846 = vpop.f32.mrb[0].mxu0
      %v5847 = vpop.f32.mrb[0].mxu0
      %v5848 = vadd.f32 %v5616, %v5847
      %v5849 = vpop.f32.mrb[0].mxu0
      %5850 = vmatprep.mubr.bf16.mxu0 0
      %5851 = vmatmul.mubr.bf16.gmra.mrb[0].mxu0 %v5673
      %v5852 = vpop.f32.mrb[0].mxu0
      %v5853 = vadd.f32 %v5616, %v5852
      %v5854 = vpop.f32.mrb[0].mxu0
      %v5855 = vpop.f32.mrb[0].mxu0
      %v5856 = vadd.f32 %v5616, %v5855
      %v5857 = vpop.f32.mrb[0].mxu0
      %5858 = vmatprep.mubr.bf16.mxu0 0
      %5859 = vmatmul.mubr.bf16.gmra.mrb[0].mxu0 %v5676
      %v5860 = vpop.f32.mrb[0].mxu0
      %v5861 = vadd.f32 %v5616, %v5860
      %v5862 = vpop.f32.mrb[0].mxu0
      %v5863 = vpop.f32.mrb[0].mxu0
      %v5864 = vadd.f32 %v5616, %v5863
      %v5865 = vpop.f32.mrb[0].mxu0
      %5866 = vmatprep.mubr.bf16.mxu0 0
      %5867 = vmatmul.mubr.bf16.gmra.mrb[0].mxu0 %v5679
      %v5868 = vpop.f32.mrb[0].mxu0
      %v5869 = vadd.f32 %v5616, %v5868
      %v5870 = vpop.f32.mrb[0].mxu0
      %v5871 = vpop.f32.mrb[0].mxu0
      %v5872 = vadd.f32 %v5616, %v5871
      %v5873 = vpop.f32.mrb[0].mxu0
      %5874 = vmatprep.mubr.bf16.mxu0 0
      %5875 = vmatmul.mubr.bf16.gmra.mrb[0].mxu0 %v5682
      %v5876 = vpop.f32.mrb[0].mxu0
      %v5877 = vadd.f32 %v5616, %v5876
      %v5878 = vpop.f32.mrb[0].mxu0
      %v5879 = vpop.f32.mrb[0].mxu0
      %v5880 = vadd.f32 %v5616, %v5879
      %v5881 = vpop.f32.mrb[0].mxu0
      %5882 = vmatprep.mubr.bf16.mxu0 0
      %5883 = vmatmul.mubr.bf16.gmra.mrb[0].mxu0 %v5685
      %v5884 = vpop.f32.mrb[0].mxu0
      %v5885 = vadd.f32 %v5616, %v5884
      %v5886 = vpop.f32.mrb[0].mxu0
      %v5887 = vpop.f32.mrb[0].mxu0
      %v5888 = vadd.f32 %v5616, %v5887
      %v5889 = vpop.f32.mrb[0].mxu0
      %5890 = vmatprep.mubr.bf16.mxu0 0
      %5891 = vmatmul.mubr.bf16.gmra.mrb[0].mxu0 %v5688
      %v5892 = vpop.f32.mrb[0].mxu0
      %v5893 = vadd.f32 %v5616, %v5892
      %v5894 = vpop.f32.mrb[0].mxu0
      %v5895 = vpop.f32.mrb[0].mxu0
      %v5896 = vadd.f32 %v5616, %v5895
      %v5897 = vpop.f32.mrb[0].mxu0
      %5898 = vmatprep.mubr.bf16.mxu0 0
      %5899 = vmatmul.mubr.bf16.gmra.mrb[0].mxu0 %v5691
      %v5900 = vpop.f32.mrb[0].mxu0
      %v5901 = vadd.f32 %v5616, %v5900
      %v5902 = vpop.f32.mrb[0].mxu0
      %v5903 = vpop.f32.mrb[0].mxu0
      %v5904 = vadd.f32 %v5616, %v5903
      %v5905 = vpop.f32.mrb[0].mxu0
      %5906 = vmatprep.mubr.bf16.mxu0 0
      %5907 = vmatmul.mubr.bf16.gmra.mrb[0].mxu0 %v5694
      %v5908 = vpop.f32.mrb[0].mxu0
      %v5909 = vadd.f32 %v5616, %v5908
      %v5910 = vpop.f32.mrb[0].mxu0
      %v5911 = vpop.f32.mrb[0].mxu0
      %v5912 = vadd.f32 %v5616, %v5911
      %v5913 = vpop.f32.mrb[0].mxu0
      %5914 = vmatprep.mubr.bf16.mxu0 0
      %5915 = vmatmul.mubr.bf16.gmra.mrb[0].mxu0 %v5697
      %v5916 = vpop.f32.mrb[0].mxu0
      %v5917 = vadd.f32 %v5616, %v5916
      %v5918 = vpop.f32.mrb[0].mxu0
      %v5919 = vpop.f32.mrb[0].mxu0
      %v5920 = vadd.f32 %v5616, %v5919
      %v5921 = vpop.f32.mrb[0].mxu0
      %5922 = vmatprep.mubr.bf16.mxu0 0
      %5923 = vmatmul.mubr.bf16.gmra.mrb[0].mxu0 %v5700
      %v5924 = vpop.f32.mrb[0].mxu0
      %v5925 = vadd.f32 %v5616, %v5924
      %v5926 = vpop.f32.mrb[0].mxu0
      %v5927 = vpop.f32.mrb[0].mxu0
      %v5928 = vadd.f32 %v5616, %v5927
      %v5929 = vpop.f32.mrb[0].mxu0
      %5930 = vmatprep.mubr.bf16.mxu0 0
      %5931 = vmatmul.mubr.bf16.gmra.mrb[0].mxu0 %v5703
      %v5932 = vpop.f32.mrb[0].mxu0
      %v5933 = vadd.f32 %v5616, %v5932
      %v5934 = vpop.f32.mrb[0].mxu0
      %v5935 = vpop.f32.mrb[0].mxu0
      %v5936 = vadd.f32 %v5616, %v5935
      %v5937 = vpop.f32.mrb[0].mxu0
      %5938 = vmatprep.mubr.bf16.mxu0 0
      %5939 = vmatmul.mubr.bf16.gmra.mrb[0].mxu0 %v5706
      %v5940 = vpop.f32.mrb[0].mxu0
      %v5941 = vadd.f32 %v5616, %v5940
      %v5942 = vpop.f32.mrb[0].mxu0
      %v5943 = vpop.f32.mrb[0].mxu0
      %v5944 = vadd.f32 %v5616, %v5943
      %v5945 = vpop.f32.mrb[0].mxu0
      %5946 = vmatprep.mubr.bf16.mxu0 0
      %5947 = vmatmul.mubr.bf16.gmra.mrb[0].mxu0 %v5709
      %v5948 = vpop.f32.mrb[0].mxu0
      %v5949 = vadd.f32 %v5616, %v5948
      %v5950 = vpop.f32.mrb[0].mxu0
      %v5951 = vpop.f32.mrb[0].mxu0
      %v5952 = vadd.f32 %v5616, %v5951
      %v5953 = vpop.f32.mrb[0].mxu0
      %5954 = vmatprep.mubr.bf16.mxu0 0
      %5955 = vmatmul.mubr.bf16.gmra.mrb[0].mxu0 %v5712
      %v5956 = vpop.f32.mrb[0].mxu0
      %v5957 = vadd.f32 %v5616, %v5956
      %v5958 = vpop.f32.mrb[0].mxu0
      %v5959 = vpop.f32.mrb[0].mxu0
      %v5960 = vadd.f32 %v5616, %v5959
      %v5961 = vpop.f32.mrb[0].mxu0
      %5962 = vmatprep.mubr.bf16.mxu0 0
      %5963 = vmatmul.mubr.bf16.gmra.mrb[0].mxu0 %v5715
      %v5964 = vpop.f32.mrb[0].mxu0
      %v5965 = vadd.f32 %v5616, %v5964
      %v5966 = vpop.f32.mrb[0].mxu0
      %v5967 = vpop.f32.mrb[0].mxu0
      %v5968 = vadd.f32 %v5616, %v5967
      %v5969 = vpop.f32.mrb[0].mxu0
      %5970 = vmatprep.mubr.bf16.mxu0 0
      %5971 = vmatmul.mubr.bf16.gmra.mrb[0].mxu0 %v5718
      %v5972 = vpop.f32.mrb[0].mxu0
      %v5973 = vadd.f32 %v5616, %v5972
      %v5974 = vpop.f32.mrb[0].mxu0
      %v5975 = vpop.f32.mrb[0].mxu0
      %v5976 = vadd.f32 %v5616, %v5975
      %v5977 = vpop.f32.mrb[0].mxu0
      %5978 = vmatprep.mubr.bf16.mxu0 0
      %5979 = vmatmul.mubr.bf16.gmra.mrb[0].mxu0 %v5721
      %v5980 = vpop.f32.mrb[0].mxu0
      %v5981 = vadd.f32 %v5616, %v5980
      %v5982 = vpop.f32.mrb[0].mxu0
      %v5983 = vpop.f32.mrb[0].mxu0
      %v5984 = vadd.f32 %v5616, %v5983
      %v5985 = vpop.f32.mrb[0].mxu0
      %5986 = vmatprep.mubr.bf16.mxu0 0
      %5987 = vmatmul.mubr.bf16.gmra.mrb[0].mxu0 %v5724
      %v5988 = vpop.f32.mrb[0].mxu0
      %v5989 = vadd.f32 %v5616, %v5988
      %v5990 = vpop.f32.mrb[0].mxu0
      %v5991 = vpop.f32.mrb[0].mxu0
      %v5992 = vadd.f32 %v5616, %v5991
      %v5993 = vpop.f32.mrb[0].mxu0
      %5994 = vmatprep.mubr.bf16.mxu0 0
      %5995 = vmatmul.mubr.bf16.gmra.mrb[0].mxu0 %v5727
      %v5996 = vpop.f32.mrb[0].mxu0
      %v5997 = vadd.f32 %v5616, %v5996
      %v5998 = vpop.f32.mrb[0].mxu0
      %v5999 = vpop.f32.mrb[0].mxu0
      %v6000 = vadd.f32 %v5616, %v5999
      %v6001 = vpop.f32.mrb[0].mxu0
      %6002 = vmatprep.mubr.bf16.mxu0 0
      %6003 = vmatmul.mubr.bf16.gmra.mrb[0].mxu0 %v5730
      %v6004 = vpop.f32.mrb[0].mxu0
      %v6005 = vadd.f32 %v5616, %v6004
      %v6006 = vpop.f32.mrb[0].mxu0
      %v6007 = vpop.f32.mrb[0].mxu0
      %v6008 = vadd.f32 %v5616, %v6007
      %v6009 = vpop.f32.mrb[0].mxu0
      %6010 = vmatprep.mubr.bf16.mxu0 0
      %6011 = vmatmul.mubr.bf16.gmra.mrb[0].mxu0 %v5733
      %v6012 = vpop.f32.mrb[0].mxu0
      %v6013 = vadd.f32 %v5616, %v6012
      %v6014 = vpop.f32.mrb[0].mxu0
      %v6015 = vpop.f32.mrb[0].mxu0
      %v6016 = vadd.f32 %v5616, %v6015
      %v6017 = vpop.f32.mrb[0].mxu0
      %6018 = vmatprep.mubr.bf16.mxu0 0
      %6019 = vmatmul.mubr.bf16.gmra.mrb[0].mxu0 %v5736
      %v6020 = vpop.f32.mrb[0].mxu0
      %v6021 = vadd.f32 %v5616, %v6020
      %v6022 = vpop.f32.mrb[0].mxu0
      %v6023 = vpop.f32.mrb[0].mxu0
      %v6024 = vadd.f32 %v5616, %v6023
      %v6025 = vpop.f32.mrb[0].mxu0
      %6026 = vdwg.mxu0
      %v6027 = vmax.f32 %v5773, 0.0
      %v6028 = vmax.f32 %v5776, 0.0
      %v6029 = vmax.f32 %v5781, 0.0
      %v6030 = vmax.f32 %v5784, 0.0
      %v6031 = vmax.f32 %v5789, 0.0
      %v6032 = vmax.f32 %v5792, 0.0
      %v6033 = vmax.f32 %v5797, 0.0
      %v6034 = vmax.f32 %v5800, 0.0
      %v6035 = vmax.f32 %v5805, 0.0
      %v6036 = vmax.f32 %v5808, 0.0
      %v6037 = vmax.f32 %v5813, 0.0
      %v6038 = vmax.f32 %v5816, 0.0
      %v6039 = vmax.f32 %v5821, 0.0
      %v6040 = vmax.f32 %v5824, 0.0
      %v6041 = vmax.f32 %v5829, 0.0
      %v6042 = vmax.f32 %v5832, 0.0
      %v6043 = vmax.f32 %v5837, 0.0
      %v6044 = vmax.f32 %v5840, 0.0
      %v6045 = vmax.f32 %v5845, 0.0
      %v6046 = vmax.f32 %v5848, 0.0
      %v6047 = vmax.f32 %v5853, 0.0
      %v6048 = vmax.f32 %v5856, 0.0
      %v6049 = vmax.f32 %v5861, 0.0
      %v6050 = vmax.f32 %v5864, 0.0
      %v6051 = vmax.f32 %v5869, 0.0
      %v6052 = vmax.f32 %v5872, 0.0
      %v6053 = vmax.f32 %v5877, 0.0
      %v6054 = vmax.f32 %v5880, 0.0
      %v6055 = vmax.f32 %v5885, 0.0
      %v6056 = vmax.f32 %v5888, 0.0
      %v6057 = vmax.f32 %v5893, 0.0
      %v6058 = vmax.f32 %v5896, 0.0
      %v6059 = vmax.f32 %v5901, 0.0
      %v6060 = vmax.f32 %v5904, 0.0
      %v6061 = vmax.f32 %v5909, 0.0
      %v6062 = vmax.f32 %v5912, 0.0
      %v6063 = vmax.f32 %v5917, 0.0
      %v6064 = vmax.f32 %v5920, 0.0
      %v6065 = vmax.f32 %v5925, 0.0
      %v6066 = vmax.f32 %v5928, 0.0
      %v6067 = vmax.f32 %v5933, 0.0
      %v6068 = vmax.f32 %v5936, 0.0
      %v6069 = vmax.f32 %v5941, 0.0
      %v6070 = vmax.f32 %v5944, 0.0
      %v6071 = vmax.f32 %v5949, 0.0
      %v6072 = vmax.f32 %v5952, 0.0
      %v6073 = vmax.f32 %v5957, 0.0
      %v6074 = vmax.f32 %v5960, 0.0
      %v6075 = vmax.f32 %v5965, 0.0
      %v6076 = vmax.f32 %v5968, 0.0
      %v6077 = vmax.f32 %v5973, 0.0
      %v6078 = vmax.f32 %v5976, 0.0
      %v6079 = vmax.f32 %v5981, 0.0
      %v6080 = vmax.f32 %v5984, 0.0
      %v6081 = vmax.f32 %v5989, 0.0
      %v6082 = vmax.f32 %v5992, 0.0
      %v6083 = vmax.f32 %v5997, 0.0
      %v6084 = vmax.f32 %v6000, 0.0
      %v6085 = vmax.f32 %v6005, 0.0
      %v6086 = vmax.f32 %v6008, 0.0
      %v6087 = vmax.f32 %v6013, 0.0
      %v6088 = vmax.f32 %v6016, 0.0
      %v6089 = vmax.f32 %v6021, 0.0
      %v6090 = vmax.f32 %v6024, 0.0
      %v6091 = vpack.c.bf16 %v6028, %v6027
      %v6092 = vpack.c.bf16 %v6030, %v6029
      %v6093 = vpack.c.bf16 %v6032, %v6031
      %v6094 = vpack.c.bf16 %v6034, %v6033
      %v6095 = vpack.c.bf16 %v6036, %v6035
      %v6096 = vpack.c.bf16 %v6038, %v6037
      %v6097 = vpack.c.bf16 %v6040, %v6039
      %v6098 = vpack.c.bf16 %v6042, %v6041
      %v6099 = vpack.c.bf16 %v6044, %v6043
      %v6100 = vpack.c.bf16 %v6046, %v6045
      %v6101 = vpack.c.bf16 %v6048, %v6047
      %v6102 = vpack.c.bf16 %v6050, %v6049
      %v6103 = vpack.c.bf16 %v6052, %v6051
      %v6104 = vpack.c.bf16 %v6054, %v6053
      %v6105 = vpack.c.bf16 %v6056, %v6055
      %v6106 = vpack.c.bf16 %v6058, %v6057
      %v6107 = vpack.c.bf16 %v6060, %v6059
      %v6108 = vpack.c.bf16 %v6062, %v6061
      %v6109 = vpack.c.bf16 %v6064, %v6063
      %v6110 = vpack.c.bf16 %v6066, %v6065
      %v6111 = vpack.c.bf16 %v6068, %v6067
      %v6112 = vpack.c.bf16 %v6070, %v6069
      %v6113 = vpack.c.bf16 %v6072, %v6071
      %v6114 = vpack.c.bf16 %v6074, %v6073
      %v6115 = vpack.c.bf16 %v6076, %v6075
      %v6116 = vpack.c.bf16 %v6078, %v6077
      %v6117 = vpack.c.bf16 %v6080, %v6079
      %v6118 = vpack.c.bf16 %v6082, %v6081
      %v6119 = vpack.c.bf16 %v6084, %v6083
      %v6120 = vpack.c.bf16 %v6086, %v6085
      %v6121 = vpack.c.bf16 %v6088, %v6087
      %v6122 = vpack.c.bf16 %v6090, %v6089
      %v6123 = vld [vmem:[%s13] sm:$0xff]
      %v6124 = vld [vmem:[%s13 + $0x8] sm:$0xff]
      %v6125 = vld [vmem:[%s13 + $0x10] sm:$0xff]
      %v6126 = vld [vmem:[%s13 + $0x18] sm:$0xf]
      %v6127 = vld [vmem:[%s13 + $0x1c] sm:$0xff]
      %v6128 = vld [vmem:[%s13 + $0x24] sm:$0xff]
      %v6129 = vld [vmem:[%s13 + $0x2c] sm:$0xff]
      %v6130 = vld [vmem:[%s13 + $0x34] sm:$0xf]
      %v6131 = vld [vmem:[%s13 + $0x38] sm:$0xff]
      %v6132 = vld [vmem:[%s13 + $0x40] sm:$0xff]
      %v6133 = vld [vmem:[%s13 + $0x48] sm:$0xff]
      %v6134 = vld [vmem:[%s13 + $0x50] sm:$0xf]
      %v6135 = vld [vmem:[%s13 + $0x54] sm:$0xff]
      %v6136 = vld [vmem:[%s13 + $0x5c] sm:$0xff]
      %v6137 = vld [vmem:[%s13 + $0x64] sm:$0xff]
      %v6138 = vld [vmem:[%s13 + $0x6c] sm:$0xf]
      %v6139 = vld [vmem:[%s13 + $0x70] sm:$0xff]
      %v6140 = vld [vmem:[%s13 + $0x78] sm:$0xff]
      %v6141 = vld [vmem:[%s13 + $0x80] sm:$0xff]
      %v6142 = vld [vmem:[%s13 + $0x88] sm:$0xf]
      %v6143 = vld [vmem:[%s13 + $0x8c] sm:$0xff]
      %v6144 = vld [vmem:[%s13 + $0x94] sm:$0xff]
      %v6145 = vld [vmem:[%s13 + $0x9c] sm:$0xff]
      %v6146 = vld [vmem:[%s13 + $0xa4] sm:$0xf]
      %v6147 = vld [vmem:[%s13 + $0xa8] sm:$0xff]
      %v6148 = vld [vmem:[%s13 + $0xb0] sm:$0xff]
      %v6149 = vld [vmem:[%s13 + $0xb8] sm:$0xff]
      %v6150 = vld [vmem:[%s13 + $0xc0] sm:$0xf]
      %v6151 = vld [vmem:[%s13 + $0xc4] sm:$0xff]
      %v6152 = vld [vmem:[%s13 + $0xcc] sm:$0xff]
      %v6153 = vld [vmem:[%s13 + $0xd4] sm:$0xff]
      %v6154 = vld [vmem:[%s13 + $0xdc] sm:$0xf]
      %v6155 = vld [vmem:[%s13 + $0xe0] sm:$0xff]
      %v6156 = vld [vmem:[%s13 + $0xe8] sm:$0xff]
      %v6157 = vld [vmem:[%s13 + $0xf0] sm:$0xff]
      %v6158 = vld [vmem:[%s13 + $0xf8] sm:$0xf]
      %v6159 = vld [vmem:[%s13 + $0xfc] sm:$0xff]
      %v6160 = vld [vmem:[%s13 + $0x104] sm:$0xff]
      %v6161 = vld [vmem:[%s13 + $0x10c] sm:$0xff]
      %v6162 = vld [vmem:[%s13 + $0x114] sm:$0xf]
      %v6163 = vld [vmem:[%s13 + $0x118] sm:$0xff]
      %v6164 = vld [vmem:[%s13 + $0x120] sm:$0xff]
      %v6165 = vld [vmem:[%s13 + $0x128] sm:$0xff]
      %v6166 = vld [vmem:[%s13 + $0x130] sm:$0xf]
      %v6167 = vld [vmem:[%s13 + $0x134] sm:$0xff]
      %v6168 = vld [vmem:[%s13 + $0x13c] sm:$0xff]
      %v6169 = vld [vmem:[%s13 + $0x144] sm:$0xff]
      %v6170 = vld [vmem:[%s13 + $0x14c] sm:$0xf]
      %v6171 = vld [vmem:[%s13 + $0x150] sm:$0xff]
      %v6172 = vld [vmem:[%s13 + $0x158] sm:$0xff]
      %v6173 = vld [vmem:[%s13 + $0x160] sm:$0xff]
      %v6174 = vld [vmem:[%s13 + $0x168] sm:$0xf]
      %v6175 = vld [vmem:[%s13 + $0x16c] sm:$0xff]
      %v6176 = vld [vmem:[%s13 + $0x174] sm:$0xff]
      %v6177 = vld [vmem:[%s13 + $0x17c] sm:$0xff]
      %v6178 = vld [vmem:[%s13 + $0x184] sm:$0xf]
      %v6179 = vld [vmem:[%s13 + $0x188] sm:$0xff]
      %v6180 = vld [vmem:[%s13 + $0x190] sm:$0xff]
      %v6181 = vld [vmem:[%s13 + $0x198] sm:$0xff]
      %v6182 = vld [vmem:[%s13 + $0x1a0] sm:$0xf]
      %v6183 = vld [vmem:[%s13 + $0x1a4] sm:$0xff]
      %v6184 = vld [vmem:[%s13 + $0x1ac] sm:$0xff]
      %v6185 = vld [vmem:[%s13 + $0x1b4] sm:$0xff]
      %v6186 = vld [vmem:[%s13 + $0x1bc] sm:$0xf]
      %v6187 = vld [vmem:[%s14] sm:$0x7f]
      %v6189 = vlaneseq
      %v6190 = vshrl.u32 %v6189, 7
      %v6191 = vsub.s32 0, %v6190
      %v6192 = vrot.slane %v6187, %v6191
      %v6193 = vlaneseq
      %v6194 = vshrl.u32 %v6193, 7
      %v6195 = vsub.s32 1, %v6194
      %v6196 = vrot.slane %v6187, %v6195
      %v6197 = vlaneseq
      %v6198 = vshrl.u32 %v6197, 7
      %v6199 = vsub.s32 2, %v6198
      %v6200 = vrot.slane %v6187, %v6199
      %v6201 = vlaneseq
      %v6202 = vshrl.u32 %v6201, 7
      %v6203 = vsub.s32 3, %v6202
      %v6204 = vrot.slane %v6187, %v6203
      %v6205 = vlaneseq
      %v6206 = vshrl.u32 %v6205, 7
      %v6207 = vsub.s32 4, %v6206
      %v6208 = vrot.slane %v6187, %v6207
      %v6209 = vlaneseq
      %v6210 = vshrl.u32 %v6209, 7
      %v6211 = vsub.s32 5, %v6210
      %v6212 = vrot.slane %v6187, %v6211
      %v6213 = vlaneseq
      %v6214 = vshrl.u32 %v6213, 7
      %v6215 = vsub.s32 6, %v6214
      %v6216 = vrot.slane %v6187, %v6215
      %v6288 = vunpack.c.l.b16 %v6123
      %v6289 = vunpack.c.h.b16 %v6123
      %v6290 = vunpack.c.l.b16 %v6124
      %v6291 = vunpack.c.h.b16 %v6124
      %v6292 = vunpack.c.l.b16 %v6125
      %v6293 = vunpack.c.h.b16 %v6125
      %v6294 = vunpack.c.l.b16 %v6126
      %v6295 = vunpack.c.l.b16 %v6127
      %v6296 = vunpack.c.h.b16 %v6127
      %v6297 = vunpack.c.l.b16 %v6128
      %v6298 = vunpack.c.h.b16 %v6128
      %v6299 = vunpack.c.l.b16 %v6129
      %v6300 = vunpack.c.h.b16 %v6129
      %v6301 = vunpack.c.l.b16 %v6130
      %v6302 = vunpack.c.l.b16 %v6131
      %v6303 = vunpack.c.h.b16 %v6131
      %v6304 = vunpack.c.l.b16 %v6132
      %v6305 = vunpack.c.h.b16 %v6132
      %v6306 = vunpack.c.l.b16 %v6133
      %v6307 = vunpack.c.h.b16 %v6133
      %v6308 = vunpack.c.l.b16 %v6134
      %v6309 = vunpack.c.l.b16 %v6135
      %v6310 = vunpack.c.h.b16 %v6135
      %v6311 = vunpack.c.l.b16 %v6136
      %v6312 = vunpack.c.h.b16 %v6136
      %v6313 = vunpack.c.l.b16 %v6137
      %v6314 = vunpack.c.h.b16 %v6137
      %v6315 = vunpack.c.l.b16 %v6138
      %v6316 = vunpack.c.l.b16 %v6139
      %v6317 = vunpack.c.h.b16 %v6139
      %v6318 = vunpack.c.l.b16 %v6140
      %v6319 = vunpack.c.h.b16 %v6140
      %v6320 = vunpack.c.l.b16 %v6141
      %v6321 = vunpack.c.h.b16 %v6141
      %v6322 = vunpack.c.l.b16 %v6142
      %v6323 = vunpack.c.l.b16 %v6143
      %v6324 = vunpack.c.h.b16 %v6143
      %v6325 = vunpack.c.l.b16 %v6144
      %v6326 = vunpack.c.h.b16 %v6144
      %v6327 = vunpack.c.l.b16 %v6145
      %v6328 = vunpack.c.h.b16 %v6145
      %v6329 = vunpack.c.l.b16 %v6146
      %v6330 = vunpack.c.l.b16 %v6147
      %v6331 = vunpack.c.h.b16 %v6147
      %v6332 = vunpack.c.l.b16 %v6148
      %v6333 = vunpack.c.h.b16 %v6148
      %v6334 = vunpack.c.l.b16 %v6149
      %v6335 = vunpack.c.h.b16 %v6149
      %v6336 = vunpack.c.l.b16 %v6150
      %v6337 = vunpack.c.l.b16 %v6151
      %v6338 = vunpack.c.h.b16 %v6151
      %v6339 = vunpack.c.l.b16 %v6152
      %v6340 = vunpack.c.h.b16 %v6152
      %v6341 = vunpack.c.l.b16 %v6153
      %v6342 = vunpack.c.h.b16 %v6153
      %v6343 = vunpack.c.l.b16 %v6154
      %v6344 = vunpack.c.l.b16 %v6155
      %v6345 = vunpack.c.h.b16 %v6155
      %v6346 = vunpack.c.l.b16 %v6156
      %v6347 = vunpack.c.h.b16 %v6156
      %v6348 = vunpack.c.l.b16 %v6157
      %v6349 = vunpack.c.h.b16 %v6157
      %v6350 = vunpack.c.l.b16 %v6158
      %v6351 = vunpack.c.l.b16 %v6159
      %v6352 = vunpack.c.h.b16 %v6159
      %v6353 = vunpack.c.l.b16 %v6160
      %v6354 = vunpack.c.h.b16 %v6160
      %v6355 = vunpack.c.l.b16 %v6161
      %v6356 = vunpack.c.h.b16 %v6161
      %v6357 = vunpack.c.l.b16 %v6162
      %v6358 = vunpack.c.l.b16 %v6163
      %v6359 = vunpack.c.h.b16 %v6163
      %v6360 = vunpack.c.l.b16 %v6164
      %v6361 = vunpack.c.h.b16 %v6164
      %v6362 = vunpack.c.l.b16 %v6165
      %v6363 = vunpack.c.h.b16 %v6165
      %v6364 = vunpack.c.l.b16 %v6166
      %v6365 = vunpack.c.l.b16 %v6167
      %v6366 = vunpack.c.h.b16 %v6167
      %v6367 = vunpack.c.l.b16 %v6168
      %v6368 = vunpack.c.h.b16 %v6168
      %v6369 = vunpack.c.l.b16 %v6169
      %v6370 = vunpack.c.h.b16 %v6169
      %v6371 = vunpack.c.l.b16 %v6170
      %v6372 = vunpack.c.l.b16 %v6171
      %v6373 = vunpack.c.h.b16 %v6171
      %v6374 = vunpack.c.l.b16 %v6172
      %v6375 = vunpack.c.h.b16 %v6172
      %v6376 = vunpack.c.l.b16 %v6173
      %v6377 = vunpack.c.h.b16 %v6173
      %v6378 = vunpack.c.l.b16 %v6174
      %v6379 = vunpack.c.l.b16 %v6175
      %v6380 = vunpack.c.h.b16 %v6175
      %v6381 = vunpack.c.l.b16 %v6176
      %v6382 = vunpack.c.h.b16 %v6176
      %v6383 = vunpack.c.l.b16 %v6177
      %v6384 = vunpack.c.h.b16 %v6177
      %v6385 = vunpack.c.l.b16 %v6178
      %v6386 = vunpack.c.l.b16 %v6179
      %v6387 = vunpack.c.h.b16 %v6179
      %v6388 = vunpack.c.l.b16 %v6180
      %v6389 = vunpack.c.h.b16 %v6180
      %v6390 = vunpack.c.l.b16 %v6181
      %v6391 = vunpack.c.h.b16 %v6181
      %v6392 = vunpack.c.l.b16 %v6182
      %v6393 = vunpack.c.l.b16 %v6183
      %v6394 = vunpack.c.h.b16 %v6183
      %v6395 = vunpack.c.l.b16 %v6184
      %v6396 = vunpack.c.h.b16 %v6184
      %v6397 = vunpack.c.l.b16 %v6185
      %v6398 = vunpack.c.h.b16 %v6185
      %v6399 = vunpack.c.l.b16 %v6186
      %v6400 = vpack.c.b16 %v6295, %v6288
      %v6401 = vpack.c.b16 %v6296, %v6289
      %v6402 = vpack.c.b16 %v6297, %v6290
      %v6403 = vpack.c.b16 %v6298, %v6291
      %v6404 = vpack.c.b16 %v6299, %v6292
      %v6405 = vpack.c.b16 %v6300, %v6293
      %v6406 = vpack.c.b16 %v6301, %v6294
      %v6407 = vpack.c.b16 %v6309, %v6302
      %v6408 = vpack.c.b16 %v6310, %v6303
      %v6409 = vpack.c.b16 %v6311, %v6304
      %v6410 = vpack.c.b16 %v6312, %v6305
      %v6411 = vpack.c.b16 %v6313, %v6306
      %v6412 = vpack.c.b16 %v6314, %v6307
      %v6413 = vpack.c.b16 %v6315, %v6308
      %v6414 = vpack.c.b16 %v6323, %v6316
      %v6415 = vpack.c.b16 %v6324, %v6317
      %v6416 = vpack.c.b16 %v6325, %v6318
      %v6417 = vpack.c.b16 %v6326, %v6319
      %v6418 = vpack.c.b16 %v6327, %v6320
      %v6419 = vpack.c.b16 %v6328, %v6321
      %v6420 = vpack.c.b16 %v6329, %v6322
      %v6421 = vpack.c.b16 %v6337, %v6330
      %v6422 = vpack.c.b16 %v6338, %v6331
      %v6423 = vpack.c.b16 %v6339, %v6332
      %v6424 = vpack.c.b16 %v6340, %v6333
      %v6425 = vpack.c.b16 %v6341, %v6334
      %v6426 = vpack.c.b16 %v6342, %v6335
      %v6427 = vpack.c.b16 %v6343, %v6336
      %v6428 = vpack.c.b16 %v6351, %v6344
      %v6429 = vpack.c.b16 %v6352, %v6345
      %v6430 = vpack.c.b16 %v6353, %v6346
      %v6431 = vpack.c.b16 %v6354, %v6347
      %v6432 = vpack.c.b16 %v6355, %v6348
      %v6433 = vpack.c.b16 %v6356, %v6349
      %v6434 = vpack.c.b16 %v6357, %v6350
      %v6435 = vpack.c.b16 %v6365, %v6358
      %v6436 = vpack.c.b16 %v6366, %v6359
      %v6437 = vpack.c.b16 %v6367, %v6360
      %v6438 = vpack.c.b16 %v6368, %v6361
      %v6439 = vpack.c.b16 %v6369, %v6362
      %v6440 = vpack.c.b16 %v6370, %v6363
      %v6441 = vpack.c.b16 %v6371, %v6364
      %v6442 = vpack.c.b16 %v6379, %v6372
      %v6443 = vpack.c.b16 %v6380, %v6373
      %v6444 = vpack.c.b16 %v6381, %v6374
      %v6445 = vpack.c.b16 %v6382, %v6375
      %v6446 = vpack.c.b16 %v6383, %v6376
      %v6447 = vpack.c.b16 %v6384, %v6377
      %v6448 = vpack.c.b16 %v6385, %v6378
      %v6449 = vpack.c.b16 %v6393, %v6386
      %v6450 = vpack.c.b16 %v6394, %v6387
      %v6451 = vpack.c.b16 %v6395, %v6388
      %v6452 = vpack.c.b16 %v6396, %v6389
      %v6453 = vpack.c.b16 %v6397, %v6390
      %v6454 = vpack.c.b16 %v6398, %v6391
      %v6455 = vpack.c.b16 %v6399, %v6392
      %6512 = vmatprep.subr.bf16.mxu0 %v6401
      %6513 = vmatpush1.bf16.msra.mxu0 %v6400
      %6514 = vmatprep.subr.bf16.mxu0 %v6408
      %6515 = vmatpush1.bf16.msra.mxu0 %v6407
      %6516 = vmatprep.subr.bf16.mxu0 %v6415
      %6517 = vmatpush1.bf16.msra.mxu0 %v6414
      %6518 = vmatprep.subr.bf16.mxu0 %v6422
      %6519 = vmatpush1.bf16.msra.mxu0 %v6421
      %6520 = vmatprep.subr.bf16.mxu0 %v6429
      %6521 = vmatpush1.bf16.msra.mxu0 %v6428
      %6522 = vmatprep.subr.bf16.mxu0 %v6436
      %6523 = vmatpush1.bf16.msra.mxu0 %v6435
      %6524 = vmatprep.subr.bf16.mxu0 %v6443
      %6525 = vmatpush1.bf16.msra.mxu0 %v6442
      %6526 = vmatprep.subr.bf16.mxu0 %v6450
      %6527 = vmatpush1.bf16.msra.mxu0 %v6449
      %6528 = vmatprep.subr.bf16.mxu0 0
      %6529 = vmatpush1.bf16.msra.mxu0 0
      %6530 = vmatprep.subr.bf16.mxu0 0
      %6531 = vmatpush1.bf16.msra.mxu0 0
      %6532 = vmatprep.subr.bf16.mxu0 0
      %6533 = vmatpush1.bf16.msra.mxu0 0
      %6534 = vmatprep.subr.bf16.mxu0 0
      %6535 = vmatpush1.bf16.msra.mxu0 0
      %6536 = vmatprep.subr.bf16.mxu0 0
      %6537 = vmatpush1.bf16.msra.mxu0 0
      %6538 = vmatprep.subr.bf16.mxu0 0
      %6539 = vmatpush1.bf16.msra.mxu0 0
      %6540 = vmatprep.subr.bf16.mxu0 0
      %6541 = vmatpush1.bf16.msra.mxu0 0
      %6542 = vmatprep.subr.bf16.mxu0 0
      %6543 = vmatpush1.bf16.msra.mxu0 0
      %6544 = vmatprep.mubr.bf16.mxu0 0
      %6545 = vmatmul.mubr.bf16.gmra.mrb[0].mxu0 %v6091
      %v6546 = vpop.f32.mrb[0].mxu0
      %v6547 = vadd.f32 %v6192, %v6546
      %v6548 = vpop.f32.mrb[0].mxu0
      %v6549 = vadd.f32 %v6196, %v6548
      %v6550 = vpop.f32.mrb[0].mxu0
      %v6551 = vadd.f32 %v6192, %v6550
      %v6552 = vpop.f32.mrb[0].mxu0
      %v6553 = vadd.f32 %v6196, %v6552
      %6554 = vmatprep.mubr.bf16.mxu0 0
      %6555 = vmatmul.mubr.bf16.gmra.mrb[0].mxu0 %v6092
      %v6556 = vpop.f32.mrb[0].mxu0
      %v6557 = vadd.f32 %v6192, %v6556
      %v6558 = vpop.f32.mrb[0].mxu0
      %v6559 = vadd.f32 %v6196, %v6558
      %v6560 = vpop.f32.mrb[0].mxu0
      %v6561 = vadd.f32 %v6192, %v6560
      %v6562 = vpop.f32.mrb[0].mxu0
      %v6563 = vadd.f32 %v6196, %v6562
      %6564 = vmatprep.mubr.bf16.mxu0 0
      %6565 = vmatmul.mubr.bf16.gmra.mrb[0].mxu0 %v6093
      %v6566 = vpop.f32.mrb[0].mxu0
      %v6567 = vadd.f32 %v6192, %v6566
      %v6568 = vpop.f32.mrb[0].mxu0
      %v6569 = vadd.f32 %v6196, %v6568
      %v6570 = vpop.f32.mrb[0].mxu0
      %v6571 = vadd.f32 %v6192, %v6570
      %v6572 = vpop.f32.mrb[0].mxu0
      %v6573 = vadd.f32 %v6196, %v6572
      %6574 = vmatprep.mubr.bf16.mxu0 0
      %6575 = vmatmul.mubr.bf16.gmra.mrb[0].mxu0 %v6094
      %v6576 = vpop.f32.mrb[0].mxu0
      %v6577 = vadd.f32 %v6192, %v6576
      %v6578 = vpop.f32.mrb[0].mxu0
      %v6579 = vadd.f32 %v6196, %v6578
      %v6580 = vpop.f32.mrb[0].mxu0
      %v6581 = vadd.f32 %v6192, %v6580
      %v6582 = vpop.f32.mrb[0].mxu0
      %v6583 = vadd.f32 %v6196, %v6582
      %6584 = vmatprep.mubr.bf16.mxu0 0
      %6585 = vmatmul.mubr.bf16.gmra.mrb[0].mxu0 %v6095
      %v6586 = vpop.f32.mrb[0].mxu0
      %v6587 = vadd.f32 %v6192, %v6586
      %v6588 = vpop.f32.mrb[0].mxu0
      %v6589 = vadd.f32 %v6196, %v6588
      %v6590 = vpop.f32.mrb[0].mxu0
      %v6591 = vadd.f32 %v6192, %v6590
      %v6592 = vpop.f32.mrb[0].mxu0
      %v6593 = vadd.f32 %v6196, %v6592
      %6594 = vmatprep.mubr.bf16.mxu0 0
      %6595 = vmatmul.mubr.bf16.gmra.mrb[0].mxu0 %v6096
      %v6596 = vpop.f32.mrb[0].mxu0
      %v6597 = vadd.f32 %v6192, %v6596
      %v6598 = vpop.f32.mrb[0].mxu0
      %v6599 = vadd.f32 %v6196, %v6598
      %v6600 = vpop.f32.mrb[0].mxu0
      %v6601 = vadd.f32 %v6192, %v6600
      %v6602 = vpop.f32.mrb[0].mxu0
      %v6603 = vadd.f32 %v6196, %v6602
      %6604 = vmatprep.mubr.bf16.mxu0 0
      %6605 = vmatmul.mubr.bf16.gmra.mrb[0].mxu0 %v6097
      %v6606 = vpop.f32.mrb[0].mxu0
      %v6607 = vadd.f32 %v6192, %v6606
      %v6608 = vpop.f32.mrb[0].mxu0
      %v6609 = vadd.f32 %v6196, %v6608
      %v6610 = vpop.f32.mrb[0].mxu0
      %v6611 = vadd.f32 %v6192, %v6610
      %v6612 = vpop.f32.mrb[0].mxu0
      %v6613 = vadd.f32 %v6196, %v6612
      %6614 = vmatprep.mubr.bf16.mxu0 0
      %6615 = vmatmul.mubr.bf16.gmra.mrb[0].mxu0 %v6098
      %v6616 = vpop.f32.mrb[0].mxu0
      %v6617 = vadd.f32 %v6192, %v6616
      %v6618 = vpop.f32.mrb[0].mxu0
      %v6619 = vadd.f32 %v6196, %v6618
      %v6620 = vpop.f32.mrb[0].mxu0
      %v6621 = vadd.f32 %v6192, %v6620
      %v6622 = vpop.f32.mrb[0].mxu0
      %v6623 = vadd.f32 %v6196, %v6622
      %6624 = vmatprep.mubr.bf16.mxu0 0
      %6625 = vmatmul.mubr.bf16.gmra.mrb[0].mxu0 %v6099
      %v6626 = vpop.f32.mrb[0].mxu0
      %v6627 = vadd.f32 %v6192, %v6626
      %v6628 = vpop.f32.mrb[0].mxu0
      %v6629 = vadd.f32 %v6196, %v6628
      %v6630 = vpop.f32.mrb[0].mxu0
      %v6631 = vadd.f32 %v6192, %v6630
      %v6632 = vpop.f32.mrb[0].mxu0
      %v6633 = vadd.f32 %v6196, %v6632
      %6634 = vmatprep.mubr.bf16.mxu0 0
      %6635 = vmatmul.mubr.bf16.gmra.mrb[0].mxu0 %v6100
      %v6636 = vpop.f32.mrb[0].mxu0
      %v6637 = vadd.f32 %v6192, %v6636
      %v6638 = vpop.f32.mrb[0].mxu0
      %v6639 = vadd.f32 %v6196, %v6638
      %v6640 = vpop.f32.mrb[0].mxu0
      %v6641 = vadd.f32 %v6192, %v6640
      %v6642 = vpop.f32.mrb[0].mxu0
      %v6643 = vadd.f32 %v6196, %v6642
      %6644 = vmatprep.mubr.bf16.mxu0 0
      %6645 = vmatmul.mubr.bf16.gmra.mrb[0].mxu0 %v6101
      %v6646 = vpop.f32.mrb[0].mxu0
      %v6647 = vadd.f32 %v6192, %v6646
      %v6648 = vpop.f32.mrb[0].mxu0
      %v6649 = vadd.f32 %v6196, %v6648
      %v6650 = vpop.f32.mrb[0].mxu0
      %v6651 = vadd.f32 %v6192, %v6650
      %v6652 = vpop.f32.mrb[0].mxu0
      %v6653 = vadd.f32 %v6196, %v6652
      %6654 = vmatprep.mubr.bf16.mxu0 0
      %6655 = vmatmul.mubr.bf16.gmra.mrb[0].mxu0 %v6102
      %v6656 = vpop.f32.mrb[0].mxu0
      %v6657 = vadd.f32 %v6192, %v6656
      %v6658 = vpop.f32.mrb[0].mxu0
      %v6659 = vadd.f32 %v6196, %v6658
      %v6660 = vpop.f32.mrb[0].mxu0
      %v6661 = vadd.f32 %v6192, %v6660
      %v6662 = vpop.f32.mrb[0].mxu0
      %v6663 = vadd.f32 %v6196, %v6662
      %6664 = vmatprep.mubr.bf16.mxu0 0
      %6665 = vmatmul.mubr.bf16.gmra.mrb[0].mxu0 %v6103
      %v6666 = vpop.f32.mrb[0].mxu0
      %v6667 = vadd.f32 %v6192, %v6666
      %v6668 = vpop.f32.mrb[0].mxu0
      %v6669 = vadd.f32 %v6196, %v6668
      %v6670 = vpop.f32.mrb[0].mxu0
      %v6671 = vadd.f32 %v6192, %v6670
      %v6672 = vpop.f32.mrb[0].mxu0
      %v6673 = vadd.f32 %v6196, %v6672
      %6674 = vmatprep.mubr.bf16.mxu0 0
      %6675 = vmatmul.mubr.bf16.gmra.mrb[0].mxu0 %v6104
      %v6676 = vpop.f32.mrb[0].mxu0
      %v6677 = vadd.f32 %v6192, %v6676
      %v6678 = vpop.f32.mrb[0].mxu0
      %v6679 = vadd.f32 %v6196, %v6678
      %v6680 = vpop.f32.mrb[0].mxu0
      %v6681 = vadd.f32 %v6192, %v6680
      %v6682 = vpop.f32.mrb[0].mxu0
      %v6683 = vadd.f32 %v6196, %v6682
      %6684 = vmatprep.mubr.bf16.mxu0 0
      %6685 = vmatmul.mubr.bf16.gmra.mrb[0].mxu0 %v6105
      %v6686 = vpop.f32.mrb[0].mxu0
      %v6687 = vadd.f32 %v6192, %v6686
      %v6688 = vpop.f32.mrb[0].mxu0
      %v6689 = vadd.f32 %v6196, %v6688
      %v6690 = vpop.f32.mrb[0].mxu0
      %v6691 = vadd.f32 %v6192, %v6690
      %v6692 = vpop.f32.mrb[0].mxu0
      %v6693 = vadd.f32 %v6196, %v6692
      %6694 = vmatprep.mubr.bf16.mxu0 0
      %6695 = vmatmul.mubr.bf16.gmra.mrb[0].mxu0 %v6106
      %v6696 = vpop.f32.mrb[0].mxu0
      %v6697 = vadd.f32 %v6192, %v6696
      %v6698 = vpop.f32.mrb[0].mxu0
      %v6699 = vadd.f32 %v6196, %v6698
      %v6700 = vpop.f32.mrb[0].mxu0
      %v6701 = vadd.f32 %v6192, %v6700
      %v6702 = vpop.f32.mrb[0].mxu0
      %v6703 = vadd.f32 %v6196, %v6702
      %6704 = vmatprep.mubr.bf16.mxu0 0
      %6705 = vmatmul.mubr.bf16.gmra.mrb[0].mxu0 %v6107
      %v6706 = vpop.f32.mrb[0].mxu0
      %v6707 = vadd.f32 %v6192, %v6706
      %v6708 = vpop.f32.mrb[0].mxu0
      %v6709 = vadd.f32 %v6196, %v6708
      %v6710 = vpop.f32.mrb[0].mxu0
      %v6711 = vadd.f32 %v6192, %v6710
      %v6712 = vpop.f32.mrb[0].mxu0
      %v6713 = vadd.f32 %v6196, %v6712
      %6714 = vmatprep.mubr.bf16.mxu0 0
      %6715 = vmatmul.mubr.bf16.gmra.mrb[0].mxu0 %v6108
      %v6716 = vpop.f32.mrb[0].mxu0
      %v6717 = vadd.f32 %v6192, %v6716
      %v6718 = vpop.f32.mrb[0].mxu0
      %v6719 = vadd.f32 %v6196, %v6718
      %v6720 = vpop.f32.mrb[0].mxu0
      %v6721 = vadd.f32 %v6192, %v6720
      %v6722 = vpop.f32.mrb[0].mxu0
      %v6723 = vadd.f32 %v6196, %v6722
      %6724 = vmatprep.mubr.bf16.mxu0 0
      %6725 = vmatmul.mubr.bf16.gmra.mrb[0].mxu0 %v6109
      %v6726 = vpop.f32.mrb[0].mxu0
      %v6727 = vadd.f32 %v6192, %v6726
      %v6728 = vpop.f32.mrb[0].mxu0
      %v6729 = vadd.f32 %v6196, %v6728
      %v6730 = vpop.f32.mrb[0].mxu0
      %v6731 = vadd.f32 %v6192, %v6730
      %v6732 = vpop.f32.mrb[0].mxu0
      %v6733 = vadd.f32 %v6196, %v6732
      %6734 = vmatprep.mubr.bf16.mxu0 0
      %6735 = vmatmul.mubr.bf16.gmra.mrb[0].mxu0 %v6110
      %v6736 = vpop.f32.mrb[0].mxu0
      %v6737 = vadd.f32 %v6192, %v6736
      %v6738 = vpop.f32.mrb[0].mxu0
      %v6739 = vadd.f32 %v6196, %v6738
      %v6740 = vpop.f32.mrb[0].mxu0
      %v6741 = vadd.f32 %v6192, %v6740
      %v6742 = vpop.f32.mrb[0].mxu0
      %v6743 = vadd.f32 %v6196, %v6742
      %6744 = vmatprep.mubr.bf16.mxu0 0
      %6745 = vmatmul.mubr.bf16.gmra.mrb[0].mxu0 %v6111
      %v6746 = vpop.f32.mrb[0].mxu0
      %v6747 = vadd.f32 %v6192, %v6746
      %v6748 = vpop.f32.mrb[0].mxu0
      %v6749 = vadd.f32 %v6196, %v6748
      %v6750 = vpop.f32.mrb[0].mxu0
      %v6751 = vadd.f32 %v6192, %v6750
      %v6752 = vpop.f32.mrb[0].mxu0
      %v6753 = vadd.f32 %v6196, %v6752
      %6754 = vmatprep.mubr.bf16.mxu0 0
      %6755 = vmatmul.mubr.bf16.gmra.mrb[0].mxu0 %v6112
      %v6756 = vpop.f32.mrb[0].mxu0
      %v6757 = vadd.f32 %v6192, %v6756
      %v6758 = vpop.f32.mrb[0].mxu0
      %v6759 = vadd.f32 %v6196, %v6758
      %v6760 = vpop.f32.mrb[0].mxu0
      %v6761 = vadd.f32 %v6192, %v6760
      %v6762 = vpop.f32.mrb[0].mxu0
      %v6763 = vadd.f32 %v6196, %v6762
      %6764 = vmatprep.mubr.bf16.mxu0 0
      %6765 = vmatmul.mubr.bf16.gmra.mrb[0].mxu0 %v6113
      %v6766 = vpop.f32.mrb[0].mxu0
      %v6767 = vadd.f32 %v6192, %v6766
      %v6768 = vpop.f32.mrb[0].mxu0
      %v6769 = vadd.f32 %v6196, %v6768
      %v6770 = vpop.f32.mrb[0].mxu0
      %v6771 = vadd.f32 %v6192, %v6770
      %v6772 = vpop.f32.mrb[0].mxu0
      %v6773 = vadd.f32 %v6196, %v6772
      %6774 = vmatprep.mubr.bf16.mxu0 0
      %6775 = vmatmul.mubr.bf16.gmra.mrb[0].mxu0 %v6114
      %v6776 = vpop.f32.mrb[0].mxu0
      %v6777 = vadd.f32 %v6192, %v6776
      %v6778 = vpop.f32.mrb[0].mxu0
      %v6779 = vadd.f32 %v6196, %v6778
      %v6780 = vpop.f32.mrb[0].mxu0
      %v6781 = vadd.f32 %v6192, %v6780
      %v6782 = vpop.f32.mrb[0].mxu0
      %v6783 = vadd.f32 %v6196, %v6782
      %6784 = vmatprep.mubr.bf16.mxu0 0
      %6785 = vmatmul.mubr.bf16.gmra.mrb[0].mxu0 %v6115
      %v6786 = vpop.f32.mrb[0].mxu0
      %v6787 = vadd.f32 %v6192, %v6786
      %v6788 = vpop.f32.mrb[0].mxu0
      %v6789 = vadd.f32 %v6196, %v6788
      %v6790 = vpop.f32.mrb[0].mxu0
      %v6791 = vadd.f32 %v6192, %v6790
      %v6792 = vpop.f32.mrb[0].mxu0
      %v6793 = vadd.f32 %v6196, %v6792
      %6794 = vmatprep.mubr.bf16.mxu0 0
      %6795 = vmatmul.mubr.bf16.gmra.mrb[0].mxu0 %v6116
      %v6796 = vpop.f32.mrb[0].mxu0
      %v6797 = vadd.f32 %v6192, %v6796
      %v6798 = vpop.f32.mrb[0].mxu0
      %v6799 = vadd.f32 %v6196, %v6798
      %v6800 = vpop.f32.mrb[0].mxu0
      %v6801 = vadd.f32 %v6192, %v6800
      %v6802 = vpop.f32.mrb[0].mxu0
      %v6803 = vadd.f32 %v6196, %v6802
      %6804 = vmatprep.mubr.bf16.mxu0 0
      %6805 = vmatmul.mubr.bf16.gmra.mrb[0].mxu0 %v6117
      %v6806 = vpop.f32.mrb[0].mxu0
      %v6807 = vadd.f32 %v6192, %v6806
      %v6808 = vpop.f32.mrb[0].mxu0
      %v6809 = vadd.f32 %v6196, %v6808
      %v6810 = vpop.f32.mrb[0].mxu0
      %v6811 = vadd.f32 %v6192, %v6810
      %v6812 = vpop.f32.mrb[0].mxu0
      %v6813 = vadd.f32 %v6196, %v6812
      %6814 = vmatprep.mubr.bf16.mxu0 0
      %6815 = vmatmul.mubr.bf16.gmra.mrb[0].mxu0 %v6118
      %v6816 = vpop.f32.mrb[0].mxu0
      %v6817 = vadd.f32 %v6192, %v6816
      %v6818 = vpop.f32.mrb[0].mxu0
      %v6819 = vadd.f32 %v6196, %v6818
      %v6820 = vpop.f32.mrb[0].mxu0
      %v6821 = vadd.f32 %v6192, %v6820
      %v6822 = vpop.f32.mrb[0].mxu0
      %v6823 = vadd.f32 %v6196, %v6822
      %6824 = vmatprep.mubr.bf16.mxu0 0
      %6825 = vmatmul.mubr.bf16.gmra.mrb[0].mxu0 %v6119
      %v6826 = vpop.f32.mrb[0].mxu0
      %v6827 = vadd.f32 %v6192, %v6826
      %v6828 = vpop.f32.mrb[0].mxu0
      %v6829 = vadd.f32 %v6196, %v6828
      %v6830 = vpop.f32.mrb[0].mxu0
      %v6831 = vadd.f32 %v6192, %v6830
      %v6832 = vpop.f32.mrb[0].mxu0
      %v6833 = vadd.f32 %v6196, %v6832
      %6834 = vmatprep.mubr.bf16.mxu0 0
      %6835 = vmatmul.mubr.bf16.gmra.mrb[0].mxu0 %v6120
      %v6836 = vpop.f32.mrb[0].mxu0
      %v6837 = vadd.f32 %v6192, %v6836
      %v6838 = vpop.f32.mrb[0].mxu0
      %v6839 = vadd.f32 %v6196, %v6838
      %v6840 = vpop.f32.mrb[0].mxu0
      %v6841 = vadd.f32 %v6192, %v6840
      %v6842 = vpop.f32.mrb[0].mxu0
      %v6843 = vadd.f32 %v6196, %v6842
      %6844 = vmatprep.mubr.bf16.mxu0 0
      %6845 = vmatmul.mubr.bf16.gmra.mrb[0].mxu0 %v6121
      %v6846 = vpop.f32.mrb[0].mxu0
      %v6847 = vadd.f32 %v6192, %v6846
      %v6848 = vpop.f32.mrb[0].mxu0
      %v6849 = vadd.f32 %v6196, %v6848
      %v6850 = vpop.f32.mrb[0].mxu0
      %v6851 = vadd.f32 %v6192, %v6850
      %v6852 = vpop.f32.mrb[0].mxu0
      %v6853 = vadd.f32 %v6196, %v6852
      %6854 = vmatprep.mubr.bf16.mxu0 0
      %6855 = vmatmul.mubr.bf16.gmra.mrb[0].mxu0 %v6122
      %v6856 = vpop.f32.mrb[0].mxu0
      %v6857 = vadd.f32 %v6192, %v6856
      %v6858 = vpop.f32.mrb[0].mxu0
      %v6859 = vadd.f32 %v6196, %v6858
      %v6860 = vpop.f32.mrb[0].mxu0
      %v6861 = vadd.f32 %v6192, %v6860
      %v6862 = vpop.f32.mrb[0].mxu0
      %v6863 = vadd.f32 %v6196, %v6862
      %6864 = vdwg.mxu0
      %6865 = vmatprep.subr.bf16.mxu0 %v6403
      %6866 = vmatpush1.bf16.msra.mxu0 %v6402
      %6867 = vmatprep.subr.bf16.mxu0 %v6410
      %6868 = vmatpush1.bf16.msra.mxu0 %v6409
      %6869 = vmatprep.subr.bf16.mxu0 %v6417
      %6870 = vmatpush1.bf16.msra.mxu0 %v6416
      %6871 = vmatprep.subr.bf16.mxu0 %v6424
      %6872 = vmatpush1.bf16.msra.mxu0 %v6423
      %6873 = vmatprep.subr.bf16.mxu0 %v6431
      %6874 = vmatpush1.bf16.msra.mxu0 %v6430
      %6875 = vmatprep.subr.bf16.mxu0 %v6438
      %6876 = vmatpush1.bf16.msra.mxu0 %v6437
      %6877 = vmatprep.subr.bf16.mxu0 %v6445
      %6878 = vmatpush1.bf16.msra.mxu0 %v6444
      %6879 = vmatprep.subr.bf16.mxu0 %v6452
      %6880 = vmatpush1.bf16.msra.mxu0 %v6451
      %6881 = vmatprep.subr.bf16.mxu0 0
      %6882 = vmatpush1.bf16.msra.mxu0 0
      %6883 = vmatprep.subr.bf16.mxu0 0
      %6884 = vmatpush1.bf16.msra.mxu0 0
      %6885 = vmatprep.subr.bf16.mxu0 0
      %6886 = vmatpush1.bf16.msra.mxu0 0
      %6887 = vmatprep.subr.bf16.mxu0 0
      %6888 = vmatpush1.bf16.msra.mxu0 0
      %6889 = vmatprep.subr.bf16.mxu0 0
      %6890 = vmatpush1.bf16.msra.mxu0 0
      %6891 = vmatprep.subr.bf16.mxu0 0
      %6892 = vmatpush1.bf16.msra.mxu0 0
      %6893 = vmatprep.subr.bf16.mxu0 0
      %6894 = vmatpush1.bf16.msra.mxu0 0
      %6895 = vmatprep.subr.bf16.mxu0 0
      %6896 = vmatpush1.bf16.msra.mxu0 0
      %6897 = vmatprep.mubr.bf16.mxu0 0
      %6898 = vmatmul.mubr.bf16.gmra.mrb[0].mxu0 %v6091
      %v6899 = vpop.f32.mrb[0].mxu0
      %v6900 = vadd.f32 %v6200, %v6899
      %v6901 = vpop.f32.mrb[0].mxu0
      %v6902 = vadd.f32 %v6204, %v6901
      %v6903 = vpop.f32.mrb[0].mxu0
      %v6904 = vadd.f32 %v6200, %v6903
      %v6905 = vpop.f32.mrb[0].mxu0
      %v6906 = vadd.f32 %v6204, %v6905
      %6907 = vmatprep.mubr.bf16.mxu0 0
      %6908 = vmatmul.mubr.bf16.gmra.mrb[0].mxu0 %v6092
      %v6909 = vpop.f32.mrb[0].mxu0
      %v6910 = vadd.f32 %v6200, %v6909
      %v6911 = vpop.f32.mrb[0].mxu0
      %v6912 = vadd.f32 %v6204, %v6911
      %v6913 = vpop.f32.mrb[0].mxu0
      %v6914 = vadd.f32 %v6200, %v6913
      %v6915 = vpop.f32.mrb[0].mxu0
      %v6916 = vadd.f32 %v6204, %v6915
      %6917 = vmatprep.mubr.bf16.mxu0 0
      %6918 = vmatmul.mubr.bf16.gmra.mrb[0].mxu0 %v6093
      %v6919 = vpop.f32.mrb[0].mxu0
      %v6920 = vadd.f32 %v6200, %v6919
      %v6921 = vpop.f32.mrb[0].mxu0
      %v6922 = vadd.f32 %v6204, %v6921
      %v6923 = vpop.f32.mrb[0].mxu0
      %v6924 = vadd.f32 %v6200, %v6923
      %v6925 = vpop.f32.mrb[0].mxu0
      %v6926 = vadd.f32 %v6204, %v6925
      %6927 = vmatprep.mubr.bf16.mxu0 0
      %6928 = vmatmul.mubr.bf16.gmra.mrb[0].mxu0 %v6094
      %v6929 = vpop.f32.mrb[0].mxu0
      %v6930 = vadd.f32 %v6200, %v6929
      %v6931 = vpop.f32.mrb[0].mxu0
      %v6932 = vadd.f32 %v6204, %v6931
      %v6933 = vpop.f32.mrb[0].mxu0
      %v6934 = vadd.f32 %v6200, %v6933
      %v6935 = vpop.f32.mrb[0].mxu0
      %v6936 = vadd.f32 %v6204, %v6935
      %6937 = vmatprep.mubr.bf16.mxu0 0
      %6938 = vmatmul.mubr.bf16.gmra.mrb[0].mxu0 %v6095
      %v6939 = vpop.f32.mrb[0].mxu0
      %v6940 = vadd.f32 %v6200, %v6939
      %v6941 = vpop.f32.mrb[0].mxu0
      %v6942 = vadd.f32 %v6204, %v6941
      %v6943 = vpop.f32.mrb[0].mxu0
      %v6944 = vadd.f32 %v6200, %v6943
      %v6945 = vpop.f32.mrb[0].mxu0
      %v6946 = vadd.f32 %v6204, %v6945
      %6947 = vmatprep.mubr.bf16.mxu0 0
      %6948 = vmatmul.mubr.bf16.gmra.mrb[0].mxu0 %v6096
      %v6949 = vpop.f32.mrb[0].mxu0
      %v6950 = vadd.f32 %v6200, %v6949
      %v6951 = vpop.f32.mrb[0].mxu0
      %v6952 = vadd.f32 %v6204, %v6951
      %v6953 = vpop.f32.mrb[0].mxu0
      %v6954 = vadd.f32 %v6200, %v6953
      %v6955 = vpop.f32.mrb[0].mxu0
      %v6956 = vadd.f32 %v6204, %v6955
      %6957 = vmatprep.mubr.bf16.mxu0 0
      %6958 = vmatmul.mubr.bf16.gmra.mrb[0].mxu0 %v6097
      %v6959 = vpop.f32.mrb[0].mxu0
      %v6960 = vadd.f32 %v6200, %v6959
      %v6961 = vpop.f32.mrb[0].mxu0
      %v6962 = vadd.f32 %v6204, %v6961
      %v6963 = vpop.f32.mrb[0].mxu0
      %v6964 = vadd.f32 %v6200, %v6963
      %v6965 = vpop.f32.mrb[0].mxu0
      %v6966 = vadd.f32 %v6204, %v6965
      %6967 = vmatprep.mubr.bf16.mxu0 0
      %6968 = vmatmul.mubr.bf16.gmra.mrb[0].mxu0 %v6098
      %v6969 = vpop.f32.mrb[0].mxu0
      %v6970 = vadd.f32 %v6200, %v6969
      %v6971 = vpop.f32.mrb[0].mxu0
      %v6972 = vadd.f32 %v6204, %v6971
      %v6973 = vpop.f32.mrb[0].mxu0
      %v6974 = vadd.f32 %v6200, %v6973
      %v6975 = vpop.f32.mrb[0].mxu0
      %v6976 = vadd.f32 %v6204, %v6975
      %6977 = vmatprep.mubr.bf16.mxu0 0
      %6978 = vmatmul.mubr.bf16.gmra.mrb[0].mxu0 %v6099
      %v6979 = vpop.f32.mrb[0].mxu0
      %v6980 = vadd.f32 %v6200, %v6979
      %v6981 = vpop.f32.mrb[0].mxu0
      %v6982 = vadd.f32 %v6204, %v6981
      %v6983 = vpop.f32.mrb[0].mxu0
      %v6984 = vadd.f32 %v6200, %v6983
      %v6985 = vpop.f32.mrb[0].mxu0
      %v6986 = vadd.f32 %v6204, %v6985
      %6987 = vmatprep.mubr.bf16.mxu0 0
      %6988 = vmatmul.mubr.bf16.gmra.mrb[0].mxu0 %v6100
      %v6989 = vpop.f32.mrb[0].mxu0
      %v6990 = vadd.f32 %v6200, %v6989
      %v6991 = vpop.f32.mrb[0].mxu0
      %v6992 = vadd.f32 %v6204, %v6991
      %v6993 = vpop.f32.mrb[0].mxu0
      %v6994 = vadd.f32 %v6200, %v6993
      %v6995 = vpop.f32.mrb[0].mxu0
      %v6996 = vadd.f32 %v6204, %v6995
      %6997 = vmatprep.mubr.bf16.mxu0 0
      %6998 = vmatmul.mubr.bf16.gmra.mrb[0].mxu0 %v6101
      %v6999 = vpop.f32.mrb[0].mxu0
      %v7000 = vadd.f32 %v6200, %v6999
      %v7001 = vpop.f32.mrb[0].mxu0
      %v7002 = vadd.f32 %v6204, %v7001
      %v7003 = vpop.f32.mrb[0].mxu0
      %v7004 = vadd.f32 %v6200, %v7003
      %v7005 = vpop.f32.mrb[0].mxu0
      %v7006 = vadd.f32 %v6204, %v7005
      %7007 = vmatprep.mubr.bf16.mxu0 0
      %7008 = vmatmul.mubr.bf16.gmra.mrb[0].mxu0 %v6102
      %v7009 = vpop.f32.mrb[0].mxu0
      %v7010 = vadd.f32 %v6200, %v7009
      %v7011 = vpop.f32.mrb[0].mxu0
      %v7012 = vadd.f32 %v6204, %v7011
      %v7013 = vpop.f32.mrb[0].mxu0
      %v7014 = vadd.f32 %v6200, %v7013
      %v7015 = vpop.f32.mrb[0].mxu0
      %v7016 = vadd.f32 %v6204, %v7015
      %7017 = vmatprep.mubr.bf16.mxu0 0
      %7018 = vmatmul.mubr.bf16.gmra.mrb[0].mxu0 %v6103
      %v7019 = vpop.f32.mrb[0].mxu0
      %v7020 = vadd.f32 %v6200, %v7019
      %v7021 = vpop.f32.mrb[0].mxu0
      %v7022 = vadd.f32 %v6204, %v7021
      %v7023 = vpop.f32.mrb[0].mxu0
      %v7024 = vadd.f32 %v6200, %v7023
      %v7025 = vpop.f32.mrb[0].mxu0
      %v7026 = vadd.f32 %v6204, %v7025
      %7027 = vmatprep.mubr.bf16.mxu0 0
      %7028 = vmatmul.mubr.bf16.gmra.mrb[0].mxu0 %v6104
      %v7029 = vpop.f32.mrb[0].mxu0
      %v7030 = vadd.f32 %v6200, %v7029
      %v7031 = vpop.f32.mrb[0].mxu0
      %v7032 = vadd.f32 %v6204, %v7031
      %v7033 = vpop.f32.mrb[0].mxu0
      %v7034 = vadd.f32 %v6200, %v7033
      %v7035 = vpop.f32.mrb[0].mxu0
      %v7036 = vadd.f32 %v6204, %v7035
      %7037 = vmatprep.mubr.bf16.mxu0 0
      %7038 = vmatmul.mubr.bf16.gmra.mrb[0].mxu0 %v6105
      %v7039 = vpop.f32.mrb[0].mxu0
      %v7040 = vadd.f32 %v6200, %v7039
      %v7041 = vpop.f32.mrb[0].mxu0
      %v7042 = vadd.f32 %v6204, %v7041
      %v7043 = vpop.f32.mrb[0].mxu0
      %v7044 = vadd.f32 %v6200, %v7043
      %v7045 = vpop.f32.mrb[0].mxu0
      %v7046 = vadd.f32 %v6204, %v7045
      %7047 = vmatprep.mubr.bf16.mxu0 0
      %7048 = vmatmul.mubr.bf16.gmra.mrb[0].mxu0 %v6106
      %v7049 = vpop.f32.mrb[0].mxu0
      %v7050 = vadd.f32 %v6200, %v7049
      %v7051 = vpop.f32.mrb[0].mxu0
      %v7052 = vadd.f32 %v6204, %v7051
      %v7053 = vpop.f32.mrb[0].mxu0
      %v7054 = vadd.f32 %v6200, %v7053
      %v7055 = vpop.f32.mrb[0].mxu0
      %v7056 = vadd.f32 %v6204, %v7055
      %7057 = vmatprep.mubr.bf16.mxu0 0
      %7058 = vmatmul.mubr.bf16.gmra.mrb[0].mxu0 %v6107
      %v7059 = vpop.f32.mrb[0].mxu0
      %v7060 = vadd.f32 %v6200, %v7059
      %v7061 = vpop.f32.mrb[0].mxu0
      %v7062 = vadd.f32 %v6204, %v7061
      %v7063 = vpop.f32.mrb[0].mxu0
      %v7064 = vadd.f32 %v6200, %v7063
      %v7065 = vpop.f32.mrb[0].mxu0
      %v7066 = vadd.f32 %v6204, %v7065
      %7067 = vmatprep.mubr.bf16.mxu0 0
      %7068 = vmatmul.mubr.bf16.gmra.mrb[0].mxu0 %v6108
      %v7069 = vpop.f32.mrb[0].mxu0
      %v7070 = vadd.f32 %v6200, %v7069
      %v7071 = vpop.f32.mrb[0].mxu0
      %v7072 = vadd.f32 %v6204, %v7071
      %v7073 = vpop.f32.mrb[0].mxu0
      %v7074 = vadd.f32 %v6200, %v7073
      %v7075 = vpop.f32.mrb[0].mxu0
      %v7076 = vadd.f32 %v6204, %v7075
      %7077 = vmatprep.mubr.bf16.mxu0 0
      %7078 = vmatmul.mubr.bf16.gmra.mrb[0].mxu0 %v6109
      %v7079 = vpop.f32.mrb[0].mxu0
      %v7080 = vadd.f32 %v6200, %v7079
      %v7081 = vpop.f32.mrb[0].mxu0
      %v7082 = vadd.f32 %v6204, %v7081
      %v7083 = vpop.f32.mrb[0].mxu0
      %v7084 = vadd.f32 %v6200, %v7083
      %v7085 = vpop.f32.mrb[0].mxu0
      %v7086 = vadd.f32 %v6204, %v7085
      %7087 = vmatprep.mubr.bf16.mxu0 0
      %7088 = vmatmul.mubr.bf16.gmra.mrb[0].mxu0 %v6110
      %v7089 = vpop.f32.mrb[0].mxu0
      %v7090 = vadd.f32 %v6200, %v7089
      %v7091 = vpop.f32.mrb[0].mxu0
      %v7092 = vadd.f32 %v6204, %v7091
      %v7093 = vpop.f32.mrb[0].mxu0
      %v7094 = vadd.f32 %v6200, %v7093
      %v7095 = vpop.f32.mrb[0].mxu0
      %v7096 = vadd.f32 %v6204, %v7095
      %7097 = vmatprep.mubr.bf16.mxu0 0
      %7098 = vmatmul.mubr.bf16.gmra.mrb[0].mxu0 %v6111
      %v7099 = vpop.f32.mrb[0].mxu0
      %v7100 = vadd.f32 %v6200, %v7099
      %v7101 = vpop.f32.mrb[0].mxu0
      %v7102 = vadd.f32 %v6204, %v7101
      %v7103 = vpop.f32.mrb[0].mxu0
      %v7104 = vadd.f32 %v6200, %v7103
      %v7105 = vpop.f32.mrb[0].mxu0
      %v7106 = vadd.f32 %v6204, %v7105
      %7107 = vmatprep.mubr.bf16.mxu0 0
      %7108 = vmatmul.mubr.bf16.gmra.mrb[0].mxu0 %v6112
      %v7109 = vpop.f32.mrb[0].mxu0
      %v7110 = vadd.f32 %v6200, %v7109
      %v7111 = vpop.f32.mrb[0].mxu0
      %v7112 = vadd.f32 %v6204, %v7111
      %v7113 = vpop.f32.mrb[0].mxu0
      %v7114 = vadd.f32 %v6200, %v7113
      %v7115 = vpop.f32.mrb[0].mxu0
      %v7116 = vadd.f32 %v6204, %v7115
      %7117 = vmatprep.mubr.bf16.mxu0 0
      %7118 = vmatmul.mubr.bf16.gmra.mrb[0].mxu0 %v6113
      %v7119 = vpop.f32.mrb[0].mxu0
      %v7120 = vadd.f32 %v6200, %v7119
      %v7121 = vpop.f32.mrb[0].mxu0
      %v7122 = vadd.f32 %v6204, %v7121
      %v7123 = vpop.f32.mrb[0].mxu0
      %v7124 = vadd.f32 %v6200, %v7123
      %v7125 = vpop.f32.mrb[0].mxu0
      %v7126 = vadd.f32 %v6204, %v7125
      %7127 = vmatprep.mubr.bf16.mxu0 0
      %7128 = vmatmul.mubr.bf16.gmra.mrb[0].mxu0 %v6114
      %v7129 = vpop.f32.mrb[0].mxu0
      %v7130 = vadd.f32 %v6200, %v7129
      %v7131 = vpop.f32.mrb[0].mxu0
      %v7132 = vadd.f32 %v6204, %v7131
      %v7133 = vpop.f32.mrb[0].mxu0
      %v7134 = vadd.f32 %v6200, %v7133
      %v7135 = vpop.f32.mrb[0].mxu0
      %v7136 = vadd.f32 %v6204, %v7135
      %7137 = vmatprep.mubr.bf16.mxu0 0
      %7138 = vmatmul.mubr.bf16.gmra.mrb[0].mxu0 %v6115
      %v7139 = vpop.f32.mrb[0].mxu0
      %v7140 = vadd.f32 %v6200, %v7139
      %v7141 = vpop.f32.mrb[0].mxu0
      %v7142 = vadd.f32 %v6204, %v7141
      %v7143 = vpop.f32.mrb[0].mxu0
      %v7144 = vadd.f32 %v6200, %v7143
      %v7145 = vpop.f32.mrb[0].mxu0
      %v7146 = vadd.f32 %v6204, %v7145
      %7147 = vmatprep.mubr.bf16.mxu0 0
      %7148 = vmatmul.mubr.bf16.gmra.mrb[0].mxu0 %v6116
      %v7149 = vpop.f32.mrb[0].mxu0
      %v7150 = vadd.f32 %v6200, %v7149
      %v7151 = vpop.f32.mrb[0].mxu0
      %v7152 = vadd.f32 %v6204, %v7151
      %v7153 = vpop.f32.mrb[0].mxu0
      %v7154 = vadd.f32 %v6200, %v7153
      %v7155 = vpop.f32.mrb[0].mxu0
      %v7156 = vadd.f32 %v6204, %v7155
      %7157 = vmatprep.mubr.bf16.mxu0 0
      %7158 = vmatmul.mubr.bf16.gmra.mrb[0].mxu0 %v6117
      %v7159 = vpop.f32.mrb[0].mxu0
      %v7160 = vadd.f32 %v6200, %v7159
      %v7161 = vpop.f32.mrb[0].mxu0
      %v7162 = vadd.f32 %v6204, %v7161
      %v7163 = vpop.f32.mrb[0].mxu0
      %v7164 = vadd.f32 %v6200, %v7163
      %v7165 = vpop.f32.mrb[0].mxu0
      %v7166 = vadd.f32 %v6204, %v7165
      %7167 = vmatprep.mubr.bf16.mxu0 0
      %7168 = vmatmul.mubr.bf16.gmra.mrb[0].mxu0 %v6118
      %v7169 = vpop.f32.mrb[0].mxu0
      %v7170 = vadd.f32 %v6200, %v7169
      %v7171 = vpop.f32.mrb[0].mxu0
      %v7172 = vadd.f32 %v6204, %v7171
      %v7173 = vpop.f32.mrb[0].mxu0
      %v7174 = vadd.f32 %v6200, %v7173
      %v7175 = vpop.f32.mrb[0].mxu0
      %v7176 = vadd.f32 %v6204, %v7175
      %7177 = vmatprep.mubr.bf16.mxu0 0
      %7178 = vmatmul.mubr.bf16.gmra.mrb[0].mxu0 %v6119
      %v7179 = vpop.f32.mrb[0].mxu0
      %v7180 = vadd.f32 %v6200, %v7179
      %v7181 = vpop.f32.mrb[0].mxu0
      %v7182 = vadd.f32 %v6204, %v7181
      %v7183 = vpop.f32.mrb[0].mxu0
      %v7184 = vadd.f32 %v6200, %v7183
      %v7185 = vpop.f32.mrb[0].mxu0
      %v7186 = vadd.f32 %v6204, %v7185
      %7187 = vmatprep.mubr.bf16.mxu0 0
      %7188 = vmatmul.mubr.bf16.gmra.mrb[0].mxu0 %v6120
      %v7189 = vpop.f32.mrb[0].mxu0
      %v7190 = vadd.f32 %v6200, %v7189
      %v7191 = vpop.f32.mrb[0].mxu0
      %v7192 = vadd.f32 %v6204, %v7191
      %v7193 = vpop.f32.mrb[0].mxu0
      %v7194 = vadd.f32 %v6200, %v7193
      %v7195 = vpop.f32.mrb[0].mxu0
      %v7196 = vadd.f32 %v6204, %v7195
      %7197 = vmatprep.mubr.bf16.mxu0 0
      %7198 = vmatmul.mubr.bf16.gmra.mrb[0].mxu0 %v6121
      %v7199 = vpop.f32.mrb[0].mxu0
      %v7200 = vadd.f32 %v6200, %v7199
      %v7201 = vpop.f32.mrb[0].mxu0
      %v7202 = vadd.f32 %v6204, %v7201
      %v7203 = vpop.f32.mrb[0].mxu0
      %v7204 = vadd.f32 %v6200, %v7203
      %v7205 = vpop.f32.mrb[0].mxu0
      %v7206 = vadd.f32 %v6204, %v7205
      %7207 = vmatprep.mubr.bf16.mxu0 0
      %7208 = vmatmul.mubr.bf16.gmra.mrb[0].mxu0 %v6122
      %v7209 = vpop.f32.mrb[0].mxu0
      %v7210 = vadd.f32 %v6200, %v7209
      %v7211 = vpop.f32.mrb[0].mxu0
      %v7212 = vadd.f32 %v6204, %v7211
      %v7213 = vpop.f32.mrb[0].mxu0
      %v7214 = vadd.f32 %v6200, %v7213
      %v7215 = vpop.f32.mrb[0].mxu0
      %v7216 = vadd.f32 %v6204, %v7215
      %7217 = vdwg.mxu0
      %7218 = vmatprep.subr.bf16.mxu0 %v6405
      %7219 = vmatpush1.bf16.msra.mxu0 %v6404
      %7220 = vmatprep.subr.bf16.mxu0 %v6412
      %7221 = vmatpush1.bf16.msra.mxu0 %v6411
      %7222 = vmatprep.subr.bf16.mxu0 %v6419
      %7223 = vmatpush1.bf16.msra.mxu0 %v6418
      %7224 = vmatprep.subr.bf16.mxu0 %v6426
      %7225 = vmatpush1.bf16.msra.mxu0 %v6425
      %7226 = vmatprep.subr.bf16.mxu0 %v6433
      %7227 = vmatpush1.bf16.msra.mxu0 %v6432
      %7228 = vmatprep.subr.bf16.mxu0 %v6440
      %7229 = vmatpush1.bf16.msra.mxu0 %v6439
      %7230 = vmatprep.subr.bf16.mxu0 %v6447
      %7231 = vmatpush1.bf16.msra.mxu0 %v6446
      %7232 = vmatprep.subr.bf16.mxu0 %v6454
      %7233 = vmatpush1.bf16.msra.mxu0 %v6453
      %7234 = vmatprep.subr.bf16.mxu0 0
      %7235 = vmatpush1.bf16.msra.mxu0 0
      %7236 = vmatprep.subr.bf16.mxu0 0
      %7237 = vmatpush1.bf16.msra.mxu0 0
      %7238 = vmatprep.subr.bf16.mxu0 0
      %7239 = vmatpush1.bf16.msra.mxu0 0
      %7240 = vmatprep.subr.bf16.mxu0 0
      %7241 = vmatpush1.bf16.msra.mxu0 0
      %7242 = vmatprep.subr.bf16.mxu0 0
      %7243 = vmatpush1.bf16.msra.mxu0 0
      %7244 = vmatprep.subr.bf16.mxu0 0
      %7245 = vmatpush1.bf16.msra.mxu0 0
      %7246 = vmatprep.subr.bf16.mxu0 0
      %7247 = vmatpush1.bf16.msra.mxu0 0
      %7248 = vmatprep.subr.bf16.mxu0 0
      %7249 = vmatpush1.bf16.msra.mxu0 0
      %7250 = vmatprep.mubr.bf16.mxu0 0
      %7251 = vmatmul.mubr.bf16.gmra.mrb[0].mxu0 %v6091
      %v7252 = vpop.f32.mrb[0].mxu0
      %v7253 = vadd.f32 %v6208, %v7252
      %v7254 = vpop.f32.mrb[0].mxu0
      %v7255 = vadd.f32 %v6212, %v7254
      %v7256 = vpop.f32.mrb[0].mxu0
      %v7257 = vadd.f32 %v6208, %v7256
      %v7258 = vpop.f32.mrb[0].mxu0
      %v7259 = vadd.f32 %v6212, %v7258
      %7260 = vmatprep.mubr.bf16.mxu0 0
      %7261 = vmatmul.mubr.bf16.gmra.mrb[0].mxu0 %v6092
      %v7262 = vpop.f32.mrb[0].mxu0
      %v7263 = vadd.f32 %v6208, %v7262
      %v7264 = vpop.f32.mrb[0].mxu0
      %v7265 = vadd.f32 %v6212, %v7264
      %v7266 = vpop.f32.mrb[0].mxu0
      %v7267 = vadd.f32 %v6208, %v7266
      %v7268 = vpop.f32.mrb[0].mxu0
      %v7269 = vadd.f32 %v6212, %v7268
      %7270 = vmatprep.mubr.bf16.mxu0 0
      %7271 = vmatmul.mubr.bf16.gmra.mrb[0].mxu0 %v6093
      %v7272 = vpop.f32.mrb[0].mxu0
      %v7273 = vadd.f32 %v6208, %v7272
      %v7274 = vpop.f32.mrb[0].mxu0
      %v7275 = vadd.f32 %v6212, %v7274
      %v7276 = vpop.f32.mrb[0].mxu0
      %v7277 = vadd.f32 %v6208, %v7276
      %v7278 = vpop.f32.mrb[0].mxu0
      %v7279 = vadd.f32 %v6212, %v7278
      %7280 = vmatprep.mubr.bf16.mxu0 0
      %7281 = vmatmul.mubr.bf16.gmra.mrb[0].mxu0 %v6094
      %v7282 = vpop.f32.mrb[0].mxu0
      %v7283 = vadd.f32 %v6208, %v7282
      %v7284 = vpop.f32.mrb[0].mxu0
      %v7285 = vadd.f32 %v6212, %v7284
      %v7286 = vpop.f32.mrb[0].mxu0
      %v7287 = vadd.f32 %v6208, %v7286
      %v7288 = vpop.f32.mrb[0].mxu0
      %v7289 = vadd.f32 %v6212, %v7288
      %7290 = vmatprep.mubr.bf16.mxu0 0
      %7291 = vmatmul.mubr.bf16.gmra.mrb[0].mxu0 %v6095
      %v7292 = vpop.f32.mrb[0].mxu0
      %v7293 = vadd.f32 %v6208, %v7292
      %v7294 = vpop.f32.mrb[0].mxu0
      %v7295 = vadd.f32 %v6212, %v7294
      %v7296 = vpop.f32.mrb[0].mxu0
      %v7297 = vadd.f32 %v6208, %v7296
      %v7298 = vpop.f32.mrb[0].mxu0
      %v7299 = vadd.f32 %v6212, %v7298
      %7300 = vmatprep.mubr.bf16.mxu0 0
      %7301 = vmatmul.mubr.bf16.gmra.mrb[0].mxu0 %v6096
      %v7302 = vpop.f32.mrb[0].mxu0
      %v7303 = vadd.f32 %v6208, %v7302
      %v7304 = vpop.f32.mrb[0].mxu0
      %v7305 = vadd.f32 %v6212, %v7304
      %v7306 = vpop.f32.mrb[0].mxu0
      %v7307 = vadd.f32 %v6208, %v7306
      %v7308 = vpop.f32.mrb[0].mxu0
      %v7309 = vadd.f32 %v6212, %v7308
      %7310 = vmatprep.mubr.bf16.mxu0 0
      %7311 = vmatmul.mubr.bf16.gmra.mrb[0].mxu0 %v6097
      %v7312 = vpop.f32.mrb[0].mxu0
      %v7313 = vadd.f32 %v6208, %v7312
      %v7314 = vpop.f32.mrb[0].mxu0
      %v7315 = vadd.f32 %v6212, %v7314
      %v7316 = vpop.f32.mrb[0].mxu0
      %v7317 = vadd.f32 %v6208, %v7316
      %v7318 = vpop.f32.mrb[0].mxu0
      %v7319 = vadd.f32 %v6212, %v7318
      %7320 = vmatprep.mubr.bf16.mxu0 0
      %7321 = vmatmul.mubr.bf16.gmra.mrb[0].mxu0 %v6098
      %v7322 = vpop.f32.mrb[0].mxu0
      %v7323 = vadd.f32 %v6208, %v7322
      %v7324 = vpop.f32.mrb[0].mxu0
      %v7325 = vadd.f32 %v6212, %v7324
      %v7326 = vpop.f32.mrb[0].mxu0
      %v7327 = vadd.f32 %v6208, %v7326
      %v7328 = vpop.f32.mrb[0].mxu0
      %v7329 = vadd.f32 %v6212, %v7328
      %7330 = vmatprep.mubr.bf16.mxu0 0
      %7331 = vmatmul.mubr.bf16.gmra.mrb[0].mxu0 %v6099
      %v7332 = vpop.f32.mrb[0].mxu0
      %v7333 = vadd.f32 %v6208, %v7332
      %v7334 = vpop.f32.mrb[0].mxu0
      %v7335 = vadd.f32 %v6212, %v7334
      %v7336 = vpop.f32.mrb[0].mxu0
      %v7337 = vadd.f32 %v6208, %v7336
      %v7338 = vpop.f32.mrb[0].mxu0
      %v7339 = vadd.f32 %v6212, %v7338
      %7340 = vmatprep.mubr.bf16.mxu0 0
      %7341 = vmatmul.mubr.bf16.gmra.mrb[0].mxu0 %v6100
      %v7342 = vpop.f32.mrb[0].mxu0
      %v7343 = vadd.f32 %v6208, %v7342
      %v7344 = vpop.f32.mrb[0].mxu0
      %v7345 = vadd.f32 %v6212, %v7344
      %v7346 = vpop.f32.mrb[0].mxu0
      %v7347 = vadd.f32 %v6208, %v7346
      %v7348 = vpop.f32.mrb[0].mxu0
      %v7349 = vadd.f32 %v6212, %v7348
      %7350 = vmatprep.mubr.bf16.mxu0 0
      %7351 = vmatmul.mubr.bf16.gmra.mrb[0].mxu0 %v6101
      %v7352 = vpop.f32.mrb[0].mxu0
      %v7353 = vadd.f32 %v6208, %v7352
      %v7354 = vpop.f32.mrb[0].mxu0
      %v7355 = vadd.f32 %v6212, %v7354
      %v7356 = vpop.f32.mrb[0].mxu0
      %v7357 = vadd.f32 %v6208, %v7356
      %v7358 = vpop.f32.mrb[0].mxu0
      %v7359 = vadd.f32 %v6212, %v7358
      %7360 = vmatprep.mubr.bf16.mxu0 0
      %7361 = vmatmul.mubr.bf16.gmra.mrb[0].mxu0 %v6102
      %v7362 = vpop.f32.mrb[0].mxu0
      %v7363 = vadd.f32 %v6208, %v7362
      %v7364 = vpop.f32.mrb[0].mxu0
      %v7365 = vadd.f32 %v6212, %v7364
      %v7366 = vpop.f32.mrb[0].mxu0
      %v7367 = vadd.f32 %v6208, %v7366
      %v7368 = vpop.f32.mrb[0].mxu0
      %v7369 = vadd.f32 %v6212, %v7368
      %7370 = vmatprep.mubr.bf16.mxu0 0
      %7371 = vmatmul.mubr.bf16.gmra.mrb[0].mxu0 %v6103
      %v7372 = vpop.f32.mrb[0].mxu0
      %v7373 = vadd.f32 %v6208, %v7372
      %v7374 = vpop.f32.mrb[0].mxu0
      %v7375 = vadd.f32 %v6212, %v7374
      %v7376 = vpop.f32.mrb[0].mxu0
      %v7377 = vadd.f32 %v6208, %v7376
      %v7378 = vpop.f32.mrb[0].mxu0
      %v7379 = vadd.f32 %v6212, %v7378
      %7380 = vmatprep.mubr.bf16.mxu0 0
      %7381 = vmatmul.mubr.bf16.gmra.mrb[0].mxu0 %v6104
      %v7382 = vpop.f32.mrb[0].mxu0
      %v7383 = vadd.f32 %v6208, %v7382
      %v7384 = vpop.f32.mrb[0].mxu0
      %v7385 = vadd.f32 %v6212, %v7384
      %v7386 = vpop.f32.mrb[0].mxu0
      %v7387 = vadd.f32 %v6208, %v7386
      %v7388 = vpop.f32.mrb[0].mxu0
      %v7389 = vadd.f32 %v6212, %v7388
      %7390 = vmatprep.mubr.bf16.mxu0 0
      %7391 = vmatmul.mubr.bf16.gmra.mrb[0].mxu0 %v6105
      %v7392 = vpop.f32.mrb[0].mxu0
      %v7393 = vadd.f32 %v6208, %v7392
      %v7394 = vpop.f32.mrb[0].mxu0
      %v7395 = vadd.f32 %v6212, %v7394
      %v7396 = vpop.f32.mrb[0].mxu0
      %v7397 = vadd.f32 %v6208, %v7396
      %v7398 = vpop.f32.mrb[0].mxu0
      %v7399 = vadd.f32 %v6212, %v7398
      %7400 = vmatprep.mubr.bf16.mxu0 0
      %7401 = vmatmul.mubr.bf16.gmra.mrb[0].mxu0 %v6106
      %v7402 = vpop.f32.mrb[0].mxu0
      %v7403 = vadd.f32 %v6208, %v7402
      %v7404 = vpop.f32.mrb[0].mxu0
      %v7405 = vadd.f32 %v6212, %v7404
      %v7406 = vpop.f32.mrb[0].mxu0
      %v7407 = vadd.f32 %v6208, %v7406
      %v7408 = vpop.f32.mrb[0].mxu0
      %v7409 = vadd.f32 %v6212, %v7408
      %7410 = vmatprep.mubr.bf16.mxu0 0
      %7411 = vmatmul.mubr.bf16.gmra.mrb[0].mxu0 %v6107
      %v7412 = vpop.f32.mrb[0].mxu0
      %v7413 = vadd.f32 %v6208, %v7412
      %v7414 = vpop.f32.mrb[0].mxu0
      %v7415 = vadd.f32 %v6212, %v7414
      %v7416 = vpop.f32.mrb[0].mxu0
      %v7417 = vadd.f32 %v6208, %v7416
      %v7418 = vpop.f32.mrb[0].mxu0
      %v7419 = vadd.f32 %v6212, %v7418
      %7420 = vmatprep.mubr.bf16.mxu0 0
      %7421 = vmatmul.mubr.bf16.gmra.mrb[0].mxu0 %v6108
      %v7422 = vpop.f32.mrb[0].mxu0
      %v7423 = vadd.f32 %v6208, %v7422
      %v7424 = vpop.f32.mrb[0].mxu0
      %v7425 = vadd.f32 %v6212, %v7424
      %v7426 = vpop.f32.mrb[0].mxu0
      %v7427 = vadd.f32 %v6208, %v7426
      %v7428 = vpop.f32.mrb[0].mxu0
      %v7429 = vadd.f32 %v6212, %v7428
      %7430 = vmatprep.mubr.bf16.mxu0 0
      %7431 = vmatmul.mubr.bf16.gmra.mrb[0].mxu0 %v6109
      %v7432 = vpop.f32.mrb[0].mxu0
      %v7433 = vadd.f32 %v6208, %v7432
      %v7434 = vpop.f32.mrb[0].mxu0
      %v7435 = vadd.f32 %v6212, %v7434
      %v7436 = vpop.f32.mrb[0].mxu0
      %v7437 = vadd.f32 %v6208, %v7436
      %v7438 = vpop.f32.mrb[0].mxu0
      %v7439 = vadd.f32 %v6212, %v7438
      %7440 = vmatprep.mubr.bf16.mxu0 0
      %7441 = vmatmul.mubr.bf16.gmra.mrb[0].mxu0 %v6110
      %v7442 = vpop.f32.mrb[0].mxu0
      %v7443 = vadd.f32 %v6208, %v7442
      %v7444 = vpop.f32.mrb[0].mxu0
      %v7445 = vadd.f32 %v6212, %v7444
      %v7446 = vpop.f32.mrb[0].mxu0
      %v7447 = vadd.f32 %v6208, %v7446
      %v7448 = vpop.f32.mrb[0].mxu0
      %v7449 = vadd.f32 %v6212, %v7448
      %7450 = vmatprep.mubr.bf16.mxu0 0
      %7451 = vmatmul.mubr.bf16.gmra.mrb[0].mxu0 %v6111
      %v7452 = vpop.f32.mrb[0].mxu0
      %v7453 = vadd.f32 %v6208, %v7452
      %v7454 = vpop.f32.mrb[0].mxu0
      %v7455 = vadd.f32 %v6212, %v7454
      %v7456 = vpop.f32.mrb[0].mxu0
      %v7457 = vadd.f32 %v6208, %v7456
      %v7458 = vpop.f32.mrb[0].mxu0
      %v7459 = vadd.f32 %v6212, %v7458
      %7460 = vmatprep.mubr.bf16.mxu0 0
      %7461 = vmatmul.mubr.bf16.gmra.mrb[0].mxu0 %v6112
      %v7462 = vpop.f32.mrb[0].mxu0
      %v7463 = vadd.f32 %v6208, %v7462
      %v7464 = vpop.f32.mrb[0].mxu0
      %v7465 = vadd.f32 %v6212, %v7464
      %v7466 = vpop.f32.mrb[0].mxu0
      %v7467 = vadd.f32 %v6208, %v7466
      %v7468 = vpop.f32.mrb[0].mxu0
      %v7469 = vadd.f32 %v6212, %v7468
      %7470 = vmatprep.mubr.bf16.mxu0 0
      %7471 = vmatmul.mubr.bf16.gmra.mrb[0].mxu0 %v6113
      %v7472 = vpop.f32.mrb[0].mxu0
      %v7473 = vadd.f32 %v6208, %v7472
      %v7474 = vpop.f32.mrb[0].mxu0
      %v7475 = vadd.f32 %v6212, %v7474
      %v7476 = vpop.f32.mrb[0].mxu0
      %v7477 = vadd.f32 %v6208, %v7476
      %v7478 = vpop.f32.mrb[0].mxu0
      %v7479 = vadd.f32 %v6212, %v7478
      %7480 = vmatprep.mubr.bf16.mxu0 0
      %7481 = vmatmul.mubr.bf16.gmra.mrb[0].mxu0 %v6114
      %v7482 = vpop.f32.mrb[0].mxu0
      %v7483 = vadd.f32 %v6208, %v7482
      %v7484 = vpop.f32.mrb[0].mxu0
      %v7485 = vadd.f32 %v6212, %v7484
      %v7486 = vpop.f32.mrb[0].mxu0
      %v7487 = vadd.f32 %v6208, %v7486
      %v7488 = vpop.f32.mrb[0].mxu0
      %v7489 = vadd.f32 %v6212, %v7488
      %7490 = vmatprep.mubr.bf16.mxu0 0
      %7491 = vmatmul.mubr.bf16.gmra.mrb[0].mxu0 %v6115
      %v7492 = vpop.f32.mrb[0].mxu0
      %v7493 = vadd.f32 %v6208, %v7492
      %v7494 = vpop.f32.mrb[0].mxu0
      %v7495 = vadd.f32 %v6212, %v7494
      %v7496 = vpop.f32.mrb[0].mxu0
      %v7497 = vadd.f32 %v6208, %v7496
      %v7498 = vpop.f32.mrb[0].mxu0
      %v7499 = vadd.f32 %v6212, %v7498
      %7500 = vmatprep.mubr.bf16.mxu0 0
      %7501 = vmatmul.mubr.bf16.gmra.mrb[0].mxu0 %v6116
      %v7502 = vpop.f32.mrb[0].mxu0
      %v7503 = vadd.f32 %v6208, %v7502
      %v7504 = vpop.f32.mrb[0].mxu0
      %v7505 = vadd.f32 %v6212, %v7504
      %v7506 = vpop.f32.mrb[0].mxu0
      %v7507 = vadd.f32 %v6208, %v7506
      %v7508 = vpop.f32.mrb[0].mxu0
      %v7509 = vadd.f32 %v6212, %v7508
      %7510 = vmatprep.mubr.bf16.mxu0 0
      %7511 = vmatmul.mubr.bf16.gmra.mrb[0].mxu0 %v6117
      %v7512 = vpop.f32.mrb[0].mxu0
      %v7513 = vadd.f32 %v6208, %v7512
      %v7514 = vpop.f32.mrb[0].mxu0
      %v7515 = vadd.f32 %v6212, %v7514
      %v7516 = vpop.f32.mrb[0].mxu0
      %v7517 = vadd.f32 %v6208, %v7516
      %v7518 = vpop.f32.mrb[0].mxu0
      %v7519 = vadd.f32 %v6212, %v7518
      %7520 = vmatprep.mubr.bf16.mxu0 0
      %7521 = vmatmul.mubr.bf16.gmra.mrb[0].mxu0 %v6118
      %v7522 = vpop.f32.mrb[0].mxu0
      %v7523 = vadd.f32 %v6208, %v7522
      %v7524 = vpop.f32.mrb[0].mxu0
      %v7525 = vadd.f32 %v6212, %v7524
      %v7526 = vpop.f32.mrb[0].mxu0
      %v7527 = vadd.f32 %v6208, %v7526
      %v7528 = vpop.f32.mrb[0].mxu0
      %v7529 = vadd.f32 %v6212, %v7528
      %7530 = vmatprep.mubr.bf16.mxu0 0
      %7531 = vmatmul.mubr.bf16.gmra.mrb[0].mxu0 %v6119
      %v7532 = vpop.f32.mrb[0].mxu0
      %v7533 = vadd.f32 %v6208, %v7532
      %v7534 = vpop.f32.mrb[0].mxu0
      %v7535 = vadd.f32 %v6212, %v7534
      %v7536 = vpop.f32.mrb[0].mxu0
      %v7537 = vadd.f32 %v6208, %v7536
      %v7538 = vpop.f32.mrb[0].mxu0
      %v7539 = vadd.f32 %v6212, %v7538
      %7540 = vmatprep.mubr.bf16.mxu0 0
      %7541 = vmatmul.mubr.bf16.gmra.mrb[0].mxu0 %v6120
      %v7542 = vpop.f32.mrb[0].mxu0
      %v7543 = vadd.f32 %v6208, %v7542
      %v7544 = vpop.f32.mrb[0].mxu0
      %v7545 = vadd.f32 %v6212, %v7544
      %v7546 = vpop.f32.mrb[0].mxu0
      %v7547 = vadd.f32 %v6208, %v7546
      %v7548 = vpop.f32.mrb[0].mxu0
      %v7549 = vadd.f32 %v6212, %v7548
      %7550 = vmatprep.mubr.bf16.mxu0 0
      %7551 = vmatmul.mubr.bf16.gmra.mrb[0].mxu0 %v6121
      %v7552 = vpop.f32.mrb[0].mxu0
      %v7553 = vadd.f32 %v6208, %v7552
      %v7554 = vpop.f32.mrb[0].mxu0
      %v7555 = vadd.f32 %v6212, %v7554
      %v7556 = vpop.f32.mrb[0].mxu0
      %v7557 = vadd.f32 %v6208, %v7556
      %v7558 = vpop.f32.mrb[0].mxu0
      %v7559 = vadd.f32 %v6212, %v7558
      %7560 = vmatprep.mubr.bf16.mxu0 0
      %7561 = vmatmul.mubr.bf16.gmra.mrb[0].mxu0 %v6122
      %v7562 = vpop.f32.mrb[0].mxu0
      %v7563 = vadd.f32 %v6208, %v7562
      %v7564 = vpop.f32.mrb[0].mxu0
      %v7565 = vadd.f32 %v6212, %v7564
      %v7566 = vpop.f32.mrb[0].mxu0
      %v7567 = vadd.f32 %v6208, %v7566
      %v7568 = vpop.f32.mrb[0].mxu0
      %v7569 = vadd.f32 %v6212, %v7568
      %7570 = vdwg.mxu0
      %7571 = vmatprep.subr.bf16.mxu0 0
      %7572 = vmatpush1.bf16.msra.mxu0 %v6406
      %7573 = vmatprep.subr.bf16.mxu0 0
      %7574 = vmatpush1.bf16.msra.mxu0 %v6413
      %7575 = vmatprep.subr.bf16.mxu0 0
      %7576 = vmatpush1.bf16.msra.mxu0 %v6420
      %7577 = vmatprep.subr.bf16.mxu0 0
      %7578 = vmatpush1.bf16.msra.mxu0 %v6427
      %7579 = vmatprep.subr.bf16.mxu0 0
      %7580 = vmatpush1.bf16.msra.mxu0 %v6434
      %7581 = vmatprep.subr.bf16.mxu0 0
      %7582 = vmatpush1.bf16.msra.mxu0 %v6441
      %7583 = vmatprep.subr.bf16.mxu0 0
      %7584 = vmatpush1.bf16.msra.mxu0 %v6448
      %7585 = vmatprep.subr.bf16.mxu0 0
      %7586 = vmatpush1.bf16.msra.mxu0 %v6455
      %7587 = vmatprep.subr.bf16.mxu0 0
      %7588 = vmatpush1.bf16.msra.mxu0 0
      %7589 = vmatprep.subr.bf16.mxu0 0
      %7590 = vmatpush1.bf16.msra.mxu0 0
      %7591 = vmatprep.subr.bf16.mxu0 0
      %7592 = vmatpush1.bf16.msra.mxu0 0
      %7593 = vmatprep.subr.bf16.mxu0 0
      %7594 = vmatpush1.bf16.msra.mxu0 0
      %7595 = vmatprep.subr.bf16.mxu0 0
      %7596 = vmatpush1.bf16.msra.mxu0 0
      %7597 = vmatprep.subr.bf16.mxu0 0
      %7598 = vmatpush1.bf16.msra.mxu0 0
      %7599 = vmatprep.subr.bf16.mxu0 0
      %7600 = vmatpush1.bf16.msra.mxu0 0
      %7601 = vmatprep.subr.bf16.mxu0 0
      %7602 = vmatpush1.bf16.msra.mxu0 0
      %7603 = vmatprep.mubr.bf16.mxu0 0
      %7604 = vmatmul.mubr.bf16.gmra.mrb[0].mxu0 %v6091
      %v7605 = vpop.f32.mrb[0].mxu0
      %v7606 = vadd.f32 %v6216, %v7605
      %v7607 = vpop.f32.mrb[0].mxu0
      %v7608 = vpop.f32.mrb[0].mxu0
      %v7609 = vadd.f32 %v6216, %v7608
      %v7610 = vpop.f32.mrb[0].mxu0
      %7611 = vmatprep.mubr.bf16.mxu0 0
      %7612 = vmatmul.mubr.bf16.gmra.mrb[0].mxu0 %v6092
      %v7613 = vpop.f32.mrb[0].mxu0
      %v7614 = vadd.f32 %v6216, %v7613
      %v7615 = vpop.f32.mrb[0].mxu0
      %v7616 = vpop.f32.mrb[0].mxu0
      %v7617 = vadd.f32 %v6216, %v7616
      %v7618 = vpop.f32.mrb[0].mxu0
      %7619 = vmatprep.mubr.bf16.mxu0 0
      %7620 = vmatmul.mubr.bf16.gmra.mrb[0].mxu0 %v6093
      %v7621 = vpop.f32.mrb[0].mxu0
      %v7622 = vadd.f32 %v6216, %v7621
      %v7623 = vpop.f32.mrb[0].mxu0
      %v7624 = vpop.f32.mrb[0].mxu0
      %v7625 = vadd.f32 %v6216, %v7624
      %v7626 = vpop.f32.mrb[0].mxu0
      %7627 = vmatprep.mubr.bf16.mxu0 0
      %7628 = vmatmul.mubr.bf16.gmra.mrb[0].mxu0 %v6094
      %v7629 = vpop.f32.mrb[0].mxu0
      %v7630 = vadd.f32 %v6216, %v7629
      %v7631 = vpop.f32.mrb[0].mxu0
      %v7632 = vpop.f32.mrb[0].mxu0
      %v7633 = vadd.f32 %v6216, %v7632
      %v7634 = vpop.f32.mrb[0].mxu0
      %7635 = vmatprep.mubr.bf16.mxu0 0
      %7636 = vmatmul.mubr.bf16.gmra.mrb[0].mxu0 %v6095
      %v7637 = vpop.f32.mrb[0].mxu0
      %v7638 = vadd.f32 %v6216, %v7637
      %v7639 = vpop.f32.mrb[0].mxu0
      %v7640 = vpop.f32.mrb[0].mxu0
      %v7641 = vadd.f32 %v6216, %v7640
      %v7642 = vpop.f32.mrb[0].mxu0
      %7643 = vmatprep.mubr.bf16.mxu0 0
      %7644 = vmatmul.mubr.bf16.gmra.mrb[0].mxu0 %v6096
      %v7645 = vpop.f32.mrb[0].mxu0
      %v7646 = vadd.f32 %v6216, %v7645
      %v7647 = vpop.f32.mrb[0].mxu0
      %v7648 = vpop.f32.mrb[0].mxu0
      %v7649 = vadd.f32 %v6216, %v7648
      %v7650 = vpop.f32.mrb[0].mxu0
      %7651 = vmatprep.mubr.bf16.mxu0 0
      %7652 = vmatmul.mubr.bf16.gmra.mrb[0].mxu0 %v6097
      %v7653 = vpop.f32.mrb[0].mxu0
      %v7654 = vadd.f32 %v6216, %v7653
      %v7655 = vpop.f32.mrb[0].mxu0
      %v7656 = vpop.f32.mrb[0].mxu0
      %v7657 = vadd.f32 %v6216, %v7656
      %v7658 = vpop.f32.mrb[0].mxu0
      %7659 = vmatprep.mubr.bf16.mxu0 0
      %7660 = vmatmul.mubr.bf16.gmra.mrb[0].mxu0 %v6098
      %v7661 = vpop.f32.mrb[0].mxu0
      %v7662 = vadd.f32 %v6216, %v7661
      %v7663 = vpop.f32.mrb[0].mxu0
      %v7664 = vpop.f32.mrb[0].mxu0
      %v7665 = vadd.f32 %v6216, %v7664
      %v7666 = vpop.f32.mrb[0].mxu0
      %7667 = vmatprep.mubr.bf16.mxu0 0
      %7668 = vmatmul.mubr.bf16.gmra.mrb[0].mxu0 %v6099
      %v7669 = vpop.f32.mrb[0].mxu0
      %v7670 = vadd.f32 %v6216, %v7669
      %v7671 = vpop.f32.mrb[0].mxu0
      %v7672 = vpop.f32.mrb[0].mxu0
      %v7673 = vadd.f32 %v6216, %v7672
      %v7674 = vpop.f32.mrb[0].mxu0
      %7675 = vmatprep.mubr.bf16.mxu0 0
      %7676 = vmatmul.mubr.bf16.gmra.mrb[0].mxu0 %v6100
      %v7677 = vpop.f32.mrb[0].mxu0
      %v7678 = vadd.f32 %v6216, %v7677
      %v7679 = vpop.f32.mrb[0].mxu0
      %v7680 = vpop.f32.mrb[0].mxu0
      %v7681 = vadd.f32 %v6216, %v7680
      %v7682 = vpop.f32.mrb[0].mxu0
      %7683 = vmatprep.mubr.bf16.mxu0 0
      %7684 = vmatmul.mubr.bf16.gmra.mrb[0].mxu0 %v6101
      %v7685 = vpop.f32.mrb[0].mxu0
      %v7686 = vadd.f32 %v6216, %v7685
      %v7687 = vpop.f32.mrb[0].mxu0
      %v7688 = vpop.f32.mrb[0].mxu0
      %v7689 = vadd.f32 %v6216, %v7688
      %v7690 = vpop.f32.mrb[0].mxu0
      %7691 = vmatprep.mubr.bf16.mxu0 0
      %7692 = vmatmul.mubr.bf16.gmra.mrb[0].mxu0 %v6102
      %v7693 = vpop.f32.mrb[0].mxu0
      %v7694 = vadd.f32 %v6216, %v7693
      %v7695 = vpop.f32.mrb[0].mxu0
      %v7696 = vpop.f32.mrb[0].mxu0
      %v7697 = vadd.f32 %v6216, %v7696
      %v7698 = vpop.f32.mrb[0].mxu0
      %7699 = vmatprep.mubr.bf16.mxu0 0
      %7700 = vmatmul.mubr.bf16.gmra.mrb[0].mxu0 %v6103
      %v7701 = vpop.f32.mrb[0].mxu0
      %v7702 = vadd.f32 %v6216, %v7701
      %v7703 = vpop.f32.mrb[0].mxu0
      %v7704 = vpop.f32.mrb[0].mxu0
      %v7705 = vadd.f32 %v6216, %v7704
      %v7706 = vpop.f32.mrb[0].mxu0
      %7707 = vmatprep.mubr.bf16.mxu0 0
      %7708 = vmatmul.mubr.bf16.gmra.mrb[0].mxu0 %v6104
      %v7709 = vpop.f32.mrb[0].mxu0
      %v7710 = vadd.f32 %v6216, %v7709
      %v7711 = vpop.f32.mrb[0].mxu0
      %v7712 = vpop.f32.mrb[0].mxu0
      %v7713 = vadd.f32 %v6216, %v7712
      %v7714 = vpop.f32.mrb[0].mxu0
      %7715 = vmatprep.mubr.bf16.mxu0 0
      %7716 = vmatmul.mubr.bf16.gmra.mrb[0].mxu0 %v6105
      %v7717 = vpop.f32.mrb[0].mxu0
      %v7718 = vadd.f32 %v6216, %v7717
      %v7719 = vpop.f32.mrb[0].mxu0
      %v7720 = vpop.f32.mrb[0].mxu0
      %v7721 = vadd.f32 %v6216, %v7720
      %v7722 = vpop.f32.mrb[0].mxu0
      %7723 = vmatprep.mubr.bf16.mxu0 0
      %7724 = vmatmul.mubr.bf16.gmra.mrb[0].mxu0 %v6106
      %v7725 = vpop.f32.mrb[0].mxu0
      %v7726 = vadd.f32 %v6216, %v7725
      %v7727 = vpop.f32.mrb[0].mxu0
      %v7728 = vpop.f32.mrb[0].mxu0
      %v7729 = vadd.f32 %v6216, %v7728
      %v7730 = vpop.f32.mrb[0].mxu0
      %7731 = vmatprep.mubr.bf16.mxu0 0
      %7732 = vmatmul.mubr.bf16.gmra.mrb[0].mxu0 %v6107
      %v7733 = vpop.f32.mrb[0].mxu0
      %v7734 = vadd.f32 %v6216, %v7733
      %v7735 = vpop.f32.mrb[0].mxu0
      %v7736 = vpop.f32.mrb[0].mxu0
      %v7737 = vadd.f32 %v6216, %v7736
      %v7738 = vpop.f32.mrb[0].mxu0
      %7739 = vmatprep.mubr.bf16.mxu0 0
      %7740 = vmatmul.mubr.bf16.gmra.mrb[0].mxu0 %v6108
      %v7741 = vpop.f32.mrb[0].mxu0
      %v7742 = vadd.f32 %v6216, %v7741
      %v7743 = vpop.f32.mrb[0].mxu0
      %v7744 = vpop.f32.mrb[0].mxu0
      %v7745 = vadd.f32 %v6216, %v7744
      %v7746 = vpop.f32.mrb[0].mxu0
      %7747 = vmatprep.mubr.bf16.mxu0 0
      %7748 = vmatmul.mubr.bf16.gmra.mrb[0].mxu0 %v6109
      %v7749 = vpop.f32.mrb[0].mxu0
      %v7750 = vadd.f32 %v6216, %v7749
      %v7751 = vpop.f32.mrb[0].mxu0
      %v7752 = vpop.f32.mrb[0].mxu0
      %v7753 = vadd.f32 %v6216, %v7752
      %v7754 = vpop.f32.mrb[0].mxu0
      %7755 = vmatprep.mubr.bf16.mxu0 0
      %7756 = vmatmul.mubr.bf16.gmra.mrb[0].mxu0 %v6110
      %v7757 = vpop.f32.mrb[0].mxu0
      %v7758 = vadd.f32 %v6216, %v7757
      %v7759 = vpop.f32.mrb[0].mxu0
      %v7760 = vpop.f32.mrb[0].mxu0
      %v7761 = vadd.f32 %v6216, %v7760
      %v7762 = vpop.f32.mrb[0].mxu0
      %7763 = vmatprep.mubr.bf16.mxu0 0
      %7764 = vmatmul.mubr.bf16.gmra.mrb[0].mxu0 %v6111
      %v7765 = vpop.f32.mrb[0].mxu0
      %v7766 = vadd.f32 %v6216, %v7765
      %v7767 = vpop.f32.mrb[0].mxu0
      %v7768 = vpop.f32.mrb[0].mxu0
      %v7769 = vadd.f32 %v6216, %v7768
      %v7770 = vpop.f32.mrb[0].mxu0
      %7771 = vmatprep.mubr.bf16.mxu0 0
      %7772 = vmatmul.mubr.bf16.gmra.mrb[0].mxu0 %v6112
      %v7773 = vpop.f32.mrb[0].mxu0
      %v7774 = vadd.f32 %v6216, %v7773
      %v7775 = vpop.f32.mrb[0].mxu0
      %v7776 = vpop.f32.mrb[0].mxu0
      %v7777 = vadd.f32 %v6216, %v7776
      %v7778 = vpop.f32.mrb[0].mxu0
      %7779 = vmatprep.mubr.bf16.mxu0 0
      %7780 = vmatmul.mubr.bf16.gmra.mrb[0].mxu0 %v6113
      %v7781 = vpop.f32.mrb[0].mxu0
      %v7782 = vadd.f32 %v6216, %v7781
      %v7783 = vpop.f32.mrb[0].mxu0
      %v7784 = vpop.f32.mrb[0].mxu0
      %v7785 = vadd.f32 %v6216, %v7784
      %v7786 = vpop.f32.mrb[0].mxu0
      %7787 = vmatprep.mubr.bf16.mxu0 0
      %7788 = vmatmul.mubr.bf16.gmra.mrb[0].mxu0 %v6114
      %v7789 = vpop.f32.mrb[0].mxu0
      %v7790 = vadd.f32 %v6216, %v7789
      %v7791 = vpop.f32.mrb[0].mxu0
      %v7792 = vpop.f32.mrb[0].mxu0
      %v7793 = vadd.f32 %v6216, %v7792
      %v7794 = vpop.f32.mrb[0].mxu0
      %7795 = vmatprep.mubr.bf16.mxu0 0
      %7796 = vmatmul.mubr.bf16.gmra.mrb[0].mxu0 %v6115
      %v7797 = vpop.f32.mrb[0].mxu0
      %v7798 = vadd.f32 %v6216, %v7797
      %v7799 = vpop.f32.mrb[0].mxu0
      %v7800 = vpop.f32.mrb[0].mxu0
      %v7801 = vadd.f32 %v6216, %v7800
      %v7802 = vpop.f32.mrb[0].mxu0
      %7803 = vmatprep.mubr.bf16.mxu0 0
      %7804 = vmatmul.mubr.bf16.gmra.mrb[0].mxu0 %v6116
      %v7805 = vpop.f32.mrb[0].mxu0
      %v7806 = vadd.f32 %v6216, %v7805
      %v7807 = vpop.f32.mrb[0].mxu0
      %v7808 = vpop.f32.mrb[0].mxu0
      %v7809 = vadd.f32 %v6216, %v7808
      %v7810 = vpop.f32.mrb[0].mxu0
      %7811 = vmatprep.mubr.bf16.mxu0 0
      %7812 = vmatmul.mubr.bf16.gmra.mrb[0].mxu0 %v6117
      %v7813 = vpop.f32.mrb[0].mxu0
      %v7814 = vadd.f32 %v6216, %v7813
      %v7815 = vpop.f32.mrb[0].mxu0
      %v7816 = vpop.f32.mrb[0].mxu0
      %v7817 = vadd.f32 %v6216, %v7816
      %v7818 = vpop.f32.mrb[0].mxu0
      %7819 = vmatprep.mubr.bf16.mxu0 0
      %7820 = vmatmul.mubr.bf16.gmra.mrb[0].mxu0 %v6118
      %v7821 = vpop.f32.mrb[0].mxu0
      %v7822 = vadd.f32 %v6216, %v7821
      %v7823 = vpop.f32.mrb[0].mxu0
      %v7824 = vpop.f32.mrb[0].mxu0
      %v7825 = vadd.f32 %v6216, %v7824
      %v7826 = vpop.f32.mrb[0].mxu0
      %7827 = vmatprep.mubr.bf16.mxu0 0
      %7828 = vmatmul.mubr.bf16.gmra.mrb[0].mxu0 %v6119
      %v7829 = vpop.f32.mrb[0].mxu0
      %v7830 = vadd.f32 %v6216, %v7829
      %v7831 = vpop.f32.mrb[0].mxu0
      %v7832 = vpop.f32.mrb[0].mxu0
      %v7833 = vadd.f32 %v6216, %v7832
      %v7834 = vpop.f32.mrb[0].mxu0
      %7835 = vmatprep.mubr.bf16.mxu0 0
      %7836 = vmatmul.mubr.bf16.gmra.mrb[0].mxu0 %v6120
      %v7837 = vpop.f32.mrb[0].mxu0
      %v7838 = vadd.f32 %v6216, %v7837
      %v7839 = vpop.f32.mrb[0].mxu0
      %v7840 = vpop.f32.mrb[0].mxu0
      %v7841 = vadd.f32 %v6216, %v7840
      %v7842 = vpop.f32.mrb[0].mxu0
      %7843 = vmatprep.mubr.bf16.mxu0 0
      %7844 = vmatmul.mubr.bf16.gmra.mrb[0].mxu0 %v6121
      %v7845 = vpop.f32.mrb[0].mxu0
      %v7846 = vadd.f32 %v6216, %v7845
      %v7847 = vpop.f32.mrb[0].mxu0
      %v7848 = vpop.f32.mrb[0].mxu0
      %v7849 = vadd.f32 %v6216, %v7848
      %v7850 = vpop.f32.mrb[0].mxu0
      %7851 = vmatprep.mubr.bf16.mxu0 0
      %7852 = vmatmul.mubr.bf16.gmra.mrb[0].mxu0 %v6122
      %v7853 = vpop.f32.mrb[0].mxu0
      %v7854 = vadd.f32 %v6216, %v7853
      %v7855 = vpop.f32.mrb[0].mxu0
      %v7856 = vpop.f32.mrb[0].mxu0
      %v7857 = vadd.f32 %v6216, %v7856
      %v7858 = vpop.f32.mrb[0].mxu0
      %7859 = vdwg.mxu0
      %v7860 = vsub.f32 0.0, %v6547
      %v7861 = vsub.f32 0.0, %v6549
      %v7862 = vsub.f32 0.0, %v6900
      %v7863 = vsub.f32 0.0, %v6902
      %v7864 = vsub.f32 0.0, %v7253
      %v7865 = vsub.f32 0.0, %v7255
      %v7866 = vsub.f32 0.0, %v7606
      %v7867 = vsub.f32 0.0, %v6551
      %v7868 = vsub.f32 0.0, %v6553
      %v7869 = vsub.f32 0.0, %v6904
      %v7870 = vsub.f32 0.0, %v6906
      %v7871 = vsub.f32 0.0, %v7257
      %v7872 = vsub.f32 0.0, %v7259
      %v7873 = vsub.f32 0.0, %v7609
      %v7874 = vsub.f32 0.0, %v6557
      %v7875 = vsub.f32 0.0, %v6559
      %v7876 = vsub.f32 0.0, %v6910
      %v7877 = vsub.f32 0.0, %v6912
      %v7878 = vsub.f32 0.0, %v7263
      %v7879 = vsub.f32 0.0, %v7265
      %v7880 = vsub.f32 0.0, %v7614
      %v7881 = vsub.f32 0.0, %v6561
      %v7882 = vsub.f32 0.0, %v6563
      %v7883 = vsub.f32 0.0, %v6914
      %v7884 = vsub.f32 0.0, %v6916
      %v7885 = vsub.f32 0.0, %v7267
      %v7886 = vsub.f32 0.0, %v7269
      %v7887 = vsub.f32 0.0, %v7617
      %v7888 = vsub.f32 0.0, %v6567
      %v7889 = vsub.f32 0.0, %v6569
      %v7890 = vsub.f32 0.0, %v6920
      %v7891 = vsub.f32 0.0, %v6922
      %v7892 = vsub.f32 0.0, %v7273
      %v7893 = vsub.f32 0.0, %v7275
      %v7894 = vsub.f32 0.0, %v7622
      %v7895 = vsub.f32 0.0, %v6571
      %v7896 = vsub.f32 0.0, %v6573
      %v7897 = vsub.f32 0.0, %v6924
      %v7898 = vsub.f32 0.0, %v6926
      %v7899 = vsub.f32 0.0, %v7277
      %v7900 = vsub.f32 0.0, %v7279
      %v7901 = vsub.f32 0.0, %v7625
      %v7902 = vsub.f32 0.0, %v6577
      %v7903 = vsub.f32 0.0, %v6579
      %v7904 = vsub.f32 0.0, %v6930
      %v7905 = vsub.f32 0.0, %v6932
      %v7906 = vsub.f32 0.0, %v7283
      %v7907 = vsub.f32 0.0, %v7285
      %v7908 = vsub.f32 0.0, %v7630
      %v7909 = vsub.f32 0.0, %v6581
      %v7910 = vsub.f32 0.0, %v6583
      %v7911 = vsub.f32 0.0, %v6934
      %v7912 = vsub.f32 0.0, %v6936
      %v7913 = vsub.f32 0.0, %v7287
      %v7914 = vsub.f32 0.0, %v7289
      %v7915 = vsub.f32 0.0, %v7633
      %v7916 = vsub.f32 0.0, %v6587
      %v7917 = vsub.f32 0.0, %v6589
      %v7918 = vsub.f32 0.0, %v6940
      %v7919 = vsub.f32 0.0, %v6942
      %v7920 = vsub.f32 0.0, %v7293
      %v7921 = vsub.f32 0.0, %v7295
      %v7922 = vsub.f32 0.0, %v7638
      %v7923 = vsub.f32 0.0, %v6591
      %v7924 = vsub.f32 0.0, %v6593
      %v7925 = vsub.f32 0.0, %v6944
      %v7926 = vsub.f32 0.0, %v6946
      %v7927 = vsub.f32 0.0, %v7297
      %v7928 = vsub.f32 0.0, %v7299
      %v7929 = vsub.f32 0.0, %v7641
      %v7930 = vsub.f32 0.0, %v6597
      %v7931 = vsub.f32 0.0, %v6599
      %v7932 = vsub.f32 0.0, %v6950
      %v7933 = vsub.f32 0.0, %v6952
      %v7934 = vsub.f32 0.0, %v7303
      %v7935 = vsub.f32 0.0, %v7305
      %v7936 = vsub.f32 0.0, %v7646
      %v7937 = vsub.f32 0.0, %v6601
      %v7938 = vsub.f32 0.0, %v6603
      %v7939 = vsub.f32 0.0, %v6954
      %v7940 = vsub.f32 0.0, %v6956
      %v7941 = vsub.f32 0.0, %v7307
      %v7942 = vsub.f32 0.0, %v7309
      %v7943 = vsub.f32 0.0, %v7649
      %v7944 = vsub.f32 0.0, %v6607
      %v7945 = vsub.f32 0.0, %v6609
      %v7946 = vsub.f32 0.0, %v6960
      %v7947 = vsub.f32 0.0, %v6962
      %v7948 = vsub.f32 0.0, %v7313
      %v7949 = vsub.f32 0.0, %v7315
      %v7950 = vsub.f32 0.0, %v7654
      %v7951 = vsub.f32 0.0, %v6611
      %v7952 = vsub.f32 0.0, %v6613
      %v7953 = vsub.f32 0.0, %v6964
      %v7954 = vsub.f32 0.0, %v6966
      %v7955 = vsub.f32 0.0, %v7317
      %v7956 = vsub.f32 0.0, %v7319
      %v7957 = vsub.f32 0.0, %v7657
      %v7958 = vsub.f32 0.0, %v6617
      %v7959 = vsub.f32 0.0, %v6619
      %v7960 = vsub.f32 0.0, %v6970
      %v7961 = vsub.f32 0.0, %v6972
      %v7962 = vsub.f32 0.0, %v7323
      %v7963 = vsub.f32 0.0, %v7325
      %v7964 = vsub.f32 0.0, %v7662
      %v7965 = vsub.f32 0.0, %v6621
      %v7966 = vsub.f32 0.0, %v6623
      %v7967 = vsub.f32 0.0, %v6974
      %v7968 = vsub.f32 0.0, %v6976
      %v7969 = vsub.f32 0.0, %v7327
      %v7970 = vsub.f32 0.0, %v7329
      %v7971 = vsub.f32 0.0, %v7665
      %v7972 = vsub.f32 0.0, %v6627
      %v7973 = vsub.f32 0.0, %v6629
      %v7974 = vsub.f32 0.0, %v6980
      %v7975 = vsub.f32 0.0, %v6982
      %v7976 = vsub.f32 0.0, %v7333
      %v7977 = vsub.f32 0.0, %v7335
      %v7978 = vsub.f32 0.0, %v7670
      %v7979 = vsub.f32 0.0, %v6631
      %v7980 = vsub.f32 0.0, %v6633
      %v7981 = vsub.f32 0.0, %v6984
      %v7982 = vsub.f32 0.0, %v6986
      %v7983 = vsub.f32 0.0, %v7337
      %v7984 = vsub.f32 0.0, %v7339
      %v7985 = vsub.f32 0.0, %v7673
      %v7986 = vsub.f32 0.0, %v6637
      %v7987 = vsub.f32 0.0, %v6639
      %v7988 = vsub.f32 0.0, %v6990
      %v7989 = vsub.f32 0.0, %v6992
      %v7990 = vsub.f32 0.0, %v7343
      %v7991 = vsub.f32 0.0, %v7345
      %v7992 = vsub.f32 0.0, %v7678
      %v7993 = vsub.f32 0.0, %v6641
      %v7994 = vsub.f32 0.0, %v6643
      %v7995 = vsub.f32 0.0, %v6994
      %v7996 = vsub.f32 0.0, %v6996
      %v7997 = vsub.f32 0.0, %v7347
      %v7998 = vsub.f32 0.0, %v7349
      %v7999 = vsub.f32 0.0, %v7681
      %v8000 = vsub.f32 0.0, %v6647
      %v8001 = vsub.f32 0.0, %v6649
      %v8002 = vsub.f32 0.0, %v7000
      %v8003 = vsub.f32 0.0, %v7002
      %v8004 = vsub.f32 0.0, %v7353
      %v8005 = vsub.f32 0.0, %v7355
      %v8006 = vsub.f32 0.0, %v7686
      %v8007 = vsub.f32 0.0, %v6651
      %v8008 = vsub.f32 0.0, %v6653
      %v8009 = vsub.f32 0.0, %v7004
      %v8010 = vsub.f32 0.0, %v7006
      %v8011 = vsub.f32 0.0, %v7357
      %v8012 = vsub.f32 0.0, %v7359
      %v8013 = vsub.f32 0.0, %v7689
      %v8014 = vsub.f32 0.0, %v6657
      %v8015 = vsub.f32 0.0, %v6659
      %v8016 = vsub.f32 0.0, %v7010
      %v8017 = vsub.f32 0.0, %v7012
      %v8018 = vsub.f32 0.0, %v7363
      %v8019 = vsub.f32 0.0, %v7365
      %v8020 = vsub.f32 0.0, %v7694
      %v8021 = vsub.f32 0.0, %v6661
      %v8022 = vsub.f32 0.0, %v6663
      %v8023 = vsub.f32 0.0, %v7014
      %v8024 = vsub.f32 0.0, %v7016
      %v8025 = vsub.f32 0.0, %v7367
      %v8026 = vsub.f32 0.0, %v7369
      %v8027 = vsub.f32 0.0, %v7697
      %v8028 = vsub.f32 0.0, %v6667
      %v8029 = vsub.f32 0.0, %v6669
      %v8030 = vsub.f32 0.0, %v7020
      %v8031 = vsub.f32 0.0, %v7022
      %v8032 = vsub.f32 0.0, %v7373
      %v8033 = vsub.f32 0.0, %v7375
      %v8034 = vsub.f32 0.0, %v7702
      %v8035 = vsub.f32 0.0, %v6671
      %v8036 = vsub.f32 0.0, %v6673
      %v8037 = vsub.f32 0.0, %v7024
      %v8038 = vsub.f32 0.0, %v7026
      %v8039 = vsub.f32 0.0, %v7377
      %v8040 = vsub.f32 0.0, %v7379
      %v8041 = vsub.f32 0.0, %v7705
      %v8042 = vsub.f32 0.0, %v6677
      %v8043 = vsub.f32 0.0, %v6679
      %v8044 = vsub.f32 0.0, %v7030
      %v8045 = vsub.f32 0.0, %v7032
      %v8046 = vsub.f32 0.0, %v7383
      %v8047 = vsub.f32 0.0, %v7385
      %v8048 = vsub.f32 0.0, %v7710
      %v8049 = vsub.f32 0.0, %v6681
      %v8050 = vsub.f32 0.0, %v6683
      %v8051 = vsub.f32 0.0, %v7034
      %v8052 = vsub.f32 0.0, %v7036
      %v8053 = vsub.f32 0.0, %v7387
      %v8054 = vsub.f32 0.0, %v7389
      %v8055 = vsub.f32 0.0, %v7713
      %v8056 = vsub.f32 0.0, %v6687
      %v8057 = vsub.f32 0.0, %v6689
      %v8058 = vsub.f32 0.0, %v7040
      %v8059 = vsub.f32 0.0, %v7042
      %v8060 = vsub.f32 0.0, %v7393
      %v8061 = vsub.f32 0.0, %v7395
      %v8062 = vsub.f32 0.0, %v7718
      %v8063 = vsub.f32 0.0, %v6691
      %v8064 = vsub.f32 0.0, %v6693
      %v8065 = vsub.f32 0.0, %v7044
      %v8066 = vsub.f32 0.0, %v7046
      %v8067 = vsub.f32 0.0, %v7397
      %v8068 = vsub.f32 0.0, %v7399
      %v8069 = vsub.f32 0.0, %v7721
      %v8070 = vsub.f32 0.0, %v6697
      %v8071 = vsub.f32 0.0, %v6699
      %v8072 = vsub.f32 0.0, %v7050
      %v8073 = vsub.f32 0.0, %v7052
      %v8074 = vsub.f32 0.0, %v7403
      %v8075 = vsub.f32 0.0, %v7405
      %v8076 = vsub.f32 0.0, %v7726
      %v8077 = vsub.f32 0.0, %v6701
      %v8078 = vsub.f32 0.0, %v6703
      %v8079 = vsub.f32 0.0, %v7054
      %v8080 = vsub.f32 0.0, %v7056
      %v8081 = vsub.f32 0.0, %v7407
      %v8082 = vsub.f32 0.0, %v7409
      %v8083 = vsub.f32 0.0, %v7729
      %v8084 = vsub.f32 0.0, %v6707
      %v8085 = vsub.f32 0.0, %v6709
      %v8086 = vsub.f32 0.0, %v7060
      %v8087 = vsub.f32 0.0, %v7062
      %v8088 = vsub.f32 0.0, %v7413
      %v8089 = vsub.f32 0.0, %v7415
      %v8090 = vsub.f32 0.0, %v7734
      %v8091 = vsub.f32 0.0, %v6711
      %v8092 = vsub.f32 0.0, %v6713
      %v8093 = vsub.f32 0.0, %v7064
      %v8094 = vsub.f32 0.0, %v7066
      %v8095 = vsub.f32 0.0, %v7417
      %v8096 = vsub.f32 0.0, %v7419
      %v8097 = vsub.f32 0.0, %v7737
      %v8098 = vsub.f32 0.0, %v6717
      %v8099 = vsub.f32 0.0, %v6719
      %v8100 = vsub.f32 0.0, %v7070
      %v8101 = vsub.f32 0.0, %v7072
      %v8102 = vsub.f32 0.0, %v7423
      %v8103 = vsub.f32 0.0, %v7425
      %v8104 = vsub.f32 0.0, %v7742
      %v8105 = vsub.f32 0.0, %v6721
      %v8106 = vsub.f32 0.0, %v6723
      %v8107 = vsub.f32 0.0, %v7074
      %v8108 = vsub.f32 0.0, %v7076
      %v8109 = vsub.f32 0.0, %v7427
      %v8110 = vsub.f32 0.0, %v7429
      %v8111 = vsub.f32 0.0, %v7745
      %v8112 = vsub.f32 0.0, %v6727
      %v8113 = vsub.f32 0.0, %v6729
      %v8114 = vsub.f32 0.0, %v7080
      %v8115 = vsub.f32 0.0, %v7082
      %v8116 = vsub.f32 0.0, %v7433
      %v8117 = vsub.f32 0.0, %v7435
      %v8118 = vsub.f32 0.0, %v7750
      %v8119 = vsub.f32 0.0, %v6731
      %v8120 = vsub.f32 0.0, %v6733
      %v8121 = vsub.f32 0.0, %v7084
      %v8122 = vsub.f32 0.0, %v7086
      %v8123 = vsub.f32 0.0, %v7437
      %v8124 = vsub.f32 0.0, %v7439
      %v8125 = vsub.f32 0.0, %v7753
      %v8126 = vsub.f32 0.0, %v6737
      %v8127 = vsub.f32 0.0, %v6739
      %v8128 = vsub.f32 0.0, %v7090
      %v8129 = vsub.f32 0.0, %v7092
      %v8130 = vsub.f32 0.0, %v7443
      %v8131 = vsub.f32 0.0, %v7445
      %v8132 = vsub.f32 0.0, %v7758
      %v8133 = vsub.f32 0.0, %v6741
      %v8134 = vsub.f32 0.0, %v6743
      %v8135 = vsub.f32 0.0, %v7094
      %v8136 = vsub.f32 0.0, %v7096
      %v8137 = vsub.f32 0.0, %v7447
      %v8138 = vsub.f32 0.0, %v7449
      %v8139 = vsub.f32 0.0, %v7761
      %v8140 = vsub.f32 0.0, %v6747
      %v8141 = vsub.f32 0.0, %v6749
      %v8142 = vsub.f32 0.0, %v7100
      %v8143 = vsub.f32 0.0, %v7102
      %v8144 = vsub.f32 0.0, %v7453
      %v8145 = vsub.f32 0.0, %v7455
      %v8146 = vsub.f32 0.0, %v7766
      %v8147 = vsub.f32 0.0, %v6751
      %v8148 = vsub.f32 0.0, %v6753
      %v8149 = vsub.f32 0.0, %v7104
      %v8150 = vsub.f32 0.0, %v7106
      %v8151 = vsub.f32 0.0, %v7457
      %v8152 = vsub.f32 0.0, %v7459
      %v8153 = vsub.f32 0.0, %v7769
      %v8154 = vsub.f32 0.0, %v6757
      %v8155 = vsub.f32 0.0, %v6759
      %v8156 = vsub.f32 0.0, %v7110
      %v8157 = vsub.f32 0.0, %v7112
      %v8158 = vsub.f32 0.0, %v7463
      %v8159 = vsub.f32 0.0, %v7465
      %v8160 = vsub.f32 0.0, %v7774
      %v8161 = vsub.f32 0.0, %v6761
      %v8162 = vsub.f32 0.0, %v6763
      %v8163 = vsub.f32 0.0, %v7114
      %v8164 = vsub.f32 0.0, %v7116
      %v8165 = vsub.f32 0.0, %v7467
      %v8166 = vsub.f32 0.0, %v7469
      %v8167 = vsub.f32 0.0, %v7777
      %v8168 = vsub.f32 0.0, %v6767
      %v8169 = vsub.f32 0.0, %v6769
      %v8170 = vsub.f32 0.0, %v7120
      %v8171 = vsub.f32 0.0, %v7122
      %v8172 = vsub.f32 0.0, %v7473
      %v8173 = vsub.f32 0.0, %v7475
      %v8174 = vsub.f32 0.0, %v7782
      %v8175 = vsub.f32 0.0, %v6771
      %v8176 = vsub.f32 0.0, %v6773
      %v8177 = vsub.f32 0.0, %v7124
      %v8178 = vsub.f32 0.0, %v7126
      %v8179 = vsub.f32 0.0, %v7477
      %v8180 = vsub.f32 0.0, %v7479
      %v8181 = vsub.f32 0.0, %v7785
      %v8182 = vsub.f32 0.0, %v6777
      %v8183 = vsub.f32 0.0, %v6779
      %v8184 = vsub.f32 0.0, %v7130
      %v8185 = vsub.f32 0.0, %v7132
      %v8186 = vsub.f32 0.0, %v7483
      %v8187 = vsub.f32 0.0, %v7485
      %v8188 = vsub.f32 0.0, %v7790
      %v8189 = vsub.f32 0.0, %v6781
      %v8190 = vsub.f32 0.0, %v6783
      %v8191 = vsub.f32 0.0, %v7134
      %v8192 = vsub.f32 0.0, %v7136
      %v8193 = vsub.f32 0.0, %v7487
      %v8194 = vsub.f32 0.0, %v7489
      %v8195 = vsub.f32 0.0, %v7793
      %v8196 = vsub.f32 0.0, %v6787
      %v8197 = vsub.f32 0.0, %v6789
      %v8198 = vsub.f32 0.0, %v7140
      %v8199 = vsub.f32 0.0, %v7142
      %v8200 = vsub.f32 0.0, %v7493
      %v8201 = vsub.f32 0.0, %v7495
      %v8202 = vsub.f32 0.0, %v7798
      %v8203 = vsub.f32 0.0, %v6791
      %v8204 = vsub.f32 0.0, %v6793
      %v8205 = vsub.f32 0.0, %v7144
      %v8206 = vsub.f32 0.0, %v7146
      %v8207 = vsub.f32 0.0, %v7497
      %v8208 = vsub.f32 0.0, %v7499
      %v8209 = vsub.f32 0.0, %v7801
      %v8210 = vsub.f32 0.0, %v6797
      %v8211 = vsub.f32 0.0, %v6799
      %v8212 = vsub.f32 0.0, %v7150
      %v8213 = vsub.f32 0.0, %v7152
      %v8214 = vsub.f32 0.0, %v7503
      %v8215 = vsub.f32 0.0, %v7505
      %v8216 = vsub.f32 0.0, %v7806
      %v8217 = vsub.f32 0.0, %v6801
      %v8218 = vsub.f32 0.0, %v6803
      %v8219 = vsub.f32 0.0, %v7154
      %v8220 = vsub.f32 0.0, %v7156
      %v8221 = vsub.f32 0.0, %v7507
      %v8222 = vsub.f32 0.0, %v7509
      %v8223 = vsub.f32 0.0, %v7809
      %v8224 = vsub.f32 0.0, %v6807
      %v8225 = vsub.f32 0.0, %v6809
      %v8226 = vsub.f32 0.0, %v7160
      %v8227 = vsub.f32 0.0, %v7162
      %v8228 = vsub.f32 0.0, %v7513
      %v8229 = vsub.f32 0.0, %v7515
      %v8230 = vsub.f32 0.0, %v7814
      %v8231 = vsub.f32 0.0, %v6811
      %v8232 = vsub.f32 0.0, %v6813
      %v8233 = vsub.f32 0.0, %v7164
      %v8234 = vsub.f32 0.0, %v7166
      %v8235 = vsub.f32 0.0, %v7517
      %v8236 = vsub.f32 0.0, %v7519
      %v8237 = vsub.f32 0.0, %v7817
      %v8238 = vsub.f32 0.0, %v6817
      %v8239 = vsub.f32 0.0, %v6819
      %v8240 = vsub.f32 0.0, %v7170
      %v8241 = vsub.f32 0.0, %v7172
      %v8242 = vsub.f32 0.0, %v7523
      %v8243 = vsub.f32 0.0, %v7525
      %v8244 = vsub.f32 0.0, %v7822
      %v8245 = vsub.f32 0.0, %v6821
      %v8246 = vsub.f32 0.0, %v6823
      %v8247 = vsub.f32 0.0, %v7174
      %v8248 = vsub.f32 0.0, %v7176
      %v8249 = vsub.f32 0.0, %v7527
      %v8250 = vsub.f32 0.0, %v7529
      %v8251 = vsub.f32 0.0, %v7825
      %v8252 = vsub.f32 0.0, %v6827
      %v8253 = vsub.f32 0.0, %v6829
      %v8254 = vsub.f32 0.0, %v7180
      %v8255 = vsub.f32 0.0, %v7182
      %v8256 = vsub.f32 0.0, %v7533
      %v8257 = vsub.f32 0.0, %v7535
      %v8258 = vsub.f32 0.0, %v7830
      %v8259 = vsub.f32 0.0, %v6831
      %v8260 = vsub.f32 0.0, %v6833
      %v8261 = vsub.f32 0.0, %v7184
      %v8262 = vsub.f32 0.0, %v7186
      %v8263 = vsub.f32 0.0, %v7537
      %v8264 = vsub.f32 0.0, %v7539
      %v8265 = vsub.f32 0.0, %v7833
      %v8266 = vsub.f32 0.0, %v6837
      %v8267 = vsub.f32 0.0, %v6839
      %v8268 = vsub.f32 0.0, %v7190
      %v8269 = vsub.f32 0.0, %v7192
      %v8270 = vsub.f32 0.0, %v7543
      %v8271 = vsub.f32 0.0, %v7545
      %v8272 = vsub.f32 0.0, %v7838
      %v8273 = vsub.f32 0.0, %v6841
      %v8274 = vsub.f32 0.0, %v6843
      %v8275 = vsub.f32 0.0, %v7194
      %v8276 = vsub.f32 0.0, %v7196
      %v8277 = vsub.f32 0.0, %v7547
      %v8278 = vsub.f32 0.0, %v7549
      %v8279 = vsub.f32 0.0, %v7841
      %v8280 = vsub.f32 0.0, %v6847
      %v8281 = vsub.f32 0.0, %v6849
      %v8282 = vsub.f32 0.0, %v7200
      %v8283 = vsub.f32 0.0, %v7202
      %v8284 = vsub.f32 0.0, %v7553
      %v8285 = vsub.f32 0.0, %v7555
      %v8286 = vsub.f32 0.0, %v7846
      %v8287 = vsub.f32 0.0, %v6851
      %v8288 = vsub.f32 0.0, %v6853
      %v8289 = vsub.f32 0.0, %v7204
      %v8290 = vsub.f32 0.0, %v7206
      %v8291 = vsub.f32 0.0, %v7557
      %v8292 = vsub.f32 0.0, %v7559
      %v8293 = vsub.f32 0.0, %v7849
      %v8294 = vsub.f32 0.0, %v6857
      %v8295 = vsub.f32 0.0, %v6859
      %v8296 = vsub.f32 0.0, %v7210
      %v8297 = vsub.f32 0.0, %v7212
      %v8298 = vsub.f32 0.0, %v7563
      %v8299 = vsub.f32 0.0, %v7565
      %v8300 = vsub.f32 0.0, %v7854
      %v8301 = vsub.f32 0.0, %v6861
      %v8302 = vsub.f32 0.0, %v6863
      %v8303 = vsub.f32 0.0, %v7214
      %v8304 = vsub.f32 0.0, %v7216
      %v8305 = vsub.f32 0.0, %v7567
      %v8306 = vsub.f32 0.0, %v7569
      %v8307 = vsub.f32 0.0, %v7857
      %v8308 = vmul.f32 %v7860, 1.442695
      %v8309 = vpow.pop %v8308
      %v8310 = vmul.f32 %v7861, 1.442695
      %v8311 = vpow.pop %v8310
      %v8312 = vmul.f32 %v7862, 1.442695
      %v8313 = vpow.pop %v8312
      %v8314 = vmul.f32 %v7863, 1.442695
      %v8315 = vpow.pop %v8314
      %v8316 = vmul.f32 %v7864, 1.442695
      %v8317 = vpow.pop %v8316
      %v8318 = vmul.f32 %v7865, 1.442695
      %v8319 = vpow.pop %v8318
      %v8320 = vmul.f32 %v7866, 1.442695
      %v8321 = vpow.pop %v8320
      %v8322 = vmul.f32 %v7867, 1.442695
      %v8323 = vpow.pop %v8322
      %v8324 = vmul.f32 %v7868, 1.442695
      %v8325 = vpow.pop %v8324
      %v8326 = vmul.f32 %v7869, 1.442695
      %v8327 = vpow.pop %v8326
      %v8328 = vmul.f32 %v7870, 1.442695
      %v8329 = vpow.pop %v8328
      %v8330 = vmul.f32 %v7871, 1.442695
      %v8331 = vpow.pop %v8330
      %v8332 = vmul.f32 %v7872, 1.442695
      %v8333 = vpow.pop %v8332
      %v8334 = vmul.f32 %v7873, 1.442695
      %v8335 = vpow.pop %v8334
      %v8336 = vmul.f32 %v7874, 1.442695
      %v8337 = vpow.pop %v8336
      %v8338 = vmul.f32 %v7875, 1.442695
      %v8339 = vpow.pop %v8338
      %v8340 = vmul.f32 %v7876, 1.442695
      %v8341 = vpow.pop %v8340
      %v8342 = vmul.f32 %v7877, 1.442695
      %v8343 = vpow.pop %v8342
      %v8344 = vmul.f32 %v7878, 1.442695
      %v8345 = vpow.pop %v8344
      %v8346 = vmul.f32 %v7879, 1.442695
      %v8347 = vpow.pop %v8346
      %v8348 = vmul.f32 %v7880, 1.442695
      %v8349 = vpow.pop %v8348
      %v8350 = vmul.f32 %v7881, 1.442695
      %v8351 = vpow.pop %v8350
      %v8352 = vmul.f32 %v7882, 1.442695
      %v8353 = vpow.pop %v8352
      %v8354 = vmul.f32 %v7883, 1.442695
      %v8355 = vpow.pop %v8354
      %v8356 = vmul.f32 %v7884, 1.442695
      %v8357 = vpow.pop %v8356
      %v8358 = vmul.f32 %v7885, 1.442695
      %v8359 = vpow.pop %v8358
      %v8360 = vmul.f32 %v7886, 1.442695
      %v8361 = vpow.pop %v8360
      %v8362 = vmul.f32 %v7887, 1.442695
      %v8363 = vpow.pop %v8362
      %v8364 = vmul.f32 %v7888, 1.442695
      %v8365 = vpow.pop %v8364
      %v8366 = vmul.f32 %v7889, 1.442695
      %v8367 = vpow.pop %v8366
      %v8368 = vmul.f32 %v7890, 1.442695
      %v8369 = vpow.pop %v8368
      %v8370 = vmul.f32 %v7891, 1.442695
      %v8371 = vpow.pop %v8370
      %v8372 = vmul.f32 %v7892, 1.442695
      %v8373 = vpow.pop %v8372
      %v8374 = vmul.f32 %v7893, 1.442695
      %v8375 = vpow.pop %v8374
      %v8376 = vmul.f32 %v7894, 1.442695
      %v8377 = vpow.pop %v8376
      %v8378 = vmul.f32 %v7895, 1.442695
      %v8379 = vpow.pop %v8378
      %v8380 = vmul.f32 %v7896, 1.442695
      %v8381 = vpow.pop %v8380
      %v8382 = vmul.f32 %v7897, 1.442695
      %v8383 = vpow.pop %v8382
      %v8384 = vmul.f32 %v7898, 1.442695
      %v8385 = vpow.pop %v8384
      %v8386 = vmul.f32 %v7899, 1.442695
      %v8387 = vpow.pop %v8386
      %v8388 = vmul.f32 %v7900, 1.442695
      %v8389 = vpow.pop %v8388
      %v8390 = vmul.f32 %v7901, 1.442695
      %v8391 = vpow.pop %v8390
      %v8392 = vmul.f32 %v7902, 1.442695
      %v8393 = vpow.pop %v8392
      %v8394 = vmul.f32 %v7903, 1.442695
      %v8395 = vpow.pop %v8394
      %v8396 = vmul.f32 %v7904, 1.442695
      %v8397 = vpow.pop %v8396
      %v8398 = vmul.f32 %v7905, 1.442695
      %v8399 = vpow.pop %v8398
      %v8400 = vmul.f32 %v7906, 1.442695
      %v8401 = vpow.pop %v8400
      %v8402 = vmul.f32 %v7907, 1.442695
      %v8403 = vpow.pop %v8402
      %v8404 = vmul.f32 %v7908, 1.442695
      %v8405 = vpow.pop %v8404
      %v8406 = vmul.f32 %v7909, 1.442695
      %v8407 = vpow.pop %v8406
      %v8408 = vmul.f32 %v7910, 1.442695
      %v8409 = vpow.pop %v8408
      %v8410 = vmul.f32 %v7911, 1.442695
      %v8411 = vpow.pop %v8410
      %v8412 = vmul.f32 %v7912, 1.442695
      %v8413 = vpow.pop %v8412
      %v8414 = vmul.f32 %v7913, 1.442695
      %v8415 = vpow.pop %v8414
      %v8416 = vmul.f32 %v7914, 1.442695
      %v8417 = vpow.pop %v8416
      %v8418 = vmul.f32 %v7915, 1.442695
      %v8419 = vpow.pop %v8418
      %v8420 = vmul.f32 %v7916, 1.442695
      %v8421 = vpow.pop %v8420
      %v8422 = vmul.f32 %v7917, 1.442695
      %v8423 = vpow.pop %v8422
      %v8424 = vmul.f32 %v7918, 1.442695
      %v8425 = vpow.pop %v8424
      %v8426 = vmul.f32 %v7919, 1.442695
      %v8427 = vpow.pop %v8426
      %v8428 = vmul.f32 %v7920, 1.442695
      %v8429 = vpow.pop %v8428
      %v8430 = vmul.f32 %v7921, 1.442695
      %v8431 = vpow.pop %v8430
      %v8432 = vmul.f32 %v7922, 1.442695
      %v8433 = vpow.pop %v8432
      %v8434 = vmul.f32 %v7923, 1.442695
      %v8435 = vpow.pop %v8434
      %v8436 = vmul.f32 %v7924, 1.442695
      %v8437 = vpow.pop %v8436
      %v8438 = vmul.f32 %v7925, 1.442695
      %v8439 = vpow.pop %v8438
      %v8440 = vmul.f32 %v7926, 1.442695
      %v8441 = vpow.pop %v8440
      %v8442 = vmul.f32 %v7927, 1.442695
      %v8443 = vpow.pop %v8442
      %v8444 = vmul.f32 %v7928, 1.442695
      %v8445 = vpow.pop %v8444
      %v8446 = vmul.f32 %v7929, 1.442695
      %v8447 = vpow.pop %v8446
      %v8448 = vmul.f32 %v7930, 1.442695
      %v8449 = vpow.pop %v8448
      %v8450 = vmul.f32 %v7931, 1.442695
      %v8451 = vpow.pop %v8450
      %v8452 = vmul.f32 %v7932, 1.442695
      %v8453 = vpow.pop %v8452
      %v8454 = vmul.f32 %v7933, 1.442695
      %v8455 = vpow.pop %v8454
      %v8456 = vmul.f32 %v7934, 1.442695
      %v8457 = vpow.pop %v8456
      %v8458 = vmul.f32 %v7935, 1.442695
      %v8459 = vpow.pop %v8458
      %v8460 = vmul.f32 %v7936, 1.442695
      %v8461 = vpow.pop %v8460
      %v8462 = vmul.f32 %v7937, 1.442695
      %v8463 = vpow.pop %v8462
      %v8464 = vmul.f32 %v7938, 1.442695
      %v8465 = vpow.pop %v8464
      %v8466 = vmul.f32 %v7939, 1.442695
      %v8467 = vpow.pop %v8466
      %v8468 = vmul.f32 %v7940, 1.442695
      %v8469 = vpow.pop %v8468
      %v8470 = vmul.f32 %v7941, 1.442695
      %v8471 = vpow.pop %v8470
      %v8472 = vmul.f32 %v7942, 1.442695
      %v8473 = vpow.pop %v8472
      %v8474 = vmul.f32 %v7943, 1.442695
      %v8475 = vpow.pop %v8474
      %v8476 = vmul.f32 %v7944, 1.442695
      %v8477 = vpow.pop %v8476
      %v8478 = vmul.f32 %v7945, 1.442695
      %v8479 = vpow.pop %v8478
      %v8480 = vmul.f32 %v7946, 1.442695
      %v8481 = vpow.pop %v8480
      %v8482 = vmul.f32 %v7947, 1.442695
      %v8483 = vpow.pop %v8482
      %v8484 = vmul.f32 %v7948, 1.442695
      %v8485 = vpow.pop %v8484
      %v8486 = vmul.f32 %v7949, 1.442695
      %v8487 = vpow.pop %v8486
      %v8488 = vmul.f32 %v7950, 1.442695
      %v8489 = vpow.pop %v8488
      %v8490 = vmul.f32 %v7951, 1.442695
      %v8491 = vpow.pop %v8490
      %v8492 = vmul.f32 %v7952, 1.442695
      %v8493 = vpow.pop %v8492
      %v8494 = vmul.f32 %v7953, 1.442695
      %v8495 = vpow.pop %v8494
      %v8496 = vmul.f32 %v7954, 1.442695
      %v8497 = vpow.pop %v8496
      %v8498 = vmul.f32 %v7955, 1.442695
      %v8499 = vpow.pop %v8498
      %v8500 = vmul.f32 %v7956, 1.442695
      %v8501 = vpow.pop %v8500
      %v8502 = vmul.f32 %v7957, 1.442695
      %v8503 = vpow.pop %v8502
      %v8504 = vmul.f32 %v7958, 1.442695
      %v8505 = vpow.pop %v8504
      %v8506 = vmul.f32 %v7959, 1.442695
      %v8507 = vpow.pop %v8506
      %v8508 = vmul.f32 %v7960, 1.442695
      %v8509 = vpow.pop %v8508
      %v8510 = vmul.f32 %v7961, 1.442695
      %v8511 = vpow.pop %v8510
      %v8512 = vmul.f32 %v7962, 1.442695
      %v8513 = vpow.pop %v8512
      %v8514 = vmul.f32 %v7963, 1.442695
      %v8515 = vpow.pop %v8514
      %v8516 = vmul.f32 %v7964, 1.442695
      %v8517 = vpow.pop %v8516
      %v8518 = vmul.f32 %v7965, 1.442695
      %v8519 = vpow.pop %v8518
      %v8520 = vmul.f32 %v7966, 1.442695
      %v8521 = vpow.pop %v8520
      %v8522 = vmul.f32 %v7967, 1.442695
      %v8523 = vpow.pop %v8522
      %v8524 = vmul.f32 %v7968, 1.442695
      %v8525 = vpow.pop %v8524
      %v8526 = vmul.f32 %v7969, 1.442695
      %v8527 = vpow.pop %v8526
      %v8528 = vmul.f32 %v7970, 1.442695
      %v8529 = vpow.pop %v8528
      %v8530 = vmul.f32 %v7971, 1.442695
      %v8531 = vpow.pop %v8530
      %v8532 = vmul.f32 %v7972, 1.442695
      %v8533 = vpow.pop %v8532
      %v8534 = vmul.f32 %v7973, 1.442695
      %v8535 = vpow.pop %v8534
      %v8536 = vmul.f32 %v7974, 1.442695
      %v8537 = vpow.pop %v8536
      %v8538 = vmul.f32 %v7975, 1.442695
      %v8539 = vpow.pop %v8538
      %v8540 = vmul.f32 %v7976, 1.442695
      %v8541 = vpow.pop %v8540
      %v8542 = vmul.f32 %v7977, 1.442695
      %v8543 = vpow.pop %v8542
      %v8544 = vmul.f32 %v7978, 1.442695
      %v8545 = vpow.pop %v8544
      %v8546 = vmul.f32 %v7979, 1.442695
      %v8547 = vpow.pop %v8546
      %v8548 = vmul.f32 %v7980, 1.442695
      %v8549 = vpow.pop %v8548
      %v8550 = vmul.f32 %v7981, 1.442695
      %v8551 = vpow.pop %v8550
      %v8552 = vmul.f32 %v7982, 1.442695
      %v8553 = vpow.pop %v8552
      %v8554 = vmul.f32 %v7983, 1.442695
      %v8555 = vpow.pop %v8554
      %v8556 = vmul.f32 %v7984, 1.442695
      %v8557 = vpow.pop %v8556
      %v8558 = vmul.f32 %v7985, 1.442695
      %v8559 = vpow.pop %v8558
      %v8560 = vmul.f32 %v7986, 1.442695
      %v8561 = vpow.pop %v8560
      %v8562 = vmul.f32 %v7987, 1.442695
      %v8563 = vpow.pop %v8562
      %v8564 = vmul.f32 %v7988, 1.442695
      %v8565 = vpow.pop %v8564
      %v8566 = vmul.f32 %v7989, 1.442695
      %v8567 = vpow.pop %v8566
      %v8568 = vmul.f32 %v7990, 1.442695
      %v8569 = vpow.pop %v8568
      %v8570 = vmul.f32 %v7991, 1.442695
      %v8571 = vpow.pop %v8570
      %v8572 = vmul.f32 %v7992, 1.442695
      %v8573 = vpow.pop %v8572
      %v8574 = vmul.f32 %v7993, 1.442695
      %v8575 = vpow.pop %v8574
      %v8576 = vmul.f32 %v7994, 1.442695
      %v8577 = vpow.pop %v8576
      %v8578 = vmul.f32 %v7995, 1.442695
      %v8579 = vpow.pop %v8578
      %v8580 = vmul.f32 %v7996, 1.442695
      %v8581 = vpow.pop %v8580
      %v8582 = vmul.f32 %v7997, 1.442695
      %v8583 = vpow.pop %v8582
      %v8584 = vmul.f32 %v7998, 1.442695
      %v8585 = vpow.pop %v8584
      %v8586 = vmul.f32 %v7999, 1.442695
      %v8587 = vpow.pop %v8586
      %v8588 = vmul.f32 %v8000, 1.442695
      %v8589 = vpow.pop %v8588
      %v8590 = vmul.f32 %v8001, 1.442695
      %v8591 = vpow.pop %v8590
      %v8592 = vmul.f32 %v8002, 1.442695
      %v8593 = vpow.pop %v8592
      %v8594 = vmul.f32 %v8003, 1.442695
      %v8595 = vpow.pop %v8594
      %v8596 = vmul.f32 %v8004, 1.442695
      %v8597 = vpow.pop %v8596
      %v8598 = vmul.f32 %v8005, 1.442695
      %v8599 = vpow.pop %v8598
      %v8600 = vmul.f32 %v8006, 1.442695
      %v8601 = vpow.pop %v8600
      %v8602 = vmul.f32 %v8007, 1.442695
      %v8603 = vpow.pop %v8602
      %v8604 = vmul.f32 %v8008, 1.442695
      %v8605 = vpow.pop %v8604
      %v8606 = vmul.f32 %v8009, 1.442695
      %v8607 = vpow.pop %v8606
      %v8608 = vmul.f32 %v8010, 1.442695
      %v8609 = vpow.pop %v8608
      %v8610 = vmul.f32 %v8011, 1.442695
      %v8611 = vpow.pop %v8610
      %v8612 = vmul.f32 %v8012, 1.442695
      %v8613 = vpow.pop %v8612
      %v8614 = vmul.f32 %v8013, 1.442695
      %v8615 = vpow.pop %v8614
      %v8616 = vmul.f32 %v8014, 1.442695
      %v8617 = vpow.pop %v8616
      %v8618 = vmul.f32 %v8015, 1.442695
      %v8619 = vpow.pop %v8618
      %v8620 = vmul.f32 %v8016, 1.442695
      %v8621 = vpow.pop %v8620
      %v8622 = vmul.f32 %v8017, 1.442695
      %v8623 = vpow.pop %v8622
      %v8624 = vmul.f32 %v8018, 1.442695
      %v8625 = vpow.pop %v8624
      %v8626 = vmul.f32 %v8019, 1.442695
      %v8627 = vpow.pop %v8626
      %v8628 = vmul.f32 %v8020, 1.442695
      %v8629 = vpow.pop %v8628
      %v8630 = vmul.f32 %v8021, 1.442695
      %v8631 = vpow.pop %v8630
      %v8632 = vmul.f32 %v8022, 1.442695
      %v8633 = vpow.pop %v8632
      %v8634 = vmul.f32 %v8023, 1.442695
      %v8635 = vpow.pop %v8634
      %v8636 = vmul.f32 %v8024, 1.442695
      %v8637 = vpow.pop %v8636
      %v8638 = vmul.f32 %v8025, 1.442695
      %v8639 = vpow.pop %v8638
      %v8640 = vmul.f32 %v8026, 1.442695
      %v8641 = vpow.pop %v8640
      %v8642 = vmul.f32 %v8027, 1.442695
      %v8643 = vpow.pop %v8642
      %v8644 = vmul.f32 %v8028, 1.442695
      %v8645 = vpow.pop %v8644
      %v8646 = vmul.f32 %v8029, 1.442695
      %v8647 = vpow.pop %v8646
      %v8648 = vmul.f32 %v8030, 1.442695
      %v8649 = vpow.pop %v8648
      %v8650 = vmul.f32 %v8031, 1.442695
      %v8651 = vpow.pop %v8650
      %v8652 = vmul.f32 %v8032, 1.442695
      %v8653 = vpow.pop %v8652
      %v8654 = vmul.f32 %v8033, 1.442695
      %v8655 = vpow.pop %v8654
      %v8656 = vmul.f32 %v8034, 1.442695
      %v8657 = vpow.pop %v8656
      %v8658 = vmul.f32 %v8035, 1.442695
      %v8659 = vpow.pop %v8658
      %v8660 = vmul.f32 %v8036, 1.442695
      %v8661 = vpow.pop %v8660
      %v8662 = vmul.f32 %v8037, 1.442695
      %v8663 = vpow.pop %v8662
      %v8664 = vmul.f32 %v8038, 1.442695
      %v8665 = vpow.pop %v8664
      %v8666 = vmul.f32 %v8039, 1.442695
      %v8667 = vpow.pop %v8666
      %v8668 = vmul.f32 %v8040, 1.442695
      %v8669 = vpow.pop %v8668
      %v8670 = vmul.f32 %v8041, 1.442695
      %v8671 = vpow.pop %v8670
      %v8672 = vmul.f32 %v8042, 1.442695
      %v8673 = vpow.pop %v8672
      %v8674 = vmul.f32 %v8043, 1.442695
      %v8675 = vpow.pop %v8674
      %v8676 = vmul.f32 %v8044, 1.442695
      %v8677 = vpow.pop %v8676
      %v8678 = vmul.f32 %v8045, 1.442695
      %v8679 = vpow.pop %v8678
      %v8680 = vmul.f32 %v8046, 1.442695
      %v8681 = vpow.pop %v8680
      %v8682 = vmul.f32 %v8047, 1.442695
      %v8683 = vpow.pop %v8682
      %v8684 = vmul.f32 %v8048, 1.442695
      %v8685 = vpow.pop %v8684
      %v8686 = vmul.f32 %v8049, 1.442695
      %v8687 = vpow.pop %v8686
      %v8688 = vmul.f32 %v8050, 1.442695
      %v8689 = vpow.pop %v8688
      %v8690 = vmul.f32 %v8051, 1.442695
      %v8691 = vpow.pop %v8690
      %v8692 = vmul.f32 %v8052, 1.442695
      %v8693 = vpow.pop %v8692
      %v8694 = vmul.f32 %v8053, 1.442695
      %v8695 = vpow.pop %v8694
      %v8696 = vmul.f32 %v8054, 1.442695
      %v8697 = vpow.pop %v8696
      %v8698 = vmul.f32 %v8055, 1.442695
      %v8699 = vpow.pop %v8698
      %v8700 = vmul.f32 %v8056, 1.442695
      %v8701 = vpow.pop %v8700
      %v8702 = vmul.f32 %v8057, 1.442695
      %v8703 = vpow.pop %v8702
      %v8704 = vmul.f32 %v8058, 1.442695
      %v8705 = vpow.pop %v8704
      %v8706 = vmul.f32 %v8059, 1.442695
      %v8707 = vpow.pop %v8706
      %v8708 = vmul.f32 %v8060, 1.442695
      %v8709 = vpow.pop %v8708
      %v8710 = vmul.f32 %v8061, 1.442695
      %v8711 = vpow.pop %v8710
      %v8712 = vmul.f32 %v8062, 1.442695
      %v8713 = vpow.pop %v8712
      %v8714 = vmul.f32 %v8063, 1.442695
      %v8715 = vpow.pop %v8714
      %v8716 = vmul.f32 %v8064, 1.442695
      %v8717 = vpow.pop %v8716
      %v8718 = vmul.f32 %v8065, 1.442695
      %v8719 = vpow.pop %v8718
      %v8720 = vmul.f32 %v8066, 1.442695
      %v8721 = vpow.pop %v8720
      %v8722 = vmul.f32 %v8067, 1.442695
      %v8723 = vpow.pop %v8722
      %v8724 = vmul.f32 %v8068, 1.442695
      %v8725 = vpow.pop %v8724
      %v8726 = vmul.f32 %v8069, 1.442695
      %v8727 = vpow.pop %v8726
      %v8728 = vmul.f32 %v8070, 1.442695
      %v8729 = vpow.pop %v8728
      %v8730 = vmul.f32 %v8071, 1.442695
      %v8731 = vpow.pop %v8730
      %v8732 = vmul.f32 %v8072, 1.442695
      %v8733 = vpow.pop %v8732
      %v8734 = vmul.f32 %v8073, 1.442695
      %v8735 = vpow.pop %v8734
      %v8736 = vmul.f32 %v8074, 1.442695
      %v8737 = vpow.pop %v8736
      %v8738 = vmul.f32 %v8075, 1.442695
      %v8739 = vpow.pop %v8738
      %v8740 = vmul.f32 %v8076, 1.442695
      %v8741 = vpow.pop %v8740
      %v8742 = vmul.f32 %v8077, 1.442695
      %v8743 = vpow.pop %v8742
      %v8744 = vmul.f32 %v8078, 1.442695
      %v8745 = vpow.pop %v8744
      %v8746 = vmul.f32 %v8079, 1.442695
      %v8747 = vpow.pop %v8746
      %v8748 = vmul.f32 %v8080, 1.442695
      %v8749 = vpow.pop %v8748
      %v8750 = vmul.f32 %v8081, 1.442695
      %v8751 = vpow.pop %v8750
      %v8752 = vmul.f32 %v8082, 1.442695
      %v8753 = vpow.pop %v8752
      %v8754 = vmul.f32 %v8083, 1.442695
      %v8755 = vpow.pop %v8754
      %v8756 = vmul.f32 %v8084, 1.442695
      %v8757 = vpow.pop %v8756
      %v8758 = vmul.f32 %v8085, 1.442695
      %v8759 = vpow.pop %v8758
      %v8760 = vmul.f32 %v8086, 1.442695
      %v8761 = vpow.pop %v8760
      %v8762 = vmul.f32 %v8087, 1.442695
      %v8763 = vpow.pop %v8762
      %v8764 = vmul.f32 %v8088, 1.442695
      %v8765 = vpow.pop %v8764
      %v8766 = vmul.f32 %v8089, 1.442695
      %v8767 = vpow.pop %v8766
      %v8768 = vmul.f32 %v8090, 1.442695
      %v8769 = vpow.pop %v8768
      %v8770 = vmul.f32 %v8091, 1.442695
      %v8771 = vpow.pop %v8770
      %v8772 = vmul.f32 %v8092, 1.442695
      %v8773 = vpow.pop %v8772
      %v8774 = vmul.f32 %v8093, 1.442695
      %v8775 = vpow.pop %v8774
      %v8776 = vmul.f32 %v8094, 1.442695
      %v8777 = vpow.pop %v8776
      %v8778 = vmul.f32 %v8095, 1.442695
      %v8779 = vpow.pop %v8778
      %v8780 = vmul.f32 %v8096, 1.442695
      %v8781 = vpow.pop %v8780
      %v8782 = vmul.f32 %v8097, 1.442695
      %v8783 = vpow.pop %v8782
      %v8784 = vmul.f32 %v8098, 1.442695
      %v8785 = vpow.pop %v8784
      %v8786 = vmul.f32 %v8099, 1.442695
      %v8787 = vpow.pop %v8786
      %v8788 = vmul.f32 %v8100, 1.442695
      %v8789 = vpow.pop %v8788
      %v8790 = vmul.f32 %v8101, 1.442695
      %v8791 = vpow.pop %v8790
      %v8792 = vmul.f32 %v8102, 1.442695
      %v8793 = vpow.pop %v8792
      %v8794 = vmul.f32 %v8103, 1.442695
      %v8795 = vpow.pop %v8794
      %v8796 = vmul.f32 %v8104, 1.442695
      %v8797 = vpow.pop %v8796
      %v8798 = vmul.f32 %v8105, 1.442695
      %v8799 = vpow.pop %v8798
      %v8800 = vmul.f32 %v8106, 1.442695
      %v8801 = vpow.pop %v8800
      %v8802 = vmul.f32 %v8107, 1.442695
      %v8803 = vpow.pop %v8802
      %v8804 = vmul.f32 %v8108, 1.442695
      %v8805 = vpow.pop %v8804
      %v8806 = vmul.f32 %v8109, 1.442695
      %v8807 = vpow.pop %v8806
      %v8808 = vmul.f32 %v8110, 1.442695
      %v8809 = vpow.pop %v8808
      %v8810 = vmul.f32 %v8111, 1.442695
      %v8811 = vpow.pop %v8810
      %v8812 = vmul.f32 %v8112, 1.442695
      %v8813 = vpow.pop %v8812
      %v8814 = vmul.f32 %v8113, 1.442695
      %v8815 = vpow.pop %v8814
      %v8816 = vmul.f32 %v8114, 1.442695
      %v8817 = vpow.pop %v8816
      %v8818 = vmul.f32 %v8115, 1.442695
      %v8819 = vpow.pop %v8818
      %v8820 = vmul.f32 %v8116, 1.442695
      %v8821 = vpow.pop %v8820
      %v8822 = vmul.f32 %v8117, 1.442695
      %v8823 = vpow.pop %v8822
      %v8824 = vmul.f32 %v8118, 1.442695
      %v8825 = vpow.pop %v8824
      %v8826 = vmul.f32 %v8119, 1.442695
      %v8827 = vpow.pop %v8826
      %v8828 = vmul.f32 %v8120, 1.442695
      %v8829 = vpow.pop %v8828
      %v8830 = vmul.f32 %v8121, 1.442695
      %v8831 = vpow.pop %v8830
      %v8832 = vmul.f32 %v8122, 1.442695
      %v8833 = vpow.pop %v8832
      %v8834 = vmul.f32 %v8123, 1.442695
      %v8835 = vpow.pop %v8834
      %v8836 = vmul.f32 %v8124, 1.442695
      %v8837 = vpow.pop %v8836
      %v8838 = vmul.f32 %v8125, 1.442695
      %v8839 = vpow.pop %v8838
      %v8840 = vmul.f32 %v8126, 1.442695
      %v8841 = vpow.pop %v8840
      %v8842 = vmul.f32 %v8127, 1.442695
      %v8843 = vpow.pop %v8842
      %v8844 = vmul.f32 %v8128, 1.442695
      %v8845 = vpow.pop %v8844
      %v8846 = vmul.f32 %v8129, 1.442695
      %v8847 = vpow.pop %v8846
      %v8848 = vmul.f32 %v8130, 1.442695
      %v8849 = vpow.pop %v8848
      %v8850 = vmul.f32 %v8131, 1.442695
      %v8851 = vpow.pop %v8850
      %v8852 = vmul.f32 %v8132, 1.442695
      %v8853 = vpow.pop %v8852
      %v8854 = vmul.f32 %v8133, 1.442695
      %v8855 = vpow.pop %v8854
      %v8856 = vmul.f32 %v8134, 1.442695
      %v8857 = vpow.pop %v8856
      %v8858 = vmul.f32 %v8135, 1.442695
      %v8859 = vpow.pop %v8858
      %v8860 = vmul.f32 %v8136, 1.442695
      %v8861 = vpow.pop %v8860
      %v8862 = vmul.f32 %v8137, 1.442695
      %v8863 = vpow.pop %v8862
      %v8864 = vmul.f32 %v8138, 1.442695
      %v8865 = vpow.pop %v8864
      %v8866 = vmul.f32 %v8139, 1.442695
      %v8867 = vpow.pop %v8866
      %v8868 = vmul.f32 %v8140, 1.442695
      %v8869 = vpow.pop %v8868
      %v8870 = vmul.f32 %v8141, 1.442695
      %v8871 = vpow.pop %v8870
      %v8872 = vmul.f32 %v8142, 1.442695
      %v8873 = vpow.pop %v8872
      %v8874 = vmul.f32 %v8143, 1.442695
      %v8875 = vpow.pop %v8874
      %v8876 = vmul.f32 %v8144, 1.442695
      %v8877 = vpow.pop %v8876
      %v8878 = vmul.f32 %v8145, 1.442695
      %v8879 = vpow.pop %v8878
      %v8880 = vmul.f32 %v8146, 1.442695
      %v8881 = vpow.pop %v8880
      %v8882 = vmul.f32 %v8147, 1.442695
      %v8883 = vpow.pop %v8882
      %v8884 = vmul.f32 %v8148, 1.442695
      %v8885 = vpow.pop %v8884
      %v8886 = vmul.f32 %v8149, 1.442695
      %v8887 = vpow.pop %v8886
      %v8888 = vmul.f32 %v8150, 1.442695
      %v8889 = vpow.pop %v8888
      %v8890 = vmul.f32 %v8151, 1.442695
      %v8891 = vpow.pop %v8890
      %v8892 = vmul.f32 %v8152, 1.442695
      %v8893 = vpow.pop %v8892
      %v8894 = vmul.f32 %v8153, 1.442695
      %v8895 = vpow.pop %v8894
      %v8896 = vmul.f32 %v8154, 1.442695
      %v8897 = vpow.pop %v8896
      %v8898 = vmul.f32 %v8155, 1.442695
      %v8899 = vpow.pop %v8898
      %v8900 = vmul.f32 %v8156, 1.442695
      %v8901 = vpow.pop %v8900
      %v8902 = vmul.f32 %v8157, 1.442695
      %v8903 = vpow.pop %v8902
      %v8904 = vmul.f32 %v8158, 1.442695
      %v8905 = vpow.pop %v8904
      %v8906 = vmul.f32 %v8159, 1.442695
      %v8907 = vpow.pop %v8906
      %v8908 = vmul.f32 %v8160, 1.442695
      %v8909 = vpow.pop %v8908
      %v8910 = vmul.f32 %v8161, 1.442695
      %v8911 = vpow.pop %v8910
      %v8912 = vmul.f32 %v8162, 1.442695
      %v8913 = vpow.pop %v8912
      %v8914 = vmul.f32 %v8163, 1.442695
      %v8915 = vpow.pop %v8914
      %v8916 = vmul.f32 %v8164, 1.442695
      %v8917 = vpow.pop %v8916
      %v8918 = vmul.f32 %v8165, 1.442695
      %v8919 = vpow.pop %v8918
      %v8920 = vmul.f32 %v8166, 1.442695
      %v8921 = vpow.pop %v8920
      %v8922 = vmul.f32 %v8167, 1.442695
      %v8923 = vpow.pop %v8922
      %v8924 = vmul.f32 %v8168, 1.442695
      %v8925 = vpow.pop %v8924
      %v8926 = vmul.f32 %v8169, 1.442695
      %v8927 = vpow.pop %v8926
      %v8928 = vmul.f32 %v8170, 1.442695
      %v8929 = vpow.pop %v8928
      %v8930 = vmul.f32 %v8171, 1.442695
      %v8931 = vpow.pop %v8930
      %v8932 = vmul.f32 %v8172, 1.442695
      %v8933 = vpow.pop %v8932
      %v8934 = vmul.f32 %v8173, 1.442695
      %v8935 = vpow.pop %v8934
      %v8936 = vmul.f32 %v8174, 1.442695
      %v8937 = vpow.pop %v8936
      %v8938 = vmul.f32 %v8175, 1.442695
      %v8939 = vpow.pop %v8938
      %v8940 = vmul.f32 %v8176, 1.442695
      %v8941 = vpow.pop %v8940
      %v8942 = vmul.f32 %v8177, 1.442695
      %v8943 = vpow.pop %v8942
      %v8944 = vmul.f32 %v8178, 1.442695
      %v8945 = vpow.pop %v8944
      %v8946 = vmul.f32 %v8179, 1.442695
      %v8947 = vpow.pop %v8946
      %v8948 = vmul.f32 %v8180, 1.442695
      %v8949 = vpow.pop %v8948
      %v8950 = vmul.f32 %v8181, 1.442695
      %v8951 = vpow.pop %v8950
      %v8952 = vmul.f32 %v8182, 1.442695
      %v8953 = vpow.pop %v8952
      %v8954 = vmul.f32 %v8183, 1.442695
      %v8955 = vpow.pop %v8954
      %v8956 = vmul.f32 %v8184, 1.442695
      %v8957 = vpow.pop %v8956
      %v8958 = vmul.f32 %v8185, 1.442695
      %v8959 = vpow.pop %v8958
      %v8960 = vmul.f32 %v8186, 1.442695
      %v8961 = vpow.pop %v8960
      %v8962 = vmul.f32 %v8187, 1.442695
      %v8963 = vpow.pop %v8962
      %v8964 = vmul.f32 %v8188, 1.442695
      %v8965 = vpow.pop %v8964
      %v8966 = vmul.f32 %v8189, 1.442695
      %v8967 = vpow.pop %v8966
      %v8968 = vmul.f32 %v8190, 1.442695
      %v8969 = vpow.pop %v8968
      %v8970 = vmul.f32 %v8191, 1.442695
      %v8971 = vpow.pop %v8970
      %v8972 = vmul.f32 %v8192, 1.442695
      %v8973 = vpow.pop %v8972
      %v8974 = vmul.f32 %v8193, 1.442695
      %v8975 = vpow.pop %v8974
      %v8976 = vmul.f32 %v8194, 1.442695
      %v8977 = vpow.pop %v8976
      %v8978 = vmul.f32 %v8195, 1.442695
      %v8979 = vpow.pop %v8978
      %v8980 = vmul.f32 %v8196, 1.442695
      %v8981 = vpow.pop %v8980
      %v8982 = vmul.f32 %v8197, 1.442695
      %v8983 = vpow.pop %v8982
      %v8984 = vmul.f32 %v8198, 1.442695
      %v8985 = vpow.pop %v8984
      %v8986 = vmul.f32 %v8199, 1.442695
      %v8987 = vpow.pop %v8986
      %v8988 = vmul.f32 %v8200, 1.442695
      %v8989 = vpow.pop %v8988
      %v8990 = vmul.f32 %v8201, 1.442695
      %v8991 = vpow.pop %v8990
      %v8992 = vmul.f32 %v8202, 1.442695
      %v8993 = vpow.pop %v8992
      %v8994 = vmul.f32 %v8203, 1.442695
      %v8995 = vpow.pop %v8994
      %v8996 = vmul.f32 %v8204, 1.442695
      %v8997 = vpow.pop %v8996
      %v8998 = vmul.f32 %v8205, 1.442695
      %v8999 = vpow.pop %v8998
      %v9000 = vmul.f32 %v8206, 1.442695
      %v9001 = vpow.pop %v9000
      %v9002 = vmul.f32 %v8207, 1.442695
      %v9003 = vpow.pop %v9002
      %v9004 = vmul.f32 %v8208, 1.442695
      %v9005 = vpow.pop %v9004
      %v9006 = vmul.f32 %v8209, 1.442695
      %v9007 = vpow.pop %v9006
      %v9008 = vmul.f32 %v8210, 1.442695
      %v9009 = vpow.pop %v9008
      %v9010 = vmul.f32 %v8211, 1.442695
      %v9011 = vpow.pop %v9010
      %v9012 = vmul.f32 %v8212, 1.442695
      %v9013 = vpow.pop %v9012
      %v9014 = vmul.f32 %v8213, 1.442695
      %v9015 = vpow.pop %v9014
      %v9016 = vmul.f32 %v8214, 1.442695
      %v9017 = vpow.pop %v9016
      %v9018 = vmul.f32 %v8215, 1.442695
      %v9019 = vpow.pop %v9018
      %v9020 = vmul.f32 %v8216, 1.442695
      %v9021 = vpow.pop %v9020
      %v9022 = vmul.f32 %v8217, 1.442695
      %v9023 = vpow.pop %v9022
      %v9024 = vmul.f32 %v8218, 1.442695
      %v9025 = vpow.pop %v9024
      %v9026 = vmul.f32 %v8219, 1.442695
      %v9027 = vpow.pop %v9026
      %v9028 = vmul.f32 %v8220, 1.442695
      %v9029 = vpow.pop %v9028
      %v9030 = vmul.f32 %v8221, 1.442695
      %v9031 = vpow.pop %v9030
      %v9032 = vmul.f32 %v8222, 1.442695
      %v9033 = vpow.pop %v9032
      %v9034 = vmul.f32 %v8223, 1.442695
      %v9035 = vpow.pop %v9034
      %v9036 = vmul.f32 %v8224, 1.442695
      %v9037 = vpow.pop %v9036
      %v9038 = vmul.f32 %v8225, 1.442695
      %v9039 = vpow.pop %v9038
      %v9040 = vmul.f32 %v8226, 1.442695
      %v9041 = vpow.pop %v9040
      %v9042 = vmul.f32 %v8227, 1.442695
      %v9043 = vpow.pop %v9042
      %v9044 = vmul.f32 %v8228, 1.442695
      %v9045 = vpow.pop %v9044
      %v9046 = vmul.f32 %v8229, 1.442695
      %v9047 = vpow.pop %v9046
      %v9048 = vmul.f32 %v8230, 1.442695
      %v9049 = vpow.pop %v9048
      %v9050 = vmul.f32 %v8231, 1.442695
      %v9051 = vpow.pop %v9050
      %v9052 = vmul.f32 %v8232, 1.442695
      %v9053 = vpow.pop %v9052
      %v9054 = vmul.f32 %v8233, 1.442695
      %v9055 = vpow.pop %v9054
      %v9056 = vmul.f32 %v8234, 1.442695
      %v9057 = vpow.pop %v9056
      %v9058 = vmul.f32 %v8235, 1.442695
      %v9059 = vpow.pop %v9058
      %v9060 = vmul.f32 %v8236, 1.442695
      %v9061 = vpow.pop %v9060
      %v9062 = vmul.f32 %v8237, 1.442695
      %v9063 = vpow.pop %v9062
      %v9064 = vmul.f32 %v8238, 1.442695
      %v9065 = vpow.pop %v9064
      %v9066 = vmul.f32 %v8239, 1.442695
      %v9067 = vpow.pop %v9066
      %v9068 = vmul.f32 %v8240, 1.442695
      %v9069 = vpow.pop %v9068
      %v9070 = vmul.f32 %v8241, 1.442695
      %v9071 = vpow.pop %v9070
      %v9072 = vmul.f32 %v8242, 1.442695
      %v9073 = vpow.pop %v9072
      %v9074 = vmul.f32 %v8243, 1.442695
      %v9075 = vpow.pop %v9074
      %v9076 = vmul.f32 %v8244, 1.442695
      %v9077 = vpow.pop %v9076
      %v9078 = vmul.f32 %v8245, 1.442695
      %v9079 = vpow.pop %v9078
      %v9080 = vmul.f32 %v8246, 1.442695
      %v9081 = vpow.pop %v9080
      %v9082 = vmul.f32 %v8247, 1.442695
      %v9083 = vpow.pop %v9082
      %v9084 = vmul.f32 %v8248, 1.442695
      %v9085 = vpow.pop %v9084
      %v9086 = vmul.f32 %v8249, 1.442695
      %v9087 = vpow.pop %v9086
      %v9088 = vmul.f32 %v8250, 1.442695
      %v9089 = vpow.pop %v9088
      %v9090 = vmul.f32 %v8251, 1.442695
      %v9091 = vpow.pop %v9090
      %v9092 = vmul.f32 %v8252, 1.442695
      %v9093 = vpow.pop %v9092
      %v9094 = vmul.f32 %v8253, 1.442695
      %v9095 = vpow.pop %v9094
      %v9096 = vmul.f32 %v8254, 1.442695
      %v9097 = vpow.pop %v9096
      %v9098 = vmul.f32 %v8255, 1.442695
      %v9099 = vpow.pop %v9098
      %v9100 = vmul.f32 %v8256, 1.442695
      %v9101 = vpow.pop %v9100
      %v9102 = vmul.f32 %v8257, 1.442695
      %v9103 = vpow.pop %v9102
      %v9104 = vmul.f32 %v8258, 1.442695
      %v9105 = vpow.pop %v9104
      %v9106 = vmul.f32 %v8259, 1.442695
      %v9107 = vpow.pop %v9106
      %v9108 = vmul.f32 %v8260, 1.442695
      %v9109 = vpow.pop %v9108
      %v9110 = vmul.f32 %v8261, 1.442695
      %v9111 = vpow.pop %v9110
      %v9112 = vmul.f32 %v8262, 1.442695
      %v9113 = vpow.pop %v9112
      %v9114 = vmul.f32 %v8263, 1.442695
      %v9115 = vpow.pop %v9114
      %v9116 = vmul.f32 %v8264, 1.442695
      %v9117 = vpow.pop %v9116
      %v9118 = vmul.f32 %v8265, 1.442695
      %v9119 = vpow.pop %v9118
      %v9120 = vmul.f32 %v8266, 1.442695
      %v9121 = vpow.pop %v9120
      %v9122 = vmul.f32 %v8267, 1.442695
      %v9123 = vpow.pop %v9122
      %v9124 = vmul.f32 %v8268, 1.442695
      %v9125 = vpow.pop %v9124
      %v9126 = vmul.f32 %v8269, 1.442695
      %v9127 = vpow.pop %v9126
      %v9128 = vmul.f32 %v8270, 1.442695
      %v9129 = vpow.pop %v9128
      %v9130 = vmul.f32 %v8271, 1.442695
      %v9131 = vpow.pop %v9130
      %v9132 = vmul.f32 %v8272, 1.442695
      %v9133 = vpow.pop %v9132
      %v9134 = vmul.f32 %v8273, 1.442695
      %v9135 = vpow.pop %v9134
      %v9136 = vmul.f32 %v8274, 1.442695
      %v9137 = vpow.pop %v9136
      %v9138 = vmul.f32 %v8275, 1.442695
      %v9139 = vpow.pop %v9138
      %v9140 = vmul.f32 %v8276, 1.442695
      %v9141 = vpow.pop %v9140
      %v9142 = vmul.f32 %v8277, 1.442695
      %v9143 = vpow.pop %v9142
      %v9144 = vmul.f32 %v8278, 1.442695
      %v9145 = vpow.pop %v9144
      %v9146 = vmul.f32 %v8279, 1.442695
      %v9147 = vpow.pop %v9146
      %v9148 = vmul.f32 %v8280, 1.442695
      %v9149 = vpow.pop %v9148
      %v9150 = vmul.f32 %v8281, 1.442695
      %v9151 = vpow.pop %v9150
      %v9152 = vmul.f32 %v8282, 1.442695
      %v9153 = vpow.pop %v9152
      %v9154 = vmul.f32 %v8283, 1.442695
      %v9155 = vpow.pop %v9154
      %v9156 = vmul.f32 %v8284, 1.442695
      %v9157 = vpow.pop %v9156
      %v9158 = vmul.f32 %v8285, 1.442695
      %v9159 = vpow.pop %v9158
      %v9160 = vmul.f32 %v8286, 1.442695
      %v9161 = vpow.pop %v9160
      %v9162 = vmul.f32 %v8287, 1.442695
      %v9163 = vpow.pop %v9162
      %v9164 = vmul.f32 %v8288, 1.442695
      %v9165 = vpow.pop %v9164
      %v9166 = vmul.f32 %v8289, 1.442695
      %v9167 = vpow.pop %v9166
      %v9168 = vmul.f32 %v8290, 1.442695
      %v9169 = vpow.pop %v9168
      %v9170 = vmul.f32 %v8291, 1.442695
      %v9171 = vpow.pop %v9170
      %v9172 = vmul.f32 %v8292, 1.442695
      %v9173 = vpow.pop %v9172
      %v9174 = vmul.f32 %v8293, 1.442695
      %v9175 = vpow.pop %v9174
      %v9176 = vmul.f32 %v8294, 1.442695
      %v9177 = vpow.pop %v9176
      %v9178 = vmul.f32 %v8295, 1.442695
      %v9179 = vpow.pop %v9178
      %v9180 = vmul.f32 %v8296, 1.442695
      %v9181 = vpow.pop %v9180
      %v9182 = vmul.f32 %v8297, 1.442695
      %v9183 = vpow.pop %v9182
      %v9184 = vmul.f32 %v8298, 1.442695
      %v9185 = vpow.pop %v9184
      %v9186 = vmul.f32 %v8299, 1.442695
      %v9187 = vpow.pop %v9186
      %v9188 = vmul.f32 %v8300, 1.442695
      %v9189 = vpow.pop %v9188
      %v9190 = vmul.f32 %v8301, 1.442695
      %v9191 = vpow.pop %v9190
      %v9192 = vmul.f32 %v8302, 1.442695
      %v9193 = vpow.pop %v9192
      %v9194 = vmul.f32 %v8303, 1.442695
      %v9195 = vpow.pop %v9194
      %v9196 = vmul.f32 %v8304, 1.442695
      %v9197 = vpow.pop %v9196
      %v9198 = vmul.f32 %v8305, 1.442695
      %v9199 = vpow.pop %v9198
      %v9200 = vmul.f32 %v8306, 1.442695
      %v9201 = vpow.pop %v9200
      %v9202 = vmul.f32 %v8307, 1.442695
      %v9203 = vpow.pop %v9202
      %v9204 = vadd.f32 %v8309, 1.0
      %v9205 = vadd.f32 %v8311, 1.0
      %v9206 = vadd.f32 %v8313, 1.0
      %v9207 = vadd.f32 %v8315, 1.0
      %v9208 = vadd.f32 %v8317, 1.0
      %v9209 = vadd.f32 %v8319, 1.0
      %v9210 = vadd.f32 %v8321, 1.0
      %v9211 = vadd.f32 %v8323, 1.0
      %v9212 = vadd.f32 %v8325, 1.0
      %v9213 = vadd.f32 %v8327, 1.0
      %v9214 = vadd.f32 %v8329, 1.0
      %v9215 = vadd.f32 %v8331, 1.0
      %v9216 = vadd.f32 %v8333, 1.0
      %v9217 = vadd.f32 %v8335, 1.0
      %v9218 = vadd.f32 %v8337, 1.0
      %v9219 = vadd.f32 %v8339, 1.0
      %v9220 = vadd.f32 %v8341, 1.0
      %v9221 = vadd.f32 %v8343, 1.0
      %v9222 = vadd.f32 %v8345, 1.0
      %v9223 = vadd.f32 %v8347, 1.0
      %v9224 = vadd.f32 %v8349, 1.0
      %v9225 = vadd.f32 %v8351, 1.0
      %v9226 = vadd.f32 %v8353, 1.0
      %v9227 = vadd.f32 %v8355, 1.0
      %v9228 = vadd.f32 %v8357, 1.0
      %v9229 = vadd.f32 %v8359, 1.0
      %v9230 = vadd.f32 %v8361, 1.0
      %v9231 = vadd.f32 %v8363, 1.0
      %v9232 = vadd.f32 %v8365, 1.0
      %v9233 = vadd.f32 %v8367, 1.0
      %v9234 = vadd.f32 %v8369, 1.0
      %v9235 = vadd.f32 %v8371, 1.0
      %v9236 = vadd.f32 %v8373, 1.0
      %v9237 = vadd.f32 %v8375, 1.0
      %v9238 = vadd.f32 %v8377, 1.0
      %v9239 = vadd.f32 %v8379, 1.0
      %v9240 = vadd.f32 %v8381, 1.0
      %v9241 = vadd.f32 %v8383, 1.0
      %v9242 = vadd.f32 %v8385, 1.0
      %v9243 = vadd.f32 %v8387, 1.0
      %v9244 = vadd.f32 %v8389, 1.0
      %v9245 = vadd.f32 %v8391, 1.0
      %v9246 = vadd.f32 %v8393, 1.0
      %v9247 = vadd.f32 %v8395, 1.0
      %v9248 = vadd.f32 %v8397, 1.0
      %v9249 = vadd.f32 %v8399, 1.0
      %v9250 = vadd.f32 %v8401, 1.0
      %v9251 = vadd.f32 %v8403, 1.0
      %v9252 = vadd.f32 %v8405, 1.0
      %v9253 = vadd.f32 %v8407, 1.0
      %v9254 = vadd.f32 %v8409, 1.0
      %v9255 = vadd.f32 %v8411, 1.0
      %v9256 = vadd.f32 %v8413, 1.0
      %v9257 = vadd.f32 %v8415, 1.0
      %v9258 = vadd.f32 %v8417, 1.0
      %v9259 = vadd.f32 %v8419, 1.0
      %v9260 = vadd.f32 %v8421, 1.0
      %v9261 = vadd.f32 %v8423, 1.0
      %v9262 = vadd.f32 %v8425, 1.0
      %v9263 = vadd.f32 %v8427, 1.0
      %v9264 = vadd.f32 %v8429, 1.0
      %v9265 = vadd.f32 %v8431, 1.0
      %v9266 = vadd.f32 %v8433, 1.0
      %v9267 = vadd.f32 %v8435, 1.0
      %v9268 = vadd.f32 %v8437, 1.0
      %v9269 = vadd.f32 %v8439, 1.0
      %v9270 = vadd.f32 %v8441, 1.0
      %v9271 = vadd.f32 %v8443, 1.0
      %v9272 = vadd.f32 %v8445, 1.0
      %v9273 = vadd.f32 %v8447, 1.0
      %v9274 = vadd.f32 %v8449, 1.0
      %v9275 = vadd.f32 %v8451, 1.0
      %v9276 = vadd.f32 %v8453, 1.0
      %v9277 = vadd.f32 %v8455, 1.0
      %v9278 = vadd.f32 %v8457, 1.0
      %v9279 = vadd.f32 %v8459, 1.0
      %v9280 = vadd.f32 %v8461, 1.0
      %v9281 = vadd.f32 %v8463, 1.0
      %v9282 = vadd.f32 %v8465, 1.0
      %v9283 = vadd.f32 %v8467, 1.0
      %v9284 = vadd.f32 %v8469, 1.0
      %v9285 = vadd.f32 %v8471, 1.0
      %v9286 = vadd.f32 %v8473, 1.0
      %v9287 = vadd.f32 %v8475, 1.0
      %v9288 = vadd.f32 %v8477, 1.0
      %v9289 = vadd.f32 %v8479, 1.0
      %v9290 = vadd.f32 %v8481, 1.0
      %v9291 = vadd.f32 %v8483, 1.0
      %v9292 = vadd.f32 %v8485, 1.0
      %v9293 = vadd.f32 %v8487, 1.0
      %v9294 = vadd.f32 %v8489, 1.0
      %v9295 = vadd.f32 %v8491, 1.0
      %v9296 = vadd.f32 %v8493, 1.0
      %v9297 = vadd.f32 %v8495, 1.0
      %v9298 = vadd.f32 %v8497, 1.0
      %v9299 = vadd.f32 %v8499, 1.0
      %v9300 = vadd.f32 %v8501, 1.0
      %v9301 = vadd.f32 %v8503, 1.0
      %v9302 = vadd.f32 %v8505, 1.0
      %v9303 = vadd.f32 %v8507, 1.0
      %v9304 = vadd.f32 %v8509, 1.0
      %v9305 = vadd.f32 %v8511, 1.0
      %v9306 = vadd.f32 %v8513, 1.0
      %v9307 = vadd.f32 %v8515, 1.0
      %v9308 = vadd.f32 %v8517, 1.0
      %v9309 = vadd.f32 %v8519, 1.0
      %v9310 = vadd.f32 %v8521, 1.0
      %v9311 = vadd.f32 %v8523, 1.0
      %v9312 = vadd.f32 %v8525, 1.0
      %v9313 = vadd.f32 %v8527, 1.0
      %v9314 = vadd.f32 %v8529, 1.0
      %v9315 = vadd.f32 %v8531, 1.0
      %v9316 = vadd.f32 %v8533, 1.0
      %v9317 = vadd.f32 %v8535, 1.0
      %v9318 = vadd.f32 %v8537, 1.0
      %v9319 = vadd.f32 %v8539, 1.0
      %v9320 = vadd.f32 %v8541, 1.0
      %v9321 = vadd.f32 %v8543, 1.0
      %v9322 = vadd.f32 %v8545, 1.0
      %v9323 = vadd.f32 %v8547, 1.0
      %v9324 = vadd.f32 %v8549, 1.0
      %v9325 = vadd.f32 %v8551, 1.0
      %v9326 = vadd.f32 %v8553, 1.0
      %v9327 = vadd.f32 %v8555, 1.0
      %v9328 = vadd.f32 %v8557, 1.0
      %v9329 = vadd.f32 %v8559, 1.0
      %v9330 = vadd.f32 %v8561, 1.0
      %v9331 = vadd.f32 %v8563, 1.0
      %v9332 = vadd.f32 %v8565, 1.0
      %v9333 = vadd.f32 %v8567, 1.0
      %v9334 = vadd.f32 %v8569, 1.0
      %v9335 = vadd.f32 %v8571, 1.0
      %v9336 = vadd.f32 %v8573, 1.0
      %v9337 = vadd.f32 %v8575, 1.0
      %v9338 = vadd.f32 %v8577, 1.0
      %v9339 = vadd.f32 %v8579, 1.0
      %v9340 = vadd.f32 %v8581, 1.0
      %v9341 = vadd.f32 %v8583, 1.0
      %v9342 = vadd.f32 %v8585, 1.0
      %v9343 = vadd.f32 %v8587, 1.0
      %v9344 = vadd.f32 %v8589, 1.0
      %v9345 = vadd.f32 %v8591, 1.0
      %v9346 = vadd.f32 %v8593, 1.0
      %v9347 = vadd.f32 %v8595, 1.0
      %v9348 = vadd.f32 %v8597, 1.0
      %v9349 = vadd.f32 %v8599, 1.0
      %v9350 = vadd.f32 %v8601, 1.0
      %v9351 = vadd.f32 %v8603, 1.0
      %v9352 = vadd.f32 %v8605, 1.0
      %v9353 = vadd.f32 %v8607, 1.0
      %v9354 = vadd.f32 %v8609, 1.0
      %v9355 = vadd.f32 %v8611, 1.0
      %v9356 = vadd.f32 %v8613, 1.0
      %v9357 = vadd.f32 %v8615, 1.0
      %v9358 = vadd.f32 %v8617, 1.0
      %v9359 = vadd.f32 %v8619, 1.0
      %v9360 = vadd.f32 %v8621, 1.0
      %v9361 = vadd.f32 %v8623, 1.0
      %v9362 = vadd.f32 %v8625, 1.0
      %v9363 = vadd.f32 %v8627, 1.0
      %v9364 = vadd.f32 %v8629, 1.0
      %v9365 = vadd.f32 %v8631, 1.0
      %v9366 = vadd.f32 %v8633, 1.0
      %v9367 = vadd.f32 %v8635, 1.0
      %v9368 = vadd.f32 %v8637, 1.0
      %v9369 = vadd.f32 %v8639, 1.0
      %v9370 = vadd.f32 %v8641, 1.0
      %v9371 = vadd.f32 %v8643, 1.0
      %v9372 = vadd.f32 %v8645, 1.0
      %v9373 = vadd.f32 %v8647, 1.0
      %v9374 = vadd.f32 %v8649, 1.0
      %v9375 = vadd.f32 %v8651, 1.0
      %v9376 = vadd.f32 %v8653, 1.0
      %v9377 = vadd.f32 %v8655, 1.0
      %v9378 = vadd.f32 %v8657, 1.0
      %v9379 = vadd.f32 %v8659, 1.0
      %v9380 = vadd.f32 %v8661, 1.0
      %v9381 = vadd.f32 %v8663, 1.0
      %v9382 = vadd.f32 %v8665, 1.0
      %v9383 = vadd.f32 %v8667, 1.0
      %v9384 = vadd.f32 %v8669, 1.0
      %v9385 = vadd.f32 %v8671, 1.0
      %v9386 = vadd.f32 %v8673, 1.0
      %v9387 = vadd.f32 %v8675, 1.0
      %v9388 = vadd.f32 %v8677, 1.0
      %v9389 = vadd.f32 %v8679, 1.0
      %v9390 = vadd.f32 %v8681, 1.0
      %v9391 = vadd.f32 %v8683, 1.0
      %v9392 = vadd.f32 %v8685, 1.0
      %v9393 = vadd.f32 %v8687, 1.0
      %v9394 = vadd.f32 %v8689, 1.0
      %v9395 = vadd.f32 %v8691, 1.0
      %v9396 = vadd.f32 %v8693, 1.0
      %v9397 = vadd.f32 %v8695, 1.0
      %v9398 = vadd.f32 %v8697, 1.0
      %v9399 = vadd.f32 %v8699, 1.0
      %v9400 = vadd.f32 %v8701, 1.0
      %v9401 = vadd.f32 %v8703, 1.0
      %v9402 = vadd.f32 %v8705, 1.0
      %v9403 = vadd.f32 %v8707, 1.0
      %v9404 = vadd.f32 %v8709, 1.0
      %v9405 = vadd.f32 %v8711, 1.0
      %v9406 = vadd.f32 %v8713, 1.0
      %v9407 = vadd.f32 %v8715, 1.0
      %v9408 = vadd.f32 %v8717, 1.0
      %v9409 = vadd.f32 %v8719, 1.0
      %v9410 = vadd.f32 %v8721, 1.0
      %v9411 = vadd.f32 %v8723, 1.0
      %v9412 = vadd.f32 %v8725, 1.0
      %v9413 = vadd.f32 %v8727, 1.0
      %v9414 = vadd.f32 %v8729, 1.0
      %v9415 = vadd.f32 %v8731, 1.0
      %v9416 = vadd.f32 %v8733, 1.0
      %v9417 = vadd.f32 %v8735, 1.0
      %v9418 = vadd.f32 %v8737, 1.0
      %v9419 = vadd.f32 %v8739, 1.0
      %v9420 = vadd.f32 %v8741, 1.0
      %v9421 = vadd.f32 %v8743, 1.0
      %v9422 = vadd.f32 %v8745, 1.0
      %v9423 = vadd.f32 %v8747, 1.0
      %v9424 = vadd.f32 %v8749, 1.0
      %v9425 = vadd.f32 %v8751, 1.0
      %v9426 = vadd.f32 %v8753, 1.0
      %v9427 = vadd.f32 %v8755, 1.0
      %v9428 = vadd.f32 %v8757, 1.0
      %v9429 = vadd.f32 %v8759, 1.0
      %v9430 = vadd.f32 %v8761, 1.0
      %v9431 = vadd.f32 %v8763, 1.0
      %v9432 = vadd.f32 %v8765, 1.0
      %v9433 = vadd.f32 %v8767, 1.0
      %v9434 = vadd.f32 %v8769, 1.0
      %v9435 = vadd.f32 %v8771, 1.0
      %v9436 = vadd.f32 %v8773, 1.0
      %v9437 = vadd.f32 %v8775, 1.0
      %v9438 = vadd.f32 %v8777, 1.0
      %v9439 = vadd.f32 %v8779, 1.0
      %v9440 = vadd.f32 %v8781, 1.0
      %v9441 = vadd.f32 %v8783, 1.0
      %v9442 = vadd.f32 %v8785, 1.0
      %v9443 = vadd.f32 %v8787, 1.0
      %v9444 = vadd.f32 %v8789, 1.0
      %v9445 = vadd.f32 %v8791, 1.0
      %v9446 = vadd.f32 %v8793, 1.0
      %v9447 = vadd.f32 %v8795, 1.0
      %v9448 = vadd.f32 %v8797, 1.0
      %v9449 = vadd.f32 %v8799, 1.0
      %v9450 = vadd.f32 %v8801, 1.0
      %v9451 = vadd.f32 %v8803, 1.0
      %v9452 = vadd.f32 %v8805, 1.0
      %v9453 = vadd.f32 %v8807, 1.0
      %v9454 = vadd.f32 %v8809, 1.0
      %v9455 = vadd.f32 %v8811, 1.0
      %v9456 = vadd.f32 %v8813, 1.0
      %v9457 = vadd.f32 %v8815, 1.0
      %v9458 = vadd.f32 %v8817, 1.0
      %v9459 = vadd.f32 %v8819, 1.0
      %v9460 = vadd.f32 %v8821, 1.0
      %v9461 = vadd.f32 %v8823, 1.0
      %v9462 = vadd.f32 %v8825, 1.0
      %v9463 = vadd.f32 %v8827, 1.0
      %v9464 = vadd.f32 %v8829, 1.0
      %v9465 = vadd.f32 %v8831, 1.0
      %v9466 = vadd.f32 %v8833, 1.0
      %v9467 = vadd.f32 %v8835, 1.0
      %v9468 = vadd.f32 %v8837, 1.0
      %v9469 = vadd.f32 %v8839, 1.0
      %v9470 = vadd.f32 %v8841, 1.0
      %v9471 = vadd.f32 %v8843, 1.0
      %v9472 = vadd.f32 %v8845, 1.0
      %v9473 = vadd.f32 %v8847, 1.0
      %v9474 = vadd.f32 %v8849, 1.0
      %v9475 = vadd.f32 %v8851, 1.0
      %v9476 = vadd.f32 %v8853, 1.0
      %v9477 = vadd.f32 %v8855, 1.0
      %v9478 = vadd.f32 %v8857, 1.0
      %v9479 = vadd.f32 %v8859, 1.0
      %v9480 = vadd.f32 %v8861, 1.0
      %v9481 = vadd.f32 %v8863, 1.0
      %v9482 = vadd.f32 %v8865, 1.0
      %v9483 = vadd.f32 %v8867, 1.0
      %v9484 = vadd.f32 %v8869, 1.0
      %v9485 = vadd.f32 %v8871, 1.0
      %v9486 = vadd.f32 %v8873, 1.0
      %v9487 = vadd.f32 %v8875, 1.0
      %v9488 = vadd.f32 %v8877, 1.0
      %v9489 = vadd.f32 %v8879, 1.0
      %v9490 = vadd.f32 %v8881, 1.0
      %v9491 = vadd.f32 %v8883, 1.0
      %v9492 = vadd.f32 %v8885, 1.0
      %v9493 = vadd.f32 %v8887, 1.0
      %v9494 = vadd.f32 %v8889, 1.0
      %v9495 = vadd.f32 %v8891, 1.0
      %v9496 = vadd.f32 %v8893, 1.0
      %v9497 = vadd.f32 %v8895, 1.0
      %v9498 = vadd.f32 %v8897, 1.0
      %v9499 = vadd.f32 %v8899, 1.0
      %v9500 = vadd.f32 %v8901, 1.0
      %v9501 = vadd.f32 %v8903, 1.0
      %v9502 = vadd.f32 %v8905, 1.0
      %v9503 = vadd.f32 %v8907, 1.0
      %v9504 = vadd.f32 %v8909, 1.0
      %v9505 = vadd.f32 %v8911, 1.0
      %v9506 = vadd.f32 %v8913, 1.0
      %v9507 = vadd.f32 %v8915, 1.0
      %v9508 = vadd.f32 %v8917, 1.0
      %v9509 = vadd.f32 %v8919, 1.0
      %v9510 = vadd.f32 %v8921, 1.0
      %v9511 = vadd.f32 %v8923, 1.0
      %v9512 = vadd.f32 %v8925, 1.0
      %v9513 = vadd.f32 %v8927, 1.0
      %v9514 = vadd.f32 %v8929, 1.0
      %v9515 = vadd.f32 %v8931, 1.0
      %v9516 = vadd.f32 %v8933, 1.0
      %v9517 = vadd.f32 %v8935, 1.0
      %v9518 = vadd.f32 %v8937, 1.0
      %v9519 = vadd.f32 %v8939, 1.0
      %v9520 = vadd.f32 %v8941, 1.0
      %v9521 = vadd.f32 %v8943, 1.0
      %v9522 = vadd.f32 %v8945, 1.0
      %v9523 = vadd.f32 %v8947, 1.0
      %v9524 = vadd.f32 %v8949, 1.0
      %v9525 = vadd.f32 %v8951, 1.0
      %v9526 = vadd.f32 %v8953, 1.0
      %v9527 = vadd.f32 %v8955, 1.0
      %v9528 = vadd.f32 %v8957, 1.0
      %v9529 = vadd.f32 %v8959, 1.0
      %v9530 = vadd.f32 %v8961, 1.0
      %v9531 = vadd.f32 %v8963, 1.0
      %v9532 = vadd.f32 %v8965, 1.0
      %v9533 = vadd.f32 %v8967, 1.0
      %v9534 = vadd.f32 %v8969, 1.0
      %v9535 = vadd.f32 %v8971, 1.0
      %v9536 = vadd.f32 %v8973, 1.0
      %v9537 = vadd.f32 %v8975, 1.0
      %v9538 = vadd.f32 %v8977, 1.0
      %v9539 = vadd.f32 %v8979, 1.0
      %v9540 = vadd.f32 %v8981, 1.0
      %v9541 = vadd.f32 %v8983, 1.0
      %v9542 = vadd.f32 %v8985, 1.0
      %v9543 = vadd.f32 %v8987, 1.0
      %v9544 = vadd.f32 %v8989, 1.0
      %v9545 = vadd.f32 %v8991, 1.0
      %v9546 = vadd.f32 %v8993, 1.0
      %v9547 = vadd.f32 %v8995, 1.0
      %v9548 = vadd.f32 %v8997, 1.0
      %v9549 = vadd.f32 %v8999, 1.0
      %v9550 = vadd.f32 %v9001, 1.0
      %v9551 = vadd.f32 %v9003, 1.0
      %v9552 = vadd.f32 %v9005, 1.0
      %v9553 = vadd.f32 %v9007, 1.0
      %v9554 = vadd.f32 %v9009, 1.0
      %v9555 = vadd.f32 %v9011, 1.0
      %v9556 = vadd.f32 %v9013, 1.0
      %v9557 = vadd.f32 %v9015, 1.0
      %v9558 = vadd.f32 %v9017, 1.0
      %v9559 = vadd.f32 %v9019, 1.0
      %v9560 = vadd.f32 %v9021, 1.0
      %v9561 = vadd.f32 %v9023, 1.0
      %v9562 = vadd.f32 %v9025, 1.0
      %v9563 = vadd.f32 %v9027, 1.0
      %v9564 = vadd.f32 %v9029, 1.0
      %v9565 = vadd.f32 %v9031, 1.0
      %v9566 = vadd.f32 %v9033, 1.0
      %v9567 = vadd.f32 %v9035, 1.0
      %v9568 = vadd.f32 %v9037, 1.0
      %v9569 = vadd.f32 %v9039, 1.0
      %v9570 = vadd.f32 %v9041, 1.0
      %v9571 = vadd.f32 %v9043, 1.0
      %v9572 = vadd.f32 %v9045, 1.0
      %v9573 = vadd.f32 %v9047, 1.0
      %v9574 = vadd.f32 %v9049, 1.0
      %v9575 = vadd.f32 %v9051, 1.0
      %v9576 = vadd.f32 %v9053, 1.0
      %v9577 = vadd.f32 %v9055, 1.0
      %v9578 = vadd.f32 %v9057, 1.0
      %v9579 = vadd.f32 %v9059, 1.0
      %v9580 = vadd.f32 %v9061, 1.0
      %v9581 = vadd.f32 %v9063, 1.0
      %v9582 = vadd.f32 %v9065, 1.0
      %v9583 = vadd.f32 %v9067, 1.0
      %v9584 = vadd.f32 %v9069, 1.0
      %v9585 = vadd.f32 %v9071, 1.0
      %v9586 = vadd.f32 %v9073, 1.0
      %v9587 = vadd.f32 %v9075, 1.0
      %v9588 = vadd.f32 %v9077, 1.0
      %v9589 = vadd.f32 %v9079, 1.0
      %v9590 = vadd.f32 %v9081, 1.0
      %v9591 = vadd.f32 %v9083, 1.0
      %v9592 = vadd.f32 %v9085, 1.0
      %v9593 = vadd.f32 %v9087, 1.0
      %v9594 = vadd.f32 %v9089, 1.0
      %v9595 = vadd.f32 %v9091, 1.0
      %v9596 = vadd.f32 %v9093, 1.0
      %v9597 = vadd.f32 %v9095, 1.0
      %v9598 = vadd.f32 %v9097, 1.0
      %v9599 = vadd.f32 %v9099, 1.0
      %v9600 = vadd.f32 %v9101, 1.0
      %v9601 = vadd.f32 %v9103, 1.0
      %v9602 = vadd.f32 %v9105, 1.0
      %v9603 = vadd.f32 %v9107, 1.0
      %v9604 = vadd.f32 %v9109, 1.0
      %v9605 = vadd.f32 %v9111, 1.0
      %v9606 = vadd.f32 %v9113, 1.0
      %v9607 = vadd.f32 %v9115, 1.0
      %v9608 = vadd.f32 %v9117, 1.0
      %v9609 = vadd.f32 %v9119, 1.0
      %v9610 = vadd.f32 %v9121, 1.0
      %v9611 = vadd.f32 %v9123, 1.0
      %v9612 = vadd.f32 %v9125, 1.0
      %v9613 = vadd.f32 %v9127, 1.0
      %v9614 = vadd.f32 %v9129, 1.0
      %v9615 = vadd.f32 %v9131, 1.0
      %v9616 = vadd.f32 %v9133, 1.0
      %v9617 = vadd.f32 %v9135, 1.0
      %v9618 = vadd.f32 %v9137, 1.0
      %v9619 = vadd.f32 %v9139, 1.0
      %v9620 = vadd.f32 %v9141, 1.0
      %v9621 = vadd.f32 %v9143, 1.0
      %v9622 = vadd.f32 %v9145, 1.0
      %v9623 = vadd.f32 %v9147, 1.0
      %v9624 = vadd.f32 %v9149, 1.0
      %v9625 = vadd.f32 %v9151, 1.0
      %v9626 = vadd.f32 %v9153, 1.0
      %v9627 = vadd.f32 %v9155, 1.0
      %v9628 = vadd.f32 %v9157, 1.0
      %v9629 = vadd.f32 %v9159, 1.0
      %v9630 = vadd.f32 %v9161, 1.0
      %v9631 = vadd.f32 %v9163, 1.0
      %v9632 = vadd.f32 %v9165, 1.0
      %v9633 = vadd.f32 %v9167, 1.0
      %v9634 = vadd.f32 %v9169, 1.0
      %v9635 = vadd.f32 %v9171, 1.0
      %v9636 = vadd.f32 %v9173, 1.0
      %v9637 = vadd.f32 %v9175, 1.0
      %v9638 = vadd.f32 %v9177, 1.0
      %v9639 = vadd.f32 %v9179, 1.0
      %v9640 = vadd.f32 %v9181, 1.0
      %v9641 = vadd.f32 %v9183, 1.0
      %v9642 = vadd.f32 %v9185, 1.0
      %v9643 = vadd.f32 %v9187, 1.0
      %v9644 = vadd.f32 %v9189, 1.0
      %v9645 = vadd.f32 %v9191, 1.0
      %v9646 = vadd.f32 %v9193, 1.0
      %v9647 = vadd.f32 %v9195, 1.0
      %v9648 = vadd.f32 %v9197, 1.0
      %v9649 = vadd.f32 %v9199, 1.0
      %v9650 = vadd.f32 %v9201, 1.0
      %v9651 = vadd.f32 %v9203, 1.0
      %v9652 = vrcp.pop %v9204
      %v9653 = vmul.f32 1.0, %v9652
      %v9654 = vrcp.pop %v9205
      %v9655 = vmul.f32 1.0, %v9654
      %v9656 = vrcp.pop %v9206
      %v9657 = vmul.f32 1.0, %v9656
      %v9658 = vrcp.pop %v9207
      %v9659 = vmul.f32 1.0, %v9658
      %v9660 = vrcp.pop %v9208
      %v9661 = vmul.f32 1.0, %v9660
      %v9662 = vrcp.pop %v9209
      %v9663 = vmul.f32 1.0, %v9662
      %v9664 = vrcp.pop %v9210
      %v9665 = vmul.f32 1.0, %v9664
      %v9666 = vrcp.pop %v9211
      %v9667 = vmul.f32 1.0, %v9666
      %v9668 = vrcp.pop %v9212
      %v9669 = vmul.f32 1.0, %v9668
      %v9670 = vrcp.pop %v9213
      %v9671 = vmul.f32 1.0, %v9670
      %v9672 = vrcp.pop %v9214
      %v9673 = vmul.f32 1.0, %v9672
      %v9674 = vrcp.pop %v9215
      %v9675 = vmul.f32 1.0, %v9674
      %v9676 = vrcp.pop %v9216
      %v9677 = vmul.f32 1.0, %v9676
      %v9678 = vrcp.pop %v9217
      %v9679 = vmul.f32 1.0, %v9678
      %v9680 = vrcp.pop %v9218
      %v9681 = vmul.f32 1.0, %v9680
      %v9682 = vrcp.pop %v9219
      %v9683 = vmul.f32 1.0, %v9682
      %v9684 = vrcp.pop %v9220
      %v9685 = vmul.f32 1.0, %v9684
      %v9686 = vrcp.pop %v9221
      %v9687 = vmul.f32 1.0, %v9686
      %v9688 = vrcp.pop %v9222
      %v9689 = vmul.f32 1.0, %v9688
      %v9690 = vrcp.pop %v9223
      %v9691 = vmul.f32 1.0, %v9690
      %v9692 = vrcp.pop %v9224
      %v9693 = vmul.f32 1.0, %v9692
      %v9694 = vrcp.pop %v9225
      %v9695 = vmul.f32 1.0, %v9694
      %v9696 = vrcp.pop %v9226
      %v9697 = vmul.f32 1.0, %v9696
      %v9698 = vrcp.pop %v9227
      %v9699 = vmul.f32 1.0, %v9698
      %v9700 = vrcp.pop %v9228
      %v9701 = vmul.f32 1.0, %v9700
      %v9702 = vrcp.pop %v9229
      %v9703 = vmul.f32 1.0, %v9702
      %v9704 = vrcp.pop %v9230
      %v9705 = vmul.f32 1.0, %v9704
      %v9706 = vrcp.pop %v9231
      %v9707 = vmul.f32 1.0, %v9706
      %v9708 = vrcp.pop %v9232
      %v9709 = vmul.f32 1.0, %v9708
      %v9710 = vrcp.pop %v9233
      %v9711 = vmul.f32 1.0, %v9710
      %v9712 = vrcp.pop %v9234
      %v9713 = vmul.f32 1.0, %v9712
      %v9714 = vrcp.pop %v9235
      %v9715 = vmul.f32 1.0, %v9714
      %v9716 = vrcp.pop %v9236
      %v9717 = vmul.f32 1.0, %v9716
      %v9718 = vrcp.pop %v9237
      %v9719 = vmul.f32 1.0, %v9718
      %v9720 = vrcp.pop %v9238
      %v9721 = vmul.f32 1.0, %v9720
      %v9722 = vrcp.pop %v9239
      %v9723 = vmul.f32 1.0, %v9722
      %v9724 = vrcp.pop %v9240
      %v9725 = vmul.f32 1.0, %v9724
      %v9726 = vrcp.pop %v9241
      %v9727 = vmul.f32 1.0, %v9726
      %v9728 = vrcp.pop %v9242
      %v9729 = vmul.f32 1.0, %v9728
      %v9730 = vrcp.pop %v9243
      %v9731 = vmul.f32 1.0, %v9730
      %v9732 = vrcp.pop %v9244
      %v9733 = vmul.f32 1.0, %v9732
      %v9734 = vrcp.pop %v9245
      %v9735 = vmul.f32 1.0, %v9734
      %v9736 = vrcp.pop %v9246
      %v9737 = vmul.f32 1.0, %v9736
      %v9738 = vrcp.pop %v9247
      %v9739 = vmul.f32 1.0, %v9738
      %v9740 = vrcp.pop %v9248
      %v9741 = vmul.f32 1.0, %v9740
      %v9742 = vrcp.pop %v9249
      %v9743 = vmul.f32 1.0, %v9742
      %v9744 = vrcp.pop %v9250
      %v9745 = vmul.f32 1.0, %v9744
      %v9746 = vrcp.pop %v9251
      %v9747 = vmul.f32 1.0, %v9746
      %v9748 = vrcp.pop %v9252
      %v9749 = vmul.f32 1.0, %v9748
      %v9750 = vrcp.pop %v9253
      %v9751 = vmul.f32 1.0, %v9750
      %v9752 = vrcp.pop %v9254
      %v9753 = vmul.f32 1.0, %v9752
      %v9754 = vrcp.pop %v9255
      %v9755 = vmul.f32 1.0, %v9754
      %v9756 = vrcp.pop %v9256
      %v9757 = vmul.f32 1.0, %v9756
      %v9758 = vrcp.pop %v9257
      %v9759 = vmul.f32 1.0, %v9758
      %v9760 = vrcp.pop %v9258
      %v9761 = vmul.f32 1.0, %v9760
      %v9762 = vrcp.pop %v9259
      %v9763 = vmul.f32 1.0, %v9762
      %v9764 = vrcp.pop %v9260
      %v9765 = vmul.f32 1.0, %v9764
      %v9766 = vrcp.pop %v9261
      %v9767 = vmul.f32 1.0, %v9766
      %v9768 = vrcp.pop %v9262
      %v9769 = vmul.f32 1.0, %v9768
      %v9770 = vrcp.pop %v9263
      %v9771 = vmul.f32 1.0, %v9770
      %v9772 = vrcp.pop %v9264
      %v9773 = vmul.f32 1.0, %v9772
      %v9774 = vrcp.pop %v9265
      %v9775 = vmul.f32 1.0, %v9774
      %v9776 = vrcp.pop %v9266
      %v9777 = vmul.f32 1.0, %v9776
      %v9778 = vrcp.pop %v9267
      %v9779 = vmul.f32 1.0, %v9778
      %v9780 = vrcp.pop %v9268
      %v9781 = vmul.f32 1.0, %v9780
      %v9782 = vrcp.pop %v9269
      %v9783 = vmul.f32 1.0, %v9782
      %v9784 = vrcp.pop %v9270
      %v9785 = vmul.f32 1.0, %v9784
      %v9786 = vrcp.pop %v9271
      %v9787 = vmul.f32 1.0, %v9786
      %v9788 = vrcp.pop %v9272
      %v9789 = vmul.f32 1.0, %v9788
      %v9790 = vrcp.pop %v9273
      %v9791 = vmul.f32 1.0, %v9790
      %v9792 = vrcp.pop %v9274
      %v9793 = vmul.f32 1.0, %v9792
      %v9794 = vrcp.pop %v9275
      %v9795 = vmul.f32 1.0, %v9794
      %v9796 = vrcp.pop %v9276
      %v9797 = vmul.f32 1.0, %v9796
      %v9798 = vrcp.pop %v9277
      %v9799 = vmul.f32 1.0, %v9798
      %v9800 = vrcp.pop %v9278
      %v9801 = vmul.f32 1.0, %v9800
      %v9802 = vrcp.pop %v9279
      %v9803 = vmul.f32 1.0, %v9802
      %v9804 = vrcp.pop %v9280
      %v9805 = vmul.f32 1.0, %v9804
      %v9806 = vrcp.pop %v9281
      %v9807 = vmul.f32 1.0, %v9806
      %v9808 = vrcp.pop %v9282
      %v9809 = vmul.f32 1.0, %v9808
      %v9810 = vrcp.pop %v9283
      %v9811 = vmul.f32 1.0, %v9810
      %v9812 = vrcp.pop %v9284
      %v9813 = vmul.f32 1.0, %v9812
      %v9814 = vrcp.pop %v9285
      %v9815 = vmul.f32 1.0, %v9814
      %v9816 = vrcp.pop %v9286
      %v9817 = vmul.f32 1.0, %v9816
      %v9818 = vrcp.pop %v9287
      %v9819 = vmul.f32 1.0, %v9818
      %v9820 = vrcp.pop %v9288
      %v9821 = vmul.f32 1.0, %v9820
      %v9822 = vrcp.pop %v9289
      %v9823 = vmul.f32 1.0, %v9822
      %v9824 = vrcp.pop %v9290
      %v9825 = vmul.f32 1.0, %v9824
      %v9826 = vrcp.pop %v9291
      %v9827 = vmul.f32 1.0, %v9826
      %v9828 = vrcp.pop %v9292
      %v9829 = vmul.f32 1.0, %v9828
      %v9830 = vrcp.pop %v9293
      %v9831 = vmul.f32 1.0, %v9830
      %v9832 = vrcp.pop %v9294
      %v9833 = vmul.f32 1.0, %v9832
      %v9834 = vrcp.pop %v9295
      %v9835 = vmul.f32 1.0, %v9834
      %v9836 = vrcp.pop %v9296
      %v9837 = vmul.f32 1.0, %v9836
      %v9838 = vrcp.pop %v9297
      %v9839 = vmul.f32 1.0, %v9838
      %v9840 = vrcp.pop %v9298
      %v9841 = vmul.f32 1.0, %v9840
      %v9842 = vrcp.pop %v9299
      %v9843 = vmul.f32 1.0, %v9842
      %v9844 = vrcp.pop %v9300
      %v9845 = vmul.f32 1.0, %v9844
      %v9846 = vrcp.pop %v9301
      %v9847 = vmul.f32 1.0, %v9846
      %v9848 = vrcp.pop %v9302
      %v9849 = vmul.f32 1.0, %v9848
      %v9850 = vrcp.pop %v9303
      %v9851 = vmul.f32 1.0, %v9850
      %v9852 = vrcp.pop %v9304
      %v9853 = vmul.f32 1.0, %v9852
      %v9854 = vrcp.pop %v9305
      %v9855 = vmul.f32 1.0, %v9854
      %v9856 = vrcp.pop %v9306
      %v9857 = vmul.f32 1.0, %v9856
      %v9858 = vrcp.pop %v9307
      %v9859 = vmul.f32 1.0, %v9858
      %v9860 = vrcp.pop %v9308
      %v9861 = vmul.f32 1.0, %v9860
      %v9862 = vrcp.pop %v9309
      %v9863 = vmul.f32 1.0, %v9862
      %v9864 = vrcp.pop %v9310
      %v9865 = vmul.f32 1.0, %v9864
      %v9866 = vrcp.pop %v9311
      %v9867 = vmul.f32 1.0, %v9866
      %v9868 = vrcp.pop %v9312
      %v9869 = vmul.f32 1.0, %v9868
      %v9870 = vrcp.pop %v9313
      %v9871 = vmul.f32 1.0, %v9870
      %v9872 = vrcp.pop %v9314
      %v9873 = vmul.f32 1.0, %v9872
      %v9874 = vrcp.pop %v9315
      %v9875 = vmul.f32 1.0, %v9874
      %v9876 = vrcp.pop %v9316
      %v9877 = vmul.f32 1.0, %v9876
      %v9878 = vrcp.pop %v9317
      %v9879 = vmul.f32 1.0, %v9878
      %v9880 = vrcp.pop %v9318
      %v9881 = vmul.f32 1.0, %v9880
      %v9882 = vrcp.pop %v9319
      %v9883 = vmul.f32 1.0, %v9882
      %v9884 = vrcp.pop %v9320
      %v9885 = vmul.f32 1.0, %v9884
      %v9886 = vrcp.pop %v9321
      %v9887 = vmul.f32 1.0, %v9886
      %v9888 = vrcp.pop %v9322
      %v9889 = vmul.f32 1.0, %v9888
      %v9890 = vrcp.pop %v9323
      %v9891 = vmul.f32 1.0, %v9890
      %v9892 = vrcp.pop %v9324
      %v9893 = vmul.f32 1.0, %v9892
      %v9894 = vrcp.pop %v9325
      %v9895 = vmul.f32 1.0, %v9894
      %v9896 = vrcp.pop %v9326
      %v9897 = vmul.f32 1.0, %v9896
      %v9898 = vrcp.pop %v9327
      %v9899 = vmul.f32 1.0, %v9898
      %v9900 = vrcp.pop %v9328
      %v9901 = vmul.f32 1.0, %v9900
      %v9902 = vrcp.pop %v9329
      %v9903 = vmul.f32 1.0, %v9902
      %v9904 = vrcp.pop %v9330
      %v9905 = vmul.f32 1.0, %v9904
      %v9906 = vrcp.pop %v9331
      %v9907 = vmul.f32 1.0, %v9906
      %v9908 = vrcp.pop %v9332
      %v9909 = vmul.f32 1.0, %v9908
      %v9910 = vrcp.pop %v9333
      %v9911 = vmul.f32 1.0, %v9910
      %v9912 = vrcp.pop %v9334
      %v9913 = vmul.f32 1.0, %v9912
      %v9914 = vrcp.pop %v9335
      %v9915 = vmul.f32 1.0, %v9914
      %v9916 = vrcp.pop %v9336
      %v9917 = vmul.f32 1.0, %v9916
      %v9918 = vrcp.pop %v9337
      %v9919 = vmul.f32 1.0, %v9918
      %v9920 = vrcp.pop %v9338
      %v9921 = vmul.f32 1.0, %v9920
      %v9922 = vrcp.pop %v9339
      %v9923 = vmul.f32 1.0, %v9922
      %v9924 = vrcp.pop %v9340
      %v9925 = vmul.f32 1.0, %v9924
      %v9926 = vrcp.pop %v9341
      %v9927 = vmul.f32 1.0, %v9926
      %v9928 = vrcp.pop %v9342
      %v9929 = vmul.f32 1.0, %v9928
      %v9930 = vrcp.pop %v9343
      %v9931 = vmul.f32 1.0, %v9930
      %v9932 = vrcp.pop %v9344
      %v9933 = vmul.f32 1.0, %v9932
      %v9934 = vrcp.pop %v9345
      %v9935 = vmul.f32 1.0, %v9934
      %v9936 = vrcp.pop %v9346
      %v9937 = vmul.f32 1.0, %v9936
      %v9938 = vrcp.pop %v9347
      %v9939 = vmul.f32 1.0, %v9938
      %v9940 = vrcp.pop %v9348
      %v9941 = vmul.f32 1.0, %v9940
      %v9942 = vrcp.pop %v9349
      %v9943 = vmul.f32 1.0, %v9942
      %v9944 = vrcp.pop %v9350
      %v9945 = vmul.f32 1.0, %v9944
      %v9946 = vrcp.pop %v9351
      %v9947 = vmul.f32 1.0, %v9946
      %v9948 = vrcp.pop %v9352
      %v9949 = vmul.f32 1.0, %v9948
      %v9950 = vrcp.pop %v9353
      %v9951 = vmul.f32 1.0, %v9950
      %v9952 = vrcp.pop %v9354
      %v9953 = vmul.f32 1.0, %v9952
      %v9954 = vrcp.pop %v9355
      %v9955 = vmul.f32 1.0, %v9954
      %v9956 = vrcp.pop %v9356
      %v9957 = vmul.f32 1.0, %v9956
      %v9958 = vrcp.pop %v9357
      %v9959 = vmul.f32 1.0, %v9958
      %v9960 = vrcp.pop %v9358
      %v9961 = vmul.f32 1.0, %v9960
      %v9962 = vrcp.pop %v9359
      %v9963 = vmul.f32 1.0, %v9962
      %v9964 = vrcp.pop %v9360
      %v9965 = vmul.f32 1.0, %v9964
      %v9966 = vrcp.pop %v9361
      %v9967 = vmul.f32 1.0, %v9966
      %v9968 = vrcp.pop %v9362
      %v9969 = vmul.f32 1.0, %v9968
      %v9970 = vrcp.pop %v9363
      %v9971 = vmul.f32 1.0, %v9970
      %v9972 = vrcp.pop %v9364
      %v9973 = vmul.f32 1.0, %v9972
      %v9974 = vrcp.pop %v9365
      %v9975 = vmul.f32 1.0, %v9974
      %v9976 = vrcp.pop %v9366
      %v9977 = vmul.f32 1.0, %v9976
      %v9978 = vrcp.pop %v9367
      %v9979 = vmul.f32 1.0, %v9978
      %v9980 = vrcp.pop %v9368
      %v9981 = vmul.f32 1.0, %v9980
      %v9982 = vrcp.pop %v9369
      %v9983 = vmul.f32 1.0, %v9982
      %v9984 = vrcp.pop %v9370
      %v9985 = vmul.f32 1.0, %v9984
      %v9986 = vrcp.pop %v9371
      %v9987 = vmul.f32 1.0, %v9986
      %v9988 = vrcp.pop %v9372
      %v9989 = vmul.f32 1.0, %v9988
      %v9990 = vrcp.pop %v9373
      %v9991 = vmul.f32 1.0, %v9990
      %v9992 = vrcp.pop %v9374
      %v9993 = vmul.f32 1.0, %v9992
      %v9994 = vrcp.pop %v9375
      %v9995 = vmul.f32 1.0, %v9994
      %v9996 = vrcp.pop %v9376
      %v9997 = vmul.f32 1.0, %v9996
      %v9998 = vrcp.pop %v9377
      %v9999 = vmul.f32 1.0, %v9998
      %v10000 = vrcp.pop %v9378
      %v10001 = vmul.f32 1.0, %v10000
      %v10002 = vrcp.pop %v9379
      %v10003 = vmul.f32 1.0, %v10002
      %v10004 = vrcp.pop %v9380
      %v10005 = vmul.f32 1.0, %v10004
      %v10006 = vrcp.pop %v9381
      %v10007 = vmul.f32 1.0, %v10006
      %v10008 = vrcp.pop %v9382
      %v10009 = vmul.f32 1.0, %v10008
      %v10010 = vrcp.pop %v9383
      %v10011 = vmul.f32 1.0, %v10010
      %v10012 = vrcp.pop %v9384
      %v10013 = vmul.f32 1.0, %v10012
      %v10014 = vrcp.pop %v9385
      %v10015 = vmul.f32 1.0, %v10014
      %v10016 = vrcp.pop %v9386
      %v10017 = vmul.f32 1.0, %v10016
      %v10018 = vrcp.pop %v9387
      %v10019 = vmul.f32 1.0, %v10018
      %v10020 = vrcp.pop %v9388
      %v10021 = vmul.f32 1.0, %v10020
      %v10022 = vrcp.pop %v9389
      %v10023 = vmul.f32 1.0, %v10022
      %v10024 = vrcp.pop %v9390
      %v10025 = vmul.f32 1.0, %v10024
      %v10026 = vrcp.pop %v9391
      %v10027 = vmul.f32 1.0, %v10026
      %v10028 = vrcp.pop %v9392
      %v10029 = vmul.f32 1.0, %v10028
      %v10030 = vrcp.pop %v9393
      %v10031 = vmul.f32 1.0, %v10030
      %v10032 = vrcp.pop %v9394
      %v10033 = vmul.f32 1.0, %v10032
      %v10034 = vrcp.pop %v9395
      %v10035 = vmul.f32 1.0, %v10034
      %v10036 = vrcp.pop %v9396
      %v10037 = vmul.f32 1.0, %v10036
      %v10038 = vrcp.pop %v9397
      %v10039 = vmul.f32 1.0, %v10038
      %v10040 = vrcp.pop %v9398
      %v10041 = vmul.f32 1.0, %v10040
      %v10042 = vrcp.pop %v9399
      %v10043 = vmul.f32 1.0, %v10042
      %v10044 = vrcp.pop %v9400
      %v10045 = vmul.f32 1.0, %v10044
      %v10046 = vrcp.pop %v9401
      %v10047 = vmul.f32 1.0, %v10046
      %v10048 = vrcp.pop %v9402
      %v10049 = vmul.f32 1.0, %v10048
      %v10050 = vrcp.pop %v9403
      %v10051 = vmul.f32 1.0, %v10050
      %v10052 = vrcp.pop %v9404
      %v10053 = vmul.f32 1.0, %v10052
      %v10054 = vrcp.pop %v9405
      %v10055 = vmul.f32 1.0, %v10054
      %v10056 = vrcp.pop %v9406
      %v10057 = vmul.f32 1.0, %v10056
      %v10058 = vrcp.pop %v9407
      %v10059 = vmul.f32 1.0, %v10058
      %v10060 = vrcp.pop %v9408
      %v10061 = vmul.f32 1.0, %v10060
      %v10062 = vrcp.pop %v9409
      %v10063 = vmul.f32 1.0, %v10062
      %v10064 = vrcp.pop %v9410
      %v10065 = vmul.f32 1.0, %v10064
      %v10066 = vrcp.pop %v9411
      %v10067 = vmul.f32 1.0, %v10066
      %v10068 = vrcp.pop %v9412
      %v10069 = vmul.f32 1.0, %v10068
      %v10070 = vrcp.pop %v9413
      %v10071 = vmul.f32 1.0, %v10070
      %v10072 = vrcp.pop %v9414
      %v10073 = vmul.f32 1.0, %v10072
      %v10074 = vrcp.pop %v9415
      %v10075 = vmul.f32 1.0, %v10074
      %v10076 = vrcp.pop %v9416
      %v10077 = vmul.f32 1.0, %v10076
      %v10078 = vrcp.pop %v9417
      %v10079 = vmul.f32 1.0, %v10078
      %v10080 = vrcp.pop %v9418
      %v10081 = vmul.f32 1.0, %v10080
      %v10082 = vrcp.pop %v9419
      %v10083 = vmul.f32 1.0, %v10082
      %v10084 = vrcp.pop %v9420
      %v10085 = vmul.f32 1.0, %v10084
      %v10086 = vrcp.pop %v9421
      %v10087 = vmul.f32 1.0, %v10086
      %v10088 = vrcp.pop %v9422
      %v10089 = vmul.f32 1.0, %v10088
      %v10090 = vrcp.pop %v9423
      %v10091 = vmul.f32 1.0, %v10090
      %v10092 = vrcp.pop %v9424
      %v10093 = vmul.f32 1.0, %v10092
      %v10094 = vrcp.pop %v9425
      %v10095 = vmul.f32 1.0, %v10094
      %v10096 = vrcp.pop %v9426
      %v10097 = vmul.f32 1.0, %v10096
      %v10098 = vrcp.pop %v9427
      %v10099 = vmul.f32 1.0, %v10098
      %v10100 = vrcp.pop %v9428
      %v10101 = vmul.f32 1.0, %v10100
      %v10102 = vrcp.pop %v9429
      %v10103 = vmul.f32 1.0, %v10102
      %v10104 = vrcp.pop %v9430
      %v10105 = vmul.f32 1.0, %v10104
      %v10106 = vrcp.pop %v9431
      %v10107 = vmul.f32 1.0, %v10106
      %v10108 = vrcp.pop %v9432
      %v10109 = vmul.f32 1.0, %v10108
      %v10110 = vrcp.pop %v9433
      %v10111 = vmul.f32 1.0, %v10110
      %v10112 = vrcp.pop %v9434
      %v10113 = vmul.f32 1.0, %v10112
      %v10114 = vrcp.pop %v9435
      %v10115 = vmul.f32 1.0, %v10114
      %v10116 = vrcp.pop %v9436
      %v10117 = vmul.f32 1.0, %v10116
      %v10118 = vrcp.pop %v9437
      %v10119 = vmul.f32 1.0, %v10118
      %v10120 = vrcp.pop %v9438
      %v10121 = vmul.f32 1.0, %v10120
      %v10122 = vrcp.pop %v9439
      %v10123 = vmul.f32 1.0, %v10122
      %v10124 = vrcp.pop %v9440
      %v10125 = vmul.f32 1.0, %v10124
      %v10126 = vrcp.pop %v9441
      %v10127 = vmul.f32 1.0, %v10126
      %v10128 = vrcp.pop %v9442
      %v10129 = vmul.f32 1.0, %v10128
      %v10130 = vrcp.pop %v9443
      %v10131 = vmul.f32 1.0, %v10130
      %v10132 = vrcp.pop %v9444
      %v10133 = vmul.f32 1.0, %v10132
      %v10134 = vrcp.pop %v9445
      %v10135 = vmul.f32 1.0, %v10134
      %v10136 = vrcp.pop %v9446
      %v10137 = vmul.f32 1.0, %v10136
      %v10138 = vrcp.pop %v9447
      %v10139 = vmul.f32 1.0, %v10138
      %v10140 = vrcp.pop %v9448
      %v10141 = vmul.f32 1.0, %v10140
      %v10142 = vrcp.pop %v9449
      %v10143 = vmul.f32 1.0, %v10142
      %v10144 = vrcp.pop %v9450
      %v10145 = vmul.f32 1.0, %v10144
      %v10146 = vrcp.pop %v9451
      %v10147 = vmul.f32 1.0, %v10146
      %v10148 = vrcp.pop %v9452
      %v10149 = vmul.f32 1.0, %v10148
      %v10150 = vrcp.pop %v9453
      %v10151 = vmul.f32 1.0, %v10150
      %v10152 = vrcp.pop %v9454
      %v10153 = vmul.f32 1.0, %v10152
      %v10154 = vrcp.pop %v9455
      %v10155 = vmul.f32 1.0, %v10154
      %v10156 = vrcp.pop %v9456
      %v10157 = vmul.f32 1.0, %v10156
      %v10158 = vrcp.pop %v9457
      %v10159 = vmul.f32 1.0, %v10158
      %v10160 = vrcp.pop %v9458
      %v10161 = vmul.f32 1.0, %v10160
      %v10162 = vrcp.pop %v9459
      %v10163 = vmul.f32 1.0, %v10162
      %v10164 = vrcp.pop %v9460
      %v10165 = vmul.f32 1.0, %v10164
      %v10166 = vrcp.pop %v9461
      %v10167 = vmul.f32 1.0, %v10166
      %v10168 = vrcp.pop %v9462
      %v10169 = vmul.f32 1.0, %v10168
      %v10170 = vrcp.pop %v9463
      %v10171 = vmul.f32 1.0, %v10170
      %v10172 = vrcp.pop %v9464
      %v10173 = vmul.f32 1.0, %v10172
      %v10174 = vrcp.pop %v9465
      %v10175 = vmul.f32 1.0, %v10174
      %v10176 = vrcp.pop %v9466
      %v10177 = vmul.f32 1.0, %v10176
      %v10178 = vrcp.pop %v9467
      %v10179 = vmul.f32 1.0, %v10178
      %v10180 = vrcp.pop %v9468
      %v10181 = vmul.f32 1.0, %v10180
      %v10182 = vrcp.pop %v9469
      %v10183 = vmul.f32 1.0, %v10182
      %v10184 = vrcp.pop %v9470
      %v10185 = vmul.f32 1.0, %v10184
      %v10186 = vrcp.pop %v9471
      %v10187 = vmul.f32 1.0, %v10186
      %v10188 = vrcp.pop %v9472
      %v10189 = vmul.f32 1.0, %v10188
      %v10190 = vrcp.pop %v9473
      %v10191 = vmul.f32 1.0, %v10190
      %v10192 = vrcp.pop %v9474
      %v10193 = vmul.f32 1.0, %v10192
      %v10194 = vrcp.pop %v9475
      %v10195 = vmul.f32 1.0, %v10194
      %v10196 = vrcp.pop %v9476
      %v10197 = vmul.f32 1.0, %v10196
      %v10198 = vrcp.pop %v9477
      %v10199 = vmul.f32 1.0, %v10198
      %v10200 = vrcp.pop %v9478
      %v10201 = vmul.f32 1.0, %v10200
      %v10202 = vrcp.pop %v9479
      %v10203 = vmul.f32 1.0, %v10202
      %v10204 = vrcp.pop %v9480
      %v10205 = vmul.f32 1.0, %v10204
      %v10206 = vrcp.pop %v9481
      %v10207 = vmul.f32 1.0, %v10206
      %v10208 = vrcp.pop %v9482
      %v10209 = vmul.f32 1.0, %v10208
      %v10210 = vrcp.pop %v9483
      %v10211 = vmul.f32 1.0, %v10210
      %v10212 = vrcp.pop %v9484
      %v10213 = vmul.f32 1.0, %v10212
      %v10214 = vrcp.pop %v9485
      %v10215 = vmul.f32 1.0, %v10214
      %v10216 = vrcp.pop %v9486
      %v10217 = vmul.f32 1.0, %v10216
      %v10218 = vrcp.pop %v9487
      %v10219 = vmul.f32 1.0, %v10218
      %v10220 = vrcp.pop %v9488
      %v10221 = vmul.f32 1.0, %v10220
      %v10222 = vrcp.pop %v9489
      %v10223 = vmul.f32 1.0, %v10222
      %v10224 = vrcp.pop %v9490
      %v10225 = vmul.f32 1.0, %v10224
      %v10226 = vrcp.pop %v9491
      %v10227 = vmul.f32 1.0, %v10226
      %v10228 = vrcp.pop %v9492
      %v10229 = vmul.f32 1.0, %v10228
      %v10230 = vrcp.pop %v9493
      %v10231 = vmul.f32 1.0, %v10230
      %v10232 = vrcp.pop %v9494
      %v10233 = vmul.f32 1.0, %v10232
      %v10234 = vrcp.pop %v9495
      %v10235 = vmul.f32 1.0, %v10234
      %v10236 = vrcp.pop %v9496
      %v10237 = vmul.f32 1.0, %v10236
      %v10238 = vrcp.pop %v9497
      %v10239 = vmul.f32 1.0, %v10238
      %v10240 = vrcp.pop %v9498
      %v10241 = vmul.f32 1.0, %v10240
      %v10242 = vrcp.pop %v9499
      %v10243 = vmul.f32 1.0, %v10242
      %v10244 = vrcp.pop %v9500
      %v10245 = vmul.f32 1.0, %v10244
      %v10246 = vrcp.pop %v9501
      %v10247 = vmul.f32 1.0, %v10246
      %v10248 = vrcp.pop %v9502
      %v10249 = vmul.f32 1.0, %v10248
      %v10250 = vrcp.pop %v9503
      %v10251 = vmul.f32 1.0, %v10250
      %v10252 = vrcp.pop %v9504
      %v10253 = vmul.f32 1.0, %v10252
      %v10254 = vrcp.pop %v9505
      %v10255 = vmul.f32 1.0, %v10254
      %v10256 = vrcp.pop %v9506
      %v10257 = vmul.f32 1.0, %v10256
      %v10258 = vrcp.pop %v9507
      %v10259 = vmul.f32 1.0, %v10258
      %v10260 = vrcp.pop %v9508
      %v10261 = vmul.f32 1.0, %v10260
      %v10262 = vrcp.pop %v9509
      %v10263 = vmul.f32 1.0, %v10262
      %v10264 = vrcp.pop %v9510
      %v10265 = vmul.f32 1.0, %v10264
      %v10266 = vrcp.pop %v9511
      %v10267 = vmul.f32 1.0, %v10266
      %v10268 = vrcp.pop %v9512
      %v10269 = vmul.f32 1.0, %v10268
      %v10270 = vrcp.pop %v9513
      %v10271 = vmul.f32 1.0, %v10270
      %v10272 = vrcp.pop %v9514
      %v10273 = vmul.f32 1.0, %v10272
      %v10274 = vrcp.pop %v9515
      %v10275 = vmul.f32 1.0, %v10274
      %v10276 = vrcp.pop %v9516
      %v10277 = vmul.f32 1.0, %v10276
      %v10278 = vrcp.pop %v9517
      %v10279 = vmul.f32 1.0, %v10278
      %v10280 = vrcp.pop %v9518
      %v10281 = vmul.f32 1.0, %v10280
      %v10282 = vrcp.pop %v9519
      %v10283 = vmul.f32 1.0, %v10282
      %v10284 = vrcp.pop %v9520
      %v10285 = vmul.f32 1.0, %v10284
      %v10286 = vrcp.pop %v9521
      %v10287 = vmul.f32 1.0, %v10286
      %v10288 = vrcp.pop %v9522
      %v10289 = vmul.f32 1.0, %v10288
      %v10290 = vrcp.pop %v9523
      %v10291 = vmul.f32 1.0, %v10290
      %v10292 = vrcp.pop %v9524
      %v10293 = vmul.f32 1.0, %v10292
      %v10294 = vrcp.pop %v9525
      %v10295 = vmul.f32 1.0, %v10294
      %v10296 = vrcp.pop %v9526
      %v10297 = vmul.f32 1.0, %v10296
      %v10298 = vrcp.pop %v9527
      %v10299 = vmul.f32 1.0, %v10298
      %v10300 = vrcp.pop %v9528
      %v10301 = vmul.f32 1.0, %v10300
      %v10302 = vrcp.pop %v9529
      %v10303 = vmul.f32 1.0, %v10302
      %v10304 = vrcp.pop %v9530
      %v10305 = vmul.f32 1.0, %v10304
      %v10306 = vrcp.pop %v9531
      %v10307 = vmul.f32 1.0, %v10306
      %v10308 = vrcp.pop %v9532
      %v10309 = vmul.f32 1.0, %v10308
      %v10310 = vrcp.pop %v9533
      %v10311 = vmul.f32 1.0, %v10310
      %v10312 = vrcp.pop %v9534
      %v10313 = vmul.f32 1.0, %v10312
      %v10314 = vrcp.pop %v9535
      %v10315 = vmul.f32 1.0, %v10314
      %v10316 = vrcp.pop %v9536
      %v10317 = vmul.f32 1.0, %v10316
      %v10318 = vrcp.pop %v9537
      %v10319 = vmul.f32 1.0, %v10318
      %v10320 = vrcp.pop %v9538
      %v10321 = vmul.f32 1.0, %v10320
      %v10322 = vrcp.pop %v9539
      %v10323 = vmul.f32 1.0, %v10322
      %v10324 = vrcp.pop %v9540
      %v10325 = vmul.f32 1.0, %v10324
      %v10326 = vrcp.pop %v9541
      %v10327 = vmul.f32 1.0, %v10326
      %v10328 = vrcp.pop %v9542
      %v10329 = vmul.f32 1.0, %v10328
      %v10330 = vrcp.pop %v9543
      %v10331 = vmul.f32 1.0, %v10330
      %v10332 = vrcp.pop %v9544
      %v10333 = vmul.f32 1.0, %v10332
      %v10334 = vrcp.pop %v9545
      %v10335 = vmul.f32 1.0, %v10334
      %v10336 = vrcp.pop %v9546
      %v10337 = vmul.f32 1.0, %v10336
      %v10338 = vrcp.pop %v9547
      %v10339 = vmul.f32 1.0, %v10338
      %v10340 = vrcp.pop %v9548
      %v10341 = vmul.f32 1.0, %v10340
      %v10342 = vrcp.pop %v9549
      %v10343 = vmul.f32 1.0, %v10342
      %v10344 = vrcp.pop %v9550
      %v10345 = vmul.f32 1.0, %v10344
      %v10346 = vrcp.pop %v9551
      %v10347 = vmul.f32 1.0, %v10346
      %v10348 = vrcp.pop %v9552
      %v10349 = vmul.f32 1.0, %v10348
      %v10350 = vrcp.pop %v9553
      %v10351 = vmul.f32 1.0, %v10350
      %v10352 = vrcp.pop %v9554
      %v10353 = vmul.f32 1.0, %v10352
      %v10354 = vrcp.pop %v9555
      %v10355 = vmul.f32 1.0, %v10354
      %v10356 = vrcp.pop %v9556
      %v10357 = vmul.f32 1.0, %v10356
      %v10358 = vrcp.pop %v9557
      %v10359 = vmul.f32 1.0, %v10358
      %v10360 = vrcp.pop %v9558
      %v10361 = vmul.f32 1.0, %v10360
      %v10362 = vrcp.pop %v9559
      %v10363 = vmul.f32 1.0, %v10362
      %v10364 = vrcp.pop %v9560
      %v10365 = vmul.f32 1.0, %v10364
      %v10366 = vrcp.pop %v9561
      %v10367 = vmul.f32 1.0, %v10366
      %v10368 = vrcp.pop %v9562
      %v10369 = vmul.f32 1.0, %v10368
      %v10370 = vrcp.pop %v9563
      %v10371 = vmul.f32 1.0, %v10370
      %v10372 = vrcp.pop %v9564
      %v10373 = vmul.f32 1.0, %v10372
      %v10374 = vrcp.pop %v9565
      %v10375 = vmul.f32 1.0, %v10374
      %v10376 = vrcp.pop %v9566
      %v10377 = vmul.f32 1.0, %v10376
      %v10378 = vrcp.pop %v9567
      %v10379 = vmul.f32 1.0, %v10378
      %v10380 = vrcp.pop %v9568
      %v10381 = vmul.f32 1.0, %v10380
      %v10382 = vrcp.pop %v9569
      %v10383 = vmul.f32 1.0, %v10382
      %v10384 = vrcp.pop %v9570
      %v10385 = vmul.f32 1.0, %v10384
      %v10386 = vrcp.pop %v9571
      %v10387 = vmul.f32 1.0, %v10386
      %v10388 = vrcp.pop %v9572
      %v10389 = vmul.f32 1.0, %v10388
      %v10390 = vrcp.pop %v9573
      %v10391 = vmul.f32 1.0, %v10390
      %v10392 = vrcp.pop %v9574
      %v10393 = vmul.f32 1.0, %v10392
      %v10394 = vrcp.pop %v9575
      %v10395 = vmul.f32 1.0, %v10394
      %v10396 = vrcp.pop %v9576
      %v10397 = vmul.f32 1.0, %v10396
      %v10398 = vrcp.pop %v9577
      %v10399 = vmul.f32 1.0, %v10398
      %v10400 = vrcp.pop %v9578
      %v10401 = vmul.f32 1.0, %v10400
      %v10402 = vrcp.pop %v9579
      %v10403 = vmul.f32 1.0, %v10402
      %v10404 = vrcp.pop %v9580
      %v10405 = vmul.f32 1.0, %v10404
      %v10406 = vrcp.pop %v9581
      %v10407 = vmul.f32 1.0, %v10406
      %v10408 = vrcp.pop %v9582
      %v10409 = vmul.f32 1.0, %v10408
      %v10410 = vrcp.pop %v9583
      %v10411 = vmul.f32 1.0, %v10410
      %v10412 = vrcp.pop %v9584
      %v10413 = vmul.f32 1.0, %v10412
      %v10414 = vrcp.pop %v9585
      %v10415 = vmul.f32 1.0, %v10414
      %v10416 = vrcp.pop %v9586
      %v10417 = vmul.f32 1.0, %v10416
      %v10418 = vrcp.pop %v9587
      %v10419 = vmul.f32 1.0, %v10418
      %v10420 = vrcp.pop %v9588
      %v10421 = vmul.f32 1.0, %v10420
      %v10422 = vrcp.pop %v9589
      %v10423 = vmul.f32 1.0, %v10422
      %v10424 = vrcp.pop %v9590
      %v10425 = vmul.f32 1.0, %v10424
      %v10426 = vrcp.pop %v9591
      %v10427 = vmul.f32 1.0, %v10426
      %v10428 = vrcp.pop %v9592
      %v10429 = vmul.f32 1.0, %v10428
      %v10430 = vrcp.pop %v9593
      %v10431 = vmul.f32 1.0, %v10430
      %v10432 = vrcp.pop %v9594
      %v10433 = vmul.f32 1.0, %v10432
      %v10434 = vrcp.pop %v9595
      %v10435 = vmul.f32 1.0, %v10434
      %v10436 = vrcp.pop %v9596
      %v10437 = vmul.f32 1.0, %v10436
      %v10438 = vrcp.pop %v9597
      %v10439 = vmul.f32 1.0, %v10438
      %v10440 = vrcp.pop %v9598
      %v10441 = vmul.f32 1.0, %v10440
      %v10442 = vrcp.pop %v9599
      %v10443 = vmul.f32 1.0, %v10442
      %v10444 = vrcp.pop %v9600
      %v10445 = vmul.f32 1.0, %v10444
      %v10446 = vrcp.pop %v9601
      %v10447 = vmul.f32 1.0, %v10446
      %v10448 = vrcp.pop %v9602
      %v10449 = vmul.f32 1.0, %v10448
      %v10450 = vrcp.pop %v9603
      %v10451 = vmul.f32 1.0, %v10450
      %v10452 = vrcp.pop %v9604
      %v10453 = vmul.f32 1.0, %v10452
      %v10454 = vrcp.pop %v9605
      %v10455 = vmul.f32 1.0, %v10454
      %v10456 = vrcp.pop %v9606
      %v10457 = vmul.f32 1.0, %v10456
      %v10458 = vrcp.pop %v9607
      %v10459 = vmul.f32 1.0, %v10458
      %v10460 = vrcp.pop %v9608
      %v10461 = vmul.f32 1.0, %v10460
      %v10462 = vrcp.pop %v9609
      %v10463 = vmul.f32 1.0, %v10462
      %v10464 = vrcp.pop %v9610
      %v10465 = vmul.f32 1.0, %v10464
      %v10466 = vrcp.pop %v9611
      %v10467 = vmul.f32 1.0, %v10466
      %v10468 = vrcp.pop %v9612
      %v10469 = vmul.f32 1.0, %v10468
      %v10470 = vrcp.pop %v9613
      %v10471 = vmul.f32 1.0, %v10470
      %v10472 = vrcp.pop %v9614
      %v10473 = vmul.f32 1.0, %v10472
      %v10474 = vrcp.pop %v9615
      %v10475 = vmul.f32 1.0, %v10474
      %v10476 = vrcp.pop %v9616
      %v10477 = vmul.f32 1.0, %v10476
      %v10478 = vrcp.pop %v9617
      %v10479 = vmul.f32 1.0, %v10478
      %v10480 = vrcp.pop %v9618
      %v10481 = vmul.f32 1.0, %v10480
      %v10482 = vrcp.pop %v9619
      %v10483 = vmul.f32 1.0, %v10482
      %v10484 = vrcp.pop %v9620
      %v10485 = vmul.f32 1.0, %v10484
      %v10486 = vrcp.pop %v9621
      %v10487 = vmul.f32 1.0, %v10486
      %v10488 = vrcp.pop %v9622
      %v10489 = vmul.f32 1.0, %v10488
      %v10490 = vrcp.pop %v9623
      %v10491 = vmul.f32 1.0, %v10490
      %v10492 = vrcp.pop %v9624
      %v10493 = vmul.f32 1.0, %v10492
      %v10494 = vrcp.pop %v9625
      %v10495 = vmul.f32 1.0, %v10494
      %v10496 = vrcp.pop %v9626
      %v10497 = vmul.f32 1.0, %v10496
      %v10498 = vrcp.pop %v9627
      %v10499 = vmul.f32 1.0, %v10498
      %v10500 = vrcp.pop %v9628
      %v10501 = vmul.f32 1.0, %v10500
      %v10502 = vrcp.pop %v9629
      %v10503 = vmul.f32 1.0, %v10502
      %v10504 = vrcp.pop %v9630
      %v10505 = vmul.f32 1.0, %v10504
      %v10506 = vrcp.pop %v9631
      %v10507 = vmul.f32 1.0, %v10506
      %v10508 = vrcp.pop %v9632
      %v10509 = vmul.f32 1.0, %v10508
      %v10510 = vrcp.pop %v9633
      %v10511 = vmul.f32 1.0, %v10510
      %v10512 = vrcp.pop %v9634
      %v10513 = vmul.f32 1.0, %v10512
      %v10514 = vrcp.pop %v9635
      %v10515 = vmul.f32 1.0, %v10514
      %v10516 = vrcp.pop %v9636
      %v10517 = vmul.f32 1.0, %v10516
      %v10518 = vrcp.pop %v9637
      %v10519 = vmul.f32 1.0, %v10518
      %v10520 = vrcp.pop %v9638
      %v10521 = vmul.f32 1.0, %v10520
      %v10522 = vrcp.pop %v9639
      %v10523 = vmul.f32 1.0, %v10522
      %v10524 = vrcp.pop %v9640
      %v10525 = vmul.f32 1.0, %v10524
      %v10526 = vrcp.pop %v9641
      %v10527 = vmul.f32 1.0, %v10526
      %v10528 = vrcp.pop %v9642
      %v10529 = vmul.f32 1.0, %v10528
      %v10530 = vrcp.pop %v9643
      %v10531 = vmul.f32 1.0, %v10530
      %v10532 = vrcp.pop %v9644
      %v10533 = vmul.f32 1.0, %v10532
      %v10534 = vrcp.pop %v9645
      %v10535 = vmul.f32 1.0, %v10534
      %v10536 = vrcp.pop %v9646
      %v10537 = vmul.f32 1.0, %v10536
      %v10538 = vrcp.pop %v9647
      %v10539 = vmul.f32 1.0, %v10538
      %v10540 = vrcp.pop %v9648
      %v10541 = vmul.f32 1.0, %v10540
      %v10542 = vrcp.pop %v9649
      %v10543 = vmul.f32 1.0, %v10542
      %v10544 = vrcp.pop %v9650
      %v10545 = vmul.f32 1.0, %v10544
      %v10546 = vrcp.pop %v9651
      %v10547 = vmul.f32 1.0, %v10546
      %v10548 = vpack.c.bf16 %v9667, %v9653
      %v10549 = vpack.c.bf16 %v9669, %v9655
      %v10550 = vpack.c.bf16 %v9671, %v9657
      %v10551 = vpack.c.bf16 %v9673, %v9659
      %v10552 = vpack.c.bf16 %v9675, %v9661
      %v10553 = vpack.c.bf16 %v9677, %v9663
      %v10554 = vpack.c.bf16 %v9679, %v9665
      %v10555 = vpack.c.bf16 %v9695, %v9681
      %v10556 = vpack.c.bf16 %v9697, %v9683
      %v10557 = vpack.c.bf16 %v9699, %v9685
      %v10558 = vpack.c.bf16 %v9701, %v9687
      %v10559 = vpack.c.bf16 %v9703, %v9689
      %v10560 = vpack.c.bf16 %v9705, %v9691
      %v10561 = vpack.c.bf16 %v9707, %v9693
      %v10562 = vpack.c.bf16 %v9723, %v9709
      %v10563 = vpack.c.bf16 %v9725, %v9711
      %v10564 = vpack.c.bf16 %v9727, %v9713
      %v10565 = vpack.c.bf16 %v9729, %v9715
      %v10566 = vpack.c.bf16 %v9731, %v9717
      %v10567 = vpack.c.bf16 %v9733, %v9719
      %v10568 = vpack.c.bf16 %v9735, %v9721
      %v10569 = vpack.c.bf16 %v9751, %v9737
      %v10570 = vpack.c.bf16 %v9753, %v9739
      %v10571 = vpack.c.bf16 %v9755, %v9741
      %v10572 = vpack.c.bf16 %v9757, %v9743
      %v10573 = vpack.c.bf16 %v9759, %v9745
      %v10574 = vpack.c.bf16 %v9761, %v9747
      %v10575 = vpack.c.bf16 %v9763, %v9749
      %v10576 = vpack.c.bf16 %v9779, %v9765
      %v10577 = vpack.c.bf16 %v9781, %v9767
      %v10578 = vpack.c.bf16 %v9783, %v9769
      %v10579 = vpack.c.bf16 %v9785, %v9771
      %v10580 = vpack.c.bf16 %v9787, %v9773
      %v10581 = vpack.c.bf16 %v9789, %v9775
      %v10582 = vpack.c.bf16 %v9791, %v9777
      %v10583 = vpack.c.bf16 %v9807, %v9793
      %v10584 = vpack.c.bf16 %v9809, %v9795
      %v10585 = vpack.c.bf16 %v9811, %v9797
      %v10586 = vpack.c.bf16 %v9813, %v9799
      %v10587 = vpack.c.bf16 %v9815, %v9801
      %v10588 = vpack.c.bf16 %v9817, %v9803
      %v10589 = vpack.c.bf16 %v9819, %v9805
      %v10590 = vpack.c.bf16 %v9835, %v9821
      %v10591 = vpack.c.bf16 %v9837, %v9823
      %v10592 = vpack.c.bf16 %v9839, %v9825
      %v10593 = vpack.c.bf16 %v9841, %v9827
      %v10594 = vpack.c.bf16 %v9843, %v9829
      %v10595 = vpack.c.bf16 %v9845, %v9831
      %v10596 = vpack.c.bf16 %v9847, %v9833
      %v10597 = vpack.c.bf16 %v9863, %v9849
      %v10598 = vpack.c.bf16 %v9865, %v9851
      %v10599 = vpack.c.bf16 %v9867, %v9853
      %v10600 = vpack.c.bf16 %v9869, %v9855
      %v10601 = vpack.c.bf16 %v9871, %v9857
      %v10602 = vpack.c.bf16 %v9873, %v9859
      %v10603 = vpack.c.bf16 %v9875, %v9861
      %v10604 = vpack.c.bf16 %v9891, %v9877
      %v10605 = vpack.c.bf16 %v9893, %v9879
      %v10606 = vpack.c.bf16 %v9895, %v9881
      %v10607 = vpack.c.bf16 %v9897, %v9883
      %v10608 = vpack.c.bf16 %v9899, %v9885
      %v10609 = vpack.c.bf16 %v9901, %v9887
      %v10610 = vpack.c.bf16 %v9903, %v9889
      %v10611 = vpack.c.bf16 %v9919, %v9905
      %v10612 = vpack.c.bf16 %v9921, %v9907
      %v10613 = vpack.c.bf16 %v9923, %v9909
      %v10614 = vpack.c.bf16 %v9925, %v9911
      %v10615 = vpack.c.bf16 %v9927, %v9913
      %v10616 = vpack.c.bf16 %v9929, %v9915
      %v10617 = vpack.c.bf16 %v9931, %v9917
      %v10618 = vpack.c.bf16 %v9947, %v9933
      %v10619 = vpack.c.bf16 %v9949, %v9935
      %v10620 = vpack.c.bf16 %v9951, %v9937
      %v10621 = vpack.c.bf16 %v9953, %v9939
      %v10622 = vpack.c.bf16 %v9955, %v9941
      %v10623 = vpack.c.bf16 %v9957, %v9943
      %v10624 = vpack.c.bf16 %v9959, %v9945
      %v10625 = vpack.c.bf16 %v9975, %v9961
      %v10626 = vpack.c.bf16 %v9977, %v9963
      %v10627 = vpack.c.bf16 %v9979, %v9965
      %v10628 = vpack.c.bf16 %v9981, %v9967
      %v10629 = vpack.c.bf16 %v9983, %v9969
      %v10630 = vpack.c.bf16 %v9985, %v9971
      %v10631 = vpack.c.bf16 %v9987, %v9973
      %v10632 = vpack.c.bf16 %v10003, %v9989
      %v10633 = vpack.c.bf16 %v10005, %v9991
      %v10634 = vpack.c.bf16 %v10007, %v9993
      %v10635 = vpack.c.bf16 %v10009, %v9995
      %v10636 = vpack.c.bf16 %v10011, %v9997
      %v10637 = vpack.c.bf16 %v10013, %v9999
      %v10638 = vpack.c.bf16 %v10015, %v10001
      %v10639 = vpack.c.bf16 %v10031, %v10017
      %v10640 = vpack.c.bf16 %v10033, %v10019
      %v10641 = vpack.c.bf16 %v10035, %v10021
      %v10642 = vpack.c.bf16 %v10037, %v10023
      %v10643 = vpack.c.bf16 %v10039, %v10025
      %v10644 = vpack.c.bf16 %v10041, %v10027
      %v10645 = vpack.c.bf16 %v10043, %v10029
      %v10646 = vpack.c.bf16 %v10059, %v10045
      %v10647 = vpack.c.bf16 %v10061, %v10047
      %v10648 = vpack.c.bf16 %v10063, %v10049
      %v10649 = vpack.c.bf16 %v10065, %v10051
      %v10650 = vpack.c.bf16 %v10067, %v10053
      %v10651 = vpack.c.bf16 %v10069, %v10055
      %v10652 = vpack.c.bf16 %v10071, %v10057
      %v10653 = vpack.c.bf16 %v10087, %v10073
      %v10654 = vpack.c.bf16 %v10089, %v10075
      %v10655 = vpack.c.bf16 %v10091, %v10077
      %v10656 = vpack.c.bf16 %v10093, %v10079
      %v10657 = vpack.c.bf16 %v10095, %v10081
      %v10658 = vpack.c.bf16 %v10097, %v10083
      %v10659 = vpack.c.bf16 %v10099, %v10085
      %v10660 = vpack.c.bf16 %v10115, %v10101
      %v10661 = vpack.c.bf16 %v10117, %v10103
      %v10662 = vpack.c.bf16 %v10119, %v10105
      %v10663 = vpack.c.bf16 %v10121, %v10107
      %v10664 = vpack.c.bf16 %v10123, %v10109
      %v10665 = vpack.c.bf16 %v10125, %v10111
      %v10666 = vpack.c.bf16 %v10127, %v10113
      %v10667 = vpack.c.bf16 %v10143, %v10129
      %v10668 = vpack.c.bf16 %v10145, %v10131
      %v10669 = vpack.c.bf16 %v10147, %v10133
      %v10670 = vpack.c.bf16 %v10149, %v10135
      %v10671 = vpack.c.bf16 %v10151, %v10137
      %v10672 = vpack.c.bf16 %v10153, %v10139
      %v10673 = vpack.c.bf16 %v10155, %v10141
      %v10674 = vpack.c.bf16 %v10171, %v10157
      %v10675 = vpack.c.bf16 %v10173, %v10159
      %v10676 = vpack.c.bf16 %v10175, %v10161
      %v10677 = vpack.c.bf16 %v10177, %v10163
      %v10678 = vpack.c.bf16 %v10179, %v10165
      %v10679 = vpack.c.bf16 %v10181, %v10167
      %v10680 = vpack.c.bf16 %v10183, %v10169
      %v10681 = vpack.c.bf16 %v10199, %v10185
      %v10682 = vpack.c.bf16 %v10201, %v10187
      %v10683 = vpack.c.bf16 %v10203, %v10189
      %v10684 = vpack.c.bf16 %v10205, %v10191
      %v10685 = vpack.c.bf16 %v10207, %v10193
      %v10686 = vpack.c.bf16 %v10209, %v10195
      %v10687 = vpack.c.bf16 %v10211, %v10197
      %v10688 = vpack.c.bf16 %v10227, %v10213
      %v10689 = vpack.c.bf16 %v10229, %v10215
      %v10690 = vpack.c.bf16 %v10231, %v10217
      %v10691 = vpack.c.bf16 %v10233, %v10219
      %v10692 = vpack.c.bf16 %v10235, %v10221
      %v10693 = vpack.c.bf16 %v10237, %v10223
      %v10694 = vpack.c.bf16 %v10239, %v10225
      %v10695 = vpack.c.bf16 %v10255, %v10241
      %v10696 = vpack.c.bf16 %v10257, %v10243
      %v10697 = vpack.c.bf16 %v10259, %v10245
      %v10698 = vpack.c.bf16 %v10261, %v10247
      %v10699 = vpack.c.bf16 %v10263, %v10249
      %v10700 = vpack.c.bf16 %v10265, %v10251
      %v10701 = vpack.c.bf16 %v10267, %v10253
      %v10702 = vpack.c.bf16 %v10283, %v10269
      %v10703 = vpack.c.bf16 %v10285, %v10271
      %v10704 = vpack.c.bf16 %v10287, %v10273
      %v10705 = vpack.c.bf16 %v10289, %v10275
      %v10706 = vpack.c.bf16 %v10291, %v10277
      %v10707 = vpack.c.bf16 %v10293, %v10279
      %v10708 = vpack.c.bf16 %v10295, %v10281
      %v10709 = vpack.c.bf16 %v10311, %v10297
      %v10710 = vpack.c.bf16 %v10313, %v10299
      %v10711 = vpack.c.bf16 %v10315, %v10301
      %v10712 = vpack.c.bf16 %v10317, %v10303
      %v10713 = vpack.c.bf16 %v10319, %v10305
      %v10714 = vpack.c.bf16 %v10321, %v10307
      %v10715 = vpack.c.bf16 %v10323, %v10309
      %v10716 = vpack.c.bf16 %v10339, %v10325
      %v10717 = vpack.c.bf16 %v10341, %v10327
      %v10718 = vpack.c.bf16 %v10343, %v10329
      %v10719 = vpack.c.bf16 %v10345, %v10331
      %v10720 = vpack.c.bf16 %v10347, %v10333
      %v10721 = vpack.c.bf16 %v10349, %v10335
      %v10722 = vpack.c.bf16 %v10351, %v10337
      %v10723 = vpack.c.bf16 %v10367, %v10353
      %v10724 = vpack.c.bf16 %v10369, %v10355
      %v10725 = vpack.c.bf16 %v10371, %v10357
      %v10726 = vpack.c.bf16 %v10373, %v10359
      %v10727 = vpack.c.bf16 %v10375, %v10361
      %v10728 = vpack.c.bf16 %v10377, %v10363
      %v10729 = vpack.c.bf16 %v10379, %v10365
      %v10730 = vpack.c.bf16 %v10395, %v10381
      %v10731 = vpack.c.bf16 %v10397, %v10383
      %v10732 = vpack.c.bf16 %v10399, %v10385
      %v10733 = vpack.c.bf16 %v10401, %v10387
      %v10734 = vpack.c.bf16 %v10403, %v10389
      %v10735 = vpack.c.bf16 %v10405, %v10391
      %v10736 = vpack.c.bf16 %v10407, %v10393
      %v10737 = vpack.c.bf16 %v10423, %v10409
      %v10738 = vpack.c.bf16 %v10425, %v10411
      %v10739 = vpack.c.bf16 %v10427, %v10413
      %v10740 = vpack.c.bf16 %v10429, %v10415
      %v10741 = vpack.c.bf16 %v10431, %v10417
      %v10742 = vpack.c.bf16 %v10433, %v10419
      %v10743 = vpack.c.bf16 %v10435, %v10421
      %v10744 = vpack.c.bf16 %v10451, %v10437
      %v10745 = vpack.c.bf16 %v10453, %v10439
      %v10746 = vpack.c.bf16 %v10455, %v10441
      %v10747 = vpack.c.bf16 %v10457, %v10443
      %v10748 = vpack.c.bf16 %v10459, %v10445
      %v10749 = vpack.c.bf16 %v10461, %v10447
      %v10750 = vpack.c.bf16 %v10463, %v10449
      %v10751 = vpack.c.bf16 %v10479, %v10465
      %v10752 = vpack.c.bf16 %v10481, %v10467
      %v10753 = vpack.c.bf16 %v10483, %v10469
      %v10754 = vpack.c.bf16 %v10485, %v10471
      %v10755 = vpack.c.bf16 %v10487, %v10473
      %v10756 = vpack.c.bf16 %v10489, %v10475
      %v10757 = vpack.c.bf16 %v10491, %v10477
      %v10758 = vpack.c.bf16 %v10507, %v10493
      %v10759 = vpack.c.bf16 %v10509, %v10495
      %v10760 = vpack.c.bf16 %v10511, %v10497
      %v10761 = vpack.c.bf16 %v10513, %v10499
      %v10762 = vpack.c.bf16 %v10515, %v10501
      %v10763 = vpack.c.bf16 %v10517, %v10503
      %v10764 = vpack.c.bf16 %v10519, %v10505
      %v10765 = vpack.c.bf16 %v10535, %v10521
      %v10766 = vpack.c.bf16 %v10537, %v10523
      %v10767 = vpack.c.bf16 %v10539, %v10525
      %v10768 = vpack.c.bf16 %v10541, %v10527
      %v10769 = vpack.c.bf16 %v10543, %v10529
      %v10770 = vpack.c.bf16 %v10545, %v10531
      %v10771 = vpack.c.bf16 %v10547, %v10533
      %v10996 = vunpack.c.l.b16 %v10548
      %v10997 = vunpack.c.l.b16 %v10549
      %v10998 = vunpack.c.l.b16 %v10550
      %v10999 = vunpack.c.l.b16 %v10551
      %v11000 = vunpack.c.l.b16 %v10552
      %v11001 = vunpack.c.l.b16 %v10553
      %v11002 = vunpack.c.l.b16 %v10554
      %v11003 = vunpack.c.h.b16 %v10548
      %v11004 = vunpack.c.h.b16 %v10549
      %v11005 = vunpack.c.h.b16 %v10550
      %v11006 = vunpack.c.h.b16 %v10551
      %v11007 = vunpack.c.h.b16 %v10552
      %v11008 = vunpack.c.h.b16 %v10553
      %v11009 = vunpack.c.h.b16 %v10554
      %v11010 = vunpack.c.l.b16 %v10555
      %v11011 = vunpack.c.l.b16 %v10556
      %v11012 = vunpack.c.l.b16 %v10557
      %v11013 = vunpack.c.l.b16 %v10558
      %v11014 = vunpack.c.l.b16 %v10559
      %v11015 = vunpack.c.l.b16 %v10560
      %v11016 = vunpack.c.l.b16 %v10561
      %v11017 = vunpack.c.h.b16 %v10555
      %v11018 = vunpack.c.h.b16 %v10556
      %v11019 = vunpack.c.h.b16 %v10557
      %v11020 = vunpack.c.h.b16 %v10558
      %v11021 = vunpack.c.h.b16 %v10559
      %v11022 = vunpack.c.h.b16 %v10560
      %v11023 = vunpack.c.h.b16 %v10561
      %v11024 = vunpack.c.l.b16 %v10562
      %v11025 = vunpack.c.l.b16 %v10563
      %v11026 = vunpack.c.l.b16 %v10564
      %v11027 = vunpack.c.l.b16 %v10565
      %v11028 = vunpack.c.l.b16 %v10566
      %v11029 = vunpack.c.l.b16 %v10567
      %v11030 = vunpack.c.l.b16 %v10568
      %v11031 = vunpack.c.h.b16 %v10562
      %v11032 = vunpack.c.h.b16 %v10563
      %v11033 = vunpack.c.h.b16 %v10564
      %v11034 = vunpack.c.h.b16 %v10565
      %v11035 = vunpack.c.h.b16 %v10566
      %v11036 = vunpack.c.h.b16 %v10567
      %v11037 = vunpack.c.h.b16 %v10568
      %v11038 = vunpack.c.l.b16 %v10569
      %v11039 = vunpack.c.l.b16 %v10570
      %v11040 = vunpack.c.l.b16 %v10571
      %v11041 = vunpack.c.l.b16 %v10572
      %v11042 = vunpack.c.l.b16 %v10573
      %v11043 = vunpack.c.l.b16 %v10574
      %v11044 = vunpack.c.l.b16 %v10575
      %v11045 = vunpack.c.h.b16 %v10569
      %v11046 = vunpack.c.h.b16 %v10570
      %v11047 = vunpack.c.h.b16 %v10571
      %v11048 = vunpack.c.h.b16 %v10572
      %v11049 = vunpack.c.h.b16 %v10573
      %v11050 = vunpack.c.h.b16 %v10574
      %v11051 = vunpack.c.h.b16 %v10575
      %v11052 = vunpack.c.l.b16 %v10576
      %v11053 = vunpack.c.l.b16 %v10577
      %v11054 = vunpack.c.l.b16 %v10578
      %v11055 = vunpack.c.l.b16 %v10579
      %v11056 = vunpack.c.l.b16 %v10580
      %v11057 = vunpack.c.l.b16 %v10581
      %v11058 = vunpack.c.l.b16 %v10582
      %v11059 = vunpack.c.h.b16 %v10576
      %v11060 = vunpack.c.h.b16 %v10577
      %v11061 = vunpack.c.h.b16 %v10578
      %v11062 = vunpack.c.h.b16 %v10579
      %v11063 = vunpack.c.h.b16 %v10580
      %v11064 = vunpack.c.h.b16 %v10581
      %v11065 = vunpack.c.h.b16 %v10582
      %v11066 = vunpack.c.l.b16 %v10583
      %v11067 = vunpack.c.l.b16 %v10584
      %v11068 = vunpack.c.l.b16 %v10585
      %v11069 = vunpack.c.l.b16 %v10586
      %v11070 = vunpack.c.l.b16 %v10587
      %v11071 = vunpack.c.l.b16 %v10588
      %v11072 = vunpack.c.l.b16 %v10589
      %v11073 = vunpack.c.h.b16 %v10583
      %v11074 = vunpack.c.h.b16 %v10584
      %v11075 = vunpack.c.h.b16 %v10585
      %v11076 = vunpack.c.h.b16 %v10586
      %v11077 = vunpack.c.h.b16 %v10587
      %v11078 = vunpack.c.h.b16 %v10588
      %v11079 = vunpack.c.h.b16 %v10589
      %v11080 = vunpack.c.l.b16 %v10590
      %v11081 = vunpack.c.l.b16 %v10591
      %v11082 = vunpack.c.l.b16 %v10592
      %v11083 = vunpack.c.l.b16 %v10593
      %v11084 = vunpack.c.l.b16 %v10594
      %v11085 = vunpack.c.l.b16 %v10595
      %v11086 = vunpack.c.l.b16 %v10596
      %v11087 = vunpack.c.h.b16 %v10590
      %v11088 = vunpack.c.h.b16 %v10591
      %v11089 = vunpack.c.h.b16 %v10592
      %v11090 = vunpack.c.h.b16 %v10593
      %v11091 = vunpack.c.h.b16 %v10594
      %v11092 = vunpack.c.h.b16 %v10595
      %v11093 = vunpack.c.h.b16 %v10596
      %v11094 = vunpack.c.l.b16 %v10597
      %v11095 = vunpack.c.l.b16 %v10598
      %v11096 = vunpack.c.l.b16 %v10599
      %v11097 = vunpack.c.l.b16 %v10600
      %v11098 = vunpack.c.l.b16 %v10601
      %v11099 = vunpack.c.l.b16 %v10602
      %v11100 = vunpack.c.l.b16 %v10603
      %v11101 = vunpack.c.h.b16 %v10597
      %v11102 = vunpack.c.h.b16 %v10598
      %v11103 = vunpack.c.h.b16 %v10599
      %v11104 = vunpack.c.h.b16 %v10600
      %v11105 = vunpack.c.h.b16 %v10601
      %v11106 = vunpack.c.h.b16 %v10602
      %v11107 = vunpack.c.h.b16 %v10603
      %v11108 = vunpack.c.l.b16 %v10604
      %v11109 = vunpack.c.l.b16 %v10605
      %v11110 = vunpack.c.l.b16 %v10606
      %v11111 = vunpack.c.l.b16 %v10607
      %v11112 = vunpack.c.l.b16 %v10608
      %v11113 = vunpack.c.l.b16 %v10609
      %v11114 = vunpack.c.l.b16 %v10610
      %v11115 = vunpack.c.h.b16 %v10604
      %v11116 = vunpack.c.h.b16 %v10605
      %v11117 = vunpack.c.h.b16 %v10606
      %v11118 = vunpack.c.h.b16 %v10607
      %v11119 = vunpack.c.h.b16 %v10608
      %v11120 = vunpack.c.h.b16 %v10609
      %v11121 = vunpack.c.h.b16 %v10610
      %v11122 = vunpack.c.l.b16 %v10611
      %v11123 = vunpack.c.l.b16 %v10612
      %v11124 = vunpack.c.l.b16 %v10613
      %v11125 = vunpack.c.l.b16 %v10614
      %v11126 = vunpack.c.l.b16 %v10615
      %v11127 = vunpack.c.l.b16 %v10616
      %v11128 = vunpack.c.l.b16 %v10617
      %v11129 = vunpack.c.h.b16 %v10611
      %v11130 = vunpack.c.h.b16 %v10612
      %v11131 = vunpack.c.h.b16 %v10613
      %v11132 = vunpack.c.h.b16 %v10614
      %v11133 = vunpack.c.h.b16 %v10615
      %v11134 = vunpack.c.h.b16 %v10616
      %v11135 = vunpack.c.h.b16 %v10617
      %v11136 = vunpack.c.l.b16 %v10618
      %v11137 = vunpack.c.l.b16 %v10619
      %v11138 = vunpack.c.l.b16 %v10620
      %v11139 = vunpack.c.l.b16 %v10621
      %v11140 = vunpack.c.l.b16 %v10622
      %v11141 = vunpack.c.l.b16 %v10623
      %v11142 = vunpack.c.l.b16 %v10624
      %v11143 = vunpack.c.h.b16 %v10618
      %v11144 = vunpack.c.h.b16 %v10619
      %v11145 = vunpack.c.h.b16 %v10620
      %v11146 = vunpack.c.h.b16 %v10621
      %v11147 = vunpack.c.h.b16 %v10622
      %v11148 = vunpack.c.h.b16 %v10623
      %v11149 = vunpack.c.h.b16 %v10624
      %v11150 = vunpack.c.l.b16 %v10625
      %v11151 = vunpack.c.l.b16 %v10626
      %v11152 = vunpack.c.l.b16 %v10627
      %v11153 = vunpack.c.l.b16 %v10628
      %v11154 = vunpack.c.l.b16 %v10629
      %v11155 = vunpack.c.l.b16 %v10630
      %v11156 = vunpack.c.l.b16 %v10631
      %v11157 = vunpack.c.h.b16 %v10625
      %v11158 = vunpack.c.h.b16 %v10626
      %v11159 = vunpack.c.h.b16 %v10627
      %v11160 = vunpack.c.h.b16 %v10628
      %v11161 = vunpack.c.h.b16 %v10629
      %v11162 = vunpack.c.h.b16 %v10630
      %v11163 = vunpack.c.h.b16 %v10631
      %v11164 = vunpack.c.l.b16 %v10632
      %v11165 = vunpack.c.l.b16 %v10633
      %v11166 = vunpack.c.l.b16 %v10634
      %v11167 = vunpack.c.l.b16 %v10635
      %v11168 = vunpack.c.l.b16 %v10636
      %v11169 = vunpack.c.l.b16 %v10637
      %v11170 = vunpack.c.l.b16 %v10638
      %v11171 = vunpack.c.h.b16 %v10632
      %v11172 = vunpack.c.h.b16 %v10633
      %v11173 = vunpack.c.h.b16 %v10634
      %v11174 = vunpack.c.h.b16 %v10635
      %v11175 = vunpack.c.h.b16 %v10636
      %v11176 = vunpack.c.h.b16 %v10637
      %v11177 = vunpack.c.h.b16 %v10638
      %v11178 = vunpack.c.l.b16 %v10639
      %v11179 = vunpack.c.l.b16 %v10640
      %v11180 = vunpack.c.l.b16 %v10641
      %v11181 = vunpack.c.l.b16 %v10642
      %v11182 = vunpack.c.l.b16 %v10643
      %v11183 = vunpack.c.l.b16 %v10644
      %v11184 = vunpack.c.l.b16 %v10645
      %v11185 = vunpack.c.h.b16 %v10639
      %v11186 = vunpack.c.h.b16 %v10640
      %v11187 = vunpack.c.h.b16 %v10641
      %v11188 = vunpack.c.h.b16 %v10642
      %v11189 = vunpack.c.h.b16 %v10643
      %v11190 = vunpack.c.h.b16 %v10644
      %v11191 = vunpack.c.h.b16 %v10645
      %v11192 = vunpack.c.l.b16 %v10646
      %v11193 = vunpack.c.l.b16 %v10647
      %v11194 = vunpack.c.l.b16 %v10648
      %v11195 = vunpack.c.l.b16 %v10649
      %v11196 = vunpack.c.l.b16 %v10650
      %v11197 = vunpack.c.l.b16 %v10651
      %v11198 = vunpack.c.l.b16 %v10652
      %v11199 = vunpack.c.h.b16 %v10646
      %v11200 = vunpack.c.h.b16 %v10647
      %v11201 = vunpack.c.h.b16 %v10648
      %v11202 = vunpack.c.h.b16 %v10649
      %v11203 = vunpack.c.h.b16 %v10650
      %v11204 = vunpack.c.h.b16 %v10651
      %v11205 = vunpack.c.h.b16 %v10652
      %v11206 = vunpack.c.l.b16 %v10653
      %v11207 = vunpack.c.l.b16 %v10654
      %v11208 = vunpack.c.l.b16 %v10655
      %v11209 = vunpack.c.l.b16 %v10656
      %v11210 = vunpack.c.l.b16 %v10657
      %v11211 = vunpack.c.l.b16 %v10658
      %v11212 = vunpack.c.l.b16 %v10659
      %v11213 = vunpack.c.h.b16 %v10653
      %v11214 = vunpack.c.h.b16 %v10654
      %v11215 = vunpack.c.h.b16 %v10655
      %v11216 = vunpack.c.h.b16 %v10656
      %v11217 = vunpack.c.h.b16 %v10657
      %v11218 = vunpack.c.h.b16 %v10658
      %v11219 = vunpack.c.h.b16 %v10659
      %v11220 = vunpack.c.l.b16 %v10660
      %v11221 = vunpack.c.l.b16 %v10661
      %v11222 = vunpack.c.l.b16 %v10662
      %v11223 = vunpack.c.l.b16 %v10663
      %v11224 = vunpack.c.l.b16 %v10664
      %v11225 = vunpack.c.l.b16 %v10665
      %v11226 = vunpack.c.l.b16 %v10666
      %v11227 = vunpack.c.h.b16 %v10660
      %v11228 = vunpack.c.h.b16 %v10661
      %v11229 = vunpack.c.h.b16 %v10662
      %v11230 = vunpack.c.h.b16 %v10663
      %v11231 = vunpack.c.h.b16 %v10664
      %v11232 = vunpack.c.h.b16 %v10665
      %v11233 = vunpack.c.h.b16 %v10666
      %v11234 = vunpack.c.l.b16 %v10667
      %v11235 = vunpack.c.l.b16 %v10668
      %v11236 = vunpack.c.l.b16 %v10669
      %v11237 = vunpack.c.l.b16 %v10670
      %v11238 = vunpack.c.l.b16 %v10671
      %v11239 = vunpack.c.l.b16 %v10672
      %v11240 = vunpack.c.l.b16 %v10673
      %v11241 = vunpack.c.h.b16 %v10667
      %v11242 = vunpack.c.h.b16 %v10668
      %v11243 = vunpack.c.h.b16 %v10669
      %v11244 = vunpack.c.h.b16 %v10670
      %v11245 = vunpack.c.h.b16 %v10671
      %v11246 = vunpack.c.h.b16 %v10672
      %v11247 = vunpack.c.h.b16 %v10673
      %v11248 = vunpack.c.l.b16 %v10674
      %v11249 = vunpack.c.l.b16 %v10675
      %v11250 = vunpack.c.l.b16 %v10676
      %v11251 = vunpack.c.l.b16 %v10677
      %v11252 = vunpack.c.l.b16 %v10678
      %v11253 = vunpack.c.l.b16 %v10679
      %v11254 = vunpack.c.l.b16 %v10680
      %v11255 = vunpack.c.h.b16 %v10674
      %v11256 = vunpack.c.h.b16 %v10675
      %v11257 = vunpack.c.h.b16 %v10676
      %v11258 = vunpack.c.h.b16 %v10677
      %v11259 = vunpack.c.h.b16 %v10678
      %v11260 = vunpack.c.h.b16 %v10679
      %v11261 = vunpack.c.h.b16 %v10680
      %v11262 = vunpack.c.l.b16 %v10681
      %v11263 = vunpack.c.l.b16 %v10682
      %v11264 = vunpack.c.l.b16 %v10683
      %v11265 = vunpack.c.l.b16 %v10684
      %v11266 = vunpack.c.l.b16 %v10685
      %v11267 = vunpack.c.l.b16 %v10686
      %v11268 = vunpack.c.l.b16 %v10687
      %v11269 = vunpack.c.h.b16 %v10681
      %v11270 = vunpack.c.h.b16 %v10682
      %v11271 = vunpack.c.h.b16 %v10683
      %v11272 = vunpack.c.h.b16 %v10684
      %v11273 = vunpack.c.h.b16 %v10685
      %v11274 = vunpack.c.h.b16 %v10686
      %v11275 = vunpack.c.h.b16 %v10687
      %v11276 = vunpack.c.l.b16 %v10688
      %v11277 = vunpack.c.l.b16 %v10689
      %v11278 = vunpack.c.l.b16 %v10690
      %v11279 = vunpack.c.l.b16 %v10691
      %v11280 = vunpack.c.l.b16 %v10692
      %v11281 = vunpack.c.l.b16 %v10693
      %v11282 = vunpack.c.l.b16 %v10694
      %v11283 = vunpack.c.h.b16 %v10688
      %v11284 = vunpack.c.h.b16 %v10689
      %v11285 = vunpack.c.h.b16 %v10690
      %v11286 = vunpack.c.h.b16 %v10691
      %v11287 = vunpack.c.h.b16 %v10692
      %v11288 = vunpack.c.h.b16 %v10693
      %v11289 = vunpack.c.h.b16 %v10694
      %v11290 = vunpack.c.l.b16 %v10695
      %v11291 = vunpack.c.l.b16 %v10696
      %v11292 = vunpack.c.l.b16 %v10697
      %v11293 = vunpack.c.l.b16 %v10698
      %v11294 = vunpack.c.l.b16 %v10699
      %v11295 = vunpack.c.l.b16 %v10700
      %v11296 = vunpack.c.l.b16 %v10701
      %v11297 = vunpack.c.h.b16 %v10695
      %v11298 = vunpack.c.h.b16 %v10696
      %v11299 = vunpack.c.h.b16 %v10697
      %v11300 = vunpack.c.h.b16 %v10698
      %v11301 = vunpack.c.h.b16 %v10699
      %v11302 = vunpack.c.h.b16 %v10700
      %v11303 = vunpack.c.h.b16 %v10701
      %v11304 = vunpack.c.l.b16 %v10702
      %v11305 = vunpack.c.l.b16 %v10703
      %v11306 = vunpack.c.l.b16 %v10704
      %v11307 = vunpack.c.l.b16 %v10705
      %v11308 = vunpack.c.l.b16 %v10706
      %v11309 = vunpack.c.l.b16 %v10707
      %v11310 = vunpack.c.l.b16 %v10708
      %v11311 = vunpack.c.h.b16 %v10702
      %v11312 = vunpack.c.h.b16 %v10703
      %v11313 = vunpack.c.h.b16 %v10704
      %v11314 = vunpack.c.h.b16 %v10705
      %v11315 = vunpack.c.h.b16 %v10706
      %v11316 = vunpack.c.h.b16 %v10707
      %v11317 = vunpack.c.h.b16 %v10708
      %v11318 = vunpack.c.l.b16 %v10709
      %v11319 = vunpack.c.l.b16 %v10710
      %v11320 = vunpack.c.l.b16 %v10711
      %v11321 = vunpack.c.l.b16 %v10712
      %v11322 = vunpack.c.l.b16 %v10713
      %v11323 = vunpack.c.l.b16 %v10714
      %v11324 = vunpack.c.l.b16 %v10715
      %v11325 = vunpack.c.h.b16 %v10709
      %v11326 = vunpack.c.h.b16 %v10710
      %v11327 = vunpack.c.h.b16 %v10711
      %v11328 = vunpack.c.h.b16 %v10712
      %v11329 = vunpack.c.h.b16 %v10713
      %v11330 = vunpack.c.h.b16 %v10714
      %v11331 = vunpack.c.h.b16 %v10715
      %v11332 = vunpack.c.l.b16 %v10716
      %v11333 = vunpack.c.l.b16 %v10717
      %v11334 = vunpack.c.l.b16 %v10718
      %v11335 = vunpack.c.l.b16 %v10719
      %v11336 = vunpack.c.l.b16 %v10720
      %v11337 = vunpack.c.l.b16 %v10721
      %v11338 = vunpack.c.l.b16 %v10722
      %v11339 = vunpack.c.h.b16 %v10716
      %v11340 = vunpack.c.h.b16 %v10717
      %v11341 = vunpack.c.h.b16 %v10718
      %v11342 = vunpack.c.h.b16 %v10719
      %v11343 = vunpack.c.h.b16 %v10720
      %v11344 = vunpack.c.h.b16 %v10721
      %v11345 = vunpack.c.h.b16 %v10722
      %v11346 = vunpack.c.l.b16 %v10723
      %v11347 = vunpack.c.l.b16 %v10724
      %v11348 = vunpack.c.l.b16 %v10725
      %v11349 = vunpack.c.l.b16 %v10726
      %v11350 = vunpack.c.l.b16 %v10727
      %v11351 = vunpack.c.l.b16 %v10728
      %v11352 = vunpack.c.l.b16 %v10729
      %v11353 = vunpack.c.h.b16 %v10723
      %v11354 = vunpack.c.h.b16 %v10724
      %v11355 = vunpack.c.h.b16 %v10725
      %v11356 = vunpack.c.h.b16 %v10726
      %v11357 = vunpack.c.h.b16 %v10727
      %v11358 = vunpack.c.h.b16 %v10728
      %v11359 = vunpack.c.h.b16 %v10729
      %v11360 = vunpack.c.l.b16 %v10730
      %v11361 = vunpack.c.l.b16 %v10731
      %v11362 = vunpack.c.l.b16 %v10732
      %v11363 = vunpack.c.l.b16 %v10733
      %v11364 = vunpack.c.l.b16 %v10734
      %v11365 = vunpack.c.l.b16 %v10735
      %v11366 = vunpack.c.l.b16 %v10736
      %v11367 = vunpack.c.h.b16 %v10730
      %v11368 = vunpack.c.h.b16 %v10731
      %v11369 = vunpack.c.h.b16 %v10732
      %v11370 = vunpack.c.h.b16 %v10733
      %v11371 = vunpack.c.h.b16 %v10734
      %v11372 = vunpack.c.h.b16 %v10735
      %v11373 = vunpack.c.h.b16 %v10736
      %v11374 = vunpack.c.l.b16 %v10737
      %v11375 = vunpack.c.l.b16 %v10738
      %v11376 = vunpack.c.l.b16 %v10739
      %v11377 = vunpack.c.l.b16 %v10740
      %v11378 = vunpack.c.l.b16 %v10741
      %v11379 = vunpack.c.l.b16 %v10742
      %v11380 = vunpack.c.l.b16 %v10743
      %v11381 = vunpack.c.h.b16 %v10737
      %v11382 = vunpack.c.h.b16 %v10738
      %v11383 = vunpack.c.h.b16 %v10739
      %v11384 = vunpack.c.h.b16 %v10740
      %v11385 = vunpack.c.h.b16 %v10741
      %v11386 = vunpack.c.h.b16 %v10742
      %v11387 = vunpack.c.h.b16 %v10743
      %v11388 = vunpack.c.l.b16 %v10744
      %v11389 = vunpack.c.l.b16 %v10745
      %v11390 = vunpack.c.l.b16 %v10746
      %v11391 = vunpack.c.l.b16 %v10747
      %v11392 = vunpack.c.l.b16 %v10748
      %v11393 = vunpack.c.l.b16 %v10749
      %v11394 = vunpack.c.l.b16 %v10750
      %v11395 = vunpack.c.h.b16 %v10744
      %v11396 = vunpack.c.h.b16 %v10745
      %v11397 = vunpack.c.h.b16 %v10746
      %v11398 = vunpack.c.h.b16 %v10747
      %v11399 = vunpack.c.h.b16 %v10748
      %v11400 = vunpack.c.h.b16 %v10749
      %v11401 = vunpack.c.h.b16 %v10750
      %v11402 = vunpack.c.l.b16 %v10751
      %v11403 = vunpack.c.l.b16 %v10752
      %v11404 = vunpack.c.l.b16 %v10753
      %v11405 = vunpack.c.l.b16 %v10754
      %v11406 = vunpack.c.l.b16 %v10755
      %v11407 = vunpack.c.l.b16 %v10756
      %v11408 = vunpack.c.l.b16 %v10757
      %v11409 = vunpack.c.h.b16 %v10751
      %v11410 = vunpack.c.h.b16 %v10752
      %v11411 = vunpack.c.h.b16 %v10753
      %v11412 = vunpack.c.h.b16 %v10754
      %v11413 = vunpack.c.h.b16 %v10755
      %v11414 = vunpack.c.h.b16 %v10756
      %v11415 = vunpack.c.h.b16 %v10757
      %v11416 = vunpack.c.l.b16 %v10758
      %v11417 = vunpack.c.l.b16 %v10759
      %v11418 = vunpack.c.l.b16 %v10760
      %v11419 = vunpack.c.l.b16 %v10761
      %v11420 = vunpack.c.l.b16 %v10762
      %v11421 = vunpack.c.l.b16 %v10763
      %v11422 = vunpack.c.l.b16 %v10764
      %v11423 = vunpack.c.h.b16 %v10758
      %v11424 = vunpack.c.h.b16 %v10759
      %v11425 = vunpack.c.h.b16 %v10760
      %v11426 = vunpack.c.h.b16 %v10761
      %v11427 = vunpack.c.h.b16 %v10762
      %v11428 = vunpack.c.h.b16 %v10763
      %v11429 = vunpack.c.h.b16 %v10764
      %v11430 = vunpack.c.l.b16 %v10765
      %v11431 = vunpack.c.l.b16 %v10766
      %v11432 = vunpack.c.l.b16 %v10767
      %v11433 = vunpack.c.l.b16 %v10768
      %v11434 = vunpack.c.l.b16 %v10769
      %v11435 = vunpack.c.l.b16 %v10770
      %v11436 = vunpack.c.l.b16 %v10771
      %v11437 = vunpack.c.h.b16 %v10765
      %v11438 = vunpack.c.h.b16 %v10766
      %v11439 = vunpack.c.h.b16 %v10767
      %v11440 = vunpack.c.h.b16 %v10768
      %v11441 = vunpack.c.h.b16 %v10769
      %v11442 = vunpack.c.h.b16 %v10770
      %v11443 = vunpack.c.h.b16 %v10771
      %v11444 = vpack.c.b16 %v10997, %v10996
      %v11445 = vpack.c.b16 %v10999, %v10998
      %v11446 = vpack.c.b16 %v11001, %v11000
      %v11447 = vpack.c.b16 %v11002, %v11002
      %v11448 = vpack.c.b16 %v11004, %v11003
      %v11449 = vpack.c.b16 %v11006, %v11005
      %v11450 = vpack.c.b16 %v11008, %v11007
      %v11451 = vpack.c.b16 %v11009, %v11009
      %v11452 = vpack.c.b16 %v11011, %v11010
      %v11453 = vpack.c.b16 %v11013, %v11012
      %v11454 = vpack.c.b16 %v11015, %v11014
      %v11455 = vpack.c.b16 %v11016, %v11016
      %v11456 = vpack.c.b16 %v11018, %v11017
      %v11457 = vpack.c.b16 %v11020, %v11019
      %v11458 = vpack.c.b16 %v11022, %v11021
      %v11459 = vpack.c.b16 %v11023, %v11023
      %v11460 = vpack.c.b16 %v11025, %v11024
      %v11461 = vpack.c.b16 %v11027, %v11026
      %v11462 = vpack.c.b16 %v11029, %v11028
      %v11463 = vpack.c.b16 %v11030, %v11030
      %v11464 = vpack.c.b16 %v11032, %v11031
      %v11465 = vpack.c.b16 %v11034, %v11033
      %v11466 = vpack.c.b16 %v11036, %v11035
      %v11467 = vpack.c.b16 %v11037, %v11037
      %v11468 = vpack.c.b16 %v11039, %v11038
      %v11469 = vpack.c.b16 %v11041, %v11040
      %v11470 = vpack.c.b16 %v11043, %v11042
      %v11471 = vpack.c.b16 %v11044, %v11044
      %v11472 = vpack.c.b16 %v11046, %v11045
      %v11473 = vpack.c.b16 %v11048, %v11047
      %v11474 = vpack.c.b16 %v11050, %v11049
      %v11475 = vpack.c.b16 %v11051, %v11051
      %v11476 = vpack.c.b16 %v11053, %v11052
      %v11477 = vpack.c.b16 %v11055, %v11054
      %v11478 = vpack.c.b16 %v11057, %v11056
      %v11479 = vpack.c.b16 %v11058, %v11058
      %v11480 = vpack.c.b16 %v11060, %v11059
      %v11481 = vpack.c.b16 %v11062, %v11061
      %v11482 = vpack.c.b16 %v11064, %v11063
      %v11483 = vpack.c.b16 %v11065, %v11065
      %v11484 = vpack.c.b16 %v11067, %v11066
      %v11485 = vpack.c.b16 %v11069, %v11068
      %v11486 = vpack.c.b16 %v11071, %v11070
      %v11487 = vpack.c.b16 %v11072, %v11072
      %v11488 = vpack.c.b16 %v11074, %v11073
      %v11489 = vpack.c.b16 %v11076, %v11075
      %v11490 = vpack.c.b16 %v11078, %v11077
      %v11491 = vpack.c.b16 %v11079, %v11079
      %v11492 = vpack.c.b16 %v11081, %v11080
      %v11493 = vpack.c.b16 %v11083, %v11082
      %v11494 = vpack.c.b16 %v11085, %v11084
      %v11495 = vpack.c.b16 %v11086, %v11086
      %v11496 = vpack.c.b16 %v11088, %v11087
      %v11497 = vpack.c.b16 %v11090, %v11089
      %v11498 = vpack.c.b16 %v11092, %v11091
      %v11499 = vpack.c.b16 %v11093, %v11093
      %v11500 = vpack.c.b16 %v11095, %v11094
      %v11501 = vpack.c.b16 %v11097, %v11096
      %v11502 = vpack.c.b16 %v11099, %v11098
      %v11503 = vpack.c.b16 %v11100, %v11100
      %v11504 = vpack.c.b16 %v11102, %v11101
      %v11505 = vpack.c.b16 %v11104, %v11103
      %v11506 = vpack.c.b16 %v11106, %v11105
      %v11507 = vpack.c.b16 %v11107, %v11107
      %v11508 = vpack.c.b16 %v11109, %v11108
      %v11509 = vpack.c.b16 %v11111, %v11110
      %v11510 = vpack.c.b16 %v11113, %v11112
      %v11511 = vpack.c.b16 %v11114, %v11114
      %v11512 = vpack.c.b16 %v11116, %v11115
      %v11513 = vpack.c.b16 %v11118, %v11117
      %v11514 = vpack.c.b16 %v11120, %v11119
      %v11515 = vpack.c.b16 %v11121, %v11121
      %v11516 = vpack.c.b16 %v11123, %v11122
      %v11517 = vpack.c.b16 %v11125, %v11124
      %v11518 = vpack.c.b16 %v11127, %v11126
      %v11519 = vpack.c.b16 %v11128, %v11128
      %v11520 = vpack.c.b16 %v11130, %v11129
      %v11521 = vpack.c.b16 %v11132, %v11131
      %v11522 = vpack.c.b16 %v11134, %v11133
      %v11523 = vpack.c.b16 %v11135, %v11135
      %v11524 = vpack.c.b16 %v11137, %v11136
      %v11525 = vpack.c.b16 %v11139, %v11138
      %v11526 = vpack.c.b16 %v11141, %v11140
      %v11527 = vpack.c.b16 %v11142, %v11142
      %v11528 = vpack.c.b16 %v11144, %v11143
      %v11529 = vpack.c.b16 %v11146, %v11145
      %v11530 = vpack.c.b16 %v11148, %v11147
      %v11531 = vpack.c.b16 %v11149, %v11149
      %v11532 = vpack.c.b16 %v11151, %v11150
      %v11533 = vpack.c.b16 %v11153, %v11152
      %v11534 = vpack.c.b16 %v11155, %v11154
      %v11535 = vpack.c.b16 %v11156, %v11156
      %v11536 = vpack.c.b16 %v11158, %v11157
      %v11537 = vpack.c.b16 %v11160, %v11159
      %v11538 = vpack.c.b16 %v11162, %v11161
      %v11539 = vpack.c.b16 %v11163, %v11163
      %v11540 = vpack.c.b16 %v11165, %v11164
      %v11541 = vpack.c.b16 %v11167, %v11166
      %v11542 = vpack.c.b16 %v11169, %v11168
      %v11543 = vpack.c.b16 %v11170, %v11170
      %v11544 = vpack.c.b16 %v11172, %v11171
      %v11545 = vpack.c.b16 %v11174, %v11173
      %v11546 = vpack.c.b16 %v11176, %v11175
      %v11547 = vpack.c.b16 %v11177, %v11177
      %v11548 = vpack.c.b16 %v11179, %v11178
      %v11549 = vpack.c.b16 %v11181, %v11180
      %v11550 = vpack.c.b16 %v11183, %v11182
      %v11551 = vpack.c.b16 %v11184, %v11184
      %v11552 = vpack.c.b16 %v11186, %v11185
      %v11553 = vpack.c.b16 %v11188, %v11187
      %v11554 = vpack.c.b16 %v11190, %v11189
      %v11555 = vpack.c.b16 %v11191, %v11191
      %v11556 = vpack.c.b16 %v11193, %v11192
      %v11557 = vpack.c.b16 %v11195, %v11194
      %v11558 = vpack.c.b16 %v11197, %v11196
      %v11559 = vpack.c.b16 %v11198, %v11198
      %v11560 = vpack.c.b16 %v11200, %v11199
      %v11561 = vpack.c.b16 %v11202, %v11201
      %v11562 = vpack.c.b16 %v11204, %v11203
      %v11563 = vpack.c.b16 %v11205, %v11205
      %v11564 = vpack.c.b16 %v11207, %v11206
      %v11565 = vpack.c.b16 %v11209, %v11208
      %v11566 = vpack.c.b16 %v11211, %v11210
      %v11567 = vpack.c.b16 %v11212, %v11212
      %v11568 = vpack.c.b16 %v11214, %v11213
      %v11569 = vpack.c.b16 %v11216, %v11215
      %v11570 = vpack.c.b16 %v11218, %v11217
      %v11571 = vpack.c.b16 %v11219, %v11219
      %v11572 = vpack.c.b16 %v11221, %v11220
      %v11573 = vpack.c.b16 %v11223, %v11222
      %v11574 = vpack.c.b16 %v11225, %v11224
      %v11575 = vpack.c.b16 %v11226, %v11226
      %v11576 = vpack.c.b16 %v11228, %v11227
      %v11577 = vpack.c.b16 %v11230, %v11229
      %v11578 = vpack.c.b16 %v11232, %v11231
      %v11579 = vpack.c.b16 %v11233, %v11233
      %v11580 = vpack.c.b16 %v11235, %v11234
      %v11581 = vpack.c.b16 %v11237, %v11236
      %v11582 = vpack.c.b16 %v11239, %v11238
      %v11583 = vpack.c.b16 %v11240, %v11240
      %v11584 = vpack.c.b16 %v11242, %v11241
      %v11585 = vpack.c.b16 %v11244, %v11243
      %v11586 = vpack.c.b16 %v11246, %v11245
      %v11587 = vpack.c.b16 %v11247, %v11247
      %v11588 = vpack.c.b16 %v11249, %v11248
      %v11589 = vpack.c.b16 %v11251, %v11250
      %v11590 = vpack.c.b16 %v11253, %v11252
      %v11591 = vpack.c.b16 %v11254, %v11254
      %v11592 = vpack.c.b16 %v11256, %v11255
      %v11593 = vpack.c.b16 %v11258, %v11257
      %v11594 = vpack.c.b16 %v11260, %v11259
      %v11595 = vpack.c.b16 %v11261, %v11261
      %v11596 = vpack.c.b16 %v11263, %v11262
      %v11597 = vpack.c.b16 %v11265, %v11264
      %v11598 = vpack.c.b16 %v11267, %v11266
      %v11599 = vpack.c.b16 %v11268, %v11268
      %v11600 = vpack.c.b16 %v11270, %v11269
      %v11601 = vpack.c.b16 %v11272, %v11271
      %v11602 = vpack.c.b16 %v11274, %v11273
      %v11603 = vpack.c.b16 %v11275, %v11275
      %v11604 = vpack.c.b16 %v11277, %v11276
      %v11605 = vpack.c.b16 %v11279, %v11278
      %v11606 = vpack.c.b16 %v11281, %v11280
      %v11607 = vpack.c.b16 %v11282, %v11282
      %v11608 = vpack.c.b16 %v11284, %v11283
      %v11609 = vpack.c.b16 %v11286, %v11285
      %v11610 = vpack.c.b16 %v11288, %v11287
      %v11611 = vpack.c.b16 %v11289, %v11289
      %v11612 = vpack.c.b16 %v11291, %v11290
      %v11613 = vpack.c.b16 %v11293, %v11292
      %v11614 = vpack.c.b16 %v11295, %v11294
      %v11615 = vpack.c.b16 %v11296, %v11296
      %v11616 = vpack.c.b16 %v11298, %v11297
      %v11617 = vpack.c.b16 %v11300, %v11299
      %v11618 = vpack.c.b16 %v11302, %v11301
      %v11619 = vpack.c.b16 %v11303, %v11303
      %v11620 = vpack.c.b16 %v11305, %v11304
      %v11621 = vpack.c.b16 %v11307, %v11306
      %v11622 = vpack.c.b16 %v11309, %v11308
      %v11623 = vpack.c.b16 %v11310, %v11310
      %v11624 = vpack.c.b16 %v11312, %v11311
      %v11625 = vpack.c.b16 %v11314, %v11313
      %v11626 = vpack.c.b16 %v11316, %v11315
      %v11627 = vpack.c.b16 %v11317, %v11317
      %v11628 = vpack.c.b16 %v11319, %v11318
      %v11629 = vpack.c.b16 %v11321, %v11320
      %v11630 = vpack.c.b16 %v11323, %v11322
      %v11631 = vpack.c.b16 %v11324, %v11324
      %v11632 = vpack.c.b16 %v11326, %v11325
      %v11633 = vpack.c.b16 %v11328, %v11327
      %v11634 = vpack.c.b16 %v11330, %v11329
      %v11635 = vpack.c.b16 %v11331, %v11331
      %v11636 = vpack.c.b16 %v11333, %v11332
      %v11637 = vpack.c.b16 %v11335, %v11334
      %v11638 = vpack.c.b16 %v11337, %v11336
      %v11639 = vpack.c.b16 %v11338, %v11338
      %v11640 = vpack.c.b16 %v11340, %v11339
      %v11641 = vpack.c.b16 %v11342, %v11341
      %v11642 = vpack.c.b16 %v11344, %v11343
      %v11643 = vpack.c.b16 %v11345, %v11345
      %v11644 = vpack.c.b16 %v11347, %v11346
      %v11645 = vpack.c.b16 %v11349, %v11348
      %v11646 = vpack.c.b16 %v11351, %v11350
      %v11647 = vpack.c.b16 %v11352, %v11352
      %v11648 = vpack.c.b16 %v11354, %v11353
      %v11649 = vpack.c.b16 %v11356, %v11355
      %v11650 = vpack.c.b16 %v11358, %v11357
      %v11651 = vpack.c.b16 %v11359, %v11359
      %v11652 = vpack.c.b16 %v11361, %v11360
      %v11653 = vpack.c.b16 %v11363, %v11362
      %v11654 = vpack.c.b16 %v11365, %v11364
      %v11655 = vpack.c.b16 %v11366, %v11366
      %v11656 = vpack.c.b16 %v11368, %v11367
      %v11657 = vpack.c.b16 %v11370, %v11369
      %v11658 = vpack.c.b16 %v11372, %v11371
      %v11659 = vpack.c.b16 %v11373, %v11373
      %v11660 = vpack.c.b16 %v11375, %v11374
      %v11661 = vpack.c.b16 %v11377, %v11376
      %v11662 = vpack.c.b16 %v11379, %v11378
      %v11663 = vpack.c.b16 %v11380, %v11380
      %v11664 = vpack.c.b16 %v11382, %v11381
      %v11665 = vpack.c.b16 %v11384, %v11383
      %v11666 = vpack.c.b16 %v11386, %v11385
      %v11667 = vpack.c.b16 %v11387, %v11387
      %v11668 = vpack.c.b16 %v11389, %v11388
      %v11669 = vpack.c.b16 %v11391, %v11390
      %v11670 = vpack.c.b16 %v11393, %v11392
      %v11671 = vpack.c.b16 %v11394, %v11394
      %v11672 = vpack.c.b16 %v11396, %v11395
      %v11673 = vpack.c.b16 %v11398, %v11397
      %v11674 = vpack.c.b16 %v11400, %v11399
      %v11675 = vpack.c.b16 %v11401, %v11401
      %v11676 = vpack.c.b16 %v11403, %v11402
      %v11677 = vpack.c.b16 %v11405, %v11404
      %v11678 = vpack.c.b16 %v11407, %v11406
      %v11679 = vpack.c.b16 %v11408, %v11408
      %v11680 = vpack.c.b16 %v11410, %v11409
      %v11681 = vpack.c.b16 %v11412, %v11411
      %v11682 = vpack.c.b16 %v11414, %v11413
      %v11683 = vpack.c.b16 %v11415, %v11415
      %v11684 = vpack.c.b16 %v11417, %v11416
      %v11685 = vpack.c.b16 %v11419, %v11418
      %v11686 = vpack.c.b16 %v11421, %v11420
      %v11687 = vpack.c.b16 %v11422, %v11422
      %v11688 = vpack.c.b16 %v11424, %v11423
      %v11689 = vpack.c.b16 %v11426, %v11425
      %v11690 = vpack.c.b16 %v11428, %v11427
      %v11691 = vpack.c.b16 %v11429, %v11429
      %v11692 = vpack.c.b16 %v11431, %v11430
      %v11693 = vpack.c.b16 %v11433, %v11432
      %v11694 = vpack.c.b16 %v11435, %v11434
      %v11695 = vpack.c.b16 %v11436, %v11436
      %v11696 = vpack.c.b16 %v11438, %v11437
      %v11697 = vpack.c.b16 %v11440, %v11439
      %v11698 = vpack.c.b16 %v11442, %v11441
      %v11699 = vpack.c.b16 %v11443, %v11443
      %11956 = vst [vmem:[%s501] sm:$0xff] %v11444
      %11957 = vst [vmem:[%s501 + $0x8] sm:$0xff] %v11445
      %11958 = vst [vmem:[%s501 + $0x10] sm:$0xff] %v11446
      %vm11959 = vcmask 125952
      %11960 = vst.msk [vmem:[%s501 + $0x18] sm:$0xf] %vm11959, %v11447
      %11961 = vst [vmem:[%s501 + $0x1c] sm:$0xff] %v11448
      %11962 = vst [vmem:[%s501 + $0x24] sm:$0xff] %v11449
      %11963 = vst [vmem:[%s501 + $0x2c] sm:$0xff] %v11450
      %11964 = vst.msk [vmem:[%s501 + $0x34] sm:$0xf] %vm11959, %v11451
      %11965 = vst [vmem:[%s501 + $0x38] sm:$0xff] %v11452
      %11966 = vst [vmem:[%s501 + $0x40] sm:$0xff] %v11453
      %11967 = vst [vmem:[%s501 + $0x48] sm:$0xff] %v11454
      %11968 = vst.msk [vmem:[%s501 + $0x50] sm:$0xf] %vm11959, %v11455
      %11969 = vst [vmem:[%s501 + $0x54] sm:$0xff] %v11456
      %11970 = vst [vmem:[%s501 + $0x5c] sm:$0xff] %v11457
      %11971 = vst [vmem:[%s501 + $0x64] sm:$0xff] %v11458
      %11972 = vst.msk [vmem:[%s501 + $0x6c] sm:$0xf] %vm11959, %v11459
      %11973 = vst [vmem:[%s501 + $0x70] sm:$0xff] %v11460
      %11974 = vst [vmem:[%s501 + $0x78] sm:$0xff] %v11461
      %11975 = vst [vmem:[%s501 + $0x80] sm:$0xff] %v11462
      %11976 = vst.msk [vmem:[%s501 + $0x88] sm:$0xf] %vm11959, %v11463
      %11977 = vst [vmem:[%s501 + $0x8c] sm:$0xff] %v11464
      %11978 = vst [vmem:[%s501 + $0x94] sm:$0xff] %v11465
      %11979 = vst [vmem:[%s501 + $0x9c] sm:$0xff] %v11466
      %11980 = vst.msk [vmem:[%s501 + $0xa4] sm:$0xf] %vm11959, %v11467
      %11981 = vst [vmem:[%s501 + $0xa8] sm:$0xff] %v11468
      %11982 = vst [vmem:[%s501 + $0xb0] sm:$0xff] %v11469
      %11983 = vst [vmem:[%s501 + $0xb8] sm:$0xff] %v11470
      %11984 = vst.msk [vmem:[%s501 + $0xc0] sm:$0xf] %vm11959, %v11471
      %11985 = vst [vmem:[%s501 + $0xc4] sm:$0xff] %v11472
      %11986 = vst [vmem:[%s501 + $0xcc] sm:$0xff] %v11473
      %11987 = vst [vmem:[%s501 + $0xd4] sm:$0xff] %v11474
      %11988 = vst.msk [vmem:[%s501 + $0xdc] sm:$0xf] %vm11959, %v11475
      %11989 = vst [vmem:[%s501 + $0xe0] sm:$0xff] %v11476
      %11990 = vst [vmem:[%s501 + $0xe8] sm:$0xff] %v11477
      %11991 = vst [vmem:[%s501 + $0xf0] sm:$0xff] %v11478
      %11992 = vst.msk [vmem:[%s501 + $0xf8] sm:$0xf] %vm11959, %v11479
      %11993 = vst [vmem:[%s501 + $0xfc] sm:$0xff] %v11480
      %11994 = vst [vmem:[%s501 + $0x104] sm:$0xff] %v11481
      %11995 = vst [vmem:[%s501 + $0x10c] sm:$0xff] %v11482
      %11996 = vst.msk [vmem:[%s501 + $0x114] sm:$0xf] %vm11959, %v11483
      %11997 = vst [vmem:[%s501 + $0x118] sm:$0xff] %v11484
      %11998 = vst [vmem:[%s501 + $0x120] sm:$0xff] %v11485
      %11999 = vst [vmem:[%s501 + $0x128] sm:$0xff] %v11486
      %12000 = vst.msk [vmem:[%s501 + $0x130] sm:$0xf] %vm11959, %v11487
      %12001 = vst [vmem:[%s501 + $0x134] sm:$0xff] %v11488
      %12002 = vst [vmem:[%s501 + $0x13c] sm:$0xff] %v11489
      %12003 = vst [vmem:[%s501 + $0x144] sm:$0xff] %v11490
      %12004 = vst.msk [vmem:[%s501 + $0x14c] sm:$0xf] %vm11959, %v11491
      %12005 = vst [vmem:[%s501 + $0x150] sm:$0xff] %v11492
      %12006 = vst [vmem:[%s501 + $0x158] sm:$0xff] %v11493
      %12007 = vst [vmem:[%s501 + $0x160] sm:$0xff] %v11494
      %12008 = vst.msk [vmem:[%s501 + $0x168] sm:$0xf] %vm11959, %v11495
      %12009 = vst [vmem:[%s501 + $0x16c] sm:$0xff] %v11496
      %12010 = vst [vmem:[%s501 + $0x174] sm:$0xff] %v11497
      %12011 = vst [vmem:[%s501 + $0x17c] sm:$0xff] %v11498
      %12012 = vst.msk [vmem:[%s501 + $0x184] sm:$0xf] %vm11959, %v11499
      %12013 = vst [vmem:[%s501 + $0x188] sm:$0xff] %v11500
      %12014 = vst [vmem:[%s501 + $0x190] sm:$0xff] %v11501
      %12015 = vst [vmem:[%s501 + $0x198] sm:$0xff] %v11502
      %12016 = vst.msk [vmem:[%s501 + $0x1a0] sm:$0xf] %vm11959, %v11503
      %12017 = vst [vmem:[%s501 + $0x1a4] sm:$0xff] %v11504
      %12018 = vst [vmem:[%s501 + $0x1ac] sm:$0xff] %v11505
      %12019 = vst [vmem:[%s501 + $0x1b4] sm:$0xff] %v11506
      %12020 = vst.msk [vmem:[%s501 + $0x1bc] sm:$0xf] %vm11959, %v11507
      %12021 = vst [vmem:[%s501 + $0x1c0] sm:$0xff] %v11508
      %12022 = vst [vmem:[%s501 + $0x1c8] sm:$0xff] %v11509
      %12023 = vst [vmem:[%s501 + $0x1d0] sm:$0xff] %v11510
      %12024 = vst.msk [vmem:[%s501 + $0x1d8] sm:$0xf] %vm11959, %v11511
      %12025 = vst [vmem:[%s501 + $0x1dc] sm:$0xff] %v11512
      %12026 = vst [vmem:[%s501 + $0x1e4] sm:$0xff] %v11513
      %12027 = vst [vmem:[%s501 + $0x1ec] sm:$0xff] %v11514
      %12028 = vst.msk [vmem:[%s501 + $0x1f4] sm:$0xf] %vm11959, %v11515
      %12029 = vst [vmem:[%s501 + $0x1f8] sm:$0xff] %v11516
      %12030 = vst [vmem:[%s501 + $0x200] sm:$0xff] %v11517
      %12031 = vst [vmem:[%s501 + $0x208] sm:$0xff] %v11518
      %12032 = vst.msk [vmem:[%s501 + $0x210] sm:$0xf] %vm11959, %v11519
      %12033 = vst [vmem:[%s501 + $0x214] sm:$0xff] %v11520
      %12034 = vst [vmem:[%s501 + $0x21c] sm:$0xff] %v11521
      %12035 = vst [vmem:[%s501 + $0x224] sm:$0xff] %v11522
      %12036 = vst.msk [vmem:[%s501 + $0x22c] sm:$0xf] %vm11959, %v11523
      %12037 = vst [vmem:[%s501 + $0x230] sm:$0xff] %v11524
      %12038 = vst [vmem:[%s501 + $0x238] sm:$0xff] %v11525
      %12039 = vst [vmem:[%s501 + $0x240] sm:$0xff] %v11526
      %12040 = vst.msk [vmem:[%s501 + $0x248] sm:$0xf] %vm11959, %v11527
      %12041 = vst [vmem:[%s501 + $0x24c] sm:$0xff] %v11528
      %12042 = vst [vmem:[%s501 + $0x254] sm:$0xff] %v11529
      %12043 = vst [vmem:[%s501 + $0x25c] sm:$0xff] %v11530
      %12044 = vst.msk [vmem:[%s501 + $0x264] sm:$0xf] %vm11959, %v11531
      %12045 = vst [vmem:[%s501 + $0x268] sm:$0xff] %v11532
      %12046 = vst [vmem:[%s501 + $0x270] sm:$0xff] %v11533
      %12047 = vst [vmem:[%s501 + $0x278] sm:$0xff] %v11534
      %12048 = vst.msk [vmem:[%s501 + $0x280] sm:$0xf] %vm11959, %v11535
      %12049 = vst [vmem:[%s501 + $0x284] sm:$0xff] %v11536
      %12050 = vst [vmem:[%s501 + $0x28c] sm:$0xff] %v11537
      %12051 = vst [vmem:[%s501 + $0x294] sm:$0xff] %v11538
      %12052 = vst.msk [vmem:[%s501 + $0x29c] sm:$0xf] %vm11959, %v11539
      %12053 = vst [vmem:[%s501 + $0x2a0] sm:$0xff] %v11540
      %12054 = vst [vmem:[%s501 + $0x2a8] sm:$0xff] %v11541
      %12055 = vst [vmem:[%s501 + $0x2b0] sm:$0xff] %v11542
      %12056 = vst.msk [vmem:[%s501 + $0x2b8] sm:$0xf] %vm11959, %v11543
      %12057 = vst [vmem:[%s501 + $0x2bc] sm:$0xff] %v11544
      %12058 = vst [vmem:[%s501 + $0x2c4] sm:$0xff] %v11545
      %12059 = vst [vmem:[%s501 + $0x2cc] sm:$0xff] %v11546
      %12060 = vst.msk [vmem:[%s501 + $0x2d4] sm:$0xf] %vm11959, %v11547
      %12061 = vst [vmem:[%s501 + $0x2d8] sm:$0xff] %v11548
      %12062 = vst [vmem:[%s501 + $0x2e0] sm:$0xff] %v11549
      %12063 = vst [vmem:[%s501 + $0x2e8] sm:$0xff] %v11550
      %12064 = vst.msk [vmem:[%s501 + $0x2f0] sm:$0xf] %vm11959, %v11551
      %12065 = vst [vmem:[%s501 + $0x2f4] sm:$0xff] %v11552
      %12066 = vst [vmem:[%s501 + $0x2fc] sm:$0xff] %v11553
      %12067 = vst [vmem:[%s501 + $0x304] sm:$0xff] %v11554
      %12068 = vst.msk [vmem:[%s501 + $0x30c] sm:$0xf] %vm11959, %v11555
      %12069 = vst [vmem:[%s501 + $0x310] sm:$0xff] %v11556
      %12070 = vst [vmem:[%s501 + $0x318] sm:$0xff] %v11557
      %12071 = vst [vmem:[%s501 + $0x320] sm:$0xff] %v11558
      %12072 = vst.msk [vmem:[%s501 + $0x328] sm:$0xf] %vm11959, %v11559
      %12073 = vst [vmem:[%s501 + $0x32c] sm:$0xff] %v11560
      %12074 = vst [vmem:[%s501 + $0x334] sm:$0xff] %v11561
      %12075 = vst [vmem:[%s501 + $0x33c] sm:$0xff] %v11562
      %12076 = vst.msk [vmem:[%s501 + $0x344] sm:$0xf] %vm11959, %v11563
      %12077 = vst [vmem:[%s501 + $0x348] sm:$0xff] %v11564
      %12078 = vst [vmem:[%s501 + $0x350] sm:$0xff] %v11565
      %12079 = vst [vmem:[%s501 + $0x358] sm:$0xff] %v11566
      %12080 = vst.msk [vmem:[%s501 + $0x360] sm:$0xf] %vm11959, %v11567
      %12081 = vst [vmem:[%s501 + $0x364] sm:$0xff] %v11568
      %12082 = vst [vmem:[%s501 + $0x36c] sm:$0xff] %v11569
      %12083 = vst [vmem:[%s501 + $0x374] sm:$0xff] %v11570
      %12084 = vst.msk [vmem:[%s501 + $0x37c] sm:$0xf] %vm11959, %v11571
      %12085 = vst [vmem:[%s501 + $0x380] sm:$0xff] %v11572
      %12086 = vst [vmem:[%s501 + $0x388] sm:$0xff] %v11573
      %12087 = vst [vmem:[%s501 + $0x390] sm:$0xff] %v11574
      %12088 = vst.msk [vmem:[%s501 + $0x398] sm:$0xf] %vm11959, %v11575
      %12089 = vst [vmem:[%s501 + $0x39c] sm:$0xff] %v11576
      %12090 = vst [vmem:[%s501 + $0x3a4] sm:$0xff] %v11577
      %12091 = vst [vmem:[%s501 + $0x3ac] sm:$0xff] %v11578
      %12092 = vst.msk [vmem:[%s501 + $0x3b4] sm:$0xf] %vm11959, %v11579
      %12093 = vst [vmem:[%s501 + $0x3b8] sm:$0xff] %v11580
      %12094 = vst [vmem:[%s501 + $0x3c0] sm:$0xff] %v11581
      %12095 = vst [vmem:[%s501 + $0x3c8] sm:$0xff] %v11582
      %12096 = vst.msk [vmem:[%s501 + $0x3d0] sm:$0xf] %vm11959, %v11583
      %12097 = vst [vmem:[%s501 + $0x3d4] sm:$0xff] %v11584
      %12098 = vst [vmem:[%s501 + $0x3dc] sm:$0xff] %v11585
      %12099 = vst [vmem:[%s501 + $0x3e4] sm:$0xff] %v11586
      %12100 = vst.msk [vmem:[%s501 + $0x3ec] sm:$0xf] %vm11959, %v11587
      %12101 = vst [vmem:[%s501 + $0x3f0] sm:$0xff] %v11588
      %12102 = vst [vmem:[%s501 + $0x3f8] sm:$0xff] %v11589
      %12103 = vst [vmem:[%s501 + $0x400] sm:$0xff] %v11590
      %12104 = vst.msk [vmem:[%s501 + $0x408] sm:$0xf] %vm11959, %v11591
      %12105 = vst [vmem:[%s501 + $0x40c] sm:$0xff] %v11592
      %12106 = vst [vmem:[%s501 + $0x414] sm:$0xff] %v11593
      %12107 = vst [vmem:[%s501 + $0x41c] sm:$0xff] %v11594
      %12108 = vst.msk [vmem:[%s501 + $0x424] sm:$0xf] %vm11959, %v11595
      %12109 = vst [vmem:[%s501 + $0x428] sm:$0xff] %v11596
      %12110 = vst [vmem:[%s501 + $0x430] sm:$0xff] %v11597
      %12111 = vst [vmem:[%s501 + $0x438] sm:$0xff] %v11598
      %12112 = vst.msk [vmem:[%s501 + $0x440] sm:$0xf] %vm11959, %v11599
      %12113 = vst [vmem:[%s501 + $0x444] sm:$0xff] %v11600
      %12114 = vst [vmem:[%s501 + $0x44c] sm:$0xff] %v11601
      %12115 = vst [vmem:[%s501 + $0x454] sm:$0xff] %v11602
      %12116 = vst.msk [vmem:[%s501 + $0x45c] sm:$0xf] %vm11959, %v11603
      %12117 = vst [vmem:[%s501 + $0x460] sm:$0xff] %v11604
      %12118 = vst [vmem:[%s501 + $0x468] sm:$0xff] %v11605
      %12119 = vst [vmem:[%s501 + $0x470] sm:$0xff] %v11606
      %12120 = vst.msk [vmem:[%s501 + $0x478] sm:$0xf] %vm11959, %v11607
      %12121 = vst [vmem:[%s501 + $0x47c] sm:$0xff] %v11608
      %12122 = vst [vmem:[%s501 + $0x484] sm:$0xff] %v11609
      %12123 = vst [vmem:[%s501 + $0x48c] sm:$0xff] %v11610
      %12124 = vst.msk [vmem:[%s501 + $0x494] sm:$0xf] %vm11959, %v11611
      %12125 = vst [vmem:[%s501 + $0x498] sm:$0xff] %v11612
      %12126 = vst [vmem:[%s501 + $0x4a0] sm:$0xff] %v11613
      %12127 = vst [vmem:[%s501 + $0x4a8] sm:$0xff] %v11614
      %12128 = vst.msk [vmem:[%s501 + $0x4b0] sm:$0xf] %vm11959, %v11615
      %12129 = vst [vmem:[%s501 + $0x4b4] sm:$0xff] %v11616
      %12130 = vst [vmem:[%s501 + $0x4bc] sm:$0xff] %v11617
      %12131 = vst [vmem:[%s501 + $0x4c4] sm:$0xff] %v11618
      %12132 = vst.msk [vmem:[%s501 + $0x4cc] sm:$0xf] %vm11959, %v11619
      %12133 = vst [vmem:[%s501 + $0x4d0] sm:$0xff] %v11620
      %12134 = vst [vmem:[%s501 + $0x4d8] sm:$0xff] %v11621
      %12135 = vst [vmem:[%s501 + $0x4e0] sm:$0xff] %v11622
      %12136 = vst.msk [vmem:[%s501 + $0x4e8] sm:$0xf] %vm11959, %v11623
      %12137 = vst [vmem:[%s501 + $0x4ec] sm:$0xff] %v11624
      %12138 = vst [vmem:[%s501 + $0x4f4] sm:$0xff] %v11625
      %12139 = vst [vmem:[%s501 + $0x4fc] sm:$0xff] %v11626
      %12140 = vst.msk [vmem:[%s501 + $0x504] sm:$0xf] %vm11959, %v11627
      %12141 = vst [vmem:[%s501 + $0x508] sm:$0xff] %v11628
      %12142 = vst [vmem:[%s501 + $0x510] sm:$0xff] %v11629
      %12143 = vst [vmem:[%s501 + $0x518] sm:$0xff] %v11630
      %12144 = vst.msk [vmem:[%s501 + $0x520] sm:$0xf] %vm11959, %v11631
      %12145 = vst [vmem:[%s501 + $0x524] sm:$0xff] %v11632
      %12146 = vst [vmem:[%s501 + $0x52c] sm:$0xff] %v11633
      %12147 = vst [vmem:[%s501 + $0x534] sm:$0xff] %v11634
      %12148 = vst.msk [vmem:[%s501 + $0x53c] sm:$0xf] %vm11959, %v11635
      %12149 = vst [vmem:[%s501 + $0x540] sm:$0xff] %v11636
      %12150 = vst [vmem:[%s501 + $0x548] sm:$0xff] %v11637
      %12151 = vst [vmem:[%s501 + $0x550] sm:$0xff] %v11638
      %12152 = vst.msk [vmem:[%s501 + $0x558] sm:$0xf] %vm11959, %v11639
      %12153 = vst [vmem:[%s501 + $0x55c] sm:$0xff] %v11640
      %12154 = vst [vmem:[%s501 + $0x564] sm:$0xff] %v11641
      %12155 = vst [vmem:[%s501 + $0x56c] sm:$0xff] %v11642
      %12156 = vst.msk [vmem:[%s501 + $0x574] sm:$0xf] %vm11959, %v11643
      %12157 = vst [vmem:[%s501 + $0x578] sm:$0xff] %v11644
      %12158 = vst [vmem:[%s501 + $0x580] sm:$0xff] %v11645
      %12159 = vst [vmem:[%s501 + $0x588] sm:$0xff] %v11646
      %12160 = vst.msk [vmem:[%s501 + $0x590] sm:$0xf] %vm11959, %v11647
      %12161 = vst [vmem:[%s501 + $0x594] sm:$0xff] %v11648
      %12162 = vst [vmem:[%s501 + $0x59c] sm:$0xff] %v11649
      %12163 = vst [vmem:[%s501 + $0x5a4] sm:$0xff] %v11650
      %12164 = vst.msk [vmem:[%s501 + $0x5ac] sm:$0xf] %vm11959, %v11651
      %12165 = vst [vmem:[%s501 + $0x5b0] sm:$0xff] %v11652
      %12166 = vst [vmem:[%s501 + $0x5b8] sm:$0xff] %v11653
      %12167 = vst [vmem:[%s501 + $0x5c0] sm:$0xff] %v11654
      %12168 = vst.msk [vmem:[%s501 + $0x5c8] sm:$0xf] %vm11959, %v11655
      %12169 = vst [vmem:[%s501 + $0x5cc] sm:$0xff] %v11656
      %12170 = vst [vmem:[%s501 + $0x5d4] sm:$0xff] %v11657
      %12171 = vst [vmem:[%s501 + $0x5dc] sm:$0xff] %v11658
      %12172 = vst.msk [vmem:[%s501 + $0x5e4] sm:$0xf] %vm11959, %v11659
      %12173 = vst [vmem:[%s501 + $0x5e8] sm:$0xff] %v11660
      %12174 = vst [vmem:[%s501 + $0x5f0] sm:$0xff] %v11661
      %12175 = vst [vmem:[%s501 + $0x5f8] sm:$0xff] %v11662
      %12176 = vst.msk [vmem:[%s501 + $0x600] sm:$0xf] %vm11959, %v11663
      %12177 = vst [vmem:[%s501 + $0x604] sm:$0xff] %v11664
      %12178 = vst [vmem:[%s501 + $0x60c] sm:$0xff] %v11665
      %12179 = vst [vmem:[%s501 + $0x614] sm:$0xff] %v11666
      %12180 = vst.msk [vmem:[%s501 + $0x61c] sm:$0xf] %vm11959, %v11667
      %12181 = vst [vmem:[%s501 + $0x620] sm:$0xff] %v11668
      %12182 = vst [vmem:[%s501 + $0x628] sm:$0xff] %v11669
      %12183 = vst [vmem:[%s501 + $0x630] sm:$0xff] %v11670
      %12184 = vst.msk [vmem:[%s501 + $0x638] sm:$0xf] %vm11959, %v11671
      %12185 = vst [vmem:[%s501 + $0x63c] sm:$0xff] %v11672
      %12186 = vst [vmem:[%s501 + $0x644] sm:$0xff] %v11673
      %12187 = vst [vmem:[%s501 + $0x64c] sm:$0xff] %v11674
      %12188 = vst.msk [vmem:[%s501 + $0x654] sm:$0xf] %vm11959, %v11675
      %12189 = vst [vmem:[%s501 + $0x658] sm:$0xff] %v11676
      %12190 = vst [vmem:[%s501 + $0x660] sm:$0xff] %v11677
      %12191 = vst [vmem:[%s501 + $0x668] sm:$0xff] %v11678
      %12192 = vst.msk [vmem:[%s501 + $0x670] sm:$0xf] %vm11959, %v11679
      %12193 = vst [vmem:[%s501 + $0x674] sm:$0xff] %v11680
      %12194 = vst [vmem:[%s501 + $0x67c] sm:$0xff] %v11681
      %12195 = vst [vmem:[%s501 + $0x684] sm:$0xff] %v11682
      %12196 = vst.msk [vmem:[%s501 + $0x68c] sm:$0xf] %vm11959, %v11683
      %12197 = vst [vmem:[%s501 + $0x690] sm:$0xff] %v11684
      %12198 = vst [vmem:[%s501 + $0x698] sm:$0xff] %v11685
      %12199 = vst [vmem:[%s501 + $0x6a0] sm:$0xff] %v11686
      %12200 = vst.msk [vmem:[%s501 + $0x6a8] sm:$0xf] %vm11959, %v11687
      %12201 = vst [vmem:[%s501 + $0x6ac] sm:$0xff] %v11688
      %12202 = vst [vmem:[%s501 + $0x6b4] sm:$0xff] %v11689
      %12203 = vst [vmem:[%s501 + $0x6bc] sm:$0xff] %v11690
      %12204 = vst.msk [vmem:[%s501 + $0x6c4] sm:$0xf] %vm11959, %v11691
      %12205 = vst [vmem:[%s501 + $0x6c8] sm:$0xff] %v11692
      %12206 = vst [vmem:[%s501 + $0x6d0] sm:$0xff] %v11693
      %12207 = vst [vmem:[%s501 + $0x6d8] sm:$0xff] %v11694
      %12208 = vst.msk [vmem:[%s501 + $0x6e0] sm:$0xf] %vm11959, %v11695
      %12209 = vst [vmem:[%s501 + $0x6e4] sm:$0xff] %v11696
      %12210 = vst [vmem:[%s501 + $0x6ec] sm:$0xff] %v11697
      %12211 = vst [vmem:[%s501 + $0x6f4] sm:$0xff] %v11698
      %12212 = vst.msk [vmem:[%s501 + $0x6fc] sm:$0xf] %vm11959, %v11699
      %s12213 = smul.u32 64, %s26
      %p12214 = scmp.lt.s32.totalorder %s12213, 255
      %s12215 = scalar_select %p12214, %s12213, 255
      %s12216 = smul.addr %s12215, 7
      %s12217 = smul.addr %s12216, 4
      %s12218 = scalar_lea.vmem %s15, %s12217
      // Predicated region
      $region81: #{tpu_custom_call.1} parent=79 // pred_check
        %p12219 = pneg %p364
      $region82: #{tpu_custom_call.1} parent=79 // pred_check_branch
        %12221 = sbr.rel (%p12219) target = $region84
      $region83: #{tpu_custom_call.1} parent=79 // pred_region
        %s12222 = smul.u32 64, %s26
      $region84: #{tpu_custom_call.1} parent=79 // pred_fallthru
        _
    $region80: #{tpu_custom_call.1} parent=5 // pred_fallthru
      _
    %p12223 = scmp.le.s32.totalorder 2, %s21
    // Predicated region
    $region85: #{tpu_custom_call.1} parent=5 // pred_check
      %p12224 = pneg %p12223
    $region86: #{tpu_custom_call.1} parent=5 // pred_check_branch
      %12226 = sbr.rel (%p12224) target = $region88
    $region87: #{tpu_custom_call.1} parent=5 // pred_region
      %s12227 = ssub.s32 %s21, 2
      // Predicated region
      $region89: #{tpu_custom_call.1} parent=87 // pred_check
        %p12228 = pneg %p370
      $region90: #{tpu_custom_call.1} parent=87 // pred_check_branch
        %12230 = sbr.rel (%p12228) target = $region92
      $region91: #{tpu_custom_call.1} parent=87 // pred_region
        %s12231 = smul.u32 64, %s27
        %p12232 = scmp.lt.s32.totalorder %s12231, 255
        %s12233 = scalar_select %p12232, %s12231, 255
        %s12234 = smul.addr %s12233, 7
        %s12235 = smul.addr %s12234, 4
        %s12236 = scalar_lea.vmem %s15, %s12235
      $region92: #{tpu_custom_call.1} parent=87 // pred_fallthru
        _
    $region88: #{tpu_custom_call.1} parent=5 // pred_fallthru
      _
  $region6: #{tpu_custom_call.1} parent=0 // loop_footer
    %s25 = sadd.s32 1, %s21
  $region7: #{tpu_custom_call.1} parent=0 // loop_footer_branch
    %20 = sbr.rel target = $region3
  $region8: #{tpu_custom_call.1} parent=0 // loop_exit
    _

</llo_original>
